<compile_context>
chip_gen: v7x
topology: tpu7x:2x2x1
jax: 0.10.0
libtpu: 0.0.40
codegen_flags: <defaults>
</compile_context>

<pallas_src>
import math

import jax
import jax.numpy as jnp
from jax import lax
from jax.experimental import pallas as pl
from jax.experimental.pallas import tpu as pltpu

_LANES = 128
_LN_EPS = 1e-5

# Set to jnp.bfloat16 on v6e/v7x for higher MXU throughput at scaled model
# sizes (accumulation stays f32 via preferred_element_type).  Kept f32 here to
# match the PyTorch reference numerics (and v5e has no bf16 VPU).
MXU_DTYPE = jnp.float32

# Softmax denominator uses the EUP approximate reciprocal (separate bundle
# slot -> essentially free).  Set False for exact parity with the reference.
_APPROX_SOFTMAX_RECIP = True


# ----------------------------- in-kernel math --------------------------------

def _dot(a, b):
    return jnp.dot(a.astype(MXU_DTYPE), b.astype(MXU_DTYPE),
                   preferred_element_type=jnp.float32)


def _dot_t(a, b):
    # a @ b.T via dot_general contracting the last dims of both (no XLU
    # transpose op is emitted for the K operand).
    return lax.dot_general(a.astype(MXU_DTYPE), b.astype(MXU_DTYPE),
                           (((1,), (1,)), ((), ())),
                           preferred_element_type=jnp.float32)


def _ld(r, ent):
    """Load one parameter from the packed slab at its point of use."""
    r0, nr, nc = ent
    return r[r0:r0 + nr, 0:nc]


def _linear(x, r, p):
    y = _dot(x, _ld(r, p["w"]))
    if "b" in p:
        y = y + _ld(r, p["b"])
    return y


def _layer_norm(x, r, p):
    mu = jnp.mean(x, axis=-1, keepdims=True)
    xc = x - mu
    var = jnp.mean(xc * xc, axis=-1, keepdims=True)
    return xc * jax.lax.rsqrt(var + _LN_EPS) * _ld(r, p["g"]) + _ld(r, p["b"])


def _softmax_rows(s):
    s = s - jnp.max(s, axis=-1, keepdims=True)
    e = jnp.exp(s)
    d = jnp.sum(e, axis=-1, keepdims=True)
    if _APPROX_SOFTMAX_RECIP:
        return e * pl.reciprocal(d, approx=True)
    return e / d


def _mha(xq, xkv, r, p):
    """Multi-head attention with host-pre-split per-head weights.

    No K transpose, no lane slicing of activations; the 1/sqrt(dh) scale is
    already folded into W_q / b_q on the host.
    """
    out = None
    for hp in p["heads"]:
        q = _dot(xq, _ld(r, hp["wq"])) + _ld(r, hp["bq"])     # [Sq, dh]
        k = _dot(xkv, _ld(r, hp["wk"])) + _ld(r, hp["bk"])    # [Sk, dh]
        v = _dot(xkv, _ld(r, hp["wv"])) + _ld(r, hp["bv"])    # [Sk, dh]
        att = _softmax_rows(_dot_t(q, k))                     # [Sq, Sk]
        part = _dot(_dot(att, v), _ld(r, hp["wo"]))           # [Sq, Dm]
        out = part if out is None else out + part
    return out + _ld(r, p["bo"])


def _encoder_layer(x, r, p):
    x = _layer_norm(x + _mha(x, x, r, p["attn"]), r, p["ln1"])
    h = jnp.maximum(_linear(x, r, p["ff1"]), 0.0)             # fused FFN
    return _layer_norm(x + _linear(h, r, p["ff2"]), r, p["ln2"])


def _decoder_layer(tgt, mem, r, p):
    tgt = _layer_norm(tgt + _mha(tgt, tgt, r, p["self"]), r, p["ln1"])
    tgt = _layer_norm(tgt + _mha(tgt, mem, r, p["cross"]), r, p["ln2"])
    h = jnp.maximum(_linear(tgt, r, p["ff1"]), 0.0)
    return _layer_norm(tgt + _linear(h, r, p["ff2"]), r, p["ln3"])


# ------------------------------ kernel factory --------------------------------

def _make_kernels(lay, cfg):
    state_dim = cfg["state_dim"]
    action_dim = cfg["action_dim"]
    latent_dim = cfg["latent_dim"]
    act_seq = cfg["act_seq"]
    lat_off = cfg["lat_off"]
    eps_off = cfg["eps_off"]

    def _decode(r, state, latent_input, enc_scr):
        # encoder input built in VMEM scratch at fixed row offsets (no concat)
        state_embed = _linear(state, r, lay["state_encoder"])        # [1, H]
        enc_scr[0:1, :] = state_embed + _ld(r, lay["pos0"])
        enc_scr[1:2, :] = latent_input + _ld(r, lay["pos1"])
        mem = _encoder_layer(enc_scr[...], r, lay["encoder"])        # [2, H]
        tgt = _ld(r, lay["query_embed"])                             # [S, H]
        dec = _decoder_layer(tgt, mem, r, lay["decoder"])            # [S, H]
        # action_head is lane-padded to 128 cols -> [S, 128], lanes >= A are 0
        return _linear(dec, r, lay["action_head"])

    def train_kernel(xin_ref, slab_ref, out_ref, seq_scr, enc_scr):
        r = slab_ref
        # One dense input block per batch element; carve pieces out of it.
        action = xin_ref[0, 0:act_seq, 0:action_dim]                 # [S, A]
        state = xin_ref[0, act_seq:act_seq + 1, 0:state_dim]         # [1, sd]
        eps = xin_ref[0, act_seq:act_seq + 1, eps_off:eps_off + latent_dim]

        # CVAE posterior: action encoder -> latent_proj -> reparametrize.
        a_emb = _linear(action, r, lay["action_embed"])              # [S, E]
        # Tokens laid out [actions..., CLS] (sublane-aligned store); the
        # encoder layer is permutation-equivariant, so taking the CLS output
        # from the last row is identical to the reference (CLS first).
        seq_scr[0:act_seq, :] = a_emb + _ld(r, lay["act_pos_rest"])
        seq_scr[act_seq:act_seq + 1, :] = _ld(r, lay["cls_pos0"])
        z_all = _encoder_layer(seq_scr[...], r, lay["action_encoder"])
        latent_z = z_all[act_seq:act_seq + 1, :]                     # [1, E]
        latent_info = _linear(latent_z, r, lay["latent_proj"])       # [1, 2L]
        mu = latent_info[:, 0:latent_dim]
        logvar = latent_info[:, latent_dim:2 * latent_dim]
        z = mu + jnp.exp(0.5 * logvar) * eps                         # reparam
        latent_input = _linear(z, r, lay["latent_out_proj"])         # [1, H]

        # One full-width unmasked store + one small store for (mu|logvar).
        out_ref[0] = _decode(r, state, latent_input, enc_scr)
        out_ref[0, 0:1, lat_off:lat_off + 2 * latent_dim] = latent_info

    def infer_kernel(xin_ref, slab_ref, out_ref, enc_scr):
        r = slab_ref
        state = xin_ref[0, 0:1, 0:state_dim]
        latent_sample = xin_ref[0, 0:1, eps_off:eps_off + latent_dim]
        latent_input = _linear(latent_sample, r, lay["latent_out_proj"])
        out_ref[0] = _decode(r, state, latent_input, enc_scr)

    return train_kernel, infer_kernel


# --------------------------- parameter slab packing ---------------------------

def _round_up(x, m):
    return (x + m - 1) // m * m


class _SlabBuilder:
    """Packs 2-D f32 leaves into one lane-dense [rows, 128] slab.

    Each leaf gets an 8-row-aligned static slot so in-kernel loads are
    tile-aligned row slices; layout entries are (row0, n_rows, n_cols).
    """

    def __init__(self, lanes=_LANES):
        self._lanes = lanes
        self._rows = 0
        self._chunks = []

    def add(self, arr):
        arr = jnp.asarray(arr, jnp.float32)
        if arr.ndim == 1:
            arr = arr[None, :]
        assert arr.ndim == 2 and arr.shape[1] <= self._lanes, arr.shape
        r0 = self._rows
        self._chunks.append((r0, arr))
        self._rows += _round_up(arr.shape[0], 8)
        return (r0, int(arr.shape[0]), int(arr.shape[1]))

    def build(self):
        slab = jnp.zeros((max(_round_up(self._rows, 8), 8), self._lanes),
                         jnp.float32)
        for r0, arr in self._chunks:
            slab = slab.at[r0:r0 + arr.shape[0], :arr.shape[1]].set(arr)
        return slab


def pack_params(params, *, nhead):
    """Repack the logical parameter tree into the kernel's slab layout.

    * per-head split of QKV / output projections (no in-kernel lane slicing)
    * 1/sqrt(dh) folded into W_q / b_q
    * cls_embed + act_pos_emb[0] baked into one row
    * action_head lane-padded to 128 columns for an unmasked output store
    """
    sd, hidden = params["state_encoder"]["w"].shape
    action_dim, embed = params["action_embed"]["w"].shape
    act_seq = params["query_embed"].shape[0]
    latent = params["latent_out_proj"]["w"].shape[0]
    ffn = params["encoder"]["ff1"]["w"].shape[1]

    assert hidden % nhead == 0 and embed % nhead == 0
    assert max(hidden, embed, ffn) <= _LANES
    lat_off = _LANES - 2 * latent          # output lanes for (mu | logvar)
    eps_off = _LANES - latent              # input lanes for eps / latent
    assert action_dim <= lat_off and sd <= eps_off and 2 * latent <= _LANES

    b = _SlabBuilder()

    def lin(p):
        d = {"w": b.add(p["w"])}
        if "b" in p:
            d["b"] = b.add(p["b"])
        return d

    def ln(p):
        return {"g": b.add(p["g"]), "b": b.add(p["b"])}

    def mha(p, dm):
        dh = dm // nhead
        scale = 1.0 / math.sqrt(dh)
        heads = []
        for h in range(nhead):
            q_sl = slice(h * dh, (h + 1) * dh)
            k_sl = slice(dm + h * dh, dm + (h + 1) * dh)
            v_sl = slice(2 * dm + h * dh, 2 * dm + (h + 1) * dh)
            heads.append({
                "wq": b.add(p["qkv_w"][:, q_sl] * scale),
                "bq": b.add(p["qkv_b"][:, q_sl] * scale),
                "wk": b.add(p["qkv_w"][:, k_sl]),
                "bk": b.add(p["qkv_b"][:, k_sl]),
                "wv": b.add(p["qkv_w"][:, v_sl]),
                "bv": b.add(p["qkv_b"][:, v_sl]),
                "wo": b.add(p["o_w"][q_sl, :]),
            })
        return {"heads": heads, "bo": b.add(p["o_b"])}

    def enc(p, dm):
        return {"attn": mha(p["attn"], dm), "ln1": ln(p["ln1"]),
                "ff1": lin(p["ff1"]), "ff2": lin(p["ff2"]),
                "ln2": ln(p["ln2"])}

    def dec(p, dm):
        return {"self": mha(p["self"], dm), "ln1": ln(p["ln1"]),
                "cross": mha(p["cross"], dm), "ln2": ln(p["ln2"]),
                "ff1": lin(p["ff1"]), "ff2": lin(p["ff2"]),
                "ln3": ln(p["ln3"])}

    lay = {}
    lay["state_encoder"] = lin(params["state_encoder"])
    lay["action_embed"] = lin(params["action_embed"])
    lay["latent_out_proj"] = lin(params["latent_out_proj"])
    lay["latent_proj"] = lin(params["latent_proj"])

    w_head = jnp.zeros((hidden, _LANES), jnp.float32)
    w_head = w_head.at[:, :action_dim].set(params["action_head"]["w"])
    b_head = jnp.zeros((1, _LANES), jnp.float32)
    b_head = b_head.at[:, :action_dim].set(params["action_head"]["b"])
    lay["action_head"] = {"w": b.add(w_head), "b": b.add(b_head)}

    lay["query_embed"] = b.add(params["query_embed"])
    lay["cls_pos0"] = b.add(params["cls_embed"]
                            + params["act_pos_emb"][0, 0:1, :])
    lay["act_pos_rest"] = b.add(params["act_pos_emb"][0, 1:, :])
    lay["pos0"] = b.add(params["pos_emb"][0, 0:1, :])
    lay["pos1"] = b.add(params["pos_emb"][0, 1:2, :])
    lay["action_encoder"] = enc(params["action_encoder"], embed)
    lay["encoder"] = enc(params["encoder"], hidden)
    lay["decoder"] = dec(params["decoder"], hidden)

    cfg = dict(state_dim=sd, action_dim=action_dim, hidden_dim=hidden,
               embed_dim=embed, ffn_dim=ffn, act_seq=act_seq,
               latent_dim=latent, nhead=nhead, lat_off=lat_off,
               eps_off=eps_off)
    return {"slab": b.build(), "layout": lay, "cfg": cfg}


# ------------------------------- cost estimate --------------------------------

def _cost_estimate(cfg, bs, slab, train):
    H, E, F, L, S = (cfg["hidden_dim"], cfg["embed_dim"], cfg["ffn_dim"],
                     cfg["latent_dim"], cfg["act_seq"])
    A, sd, nh = cfg["action_dim"], cfg["state_dim"], cfg["nhead"]

    def mm(m, k, n):
        return 2 * m * k * n

    def attn(sq, skv, dm):
        return (mm(sq, dm, dm) + 2 * mm(skv, dm, dm) + 2 * mm(sq, skv, dm)
                + mm(sq, dm, dm))

    def enc(s, dm):
        return attn(s, s, dm) + mm(s, dm, F) + mm(s, F, dm)

    flops = (mm(1, sd, H) + mm(1, L, H) + enc(2, H)
             + attn(S, S, H) + attn(S, 2, H) + mm(S, H, F) + mm(S, F, H)
             + mm(S, H, _LANES))
    trans = nh * (4 + S * S + 2 * S) + 4 * (S + 2) + 16
    if train:
        flops += mm(S, A, E) + enc(S + 1, E) + mm(1, E, 2 * L) + mm(1, L, H)
        trans += nh * (S + 1) * (S + 1) + L
    nbytes = (int(slab.size) * 4
              + bs * ((S + 1) + S) * _LANES * 4)
    return pl.CostEstimate(flops=int(bs * flops),
                           transcendentals=int(bs * trans),
                           bytes_accessed=int(nbytes))


# --------------------------------- wrapper -------------------------------------

def act_vae_forward(packed, state, goal=None, action=None, *, rng):
    if goal is not None:
        # TODO(synk): goal encoder path (goal_dim is not None) not implemented.
        raise NotImplementedError("goal path is not implemented")

    slab, lay, cfg = packed["slab"], packed["layout"], packed["cfg"]
    S, A, L = cfg["act_seq"], cfg["action_dim"], cfg["latent_dim"]
    sd, lat_off, eps_off = cfg["state_dim"], cfg["lat_off"], cfg["eps_off"]

    state = state[:, :1, :].astype(jnp.float32)
    bs = state.shape[0]

    train_kernel, infer_kernel = _make_kernels(lay, cfg)
    cparams = pltpu.CompilerParams(dimension_semantics=("parallel",))
    # NOTE(v7x): the constant-index_map slab could be single-buffered
    # (pipeline_mode=pl.Buffered(1)) to halve its VMEM cost per TC once model
    # dims grow; irrelevant at this size so we keep the default.
    slab_spec = pl.BlockSpec(tuple(slab.shape), lambda b: (0, 0))
    out_shape = jax.ShapeDtypeStruct((bs, S, _LANES), jnp.float32)
    out_spec = pl.BlockSpec((1, S, _LANES), lambda b: (b, 0, 0))

    if action is not None:
        action = action.astype(jnp.float32)
        eps = jax.random.normal(rng, (bs, 1, L), dtype=jnp.float32)
        # One lane-dense input block per batch element:
        #   rows [0:S)  lanes [0:A)        -> action
        #   row   S     lanes [0:sd)       -> state
        #   row   S     lanes [eps_off:+L) -> eps
        xin = jnp.zeros((bs, S + 1, _LANES), jnp.float32)
        xin = xin.at[:, :S, :A].set(action)
        xin = xin.at[:, S, :sd].set(state[:, 0, :])
        xin = xin.at[:, S, eps_off:eps_off + L].set(eps[:, 0, :])

        packed_out = pl.pallas_call(
            train_kernel,
            grid=(bs,),
            out_shape=out_shape,
            in_specs=[pl.BlockSpec((1, S + 1, _LANES), lambda b: (b, 0, 0)),
                      slab_spec],
            out_specs=out_spec,
            scratch_shapes=[pltpu.VMEM((S + 1, cfg["embed_dim"]), jnp.float32),
                            pltpu.VMEM((2, cfg["hidden_dim"]), jnp.float32)],
            compiler_params=cparams,
            cost_estimate=_cost_estimate(cfg, bs, slab, train=True),
        )(xin, slab)
        action_pred = packed_out[:, :, :A]
        mu = packed_out[:, 0:1, lat_off:lat_off + L]
        logvar = packed_out[:, 0:1, lat_off + L:lat_off + 2 * L]
        return action_pred, (mu, logvar)

    # Inference path: latent ~ Uniform[0,1), matching torch.rand in the
    # reference implementation.
    latent_sample = jax.random.uniform(rng, (bs, 1, L), dtype=jnp.float32)
    xin = jnp.zeros((bs, 1, _LANES), jnp.float32)
    xin = xin.at[:, 0, :sd].set(state[:, 0, :])
    xin = xin.at[:, 0, eps_off:eps_off + L].set(latent_sample[:, 0, :])

    packed_out = pl.pallas_call(
        infer_kernel,
        grid=(bs,),
        out_shape=out_shape,
        in_specs=[pl.BlockSpec((1, 1, _LANES), lambda b: (b, 0, 0)),
                  slab_spec],
        out_specs=out_spec,
        scratch_shapes=[pltpu.VMEM((2, cfg["hidden_dim"]), jnp.float32)],
        compiler_params=cparams,
        cost_estimate=_cost_estimate(cfg, bs, slab, train=False),
    )(xin, slab)
    return packed_out[:, :, :A], (None, None)


# ------------------------------- parameters -----------------------------------

def init_params(key, *, state_dim, action_dim, hidden_dim, embed_dim,
                act_seq_size, latent_dim, ffn_dim):
    keys = iter(jax.random.split(key, 64))

    def nrm(shape, std=0.02):
        return std * jax.random.normal(next(keys), shape, dtype=jnp.float32)

    def dense(din, dout, bias=True):
        p = {"w": nrm((din, dout))}          # stored [in, out] = torch W^T
        if bias:
            p["b"] = jnp.zeros((1, dout), jnp.float32)
        return p

    def mha_p(dm):
        return {"qkv_w": nrm((dm, 3 * dm)),
                "qkv_b": jnp.zeros((1, 3 * dm), jnp.float32),
                "o_w": nrm((dm, dm)),
                "o_b": jnp.zeros((1, dm), jnp.float32)}

    def ln_p(dm):
        return {"g": jnp.ones((1, dm), jnp.float32),
                "b": jnp.zeros((1, dm), jnp.float32)}

    def enc_layer_p(dm):
        return {"attn": mha_p(dm), "ln1": ln_p(dm),
                "ff1": dense(dm, ffn_dim), "ff2": dense(ffn_dim, dm),
                "ln2": ln_p(dm)}

    def dec_layer_p(dm):
        return {"self": mha_p(dm), "ln1": ln_p(dm),
                "cross": mha_p(dm), "ln2": ln_p(dm),
                "ff1": dense(dm, ffn_dim), "ff2": dense(ffn_dim, dm),
                "ln3": ln_p(dm)}

    return {
        "state_encoder": dense(state_dim, hidden_dim, bias=False),
        "action_embed": dense(action_dim, embed_dim, bias=False),
        "latent_out_proj": dense(latent_dim, hidden_dim, bias=False),
        "action_head": dense(hidden_dim, action_dim, bias=True),
        "latent_proj": dense(embed_dim, 2 * latent_dim, bias=True),
        "query_embed": nrm((act_seq_size, hidden_dim)),          # nn.Embedding
        "cls_embed": nrm((1, embed_dim)),                        # nn.Embedding
        "pos_emb": nrm((1, act_seq_size, hidden_dim)),           # normal init
        "act_pos_emb": jnp.zeros((1, act_seq_size + 1, embed_dim), jnp.float32),
        "action_encoder": enc_layer_p(embed_dim),
        "encoder": enc_layer_p(hidden_dim),
        "decoder": dec_layer_p(hidden_dim),
    }


# --------------------------- pure-JAX reference -------------------------------

def _reference_forward(p, state, action, eps, *, latent_dim, nhead):
    def linear(x, d):
        y = x @ d["w"]
        return y + d["b"] if "b" in d else y

    def ln(x, d):
        m = x.mean(-1, keepdims=True)
        v = ((x - m) ** 2).mean(-1, keepdims=True)
        return (x - m) / jnp.sqrt(v + _LN_EPS) * d["g"] + d["b"]

    def mha(xq, xkv, d):
        dm = xq.shape[-1]
        dh = dm // nhead
        q = xq @ d["qkv_w"][:, :dm] + d["qkv_b"][:, :dm]
        k = xkv @ d["qkv_w"][:, dm:2 * dm] + d["qkv_b"][:, dm:2 * dm]
        v = xkv @ d["qkv_w"][:, 2 * dm:] + d["qkv_b"][:, 2 * dm:]

        def split(t):
            b, s, _ = t.shape
            return t.reshape(b, s, nhead, dh).transpose(0, 2, 1, 3)

        qh, kh, vh = split(q), split(k), split(v)
        s = jnp.einsum("bhqd,bhkd->bhqk", qh, kh) / math.sqrt(dh)
        a = jax.nn.softmax(s, axis=-1)
        o = jnp.einsum("bhqk,bhkd->bhqd", a, vh)
        b, h, sq, _ = o.shape
        o = o.transpose(0, 2, 1, 3).reshape(b, sq, dm)
        return o @ d["o_w"] + d["o_b"]

    def enc_layer(x, d):
        x = ln(x + mha(x, x, d["attn"]), d["ln1"])
        h = jax.nn.relu(linear(x, d["ff1"]))
        return ln(x + linear(h, d["ff2"]), d["ln2"])

    def dec_layer(t, m, d):
        t = ln(t + mha(t, t, d["self"]), d["ln1"])
        t = ln(t + mha(t, m, d["cross"]), d["ln2"])
        h = jax.nn.relu(linear(t, d["ff1"]))
        return ln(t + linear(h, d["ff2"]), d["ln3"])

    state = state[:, :1, :]
    bs = state.shape[0]
    state_embed = linear(state, p["state_encoder"])
    action_embed = linear(action, p["action_embed"])
    cls = jnp.broadcast_to(p["cls_embed"][None],
                           (bs, 1, p["cls_embed"].shape[-1]))
    seq = jnp.concatenate([cls, action_embed], axis=1) + p["act_pos_emb"]
    latent_z = enc_layer(seq, p["action_encoder"])[:, 0:1, :]
    latent_info = linear(latent_z, p["latent_proj"])
    mu = latent_info[..., :latent_dim]
    logvar = latent_info[..., latent_dim:]
    z = mu + jnp.exp(0.5 * logvar) * eps
    latent_input = linear(z, p["latent_out_proj"])
    x = jnp.concatenate([state_embed, latent_input], axis=1)
    x = x + p["pos_emb"][:, : x.shape[1]]
    mem = enc_layer(x, p["encoder"])
    tgt = jnp.broadcast_to(p["query_embed"][None],
                           (bs,) + p["query_embed"].shape)
    dec = dec_layer(tgt, mem, p["decoder"])
    return linear(dec, p["action_head"]), mu, logvar


# ---------------------------------- main --------------------------------------

if __name__ == "__main__":
    key = jax.random.PRNGKey(0)
    pkey, skey, akey, rkey, rkey2 = jax.random.split(key, 5)

    bs, seq_in = 2, 3
    state_dim, action_dim = 8, 8
    hidden_dim, embed_dim = 32, 32
    act_seq_size, latent_dim = 8, 32
    nhead, ffn_dim = 2, 64

    params = init_params(pkey, state_dim=state_dim, action_dim=action_dim,
                         hidden_dim=hidden_dim, embed_dim=embed_dim,
                         act_seq_size=act_seq_size, latent_dim=latent_dim,
                         ffn_dim=ffn_dim)
    packed = pack_params(params, nhead=nhead)

    state = jax.random.normal(skey, (bs, seq_in, state_dim), dtype=jnp.float32)
    action = jax.random.normal(akey, (bs, act_seq_size, action_dim),
                               dtype=jnp.float32)

    # Training path (action provided): fused kernel -> action_pred, mu, logvar.
    action_pred, (mu, logvar) = act_vae_forward(packed, state, goal=None,
                                                action=action, rng=rkey)
    jax.block_until_ready(action_pred)
    assert action_pred.shape == (bs, act_seq_size, action_dim)
    assert mu.shape == (bs, 1, latent_dim) and logvar.shape == (bs, 1, latent_dim)

    # Numerical check against a plain-JAX reference (same eps via same key).
    eps = jax.random.normal(rkey, (bs, 1, latent_dim), dtype=jnp.float32)
    with jax.default_matmul_precision("highest"):
        ref_pred, ref_mu, ref_logvar = _reference_forward(
            params, state, action, eps, latent_dim=latent_dim, nhead=nhead)
    assert bool(jnp.allclose(mu, ref_mu, rtol=1e-2, atol=1e-2))
    assert bool(jnp.allclose(logvar, ref_logvar, rtol=1e-2, atol=1e-2))
    assert bool(jnp.allclose(action_pred, ref_pred, rtol=1e-2, atol=1e-2))

    # Inference path (action=None) also runs through the fused decode kernel.
    infer_pred, _ = act_vae_forward(packed, state, goal=None, action=None,
                                    rng=rkey2)
    jax.block_until_ready(infer_pred)
    assert infer_pred.shape == (bs, act_seq_size, action_dim)
    assert bool(jnp.all(jnp.isfinite(infer_pred)))

    print("KERNEL_OK")
</pallas_src>

<mosaic_0001>
module attributes {stable_mosaic.version = 11 : i64} {
  func.func @train_kernel(%arg0: i32, %arg1: memref<1x9x128xf32, #tpu.memory_space<vmem>>, %arg2: memref<1736x128xf32, #tpu.memory_space<vmem>>, %arg3: memref<1x8x128xf32, #tpu.memory_space<vmem>>, %arg4: memref<9x32xf32, #tpu.memory_space<vmem>>, %arg5: memref<2x32xf32, #tpu.memory_space<vmem>>) attributes {dimension_semantics = [#tpu.dimension_semantics<parallel>], iteration_bounds = array<i64: 2>, scalar_prefetch = 0 : i64, scratch_operands = 2 : i64, tpu.core_type = #tpu.core_type<tc>, window_params = [{transform_indices = @transform_0, window_bounds = array<i64: 1, 9, 128>}, {pipeline_mode = #tpu.pipeline_mode<synchronous>, transform_indices = @transform_1, window_bounds = array<i64: 1736, 128>}, {transform_indices = @transform_2, window_bounds = array<i64: 1, 8, 128>}]} {
    %c0 = arith.constant 0 : index
    %c0_0 = arith.constant 0 : index
    %c0_1 = arith.constant 0 : index
    %0 = vector.load %arg1[%c0, %c0_0, %c0_1] : memref<1x9x128xf32, #tpu.memory_space<vmem>>, vector<1x8x8xf32>
    %1 = vector.shape_cast %0 : vector<1x8x8xf32> to vector<8x8xf32>
    %c0_2 = arith.constant 0 : index
    %c8 = arith.constant 8 : index
    %c0_3 = arith.constant 0 : index
    %2 = vector.load %arg1[%c0_2, %c8, %c0_3] : memref<1x9x128xf32, #tpu.memory_space<vmem>>, vector<1x1x8xf32>
    %3 = vector.shape_cast %2 : vector<1x1x8xf32> to vector<1x8xf32>
    %c0_4 = arith.constant 0 : index
    %c8_5 = arith.constant 8 : index
    %c96 = arith.constant 96 : index
    %4 = vector.load %arg1[%c0_4, %c8_5, %c96] : memref<1x9x128xf32, #tpu.memory_space<vmem>>, vector<1x1x32xf32>
    %5 = vector.shape_cast %4 : vector<1x1x32xf32> to vector<1x32xf32>
    %c8_6 = arith.constant 8 : index
    %c0_7 = arith.constant 0 : index
    %6 = vector.load %arg2[%c8_6, %c0_7] : memref<1736x128xf32, #tpu.memory_space<vmem>>, vector<8x32xf32>
    %cst = arith.constant dense<0.000000e+00> : vector<8x32xf32>
    %7 = tpu.matmul %1, %6, %cst {dimension_numbers = #tpu.dot_dimension_numbers<[1], [0], [0], [1], [0, 0, 1, 1], [], []>} : vector<8x8xf32>, vector<8x32xf32>, vector<8x32xf32> -> vector<8x32xf32>
    %c144 = arith.constant 144 : index
    %c0_8 = arith.constant 0 : index
    %8 = vector.load %arg2[%c144, %c0_8] : memref<1736x128xf32, #tpu.memory_space<vmem>>, vector<8x32xf32>
    %9 = arith.addf %7, %8 : vector<8x32xf32>
    %c0_9 = arith.constant 0 : index
    %c0_10 = arith.constant 0 : index
    %10 = vector.load %arg4[%c0_9, %c0_10] : memref<9x32xf32, #tpu.memory_space<vmem>>, vector<8x32xf32>
    tpu.vector_store %arg4[%c0_9, %c0_10], %9 {strides = array<i32>} : memref<9x32xf32, #tpu.memory_space<vmem>>, vector<8x32xf32>,
    %c136 = arith.constant 136 : index
    %c0_11 = arith.constant 0 : index
    %11 = vector.load %arg2[%c136, %c0_11] : memref<1736x128xf32, #tpu.memory_space<vmem>>, vector<1x32xf32>
    %c8_12 = arith.constant 8 : index
    %c0_13 = arith.constant 0 : index
    %12 = vector.load %arg4[%c8_12, %c0_13] : memref<9x32xf32, #tpu.memory_space<vmem>>, vector<1x32xf32>
    tpu.vector_store %arg4[%c8_12, %c0_13], %11 {strides = array<i32>} : memref<9x32xf32, #tpu.memory_space<vmem>>, vector<1x32xf32>,
    %c0_14 = arith.constant 0 : index
    %c0_15 = arith.constant 0 : index
    %13 = vector.load %arg4[%c0_14, %c0_15] : memref<9x32xf32, #tpu.memory_space<vmem>>, vector<9x32xf32>
    %c168 = arith.constant 168 : index
    %c0_16 = arith.constant 0 : index
    %14 = vector.load %arg2[%c168, %c0_16] : memref<1736x128xf32, #tpu.memory_space<vmem>>, vector<32x16xf32>
    %cst_17 = arith.constant dense<0.000000e+00> : vector<9x16xf32>
    %15 = tpu.matmul %13, %14, %cst_17 {dimension_numbers = #tpu.dot_dimension_numbers<[1], [0], [0], [1], [0, 0, 1, 1], [], []>} : vector<9x32xf32>, vector<32x16xf32>, vector<9x16xf32> -> vector<9x16xf32>
    %c200 = arith.constant 200 : index
    %c0_18 = arith.constant 0 : index
    %16 = vector.load %arg2[%c200, %c0_18] : memref<1736x128xf32, #tpu.memory_space<vmem>>, vector<1x16xf32>
    %17 = vector.broadcast %16 : vector<1x16xf32> to vector<9x16xf32>
    %18 = arith.addf %15, %17 : vector<9x16xf32>
    %c208 = arith.constant 208 : index
    %c0_19 = arith.constant 0 : index
    %19 = vector.load %arg2[%c208, %c0_19] : memref<1736x128xf32, #tpu.memory_space<vmem>>, vector<32x16xf32>
    %cst_20 = arith.constant dense<0.000000e+00> : vector<9x16xf32>
    %20 = tpu.matmul %13, %19, %cst_20 {dimension_numbers = #tpu.dot_dimension_numbers<[1], [0], [0], [1], [0, 0, 1, 1], [], []>} : vector<9x32xf32>, vector<32x16xf32>, vector<9x16xf32> -> vector<9x16xf32>
    %c240 = arith.constant 240 : index
    %c0_21 = arith.constant 0 : index
    %21 = vector.load %arg2[%c240, %c0_21] : memref<1736x128xf32, #tpu.memory_space<vmem>>, vector<1x16xf32>
    %22 = vector.broadcast %21 : vector<1x16xf32> to vector<9x16xf32>
    %23 = arith.addf %20, %22 : vector<9x16xf32>
    %c248 = arith.constant 248 : index
    %c0_22 = arith.constant 0 : index
    %24 = vector.load %arg2[%c248, %c0_22] : memref<1736x128xf32, #tpu.memory_space<vmem>>, vector<32x16xf32>
    %cst_23 = arith.constant dense<0.000000e+00> : vector<9x16xf32>
    %25 = tpu.matmul %13, %24, %cst_23 {dimension_numbers = #tpu.dot_dimension_numbers<[1], [0], [0], [1], [0, 0, 1, 1], [], []>} : vector<9x32xf32>, vector<32x16xf32>, vector<9x16xf32> -> vector<9x16xf32>
    %c280 = arith.constant 280 : index
    %c0_24 = arith.constant 0 : index
    %26 = vector.load %arg2[%c280, %c0_24] : memref<1736x128xf32, #tpu.memory_space<vmem>>, vector<1x16xf32>
    %27 = vector.broadcast %26 : vector<1x16xf32> to vector<9x16xf32>
    %28 = arith.addf %25, %27 : vector<9x16xf32>
    %cst_25 = arith.constant dense<0.000000e+00> : vector<9x9xf32>
    %29 = tpu.matmul %18, %23, %cst_25 {dimension_numbers = #tpu.dot_dimension_numbers<[1], [1], [0], [0], [0, 0, 1, 0], [], []>} : vector<9x16xf32>, vector<9x16xf32>, vector<9x9xf32> -> vector<9x9xf32>
    %cst_26 = arith.constant dense<0xFF800000> : vector<9xf32>
    %30 = vector.multi_reduction <maximumf>, %29, %cst_26 [1] : vector<9x9xf32> to vector<9xf32>
    %31 = vector.shape_cast %30 : vector<9xf32> to vector<9x1xf32>
    %32 = vector.broadcast %31 : vector<9x1xf32> to vector<9x9xf32>
    %33 = arith.subf %29, %32 : vector<9x9xf32>
    %34 = math.exp %33 : vector<9x9xf32>
    %cst_27 = arith.constant dense<0.000000e+00> : vector<9xf32>
    %35 = vector.multi_reduction <add>, %34, %cst_27 [1] : vector<9x9xf32> to vector<9xf32>
    %36 = vector.shape_cast %35 : vector<9xf32> to vector<9x1xf32>
    %37 = tpu.reciprocal %36 {approx = true} : vector<9x1xf32> -> vector<9x1xf32>
    %38 = vector.broadcast %37 : vector<9x1xf32> to vector<9x9xf32>
    %39 = arith.mulf %34, %38 : vector<9x9xf32>
    %cst_28 = arith.constant dense<0.000000e+00> : vector<9x16xf32>
    %40 = tpu.matmul %39, %28, %cst_28 {dimension_numbers = #tpu.dot_dimension_numbers<[1], [0], [0], [1], [0, 0, 1, 1], [], []>} : vector<9x9xf32>, vector<9x16xf32>, vector<9x16xf32> -> vector<9x16xf32>
    %c288 = arith.constant 288 : index
    %c0_29 = arith.constant 0 : index
    %41 = vector.load %arg2[%c288, %c0_29] : memref<1736x128xf32, #tpu.memory_space<vmem>>, vector<16x32xf32>
    %cst_30 = arith.constant dense<0.000000e+00> : vector<9x32xf32>
    %42 = tpu.matmul %40, %41, %cst_30 {dimension_numbers = #tpu.dot_dimension_numbers<[1], [0], [0], [1], [0, 0, 1, 1], [], []>} : vector<9x16xf32>, vector<16x32xf32>, vector<9x32xf32> -> vector<9x32xf32>
    %c304 = arith.constant 304 : index
    %c0_31 = arith.constant 0 : index
    %43 = vector.load %arg2[%c304, %c0_31] : memref<1736x128xf32, #tpu.memory_space<vmem>>, vector<32x16xf32>
    %cst_32 = arith.constant dense<0.000000e+00> : vector<9x16xf32>
    %44 = tpu.matmul %13, %43, %cst_32 {dimension_numbers = #tpu.dot_dimension_numbers<[1], [0], [0], [1], [0, 0, 1, 1], [], []>} : vector<9x32xf32>, vector<32x16xf32>, vector<9x16xf32> -> vector<9x16xf32>
    %c336 = arith.constant 336 : index
    %c0_33 = arith.constant 0 : index
    %45 = vector.load %arg2[%c336, %c0_33] : memref<1736x128xf32, #tpu.memory_space<vmem>>, vector<1x16xf32>
    %46 = vector.broadcast %45 : vector<1x16xf32> to vector<9x16xf32>
    %47 = arith.addf %44, %46 : vector<9x16xf32>
    %c344 = arith.constant 344 : index
    %c0_34 = arith.constant 0 : index
    %48 = vector.load %arg2[%c344, %c0_34] : memref<1736x128xf32, #tpu.memory_space<vmem>>, vector<32x16xf32>
    %cst_35 = arith.constant dense<0.000000e+00> : vector<9x16xf32>
    %49 = tpu.matmul %13, %48, %cst_35 {dimension_numbers = #tpu.dot_dimension_numbers<[1], [0], [0], [1], [0, 0, 1, 1], [], []>} : vector<9x32xf32>, vector<32x16xf32>, vector<9x16xf32> -> vector<9x16xf32>
    %c376 = arith.constant 376 : index
    %c0_36 = arith.constant 0 : index
    %50 = vector.load %arg2[%c376, %c0_36] : memref<1736x128xf32, #tpu.memory_space<vmem>>, vector<1x16xf32>
    %51 = vector.broadcast %50 : vector<1x16xf32> to vector<9x16xf32>
    %52 = arith.addf %49, %51 : vector<9x16xf32>
    %c384 = arith.constant 384 : index
    %c0_37 = arith.constant 0 : index
    %53 = vector.load %arg2[%c384, %c0_37] : memref<1736x128xf32, #tpu.memory_space<vmem>>, vector<32x16xf32>
    %cst_38 = arith.constant dense<0.000000e+00> : vector<9x16xf32>
    %54 = tpu.matmul %13, %53, %cst_38 {dimension_numbers = #tpu.dot_dimension_numbers<[1], [0], [0], [1], [0, 0, 1, 1], [], []>} : vector<9x32xf32>, vector<32x16xf32>, vector<9x16xf32> -> vector<9x16xf32>
    %c416 = arith.constant 416 : index
    %c0_39 = arith.constant 0 : index
    %55 = vector.load %arg2[%c416, %c0_39] : memref<1736x128xf32, #tpu.memory_space<vmem>>, vector<1x16xf32>
    %56 = vector.broadcast %55 : vector<1x16xf32> to vector<9x16xf32>
    %57 = arith.addf %54, %56 : vector<9x16xf32>
    %cst_40 = arith.constant dense<0.000000e+00> : vector<9x9xf32>
    %58 = tpu.matmul %47, %52, %cst_40 {dimension_numbers = #tpu.dot_dimension_numbers<[1], [1], [0], [0], [0, 0, 1, 0], [], []>} : vector<9x16xf32>, vector<9x16xf32>, vector<9x9xf32> -> vector<9x9xf32>
    %cst_41 = arith.constant dense<0xFF800000> : vector<9xf32>
    %59 = vector.multi_reduction <maximumf>, %58, %cst_41 [1] : vector<9x9xf32> to vector<9xf32>
    %60 = vector.shape_cast %59 : vector<9xf32> to vector<9x1xf32>
    %61 = vector.broadcast %60 : vector<9x1xf32> to vector<9x9xf32>
    %62 = arith.subf %58, %61 : vector<9x9xf32>
    %63 = math.exp %62 : vector<9x9xf32>
    %cst_42 = arith.constant dense<0.000000e+00> : vector<9xf32>
    %64 = vector.multi_reduction <add>, %63, %cst_42 [1] : vector<9x9xf32> to vector<9xf32>
    %65 = vector.shape_cast %64 : vector<9xf32> to vector<9x1xf32>
    %66 = tpu.reciprocal %65 {approx = true} : vector<9x1xf32> -> vector<9x1xf32>
    %67 = vector.broadcast %66 : vector<9x1xf32> to vector<9x9xf32>
    %68 = arith.mulf %63, %67 : vector<9x9xf32>
    %cst_43 = arith.constant dense<0.000000e+00> : vector<9x16xf32>
    %69 = tpu.matmul %68, %57, %cst_43 {dimension_numbers = #tpu.dot_dimension_numbers<[1], [0], [0], [1], [0, 0, 1, 1], [], []>} : vector<9x9xf32>, vector<9x16xf32>, vector<9x16xf32> -> vector<9x16xf32>
    %c424 = arith.constant 424 : index
    %c0_44 = arith.constant 0 : index
    %70 = vector.load %arg2[%c424, %c0_44] : memref<1736x128xf32, #tpu.memory_space<vmem>>, vector<16x32xf32>
    %cst_45 = arith.constant dense<0.000000e+00> : vector<9x32xf32>
    %71 = tpu.matmul %69, %70, %cst_45 {dimension_numbers = #tpu.dot_dimension_numbers<[1], [0], [0], [1], [0, 0, 1, 1], [], []>} : vector<9x16xf32>, vector<16x32xf32>, vector<9x32xf32> -> vector<9x32xf32>
    %72 = arith.addf %42, %71 : vector<9x32xf32>
    %c440 = arith.constant 440 : index
    %c0_46 = arith.constant 0 : index
    %73 = vector.load %arg2[%c440, %c0_46] : memref<1736x128xf32, #tpu.memory_space<vmem>>, vector<1x32xf32>
    %74 = vector.broadcast %73 : vector<1x32xf32> to vector<9x32xf32>
    %75 = arith.addf %72, %74 : vector<9x32xf32>
    %76 = arith.addf %13, %75 : vector<9x32xf32>
    %cst_47 = arith.constant dense<0.000000e+00> : vector<9xf32>
    %77 = vector.multi_reduction <add>, %76, %cst_47 [1] : vector<9x32xf32> to vector<9xf32>
    %78 = vector.shape_cast %77 : vector<9xf32> to vector<9x1xf32>
    %cst_48 = arith.constant 3.200000e+01 : f32
    %79 = vector.broadcast %cst_48 : f32 to vector<9x1xf32>
    %80 = arith.divf %78, %79 : vector<9x1xf32>
    %81 = vector.broadcast %80 : vector<9x1xf32> to vector<9x32xf32>
    %82 = arith.subf %76, %81 : vector<9x32xf32>
    %83 = arith.mulf %82, %82 : vector<9x32xf32>
    %cst_49 = arith.constant dense<0.000000e+00> : vector<9xf32>
    %84 = vector.multi_reduction <add>, %83, %cst_49 [1] : vector<9x32xf32> to vector<9xf32>
    %85 = vector.shape_cast %84 : vector<9xf32> to vector<9x1xf32>
    %cst_50 = arith.constant 3.200000e+01 : f32
    %86 = vector.broadcast %cst_50 : f32 to vector<9x1xf32>
    %87 = arith.divf %85, %86 : vector<9x1xf32>
    %cst_51 = arith.constant 9.99999974E-6 : f32
    %88 = vector.broadcast %cst_51 : f32 to vector<9x1xf32>
    %89 = arith.addf %87, %88 : vector<9x1xf32>
    %90 = math.rsqrt %89 : vector<9x1xf32>
    %91 = vector.broadcast %90 : vector<9x1xf32> to vector<9x32xf32>
    %92 = arith.mulf %82, %91 : vector<9x32xf32>
    %c448 = arith.constant 448 : index
    %c0_52 = arith.constant 0 : index
    %93 = vector.load %arg2[%c448, %c0_52] : memref<1736x128xf32, #tpu.memory_space<vmem>>, vector<1x32xf32>
    %94 = vector.broadcast %93 : vector<1x32xf32> to vector<9x32xf32>
    %95 = arith.mulf %92, %94 : vector<9x32xf32>
    %c456 = arith.constant 456 : index
    %c0_53 = arith.constant 0 : index
    %96 = vector.load %arg2[%c456, %c0_53] : memref<1736x128xf32, #tpu.memory_space<vmem>>, vector<1x32xf32>
    %97 = vector.broadcast %96 : vector<1x32xf32> to vector<9x32xf32>
    %98 = arith.addf %95, %97 : vector<9x32xf32>
    %c464 = arith.constant 464 : index
    %c0_54 = arith.constant 0 : index
    %99 = vector.load %arg2[%c464, %c0_54] : memref<1736x128xf32, #tpu.memory_space<vmem>>, vector<32x64xf32>
    %cst_55 = arith.constant dense<0.000000e+00> : vector<9x64xf32>
    %100 = tpu.matmul %98, %99, %cst_55 {dimension_numbers = #tpu.dot_dimension_numbers<[1], [0], [0], [1], [0, 0, 1, 1], [], []>} : vector<9x32xf32>, vector<32x64xf32>, vector<9x64xf32> -> vector<9x64xf32>
    %c496 = arith.constant 496 : index
    %c0_56 = arith.constant 0 : index
    %101 = vector.load %arg2[%c496, %c0_56] : memref<1736x128xf32, #tpu.memory_space<vmem>>, vector<1x64xf32>
    %102 = vector.broadcast %101 : vector<1x64xf32> to vector<9x64xf32>
    %103 = arith.addf %100, %102 : vector<9x64xf32>
    %cst_57 = arith.constant 0.000000e+00 : f32
    %104 = vector.broadcast %cst_57 : f32 to vector<9x64xf32>
    %105 = arith.maximumf %103, %104 : vector<9x64xf32>
    %c504 = arith.constant 504 : index
    %c0_58 = arith.constant 0 : index
    %106 = vector.load %arg2[%c504, %c0_58] : memref<1736x128xf32, #tpu.memory_space<vmem>>, vector<64x32xf32>
    %cst_59 = arith.constant dense<0.000000e+00> : vector<9x32xf32>
    %107 = tpu.matmul %105, %106, %cst_59 {dimension_numbers = #tpu.dot_dimension_numbers<[1], [0], [0], [1], [0, 0, 1, 1], [], []>} : vector<9x64xf32>, vector<64x32xf32>, vector<9x32xf32> -> vector<9x32xf32>
    %c568 = arith.constant 568 : index
    %c0_60 = arith.constant 0 : index
    %108 = vector.load %arg2[%c568, %c0_60] : memref<1736x128xf32, #tpu.memory_space<vmem>>, vector<1x32xf32>
    %109 = vector.broadcast %108 : vector<1x32xf32> to vector<9x32xf32>
    %110 = arith.addf %107, %109 : vector<9x32xf32>
    %111 = arith.addf %98, %110 : vector<9x32xf32>
    %cst_61 = arith.constant dense<0.000000e+00> : vector<9xf32>
    %112 = vector.multi_reduction <add>, %111, %cst_61 [1] : vector<9x32xf32> to vector<9xf32>
    %113 = vector.shape_cast %112 : vector<9xf32> to vector<9x1xf32>
    %cst_62 = arith.constant 3.200000e+01 : f32
    %114 = vector.broadcast %cst_62 : f32 to vector<9x1xf32>
    %115 = arith.divf %113, %114 : vector<9x1xf32>
    %116 = vector.broadcast %115 : vector<9x1xf32> to vector<9x32xf32>
    %117 = arith.subf %111, %116 : vector<9x32xf32>
    %118 = arith.mulf %117, %117 : vector<9x32xf32>
    %cst_63 = arith.constant dense<0.000000e+00> : vector<9xf32>
    %119 = vector.multi_reduction <add>, %118, %cst_63 [1] : vector<9x32xf32> to vector<9xf32>
    %120 = vector.shape_cast %119 : vector<9xf32> to vector<9x1xf32>
    %cst_64 = arith.constant 3.200000e+01 : f32
    %121 = vector.broadcast %cst_64 : f32 to vector<9x1xf32>
    %122 = arith.divf %120, %121 : vector<9x1xf32>
    %cst_65 = arith.constant 9.99999974E-6 : f32
    %123 = vector.broadcast %cst_65 : f32 to vector<9x1xf32>
    %124 = arith.addf %122, %123 : vector<9x1xf32>
    %125 = math.rsqrt %124 : vector<9x1xf32>
    %126 = vector.broadcast %125 : vector<9x1xf32> to vector<9x32xf32>
    %127 = arith.mulf %117, %126 : vector<9x32xf32>
    %c576 = arith.constant 576 : index
    %c0_66 = arith.constant 0 : index
    %128 = vector.load %arg2[%c576, %c0_66] : memref<1736x128xf32, #tpu.memory_space<vmem>>, vector<1x32xf32>
    %129 = vector.broadcast %128 : vector<1x32xf32> to vector<9x32xf32>
    %130 = arith.mulf %127, %129 : vector<9x32xf32>
    %c584 = arith.constant 584 : index
    %c0_67 = arith.constant 0 : index
    %131 = vector.load %arg2[%c584, %c0_67] : memref<1736x128xf32, #tpu.memory_space<vmem>>, vector<1x32xf32>
    %132 = vector.broadcast %131 : vector<1x32xf32> to vector<9x32xf32>
    %133 = arith.addf %130, %132 : vector<9x32xf32>
    %134 = vector.extract_strided_slice %133 {offsets = [8, 0], sizes = [1, 32], strides = [1, 1]} : vector<9x32xf32> to vector<1x32xf32>
    %c48 = arith.constant 48 : index
    %c0_68 = arith.constant 0 : index
    %135 = vector.load %arg2[%c48, %c0_68] : memref<1736x128xf32, #tpu.memory_space<vmem>>, vector<32x64xf32>
    %cst_69 = arith.constant dense<0.000000e+00> : vector<1x64xf32>
    %136 = tpu.matmul %134, %135, %cst_69 {dimension_numbers = #tpu.dot_dimension_numbers<[1], [0], [0], [1], [0, 0, 1, 1], [], []>} : vector<1x32xf32>, vector<32x64xf32>, vector<1x64xf32> -> vector<1x64xf32>
    %c80 = arith.constant 80 : index
    %c0_70 = arith.constant 0 : index
    %137 = vector.load %arg2[%c80, %c0_70] : memref<1736x128xf32, #tpu.memory_space<vmem>>, vector<1x64xf32>
    %138 = arith.addf %136, %137 : vector<1x64xf32>
    %139 = vector.extract_strided_slice %138 {offsets = [0, 0], sizes = [1, 32], strides = [1, 1]} : vector<1x64xf32> to vector<1x32xf32>
    %140 = vector.extract_strided_slice %138 {offsets = [0, 32], sizes = [1, 32], strides = [1, 1]} : vector<1x64xf32> to vector<1x32xf32>
    %cst_71 = arith.constant 5.000000e-01 : f32
    %141 = vector.broadcast %cst_71 : f32 to vector<1x32xf32>
    %142 = arith.mulf %141, %140 : vector<1x32xf32>
    %143 = math.exp %142 : vector<1x32xf32>
    %144 = arith.mulf %143, %5 : vector<1x32xf32>
    %145 = arith.addf %139, %144 : vector<1x32xf32>
    %c16 = arith.constant 16 : index
    %c0_72 = arith.constant 0 : index
    %146 = vector.load %arg2[%c16, %c0_72] : memref<1736x128xf32, #tpu.memory_space<vmem>>, vector<32x32xf32>
    %cst_73 = arith.constant dense<0.000000e+00> : vector<1x32xf32>
    %147 = tpu.matmul %145, %146, %cst_73 {dimension_numbers = #tpu.dot_dimension_numbers<[1], [0], [0], [1], [0, 0, 1, 1], [], []>} : vector<1x32xf32>, vector<32x32xf32>, vector<1x32xf32> -> vector<1x32xf32>
    %c0_74 = arith.constant 0 : index
    %c0_75 = arith.constant 0 : index
    %148 = vector.load %arg2[%c0_74, %c0_75] : memref<1736x128xf32, #tpu.memory_space<vmem>>, vector<8x32xf32>
    %cst_76 = arith.constant dense<0.000000e+00> : vector<1x32xf32>
    %149 = tpu.matmul %3, %148, %cst_76 {dimension_numbers = #tpu.dot_dimension_numbers<[1], [0], [0], [1], [0, 0, 1, 1], [], []>} : vector<1x8xf32>, vector<8x32xf32>, vector<1x32xf32> -> vector<1x32xf32>
    %c152 = arith.constant 152 : index
    %c0_77 = arith.constant 0 : index
    %150 = vector.load %arg2[%c152, %c0_77] : memref<1736x128xf32, #tpu.memory_space<vmem>>, vector<1x32xf32>
    %151 = arith.addf %149, %150 : vector<1x32xf32>
    %c0_78 = arith.constant 0 : index
    %c0_79 = arith.constant 0 : index
    %152 = vector.load %arg5[%c0_78, %c0_79] : memref<2x32xf32, #tpu.memory_space<vmem>>, vector<1x32xf32>
    tpu.vector_store %arg5[%c0_78, %c0_79], %151 {strides = array<i32>} : memref<2x32xf32, #tpu.memory_space<vmem>>, vector<1x32xf32>,
    %c160 = arith.constant 160 : index
    %c0_80 = arith.constant 0 : index
    %153 = vector.load %arg2[%c160, %c0_80] : memref<1736x128xf32, #tpu.memory_space<vmem>>, vector<1x32xf32>
    %154 = arith.addf %147, %153 : vector<1x32xf32>
    %c1 = arith.constant 1 : index
    %c0_81 = arith.constant 0 : index
    %155 = vector.load %arg5[%c1, %c0_81] : memref<2x32xf32, #tpu.memory_space<vmem>>, vector<1x32xf32>
    tpu.vector_store %arg5[%c1, %c0_81], %154 {strides = array<i32>} : memref<2x32xf32, #tpu.memory_space<vmem>>, vector<1x32xf32>,
    %c0_82 = arith.constant 0 : index
    %c0_83 = arith.constant 0 : index
    %156 = vector.load %arg5[%c0_82, %c0_83] : memref<2x32xf32, #tpu.memory_space<vmem>>, vector<2x32xf32>
    %c592 = arith.constant 592 : index
    %c0_84 = arith.constant 0 : index
    %157 = vector.load %arg2[%c592, %c0_84] : memref<1736x128xf32, #tpu.memory_space<vmem>>, vector<32x16xf32>
    %cst_85 = arith.constant dense<0.000000e+00> : vector<2x16xf32>
    %158 = tpu.matmul %156, %157, %cst_85 {dimension_numbers = #tpu.dot_dimension_numbers<[1], [0], [0], [1], [0, 0, 1, 1], [], []>} : vector<2x32xf32>, vector<32x16xf32>, vector<2x16xf32> -> vector<2x16xf32>
    %c624 = arith.constant 624 : index
    %c0_86 = arith.constant 0 : index
    %159 = vector.load %arg2[%c624, %c0_86] : memref<1736x128xf32, #tpu.memory_space<vmem>>, vector<1x16xf32>
    %160 = vector.broadcast %159 : vector<1x16xf32> to vector<2x16xf32>
    %161 = arith.addf %158, %160 : vector<2x16xf32>
    %c632 = arith.constant 632 : index
    %c0_87 = arith.constant 0 : index
    %162 = vector.load %arg2[%c632, %c0_87] : memref<1736x128xf32, #tpu.memory_space<vmem>>, vector<32x16xf32>
    %cst_88 = arith.constant dense<0.000000e+00> : vector<2x16xf32>
    %163 = tpu.matmul %156, %162, %cst_88 {dimension_numbers = #tpu.dot_dimension_numbers<[1], [0], [0], [1], [0, 0, 1, 1], [], []>} : vector<2x32xf32>, vector<32x16xf32>, vector<2x16xf32> -> vector<2x16xf32>
    %c664 = arith.constant 664 : index
    %c0_89 = arith.constant 0 : index
    %164 = vector.load %arg2[%c664, %c0_89] : memref<1736x128xf32, #tpu.memory_space<vmem>>, vector<1x16xf32>
    %165 = vector.broadcast %164 : vector<1x16xf32> to vector<2x16xf32>
    %166 = arith.addf %163, %165 : vector<2x16xf32>
    %c672 = arith.constant 672 : index
    %c0_90 = arith.constant 0 : index
    %167 = vector.load %arg2[%c672, %c0_90] : memref<1736x128xf32, #tpu.memory_space<vmem>>, vector<32x16xf32>
    %cst_91 = arith.constant dense<0.000000e+00> : vector<2x16xf32>
    %168 = tpu.matmul %156, %167, %cst_91 {dimension_numbers = #tpu.dot_dimension_numbers<[1], [0], [0], [1], [0, 0, 1, 1], [], []>} : vector<2x32xf32>, vector<32x16xf32>, vector<2x16xf32> -> vector<2x16xf32>
    %c704 = arith.constant 704 : index
    %c0_92 = arith.constant 0 : index
    %169 = vector.load %arg2[%c704, %c0_92] : memref<1736x128xf32, #tpu.memory_space<vmem>>, vector<1x16xf32>
    %170 = vector.broadcast %169 : vector<1x16xf32> to vector<2x16xf32>
    %171 = arith.addf %168, %170 : vector<2x16xf32>
    %cst_93 = arith.constant dense<0.000000e+00> : vector<2x2xf32>
    %172 = tpu.matmul %161, %166, %cst_93 {dimension_numbers = #tpu.dot_dimension_numbers<[1], [1], [0], [0], [0, 0, 1, 0], [], []>} : vector<2x16xf32>, vector<2x16xf32>, vector<2x2xf32> -> vector<2x2xf32>
    %cst_94 = arith.constant dense<0xFF800000> : vector<2xf32>
    %173 = vector.multi_reduction <maximumf>, %172, %cst_94 [1] : vector<2x2xf32> to vector<2xf32>
    %174 = vector.shape_cast %173 : vector<2xf32> to vector<2x1xf32>
    %175 = vector.broadcast %174 : vector<2x1xf32> to vector<2x2xf32>
    %176 = arith.subf %172, %175 : vector<2x2xf32>
    %177 = math.exp %176 : vector<2x2xf32>
    %cst_95 = arith.constant dense<0.000000e+00> : vector<2xf32>
    %178 = vector.multi_reduction <add>, %177, %cst_95 [1] : vector<2x2xf32> to vector<2xf32>
    %179 = vector.shape_cast %178 : vector<2xf32> to vector<2x1xf32>
    %180 = tpu.reciprocal %179 {approx = true} : vector<2x1xf32> -> vector<2x1xf32>
    %181 = vector.broadcast %180 : vector<2x1xf32> to vector<2x2xf32>
    %182 = arith.mulf %177, %181 : vector<2x2xf32>
    %cst_96 = arith.constant dense<0.000000e+00> : vector<2x16xf32>
    %183 = tpu.matmul %182, %171, %cst_96 {dimension_numbers = #tpu.dot_dimension_numbers<[1], [0], [0], [1], [0, 0, 1, 1], [], []>} : vector<2x2xf32>, vector<2x16xf32>, vector<2x16xf32> -> vector<2x16xf32>
    %c712 = arith.constant 712 : index
    %c0_97 = arith.constant 0 : index
    %184 = vector.load %arg2[%c712, %c0_97] : memref<1736x128xf32, #tpu.memory_space<vmem>>, vector<16x32xf32>
    %cst_98 = arith.constant dense<0.000000e+00> : vector<2x32xf32>
    %185 = tpu.matmul %183, %184, %cst_98 {dimension_numbers = #tpu.dot_dimension_numbers<[1], [0], [0], [1], [0, 0, 1, 1], [], []>} : vector<2x16xf32>, vector<16x32xf32>, vector<2x32xf32> -> vector<2x32xf32>
    %c728 = arith.constant 728 : index
    %c0_99 = arith.constant 0 : index
    %186 = vector.load %arg2[%c728, %c0_99] : memref<1736x128xf32, #tpu.memory_space<vmem>>, vector<32x16xf32>
    %cst_100 = arith.constant dense<0.000000e+00> : vector<2x16xf32>
    %187 = tpu.matmul %156, %186, %cst_100 {dimension_numbers = #tpu.dot_dimension_numbers<[1], [0], [0], [1], [0, 0, 1, 1], [], []>} : vector<2x32xf32>, vector<32x16xf32>, vector<2x16xf32> -> vector<2x16xf32>
    %c760 = arith.constant 760 : index
    %c0_101 = arith.constant 0 : index
    %188 = vector.load %arg2[%c760, %c0_101] : memref<1736x128xf32, #tpu.memory_space<vmem>>, vector<1x16xf32>
    %189 = vector.broadcast %188 : vector<1x16xf32> to vector<2x16xf32>
    %190 = arith.addf %187, %189 : vector<2x16xf32>
    %c768 = arith.constant 768 : index
    %c0_102 = arith.constant 0 : index
    %191 = vector.load %arg2[%c768, %c0_102] : memref<1736x128xf32, #tpu.memory_space<vmem>>, vector<32x16xf32>
    %cst_103 = arith.constant dense<0.000000e+00> : vector<2x16xf32>
    %192 = tpu.matmul %156, %191, %cst_103 {dimension_numbers = #tpu.dot_dimension_numbers<[1], [0], [0], [1], [0, 0, 1, 1], [], []>} : vector<2x32xf32>, vector<32x16xf32>, vector<2x16xf32> -> vector<2x16xf32>
    %c800 = arith.constant 800 : index
    %c0_104 = arith.constant 0 : index
    %193 = vector.load %arg2[%c800, %c0_104] : memref<1736x128xf32, #tpu.memory_space<vmem>>, vector<1x16xf32>
    %194 = vector.broadcast %193 : vector<1x16xf32> to vector<2x16xf32>
    %195 = arith.addf %192, %194 : vector<2x16xf32>
    %c808 = arith.constant 808 : index
    %c0_105 = arith.constant 0 : index
    %196 = vector.load %arg2[%c808, %c0_105] : memref<1736x128xf32, #tpu.memory_space<vmem>>, vector<32x16xf32>
    %cst_106 = arith.constant dense<0.000000e+00> : vector<2x16xf32>
    %197 = tpu.matmul %156, %196, %cst_106 {dimension_numbers = #tpu.dot_dimension_numbers<[1], [0], [0], [1], [0, 0, 1, 1], [], []>} : vector<2x32xf32>, vector<32x16xf32>, vector<2x16xf32> -> vector<2x16xf32>
    %c840 = arith.constant 840 : index
    %c0_107 = arith.constant 0 : index
    %198 = vector.load %arg2[%c840, %c0_107] : memref<1736x128xf32, #tpu.memory_space<vmem>>, vector<1x16xf32>
    %199 = vector.broadcast %198 : vector<1x16xf32> to vector<2x16xf32>
    %200 = arith.addf %197, %199 : vector<2x16xf32>
    %cst_108 = arith.constant dense<0.000000e+00> : vector<2x2xf32>
    %201 = tpu.matmul %190, %195, %cst_108 {dimension_numbers = #tpu.dot_dimension_numbers<[1], [1], [0], [0], [0, 0, 1, 0], [], []>} : vector<2x16xf32>, vector<2x16xf32>, vector<2x2xf32> -> vector<2x2xf32>
    %cst_109 = arith.constant dense<0xFF800000> : vector<2xf32>
    %202 = vector.multi_reduction <maximumf>, %201, %cst_109 [1] : vector<2x2xf32> to vector<2xf32>
    %203 = vector.shape_cast %202 : vector<2xf32> to vector<2x1xf32>
    %204 = vector.broadcast %203 : vector<2x1xf32> to vector<2x2xf32>
    %205 = arith.subf %201, %204 : vector<2x2xf32>
    %206 = math.exp %205 : vector<2x2xf32>
    %cst_110 = arith.constant dense<0.000000e+00> : vector<2xf32>
    %207 = vector.multi_reduction <add>, %206, %cst_110 [1] : vector<2x2xf32> to vector<2xf32>
    %208 = vector.shape_cast %207 : vector<2xf32> to vector<2x1xf32>
    %209 = tpu.reciprocal %208 {approx = true} : vector<2x1xf32> -> vector<2x1xf32>
    %210 = vector.broadcast %209 : vector<2x1xf32> to vector<2x2xf32>
    %211 = arith.mulf %206, %210 : vector<2x2xf32>
    %cst_111 = arith.constant dense<0.000000e+00> : vector<2x16xf32>
    %212 = tpu.matmul %211, %200, %cst_111 {dimension_numbers = #tpu.dot_dimension_numbers<[1], [0], [0], [1], [0, 0, 1, 1], [], []>} : vector<2x2xf32>, vector<2x16xf32>, vector<2x16xf32> -> vector<2x16xf32>
    %c848 = arith.constant 848 : index
    %c0_112 = arith.constant 0 : index
    %213 = vector.load %arg2[%c848, %c0_112] : memref<1736x128xf32, #tpu.memory_space<vmem>>, vector<16x32xf32>
    %cst_113 = arith.constant dense<0.000000e+00> : vector<2x32xf32>
    %214 = tpu.matmul %212, %213, %cst_113 {dimension_numbers = #tpu.dot_dimension_numbers<[1], [0], [0], [1], [0, 0, 1, 1], [], []>} : vector<2x16xf32>, vector<16x32xf32>, vector<2x32xf32> -> vector<2x32xf32>
    %215 = arith.addf %185, %214 : vector<2x32xf32>
    %c864 = arith.constant 864 : index
    %c0_114 = arith.constant 0 : index
    %216 = vector.load %arg2[%c864, %c0_114] : memref<1736x128xf32, #tpu.memory_space<vmem>>, vector<1x32xf32>
    %217 = vector.broadcast %216 : vector<1x32xf32> to vector<2x32xf32>
    %218 = arith.addf %215, %217 : vector<2x32xf32>
    %219 = arith.addf %156, %218 : vector<2x32xf32>
    %cst_115 = arith.constant dense<0.000000e+00> : vector<2xf32>
    %220 = vector.multi_reduction <add>, %219, %cst_115 [1] : vector<2x32xf32> to vector<2xf32>
    %221 = vector.shape_cast %220 : vector<2xf32> to vector<2x1xf32>
    %cst_116 = arith.constant 3.200000e+01 : f32
    %222 = vector.broadcast %cst_116 : f32 to vector<2x1xf32>
    %223 = arith.divf %221, %222 : vector<2x1xf32>
    %224 = vector.broadcast %223 : vector<2x1xf32> to vector<2x32xf32>
    %225 = arith.subf %219, %224 : vector<2x32xf32>
    %226 = arith.mulf %225, %225 : vector<2x32xf32>
    %cst_117 = arith.constant dense<0.000000e+00> : vector<2xf32>
    %227 = vector.multi_reduction <add>, %226, %cst_117 [1] : vector<2x32xf32> to vector<2xf32>
    %228 = vector.shape_cast %227 : vector<2xf32> to vector<2x1xf32>
    %cst_118 = arith.constant 3.200000e+01 : f32
    %229 = vector.broadcast %cst_118 : f32 to vector<2x1xf32>
    %230 = arith.divf %228, %229 : vector<2x1xf32>
    %cst_119 = arith.constant 9.99999974E-6 : f32
    %231 = vector.broadcast %cst_119 : f32 to vector<2x1xf32>
    %232 = arith.addf %230, %231 : vector<2x1xf32>
    %233 = math.rsqrt %232 : vector<2x1xf32>
    %234 = vector.broadcast %233 : vector<2x1xf32> to vector<2x32xf32>
    %235 = arith.mulf %225, %234 : vector<2x32xf32>
    %c872 = arith.constant 872 : index
    %c0_120 = arith.constant 0 : index
    %236 = vector.load %arg2[%c872, %c0_120] : memref<1736x128xf32, #tpu.memory_space<vmem>>, vector<1x32xf32>
    %237 = vector.broadcast %236 : vector<1x32xf32> to vector<2x32xf32>
    %238 = arith.mulf %235, %237 : vector<2x32xf32>
    %c880 = arith.constant 880 : index
    %c0_121 = arith.constant 0 : index
    %239 = vector.load %arg2[%c880, %c0_121] : memref<1736x128xf32, #tpu.memory_space<vmem>>, vector<1x32xf32>
    %240 = vector.broadcast %239 : vector<1x32xf32> to vector<2x32xf32>
    %241 = arith.addf %238, %240 : vector<2x32xf32>
    %c888 = arith.constant 888 : index
    %c0_122 = arith.constant 0 : index
    %242 = vector.load %arg2[%c888, %c0_122] : memref<1736x128xf32, #tpu.memory_space<vmem>>, vector<32x64xf32>
    %cst_123 = arith.constant dense<0.000000e+00> : vector<2x64xf32>
    %243 = tpu.matmul %241, %242, %cst_123 {dimension_numbers = #tpu.dot_dimension_numbers<[1], [0], [0], [1], [0, 0, 1, 1], [], []>} : vector<2x32xf32>, vector<32x64xf32>, vector<2x64xf32> -> vector<2x64xf32>
    %c920 = arith.constant 920 : index
    %c0_124 = arith.constant 0 : index
    %244 = vector.load %arg2[%c920, %c0_124] : memref<1736x128xf32, #tpu.memory_space<vmem>>, vector<1x64xf32>
    %245 = vector.broadcast %244 : vector<1x64xf32> to vector<2x64xf32>
    %246 = arith.addf %243, %245 : vector<2x64xf32>
    %cst_125 = arith.constant 0.000000e+00 : f32
    %247 = vector.broadcast %cst_125 : f32 to vector<2x64xf32>
    %248 = arith.maximumf %246, %247 : vector<2x64xf32>
    %c928 = arith.constant 928 : index
    %c0_126 = arith.constant 0 : index
    %249 = vector.load %arg2[%c928, %c0_126] : memref<1736x128xf32, #tpu.memory_space<vmem>>, vector<64x32xf32>
    %cst_127 = arith.constant dense<0.000000e+00> : vector<2x32xf32>
    %250 = tpu.matmul %248, %249, %cst_127 {dimension_numbers = #tpu.dot_dimension_numbers<[1], [0], [0], [1], [0, 0, 1, 1], [], []>} : vector<2x64xf32>, vector<64x32xf32>, vector<2x32xf32> -> vector<2x32xf32>
    %c992 = arith.constant 992 : index
    %c0_128 = arith.constant 0 : index
    %251 = vector.load %arg2[%c992, %c0_128] : memref<1736x128xf32, #tpu.memory_space<vmem>>, vector<1x32xf32>
    %252 = vector.broadcast %251 : vector<1x32xf32> to vector<2x32xf32>
    %253 = arith.addf %250, %252 : vector<2x32xf32>
    %254 = arith.addf %241, %253 : vector<2x32xf32>
    %cst_129 = arith.constant dense<0.000000e+00> : vector<2xf32>
    %255 = vector.multi_reduction <add>, %254, %cst_129 [1] : vector<2x32xf32> to vector<2xf32>
    %256 = vector.shape_cast %255 : vector<2xf32> to vector<2x1xf32>
    %cst_130 = arith.constant 3.200000e+01 : f32
    %257 = vector.broadcast %cst_130 : f32 to vector<2x1xf32>
    %258 = arith.divf %256, %257 : vector<2x1xf32>
    %259 = vector.broadcast %258 : vector<2x1xf32> to vector<2x32xf32>
    %260 = arith.subf %254, %259 : vector<2x32xf32>
    %261 = arith.mulf %260, %260 : vector<2x32xf32>
    %cst_131 = arith.constant dense<0.000000e+00> : vector<2xf32>
    %262 = vector.multi_reduction <add>, %261, %cst_131 [1] : vector<2x32xf32> to vector<2xf32>
    %263 = vector.shape_cast %262 : vector<2xf32> to vector<2x1xf32>
    %cst_132 = arith.constant 3.200000e+01 : f32
    %264 = vector.broadcast %cst_132 : f32 to vector<2x1xf32>
    %265 = arith.divf %263, %264 : vector<2x1xf32>
    %cst_133 = arith.constant 9.99999974E-6 : f32
    %266 = vector.broadcast %cst_133 : f32 to vector<2x1xf32>
    %267 = arith.addf %265, %266 : vector<2x1xf32>
    %268 = math.rsqrt %267 : vector<2x1xf32>
    %269 = vector.broadcast %268 : vector<2x1xf32> to vector<2x32xf32>
    %270 = arith.mulf %260, %269 : vector<2x32xf32>
    %c1000 = arith.constant 1000 : index
    %c0_134 = arith.constant 0 : index
    %271 = vector.load %arg2[%c1000, %c0_134] : memref<1736x128xf32, #tpu.memory_space<vmem>>, vector<1x32xf32>
    %272 = vector.broadcast %271 : vector<1x32xf32> to vector<2x32xf32>
    %273 = arith.mulf %270, %272 : vector<2x32xf32>
    %c1008 = arith.constant 1008 : index
    %c0_135 = arith.constant 0 : index
    %274 = vector.load %arg2[%c1008, %c0_135] : memref<1736x128xf32, #tpu.memory_space<vmem>>, vector<1x32xf32>
    %275 = vector.broadcast %274 : vector<1x32xf32> to vector<2x32xf32>
    %276 = arith.addf %273, %275 : vector<2x32xf32>
    %c128 = arith.constant 128 : index
    %c0_136 = arith.constant 0 : index
    %277 = vector.load %arg2[%c128, %c0_136] : memref<1736x128xf32, #tpu.memory_space<vmem>>, vector<8x32xf32>
    %c1016 = arith.constant 1016 : index
    %c0_137 = arith.constant 0 : index
    %278 = vector.load %arg2[%c1016, %c0_137] : memref<1736x128xf32, #tpu.memory_space<vmem>>, vector<32x16xf32>
    %cst_138 = arith.constant dense<0.000000e+00> : vector<8x16xf32>
    %279 = tpu.matmul %277, %278, %cst_138 {dimension_numbers = #tpu.dot_dimension_numbers<[1], [0], [0], [1], [0, 0, 1, 1], [], []>} : vector<8x32xf32>, vector<32x16xf32>, vector<8x16xf32> -> vector<8x16xf32>
    %c1048 = arith.constant 1048 : index
    %c0_139 = arith.constant 0 : index
    %280 = vector.load %arg2[%c1048, %c0_139] : memref<1736x128xf32, #tpu.memory_space<vmem>>, vector<1x16xf32>
    %281 = vector.broadcast %280 : vector<1x16xf32> to vector<8x16xf32>
    %282 = arith.addf %279, %281 : vector<8x16xf32>
    %c1056 = arith.constant 1056 : index
    %c0_140 = arith.constant 0 : index
    %283 = vector.load %arg2[%c1056, %c0_140] : memref<1736x128xf32, #tpu.memory_space<vmem>>, vector<32x16xf32>
    %cst_141 = arith.constant dense<0.000000e+00> : vector<8x16xf32>
    %284 = tpu.matmul %277, %283, %cst_141 {dimension_numbers = #tpu.dot_dimension_numbers<[1], [0], [0], [1], [0, 0, 1, 1], [], []>} : vector<8x32xf32>, vector<32x16xf32>, vector<8x16xf32> -> vector<8x16xf32>
    %c1088 = arith.constant 1088 : index
    %c0_142 = arith.constant 0 : index
    %285 = vector.load %arg2[%c1088, %c0_142] : memref<1736x128xf32, #tpu.memory_space<vmem>>, vector<1x16xf32>
    %286 = vector.broadcast %285 : vector<1x16xf32> to vector<8x16xf32>
    %287 = arith.addf %284, %286 : vector<8x16xf32>
    %c1096 = arith.constant 1096 : index
    %c0_143 = arith.constant 0 : index
    %288 = vector.load %arg2[%c1096, %c0_143] : memref<1736x128xf32, #tpu.memory_space<vmem>>, vector<32x16xf32>
    %cst_144 = arith.constant dense<0.000000e+00> : vector<8x16xf32>
    %289 = tpu.matmul %277, %288, %cst_144 {dimension_numbers = #tpu.dot_dimension_numbers<[1], [0], [0], [1], [0, 0, 1, 1], [], []>} : vector<8x32xf32>, vector<32x16xf32>, vector<8x16xf32> -> vector<8x16xf32>
    %c1128 = arith.constant 1128 : index
    %c0_145 = arith.constant 0 : index
    %290 = vector.load %arg2[%c1128, %c0_145] : memref<1736x128xf32, #tpu.memory_space<vmem>>, vector<1x16xf32>
    %291 = vector.broadcast %290 : vector<1x16xf32> to vector<8x16xf32>
    %292 = arith.addf %289, %291 : vector<8x16xf32>
    %cst_146 = arith.constant dense<0.000000e+00> : vector<8x8xf32>
    %293 = tpu.matmul %282, %287, %cst_146 {dimension_numbers = #tpu.dot_dimension_numbers<[1], [1], [0], [0], [0, 0, 1, 0], [], []>} : vector<8x16xf32>, vector<8x16xf32>, vector<8x8xf32> -> vector<8x8xf32>
    %cst_147 = arith.constant dense<0xFF800000> : vector<8xf32>
    %294 = vector.multi_reduction <maximumf>, %293, %cst_147 [1] : vector<8x8xf32> to vector<8xf32>
    %295 = vector.shape_cast %294 : vector<8xf32> to vector<8x1xf32>
    %296 = vector.broadcast %295 : vector<8x1xf32> to vector<8x8xf32>
    %297 = arith.subf %293, %296 : vector<8x8xf32>
    %298 = math.exp %297 : vector<8x8xf32>
    %cst_148 = arith.constant dense<0.000000e+00> : vector<8xf32>
    %299 = vector.multi_reduction <add>, %298, %cst_148 [1] : vector<8x8xf32> to vector<8xf32>
    %300 = vector.shape_cast %299 : vector<8xf32> to vector<8x1xf32>
    %301 = tpu.reciprocal %300 {approx = true} : vector<8x1xf32> -> vector<8x1xf32>
    %302 = vector.broadcast %301 : vector<8x1xf32> to vector<8x8xf32>
    %303 = arith.mulf %298, %302 : vector<8x8xf32>
    %cst_149 = arith.constant dense<0.000000e+00> : vector<8x16xf32>
    %304 = tpu.matmul %303, %292, %cst_149 {dimension_numbers = #tpu.dot_dimension_numbers<[1], [0], [0], [1], [0, 0, 1, 1], [], []>} : vector<8x8xf32>, vector<8x16xf32>, vector<8x16xf32> -> vector<8x16xf32>
    %c1136 = arith.constant 1136 : index
    %c0_150 = arith.constant 0 : index
    %305 = vector.load %arg2[%c1136, %c0_150] : memref<1736x128xf32, #tpu.memory_space<vmem>>, vector<16x32xf32>
    %cst_151 = arith.constant dense<0.000000e+00> : vector<8x32xf32>
    %306 = tpu.matmul %304, %305, %cst_151 {dimension_numbers = #tpu.dot_dimension_numbers<[1], [0], [0], [1], [0, 0, 1, 1], [], []>} : vector<8x16xf32>, vector<16x32xf32>, vector<8x32xf32> -> vector<8x32xf32>
    %c1152 = arith.constant 1152 : index
    %c0_152 = arith.constant 0 : index
    %307 = vector.load %arg2[%c1152, %c0_152] : memref<1736x128xf32, #tpu.memory_space<vmem>>, vector<32x16xf32>
    %cst_153 = arith.constant dense<0.000000e+00> : vector<8x16xf32>
    %308 = tpu.matmul %277, %307, %cst_153 {dimension_numbers = #tpu.dot_dimension_numbers<[1], [0], [0], [1], [0, 0, 1, 1], [], []>} : vector<8x32xf32>, vector<32x16xf32>, vector<8x16xf32> -> vector<8x16xf32>
    %c1184 = arith.constant 1184 : index
    %c0_154 = arith.constant 0 : index
    %309 = vector.load %arg2[%c1184, %c0_154] : memref<1736x128xf32, #tpu.memory_space<vmem>>, vector<1x16xf32>
    %310 = vector.broadcast %309 : vector<1x16xf32> to vector<8x16xf32>
    %311 = arith.addf %308, %310 : vector<8x16xf32>
    %c1192 = arith.constant 1192 : index
    %c0_155 = arith.constant 0 : index
    %312 = vector.load %arg2[%c1192, %c0_155] : memref<1736x128xf32, #tpu.memory_space<vmem>>, vector<32x16xf32>
    %cst_156 = arith.constant dense<0.000000e+00> : vector<8x16xf32>
    %313 = tpu.matmul %277, %312, %cst_156 {dimension_numbers = #tpu.dot_dimension_numbers<[1], [0], [0], [1], [0, 0, 1, 1], [], []>} : vector<8x32xf32>, vector<32x16xf32>, vector<8x16xf32> -> vector<8x16xf32>
    %c1224 = arith.constant 1224 : index
    %c0_157 = arith.constant 0 : index
    %314 = vector.load %arg2[%c1224, %c0_157] : memref<1736x128xf32, #tpu.memory_space<vmem>>, vector<1x16xf32>
    %315 = vector.broadcast %314 : vector<1x16xf32> to vector<8x16xf32>
    %316 = arith.addf %313, %315 : vector<8x16xf32>
    %c1232 = arith.constant 1232 : index
    %c0_158 = arith.constant 0 : index
    %317 = vector.load %arg2[%c1232, %c0_158] : memref<1736x128xf32, #tpu.memory_space<vmem>>, vector<32x16xf32>
    %cst_159 = arith.constant dense<0.000000e+00> : vector<8x16xf32>
    %318 = tpu.matmul %277, %317, %cst_159 {dimension_numbers = #tpu.dot_dimension_numbers<[1], [0], [0], [1], [0, 0, 1, 1], [], []>} : vector<8x32xf32>, vector<32x16xf32>, vector<8x16xf32> -> vector<8x16xf32>
    %c1264 = arith.constant 1264 : index
    %c0_160 = arith.constant 0 : index
    %319 = vector.load %arg2[%c1264, %c0_160] : memref<1736x128xf32, #tpu.memory_space<vmem>>, vector<1x16xf32>
    %320 = vector.broadcast %319 : vector<1x16xf32> to vector<8x16xf32>
    %321 = arith.addf %318, %320 : vector<8x16xf32>
    %cst_161 = arith.constant dense<0.000000e+00> : vector<8x8xf32>
    %322 = tpu.matmul %311, %316, %cst_161 {dimension_numbers = #tpu.dot_dimension_numbers<[1], [1], [0], [0], [0, 0, 1, 0], [], []>} : vector<8x16xf32>, vector<8x16xf32>, vector<8x8xf32> -> vector<8x8xf32>
    %cst_162 = arith.constant dense<0xFF800000> : vector<8xf32>
    %323 = vector.multi_reduction <maximumf>, %322, %cst_162 [1] : vector<8x8xf32> to vector<8xf32>
    %324 = vector.shape_cast %323 : vector<8xf32> to vector<8x1xf32>
    %325 = vector.broadcast %324 : vector<8x1xf32> to vector<8x8xf32>
    %326 = arith.subf %322, %325 : vector<8x8xf32>
    %327 = math.exp %326 : vector<8x8xf32>
    %cst_163 = arith.constant dense<0.000000e+00> : vector<8xf32>
    %328 = vector.multi_reduction <add>, %327, %cst_163 [1] : vector<8x8xf32> to vector<8xf32>
    %329 = vector.shape_cast %328 : vector<8xf32> to vector<8x1xf32>
    %330 = tpu.reciprocal %329 {approx = true} : vector<8x1xf32> -> vector<8x1xf32>
    %331 = vector.broadcast %330 : vector<8x1xf32> to vector<8x8xf32>
    %332 = arith.mulf %327, %331 : vector<8x8xf32>
    %cst_164 = arith.constant dense<0.000000e+00> : vector<8x16xf32>
    %333 = tpu.matmul %332, %321, %cst_164 {dimension_numbers = #tpu.dot_dimension_numbers<[1], [0], [0], [1], [0, 0, 1, 1], [], []>} : vector<8x8xf32>, vector<8x16xf32>, vector<8x16xf32> -> vector<8x16xf32>
    %c1272 = arith.constant 1272 : index
    %c0_165 = arith.constant 0 : index
    %334 = vector.load %arg2[%c1272, %c0_165] : memref<1736x128xf32, #tpu.memory_space<vmem>>, vector<16x32xf32>
    %cst_166 = arith.constant dense<0.000000e+00> : vector<8x32xf32>
    %335 = tpu.matmul %333, %334, %cst_166 {dimension_numbers = #tpu.dot_dimension_numbers<[1], [0], [0], [1], [0, 0, 1, 1], [], []>} : vector<8x16xf32>, vector<16x32xf32>, vector<8x32xf32> -> vector<8x32xf32>
    %336 = arith.addf %306, %335 : vector<8x32xf32>
    %c1288 = arith.constant 1288 : index
    %c0_167 = arith.constant 0 : index
    %337 = vector.load %arg2[%c1288, %c0_167] : memref<1736x128xf32, #tpu.memory_space<vmem>>, vector<1x32xf32>
    %338 = vector.broadcast %337 : vector<1x32xf32> to vector<8x32xf32>
    %339 = arith.addf %336, %338 : vector<8x32xf32>
    %340 = arith.addf %277, %339 : vector<8x32xf32>
    %cst_168 = arith.constant dense<0.000000e+00> : vector<8xf32>
    %341 = vector.multi_reduction <add>, %340, %cst_168 [1] : vector<8x32xf32> to vector<8xf32>
    %342 = vector.shape_cast %341 : vector<8xf32> to vector<8x1xf32>
    %cst_169 = arith.constant 3.200000e+01 : f32
    %343 = vector.broadcast %cst_169 : f32 to vector<8x1xf32>
    %344 = arith.divf %342, %343 : vector<8x1xf32>
    %345 = vector.broadcast %344 : vector<8x1xf32> to vector<8x32xf32>
    %346 = arith.subf %340, %345 : vector<8x32xf32>
    %347 = arith.mulf %346, %346 : vector<8x32xf32>
    %cst_170 = arith.constant dense<0.000000e+00> : vector<8xf32>
    %348 = vector.multi_reduction <add>, %347, %cst_170 [1] : vector<8x32xf32> to vector<8xf32>
    %349 = vector.shape_cast %348 : vector<8xf32> to vector<8x1xf32>
    %cst_171 = arith.constant 3.200000e+01 : f32
    %350 = vector.broadcast %cst_171 : f32 to vector<8x1xf32>
    %351 = arith.divf %349, %350 : vector<8x1xf32>
    %cst_172 = arith.constant 9.99999974E-6 : f32
    %352 = vector.broadcast %cst_172 : f32 to vector<8x1xf32>
    %353 = arith.addf %351, %352 : vector<8x1xf32>
    %354 = math.rsqrt %353 : vector<8x1xf32>
    %355 = vector.broadcast %354 : vector<8x1xf32> to vector<8x32xf32>
    %356 = arith.mulf %346, %355 : vector<8x32xf32>
    %c1296 = arith.constant 1296 : index
    %c0_173 = arith.constant 0 : index
    %357 = vector.load %arg2[%c1296, %c0_173] : memref<1736x128xf32, #tpu.memory_space<vmem>>, vector<1x32xf32>
    %358 = vector.broadcast %357 : vector<1x32xf32> to vector<8x32xf32>
    %359 = arith.mulf %356, %358 : vector<8x32xf32>
    %c1304 = arith.constant 1304 : index
    %c0_174 = arith.constant 0 : index
    %360 = vector.load %arg2[%c1304, %c0_174] : memref<1736x128xf32, #tpu.memory_space<vmem>>, vector<1x32xf32>
    %361 = vector.broadcast %360 : vector<1x32xf32> to vector<8x32xf32>
    %362 = arith.addf %359, %361 : vector<8x32xf32>
    %c1312 = arith.constant 1312 : index
    %c0_175 = arith.constant 0 : index
    %363 = vector.load %arg2[%c1312, %c0_175] : memref<1736x128xf32, #tpu.memory_space<vmem>>, vector<32x16xf32>
    %cst_176 = arith.constant dense<0.000000e+00> : vector<8x16xf32>
    %364 = tpu.matmul %362, %363, %cst_176 {dimension_numbers = #tpu.dot_dimension_numbers<[1], [0], [0], [1], [0, 0, 1, 1], [], []>} : vector<8x32xf32>, vector<32x16xf32>, vector<8x16xf32> -> vector<8x16xf32>
    %c1344 = arith.constant 1344 : index
    %c0_177 = arith.constant 0 : index
    %365 = vector.load %arg2[%c1344, %c0_177] : memref<1736x128xf32, #tpu.memory_space<vmem>>, vector<1x16xf32>
    %366 = vector.broadcast %365 : vector<1x16xf32> to vector<8x16xf32>
    %367 = arith.addf %364, %366 : vector<8x16xf32>
    %c1352 = arith.constant 1352 : index
    %c0_178 = arith.constant 0 : index
    %368 = vector.load %arg2[%c1352, %c0_178] : memref<1736x128xf32, #tpu.memory_space<vmem>>, vector<32x16xf32>
    %cst_179 = arith.constant dense<0.000000e+00> : vector<2x16xf32>
    %369 = tpu.matmul %276, %368, %cst_179 {dimension_numbers = #tpu.dot_dimension_numbers<[1], [0], [0], [1], [0, 0, 1, 1], [], []>} : vector<2x32xf32>, vector<32x16xf32>, vector<2x16xf32> -> vector<2x16xf32>
    %c1384 = arith.constant 1384 : index
    %c0_180 = arith.constant 0 : index
    %370 = vector.load %arg2[%c1384, %c0_180] : memref<1736x128xf32, #tpu.memory_space<vmem>>, vector<1x16xf32>
    %371 = vector.broadcast %370 : vector<1x16xf32> to vector<2x16xf32>
    %372 = arith.addf %369, %371 : vector<2x16xf32>
    %c1392 = arith.constant 1392 : index
    %c0_181 = arith.constant 0 : index
    %373 = vector.load %arg2[%c1392, %c0_181] : memref<1736x128xf32, #tpu.memory_space<vmem>>, vector<32x16xf32>
    %cst_182 = arith.constant dense<0.000000e+00> : vector<2x16xf32>
    %374 = tpu.matmul %276, %373, %cst_182 {dimension_numbers = #tpu.dot_dimension_numbers<[1], [0], [0], [1], [0, 0, 1, 1], [], []>} : vector<2x32xf32>, vector<32x16xf32>, vector<2x16xf32> -> vector<2x16xf32>
    %c1424 = arith.constant 1424 : index
    %c0_183 = arith.constant 0 : index
    %375 = vector.load %arg2[%c1424, %c0_183] : memref<1736x128xf32, #tpu.memory_space<vmem>>, vector<1x16xf32>
    %376 = vector.broadcast %375 : vector<1x16xf32> to vector<2x16xf32>
    %377 = arith.addf %374, %376 : vector<2x16xf32>
    %cst_184 = arith.constant dense<0.000000e+00> : vector<8x2xf32>
    %378 = tpu.matmul %367, %372, %cst_184 {dimension_numbers = #tpu.dot_dimension_numbers<[1], [1], [0], [0], [0, 0, 1, 0], [], []>} : vector<8x16xf32>, vector<2x16xf32>, vector<8x2xf32> -> vector<8x2xf32>
    %cst_185 = arith.constant dense<0xFF800000> : vector<8xf32>
    %379 = vector.multi_reduction <maximumf>, %378, %cst_185 [1] : vector<8x2xf32> to vector<8xf32>
    %380 = vector.shape_cast %379 : vector<8xf32> to vector<8x1xf32>
    %381 = vector.broadcast %380 : vector<8x1xf32> to vector<8x2xf32>
    %382 = arith.subf %378, %381 : vector<8x2xf32>
    %383 = math.exp %382 : vector<8x2xf32>
    %cst_186 = arith.constant dense<0.000000e+00> : vector<8xf32>
    %384 = vector.multi_reduction <add>, %383, %cst_186 [1] : vector<8x2xf32> to vector<8xf32>
    %385 = vector.shape_cast %384 : vector<8xf32> to vector<8x1xf32>
    %386 = tpu.reciprocal %385 {approx = true} : vector<8x1xf32> -> vector<8x1xf32>
    %387 = vector.broadcast %386 : vector<8x1xf32> to vector<8x2xf32>
    %388 = arith.mulf %383, %387 : vector<8x2xf32>
    %cst_187 = arith.constant dense<0.000000e+00> : vector<8x16xf32>
    %389 = tpu.matmul %388, %377, %cst_187 {dimension_numbers = #tpu.dot_dimension_numbers<[1], [0], [0], [1], [0, 0, 1, 1], [], []>} : vector<8x2xf32>, vector<2x16xf32>, vector<8x16xf32> -> vector<8x16xf32>
    %c1432 = arith.constant 1432 : index
    %c0_188 = arith.constant 0 : index
    %390 = vector.load %arg2[%c1432, %c0_188] : memref<1736x128xf32, #tpu.memory_space<vmem>>, vector<16x32xf32>
    %cst_189 = arith.constant dense<0.000000e+00> : vector<8x32xf32>
    %391 = tpu.matmul %389, %390, %cst_189 {dimension_numbers = #tpu.dot_dimension_numbers<[1], [0], [0], [1], [0, 0, 1, 1], [], []>} : vector<8x16xf32>, vector<16x32xf32>, vector<8x32xf32> -> vector<8x32xf32>
    %c1448 = arith.constant 1448 : index
    %c0_190 = arith.constant 0 : index
    %392 = vector.load %arg2[%c1448, %c0_190] : memref<1736x128xf32, #tpu.memory_space<vmem>>, vector<32x16xf32>
    %cst_191 = arith.constant dense<0.000000e+00> : vector<8x16xf32>
    %393 = tpu.matmul %362, %392, %cst_191 {dimension_numbers = #tpu.dot_dimension_numbers<[1], [0], [0], [1], [0, 0, 1, 1], [], []>} : vector<8x32xf32>, vector<32x16xf32>, vector<8x16xf32> -> vector<8x16xf32>
    %c1480 = arith.constant 1480 : index
    %c0_192 = arith.constant 0 : index
    %394 = vector.load %arg2[%c1480, %c0_192] : memref<1736x128xf32, #tpu.memory_space<vmem>>, vector<1x16xf32>
    %395 = vector.broadcast %394 : vector<1x16xf32> to vector<8x16xf32>
    %396 = arith.addf %393, %395 : vector<8x16xf32>
    %c1488 = arith.constant 1488 : index
    %c0_193 = arith.constant 0 : index
    %397 = vector.load %arg2[%c1488, %c0_193] : memref<1736x128xf32, #tpu.memory_space<vmem>>, vector<32x16xf32>
    %cst_194 = arith.constant dense<0.000000e+00> : vector<2x16xf32>
    %398 = tpu.matmul %276, %397, %cst_194 {dimension_numbers = #tpu.dot_dimension_numbers<[1], [0], [0], [1], [0, 0, 1, 1], [], []>} : vector<2x32xf32>, vector<32x16xf32>, vector<2x16xf32> -> vector<2x16xf32>
    %c1520 = arith.constant 1520 : index
    %c0_195 = arith.constant 0 : index
    %399 = vector.load %arg2[%c1520, %c0_195] : memref<1736x128xf32, #tpu.memory_space<vmem>>, vector<1x16xf32>
    %400 = vector.broadcast %399 : vector<1x16xf32> to vector<2x16xf32>
    %401 = arith.addf %398, %400 : vector<2x16xf32>
    %c1528 = arith.constant 1528 : index
    %c0_196 = arith.constant 0 : index
    %402 = vector.load %arg2[%c1528, %c0_196] : memref<1736x128xf32, #tpu.memory_space<vmem>>, vector<32x16xf32>
    %cst_197 = arith.constant dense<0.000000e+00> : vector<2x16xf32>
    %403 = tpu.matmul %276, %402, %cst_197 {dimension_numbers = #tpu.dot_dimension_numbers<[1], [0], [0], [1], [0, 0, 1, 1], [], []>} : vector<2x32xf32>, vector<32x16xf32>, vector<2x16xf32> -> vector<2x16xf32>
    %c1560 = arith.constant 1560 : index
    %c0_198 = arith.constant 0 : index
    %404 = vector.load %arg2[%c1560, %c0_198] : memref<1736x128xf32, #tpu.memory_space<vmem>>, vector<1x16xf32>
    %405 = vector.broadcast %404 : vector<1x16xf32> to vector<2x16xf32>
    %406 = arith.addf %403, %405 : vector<2x16xf32>
    %cst_199 = arith.constant dense<0.000000e+00> : vector<8x2xf32>
    %407 = tpu.matmul %396, %401, %cst_199 {dimension_numbers = #tpu.dot_dimension_numbers<[1], [1], [0], [0], [0, 0, 1, 0], [], []>} : vector<8x16xf32>, vector<2x16xf32>, vector<8x2xf32> -> vector<8x2xf32>
    %cst_200 = arith.constant dense<0xFF800000> : vector<8xf32>
    %408 = vector.multi_reduction <maximumf>, %407, %cst_200 [1] : vector<8x2xf32> to vector<8xf32>
    %409 = vector.shape_cast %408 : vector<8xf32> to vector<8x1xf32>
    %410 = vector.broadcast %409 : vector<8x1xf32> to vector<8x2xf32>
    %411 = arith.subf %407, %410 : vector<8x2xf32>
    %412 = math.exp %411 : vector<8x2xf32>
    %cst_201 = arith.constant dense<0.000000e+00> : vector<8xf32>
    %413 = vector.multi_reduction <add>, %412, %cst_201 [1] : vector<8x2xf32> to vector<8xf32>
    %414 = vector.shape_cast %413 : vector<8xf32> to vector<8x1xf32>
    %415 = tpu.reciprocal %414 {approx = true} : vector<8x1xf32> -> vector<8x1xf32>
    %416 = vector.broadcast %415 : vector<8x1xf32> to vector<8x2xf32>
    %417 = arith.mulf %412, %416 : vector<8x2xf32>
    %cst_202 = arith.constant dense<0.000000e+00> : vector<8x16xf32>
    %418 = tpu.matmul %417, %406, %cst_202 {dimension_numbers = #tpu.dot_dimension_numbers<[1], [0], [0], [1], [0, 0, 1, 1], [], []>} : vector<8x2xf32>, vector<2x16xf32>, vector<8x16xf32> -> vector<8x16xf32>
    %c1568 = arith.constant 1568 : index
    %c0_203 = arith.constant 0 : index
    %419 = vector.load %arg2[%c1568, %c0_203] : memref<1736x128xf32, #tpu.memory_space<vmem>>, vector<16x32xf32>
    %cst_204 = arith.constant dense<0.000000e+00> : vector<8x32xf32>
    %420 = tpu.matmul %418, %419, %cst_204 {dimension_numbers = #tpu.dot_dimension_numbers<[1], [0], [0], [1], [0, 0, 1, 1], [], []>} : vector<8x16xf32>, vector<16x32xf32>, vector<8x32xf32> -> vector<8x32xf32>
    %421 = arith.addf %391, %420 : vector<8x32xf32>
    %c1584 = arith.constant 1584 : index
    %c0_205 = arith.constant 0 : index
    %422 = vector.load %arg2[%c1584, %c0_205] : memref<1736x128xf32, #tpu.memory_space<vmem>>, vector<1x32xf32>
    %423 = vector.broadcast %422 : vector<1x32xf32> to vector<8x32xf32>
    %424 = arith.addf %421, %423 : vector<8x32xf32>
    %425 = arith.addf %362, %424 : vector<8x32xf32>
    %cst_206 = arith.constant dense<0.000000e+00> : vector<8xf32>
    %426 = vector.multi_reduction <add>, %425, %cst_206 [1] : vector<8x32xf32> to vector<8xf32>
    %427 = vector.shape_cast %426 : vector<8xf32> to vector<8x1xf32>
    %cst_207 = arith.constant 3.200000e+01 : f32
    %428 = vector.broadcast %cst_207 : f32 to vector<8x1xf32>
    %429 = arith.divf %427, %428 : vector<8x1xf32>
    %430 = vector.broadcast %429 : vector<8x1xf32> to vector<8x32xf32>
    %431 = arith.subf %425, %430 : vector<8x32xf32>
    %432 = arith.mulf %431, %431 : vector<8x32xf32>
    %cst_208 = arith.constant dense<0.000000e+00> : vector<8xf32>
    %433 = vector.multi_reduction <add>, %432, %cst_208 [1] : vector<8x32xf32> to vector<8xf32>
    %434 = vector.shape_cast %433 : vector<8xf32> to vector<8x1xf32>
    %cst_209 = arith.constant 3.200000e+01 : f32
    %435 = vector.broadcast %cst_209 : f32 to vector<8x1xf32>
    %436 = arith.divf %434, %435 : vector<8x1xf32>
    %cst_210 = arith.constant 9.99999974E-6 : f32
    %437 = vector.broadcast %cst_210 : f32 to vector<8x1xf32>
    %438 = arith.addf %436, %437 : vector<8x1xf32>
    %439 = math.rsqrt %438 : vector<8x1xf32>
    %440 = vector.broadcast %439 : vector<8x1xf32> to vector<8x32xf32>
    %441 = arith.mulf %431, %440 : vector<8x32xf32>
    %c1592 = arith.constant 1592 : index
    %c0_211 = arith.constant 0 : index
    %442 = vector.load %arg2[%c1592, %c0_211] : memref<1736x128xf32, #tpu.memory_space<vmem>>, vector<1x32xf32>
    %443 = vector.broadcast %442 : vector<1x32xf32> to vector<8x32xf32>
    %444 = arith.mulf %441, %443 : vector<8x32xf32>
    %c1600 = arith.constant 1600 : index
    %c0_212 = arith.constant 0 : index
    %445 = vector.load %arg2[%c1600, %c0_212] : memref<1736x128xf32, #tpu.memory_space<vmem>>, vector<1x32xf32>
    %446 = vector.broadcast %445 : vector<1x32xf32> to vector<8x32xf32>
    %447 = arith.addf %444, %446 : vector<8x32xf32>
    %c1608 = arith.constant 1608 : index
    %c0_213 = arith.constant 0 : index
    %448 = vector.load %arg2[%c1608, %c0_213] : memref<1736x128xf32, #tpu.memory_space<vmem>>, vector<32x64xf32>
    %cst_214 = arith.constant dense<0.000000e+00> : vector<8x64xf32>
    %449 = tpu.matmul %447, %448, %cst_214 {dimension_numbers = #tpu.dot_dimension_numbers<[1], [0], [0], [1], [0, 0, 1, 1], [], []>} : vector<8x32xf32>, vector<32x64xf32>, vector<8x64xf32> -> vector<8x64xf32>
    %c1640 = arith.constant 1640 : index
    %c0_215 = arith.constant 0 : index
    %450 = vector.load %arg2[%c1640, %c0_215] : memref<1736x128xf32, #tpu.memory_space<vmem>>, vector<1x64xf32>
    %451 = vector.broadcast %450 : vector<1x64xf32> to vector<8x64xf32>
    %452 = arith.addf %449, %451 : vector<8x64xf32>
    %cst_216 = arith.constant 0.000000e+00 : f32
    %453 = vector.broadcast %cst_216 : f32 to vector<8x64xf32>
    %454 = arith.maximumf %452, %453 : vector<8x64xf32>
    %c1648 = arith.constant 1648 : index
    %c0_217 = arith.constant 0 : index
    %455 = vector.load %arg2[%c1648, %c0_217] : memref<1736x128xf32, #tpu.memory_space<vmem>>, vector<64x32xf32>
    %cst_218 = arith.constant dense<0.000000e+00> : vector<8x32xf32>
    %456 = tpu.matmul %454, %455, %cst_218 {dimension_numbers = #tpu.dot_dimension_numbers<[1], [0], [0], [1], [0, 0, 1, 1], [], []>} : vector<8x64xf32>, vector<64x32xf32>, vector<8x32xf32> -> vector<8x32xf32>
    %c1712 = arith.constant 1712 : index
    %c0_219 = arith.constant 0 : index
    %457 = vector.load %arg2[%c1712, %c0_219] : memref<1736x128xf32, #tpu.memory_space<vmem>>, vector<1x32xf32>
    %458 = vector.broadcast %457 : vector<1x32xf32> to vector<8x32xf32>
    %459 = arith.addf %456, %458 : vector<8x32xf32>
    %460 = arith.addf %447, %459 : vector<8x32xf32>
    %cst_220 = arith.constant dense<0.000000e+00> : vector<8xf32>
    %461 = vector.multi_reduction <add>, %460, %cst_220 [1] : vector<8x32xf32> to vector<8xf32>
    %462 = vector.shape_cast %461 : vector<8xf32> to vector<8x1xf32>
    %cst_221 = arith.constant 3.200000e+01 : f32
    %463 = vector.broadcast %cst_221 : f32 to vector<8x1xf32>
    %464 = arith.divf %462, %463 : vector<8x1xf32>
    %465 = vector.broadcast %464 : vector<8x1xf32> to vector<8x32xf32>
    %466 = arith.subf %460, %465 : vector<8x32xf32>
    %467 = arith.mulf %466, %466 : vector<8x32xf32>
    %cst_222 = arith.constant dense<0.000000e+00> : vector<8xf32>
    %468 = vector.multi_reduction <add>, %467, %cst_222 [1] : vector<8x32xf32> to vector<8xf32>
    %469 = vector.shape_cast %468 : vector<8xf32> to vector<8x1xf32>
    %cst_223 = arith.constant 3.200000e+01 : f32
    %470 = vector.broadcast %cst_223 : f32 to vector<8x1xf32>
    %471 = arith.divf %469, %470 : vector<8x1xf32>
    %cst_224 = arith.constant 9.99999974E-6 : f32
    %472 = vector.broadcast %cst_224 : f32 to vector<8x1xf32>
    %473 = arith.addf %471, %472 : vector<8x1xf32>
    %474 = math.rsqrt %473 : vector<8x1xf32>
    %475 = vector.broadcast %474 : vector<8x1xf32> to vector<8x32xf32>
    %476 = arith.mulf %466, %475 : vector<8x32xf32>
    %c1720 = arith.constant 1720 : index
    %c0_225 = arith.constant 0 : index
    %477 = vector.load %arg2[%c1720, %c0_225] : memref<1736x128xf32, #tpu.memory_space<vmem>>, vector<1x32xf32>
    %478 = vector.broadcast %477 : vector<1x32xf32> to vector<8x32xf32>
    %479 = arith.mulf %476, %478 : vector<8x32xf32>
    %c1728 = arith.constant 1728 : index
    %c0_226 = arith.constant 0 : index
    %480 = vector.load %arg2[%c1728, %c0_226] : memref<1736x128xf32, #tpu.memory_space<vmem>>, vector<1x32xf32>
    %481 = vector.broadcast %480 : vector<1x32xf32> to vector<8x32xf32>
    %482 = arith.addf %479, %481 : vector<8x32xf32>
    %c88 = arith.constant 88 : index
    %c0_227 = arith.constant 0 : index
    %483 = vector.load %arg2[%c88, %c0_227] : memref<1736x128xf32, #tpu.memory_space<vmem>>, vector<32x128xf32>
    %cst_228 = arith.constant dense<0.000000e+00> : vector<8x128xf32>
    %484 = tpu.matmul %482, %483, %cst_228 {dimension_numbers = #tpu.dot_dimension_numbers<[1], [0], [0], [1], [0, 0, 1, 1], [], []>} : vector<8x32xf32>, vector<32x128xf32>, vector<8x128xf32> -> vector<8x128xf32>
    %c120 = arith.constant 120 : index
    %c0_229 = arith.constant 0 : index
    %485 = vector.load %arg2[%c120, %c0_229] : memref<1736x128xf32, #tpu.memory_space<vmem>>, vector<1x128xf32>
    %486 = vector.broadcast %485 : vector<1x128xf32> to vector<8x128xf32>
    %487 = arith.addf %484, %486 : vector<8x128xf32>
    %c0_230 = arith.constant 0 : index
    %c0_231 = arith.constant 0 : index
    %c0_232 = arith.constant 0 : index
    %488 = vector.load %arg3[%c0_230, %c0_231, %c0_232] : memref<1x8x128xf32, #tpu.memory_space<vmem>>, vector<1x8x128xf32>
    %489 = vector.shape_cast %488 : vector<1x8x128xf32> to vector<8x128xf32>
    %490 = vector.shape_cast %487 : vector<8x128xf32> to vector<1x8x128xf32>
    tpu.vector_store %arg3[%c0_230, %c0_231, %c0_232], %490 {strides = array<i32>} : memref<1x8x128xf32, #tpu.memory_space<vmem>>, vector<1x8x128xf32>,
    %c0_233 = arith.constant 0 : index
    %c0_234 = arith.constant 0 : index
    %c64 = arith.constant 64 : index
    %491 = vector.load %arg3[%c0_233, %c0_234, %c64] : memref<1x8x128xf32, #tpu.memory_space<vmem>>, vector<1x1x64xf32>
    %492 = vector.shape_cast %491 : vector<1x1x64xf32> to vector<1x64xf32>
    %493 = vector.shape_cast %138 : vector<1x64xf32> to vector<1x1x64xf32>
    tpu.vector_store %arg3[%c0_233, %c0_234, %c64], %493 {strides = array<i32>} : memref<1x8x128xf32, #tpu.memory_space<vmem>>, vector<1x1x64xf32>,
    return
  }
  func.func @transform_0(%arg0: i32) -> (i32, i32, i32) {
    %c0_i32 = arith.constant 0 : i32
    %c0_i32_0 = arith.constant 0 : i32
    %c0_i32_1 = arith.constant 0 : i32
    return %arg0, %c0_i32, %c0_i32_0 : i32, i32, i32
  }
  func.func @transform_1(%arg0: i32) -> (i32, i32) {
    %c0_i32 = arith.constant 0 : i32
    %c0_i32_0 = arith.constant 0 : i32
    %c0_i32_1 = arith.constant 0 : i32
    return %c0_i32, %c0_i32_0 : i32, i32
  }
  func.func @transform_2(%arg0: i32) -> (i32, i32, i32) {
    %c0_i32 = arith.constant 0 : i32
    %c0_i32_0 = arith.constant 0 : i32
    %c0_i32_1 = arith.constant 0 : i32
    return %arg0, %c0_i32, %c0_i32_0 : i32, i32, i32
  }
}

</mosaic_0001>

<llo_original>
// kernel: tpu_custom_call.1
$region0: #{tpu_custom_call.1}
  #allocation0 [shape = 'u32[]', space=smem, size = 0x4, offset = 0x4, fixed_abs, tag = 'smem constant byte address 0x4 - core index']
  #allocation1 [shape = 'u32[144,128]{1,0:T(1,128)}', space=vmem, size = 0x12000, scoped, tag = 'internal scratch']
  #allocation2 [shape = 'f32[9,32]{1,0:T(8,128)}', space=vmem, size = 0x2000, scoped, tag = 'scratch operand']
  #allocation3 [shape = 'f32[2,32]{1,0:T(2,128)}', space=vmem, size = 0x400, scoped, tag = 'scratch operand']
  %s0 = inlined_call_operand.vmem [shape: f32[2,9,128], index: 0, kind: input, shape index: {}]
  %s1 = inlined_call_operand.hbm [shape: f32[1736,128], index: 1, kind: input, shape index: {}]
  %s2 = inlined_call_operand.hbm [shape: f32[2,8,128], index: 2, kind: output, shape index: {}]
  %s3 = sld [smem:[#allocation0]]
  $region45: #{tpu_custom_call.1} parent=0
    _
  %s5 = ssub.s32 1, %s3
  %s6 = scalar_select 0, %s5, %s3
  $region1: #{tpu_custom_call.1} parent=0
    #allocation4 [shape = 'u8[888832]{0}', space=vmem, size = 0xd9000, scoped, tag = 'input window, operand 1, single buffered']
    #allocation5 [shape = 's32[2]{0}', space=sflag, size = 0x8, scoped, tag = 'scoped memory for tpu_custom_call.1']
    #allocation6 [shape = 's32[2]{0}', space=sflag, size = 0x8, scoped, tag = 'scoped memory for tpu_custom_call.1']
    #allocation7 [shape = 'u8[8192]{0}', space=vmem, size = 0x2000, scoped, tag = 'output window, operand 0']
    %7 = vsyncpa [#allocation5], 0
    %8 = vsyncpa [#allocation6], 0
    %s9 = scalar_lea.sflag [#allocation6], 1
    %10 = vsyncpa %s9, 0
    loop: start=0, step=1, limit=4
    $region2: #{tpu_custom_call.1} parent=1 // loop_pre_header
      _
    $region3: #{tpu_custom_call.1} parent=1 // loop_header
      %s12 = sphi 0, %s16
      %p13 = scmp.ge.s32.totalorder %s12, 4
      %s22 = sphi 0, %s24
      %s25 = sphi 0, %s22
      %s26 = sphi 0, %s25
      %s42 = sphi 0, %s26
      %s46 = sphi 0, %s46
      %s48 = sphi 0, %s46
      %s49 = sphi 0, %s48
      %s63 = sphi 0, %s49
      %s69 = sphi 0, %s71
      %s72 = sphi 0, %s69
      %s73 = sphi 0, %s72
      %s89 = sphi 0, %s73
    $region4: #{tpu_custom_call.1} parent=1 // loop_header_branch
      %15 = sbr.rel (%p13) target = $region8
    $region5: #{tpu_custom_call.1} parent=1 // loop_body
      %s17 = ssub.s32 %s12, 1
      %s18 = ssub.s32 %s12, 2
      %s19 = sadd.s32 %s12, 1
      %s20 = ssub.s32 %s12, %s19
      %p21 = scmp.eq.s32.totalorder %s20, 0
      %s23 = sadd.s32 %s22, 1
      %s24 = scalar_select %p21, %s22, %s23
      %p27 = pneg %p21
      %p28 = scmp.eq.s32.totalorder %s12, 1
      %p29 = por %p27, %p28
      %p30 = scmp.ne.s32.totalorder %s22, %s25
      %p31 = scmp.eq.s32.totalorder %s12, 0
      %p32 = por %p30, %p31
      %p33 = scmp.ne.s32.totalorder %s22, %s25
      %p34 = scmp.eq.s32.totalorder %s17, 1
      %p35 = por %p33, %p34
      %p36 = scmp.ne.s32.totalorder %s25, %s26
      %p37 = scmp.eq.s32.totalorder %s17, 0
      %p38 = por %p36, %p37
      %p39 = scmp.ne.s32.totalorder %s25, %s26
      %p40 = scmp.eq.s32.totalorder %s18, 1
      %p41 = por %p39, %p40
      %p43 = scmp.ne.s32.totalorder %s26, %s42
      %p44 = scmp.eq.s32.totalorder %s18, 0
      %p45 = por %p43, %p44
      %s47 = sadd.s32 %s46, 1
      %p50 = scmp.eq.s32.totalorder %s12, 1
      %p51 = scmp.ne.s32.totalorder %s46, %s48
      %p52 = scmp.eq.s32.totalorder %s12, 0
      %p53 = por %p51, %p52
      %p54 = scmp.ne.s32.totalorder %s46, %s48
      %p55 = scmp.eq.s32.totalorder %s17, 1
      %p56 = por %p54, %p55
      %p57 = scmp.ne.s32.totalorder %s48, %s49
      %p58 = scmp.eq.s32.totalorder %s17, 0
      %p59 = por %p57, %p58
      %p60 = scmp.ne.s32.totalorder %s48, %s49
      %p61 = scmp.eq.s32.totalorder %s18, 1
      %p62 = por %p60, %p61
      %p64 = scmp.ne.s32.totalorder %s49, %s63
      %p65 = scmp.eq.s32.totalorder %s18, 0
      %p66 = por %p64, %p65
      %s67 = ssub.s32 %s12, %s19
      %p68 = scmp.eq.s32.totalorder %s67, 0
      %s70 = sadd.s32 %s69, 1
      %s71 = scalar_select %p68, %s69, %s70
      %p74 = pneg %p68
      %p75 = scmp.eq.s32.totalorder %s12, 1
      %p76 = por %p74, %p75
      %p77 = scmp.ne.s32.totalorder %s69, %s72
      %p78 = scmp.eq.s32.totalorder %s12, 0
      %p79 = por %p77, %p78
      %p80 = scmp.ne.s32.totalorder %s69, %s72
      %p81 = scmp.eq.s32.totalorder %s17, 1
      %p82 = por %p80, %p81
      %p83 = scmp.ne.s32.totalorder %s72, %s73
      %p84 = scmp.eq.s32.totalorder %s17, 0
      %p85 = por %p83, %p84
      %p86 = scmp.ne.s32.totalorder %s72, %s73
      %p87 = scmp.eq.s32.totalorder %s18, 1
      %p88 = por %p86, %p87
      %p90 = scmp.ne.s32.totalorder %s73, %s89
      %p91 = scmp.eq.s32.totalorder %s18, 0
      %p92 = por %p90, %p91
      %p93 = scmp.le.s32.totalorder 1, %s12
      %p94 = scmp.lt.s32.totalorder %s12, 3
      %p95 = pnand %p93, %p94
      %p96 = pneg %p95
      // Predicated region
      $region9: #{tpu_custom_call.1} parent=5 // pred_check
        _
      $region10: #{tpu_custom_call.1} parent=5 // pred_check_branch
        %98 = sbr.rel (%p95) target = $region12
      $region11: #{tpu_custom_call.1} parent=5 // pred_region
        %s99 = ssub.s32 %s12, 1
        // Predicated region
        $region13: #{tpu_custom_call.1} parent=11 // pred_check
          %p100 = pneg %p59
        $region14: #{tpu_custom_call.1} parent=11 // pred_check_branch
          %102 = sbr.rel (%p100) target = $region16
        $region15: #{tpu_custom_call.1} parent=11 // pred_region
          %s104 = ssub.s32 27776, 27776
          %105 = vsyncadd [#allocation5], %s104
          %s106 = sshll.u32 [#allocation4], 4
          %s107 = int_to_ptr.vmem [resolvable:$true] %s106
          %112 = dma.hbm_to_vmem [thread:$0]  %s1, 27776, %s107, [#allocation5], 128, 128, 8
        $region16: #{tpu_custom_call.1} parent=11 // pred_fallthru
          _
      $region12: #{tpu_custom_call.1} parent=5 // pred_fallthru
        _
      %p113 = scmp.lt.s32.totalorder %s12, 2
      // Predicated region
      $region17: #{tpu_custom_call.1} parent=5 // pred_check
        %p114 = pneg %p113
      $region18: #{tpu_custom_call.1} parent=5 // pred_check_branch
        %116 = sbr.rel (%p114) target = $region20
      $region19: #{tpu_custom_call.1} parent=5 // pred_region
        // Predicated region
        $region21: #{tpu_custom_call.1} parent=19 // pred_check
          %p117 = pneg %p32
        $region22: #{tpu_custom_call.1} parent=19 // pred_check_branch
          %119 = sbr.rel (%p117) target = $region24
        $region23: #{tpu_custom_call.1} parent=19 // pred_region
          %p120 = scmp.lt.s32.totalorder %s12, 1
          %s121 = scalar_select %p120, %s12, 1
          %s122 = smul.addr %s121, 2
          %s123 = smul.addr %s122, 8
          %s124 = scalar_lea.vmem %s0, %s123
        $region24: #{tpu_custom_call.1} parent=19 // pred_fallthru
          _
      $region20: #{tpu_custom_call.1} parent=5 // pred_fallthru
        _
      %p125 = scmp.le.s32.totalorder 1, %s12
      %p126 = scmp.lt.s32.totalorder %s12, 3
      %p127 = pnand %p125, %p126
      %p128 = pneg %p127
      // Predicated region
      $region25: #{tpu_custom_call.1} parent=5 // pred_check
        _
      $region26: #{tpu_custom_call.1} parent=5 // pred_check_branch
        %130 = sbr.rel (%p127) target = $region28
      $region27: #{tpu_custom_call.1} parent=5 // pred_region
        %s131 = ssub.s32 %s12, 1
        // Predicated region
        $region29: #{tpu_custom_call.1} parent=27 // pred_check
          %p132 = pneg %p59
        $region30: #{tpu_custom_call.1} parent=27 // pred_check_branch
          %134 = sbr.rel (%p132) target = $region32
        $region31: #{tpu_custom_call.1} parent=27 // pred_region
          %135 = dma.done [#allocation5], 27776
        $region32: #{tpu_custom_call.1} parent=27 // pred_fallthru
          _
        %p136 = scmp.lt.s32.totalorder %s17, 1
        %s137 = scalar_select %p136, %s17, 1
        %s138 = smul.addr %s137, 2
        %s139 = smul.addr %s138, 8
        %s140 = scalar_lea.vmem %s0, %s139
        %p141 = pneg %p38
        %p142 = pneg %p35
        %p143 = pneg %p59
        %p144 = pneg %p56
        %p145 = pneg %p85
        %p146 = pneg %p82
        %s147 = sand.u32 %s72, 1
        %s148 = scalar_lea.sflag [#allocation6], %s147
        %s149 = sand.u32 %s72, 1
        %s150 = smul.addr %s149, 8
        %s151 = scalar_lea.vmem [#allocation7], %s150
        %p152 = scmp.lt.s32.totalorder %s17, 1
        %s153 = scalar_select %p152, %s17, 1
        %s154 = smul.addr %s153, 2
        %s155 = smul.addr %s154, 8
        %s156 = scalar_lea.vmem %s0, %s155
        %v157 = vld [vmem:[%s156] sm:$0xff]
        %v158 = vld [vmem:[%s156 + $0x8] sm:$0x1]
        %v159 = vld [vmem:[#allocation4 + $0x8] sm:$0xff]
        %v160 = vld [vmem:[#allocation4 + $0x90] sm:$0xff]
        %vm161 = vcmask 64512
        %v163 = vsel %vm161, %v157, 0
        %165 = vmatprep.subr.mxu0 0.0
        %166 = vmatpush1.msra.mxu0 %v159
        %167 = vmatprep.subr.mxu0 0.0
        %168 = vmatpush1.msra.mxu0 0.0
        %169 = vmatprep.subr.mxu0 0.0
        %170 = vmatpush1.msra.mxu0 0.0
        %171 = vmatprep.subr.mxu0 0.0
        %172 = vmatpush1.msra.mxu0 0.0
        %173 = vmatprep.subr.mxu0 0.0
        %174 = vmatpush1.msra.mxu0 0.0
        %175 = vmatprep.subr.mxu0 0.0
        %176 = vmatpush1.msra.mxu0 0.0
        %177 = vmatprep.subr.mxu0 0.0
        %178 = vmatpush1.msra.mxu0 0.0
        %179 = vmatprep.subr.mxu0 0.0
        %180 = vmatpush1.msra.mxu0 0.0
        %181 = vmatprep.subr.mxu0 0.0
        %182 = vmatpush1.msra.mxu0 0.0
        %183 = vmatprep.subr.mxu0 0.0
        %184 = vmatpush1.msra.mxu0 0.0
        %185 = vmatprep.subr.mxu0 0.0
        %186 = vmatpush1.msra.mxu0 0.0
        %187 = vmatprep.subr.mxu0 0.0
        %188 = vmatpush1.msra.mxu0 0.0
        %189 = vmatprep.subr.mxu0 0.0
        %190 = vmatpush1.msra.mxu0 0.0
        %191 = vmatprep.subr.mxu0 0.0
        %192 = vmatpush1.msra.mxu0 0.0
        %193 = vmatprep.subr.mxu0 0.0
        %194 = vmatpush1.msra.mxu0 0.0
        %195 = vmatprep.subr.mxu0 0.0
        %196 = vmatpush1.msra.mxu0 0.0
        %197 = vmatprep.subr.mxu0 0.0
        %198 = vmatpush1.msra.mxu0 0.0
        %199 = vmatprep.subr.mxu0 0.0
        %200 = vmatpush1.msra.mxu0 0.0
        %201 = vmatprep.subr.mxu0 0.0
        %202 = vmatpush1.msra.mxu0 0.0
        %203 = vmatprep.subr.mxu0 0.0
        %204 = vmatpush1.msra.mxu0 0.0
        %205 = vmatprep.subr.mxu0 0.0
        %206 = vmatpush1.msra.mxu0 0.0
        %207 = vmatprep.subr.mxu0 0.0
        %208 = vmatpush1.msra.mxu0 0.0
        %209 = vmatprep.subr.mxu0 0.0
        %210 = vmatpush1.msra.mxu0 0.0
        %211 = vmatprep.subr.mxu0 0.0
        %212 = vmatpush1.msra.mxu0 0.0
        %213 = vmatprep.subr.mxu0 0.0
        %214 = vmatpush1.msra.mxu0 0.0
        %215 = vmatprep.subr.mxu0 0.0
        %216 = vmatpush1.msra.mxu0 0.0
        %217 = vmatprep.subr.mxu0 0.0
        %218 = vmatpush1.msra.mxu0 0.0
        %219 = vmatprep.subr.mxu0 0.0
        %220 = vmatpush1.msra.mxu0 0.0
        %221 = vmatprep.subr.mxu0 0.0
        %222 = vmatpush1.msra.mxu0 0.0
        %223 = vmatprep.subr.mxu0 0.0
        %224 = vmatpush1.msra.mxu0 0.0
        %225 = vmatprep.subr.mxu0 0.0
        %226 = vmatpush1.msra.mxu0 0.0
        %227 = vmatprep.subr.mxu0 0.0
        %228 = vmatpush1.msra.mxu0 0.0
        %229 = vmatprep.mubr.f32.mxu0 0.0
        %230 = vmatmul.mubr.f32.gmra.mrb[0].mxu0 %v163
        %v231 = vpop.f32.mrb[0].mxu0
        %v232 = vadd.f32 %v160, %v231
        %v233 = vpop.f32.mrb[0].mxu0
        %234 = vdwg.mxu0
        %vm235 = vcmask 261120
        %236 = vst.msk [vmem:[#allocation2] sm:$0xff] %vm235, %v232
        %v237 = vld [vmem:[#allocation4 + $0x88] sm:$0x1]
        %vm238 = vcmask 253952
        %239 = vst.msk [vmem:[#allocation2 + $0x8] sm:$0x1] %vm238, %v237
        %v240 = vld [vmem:[#allocation2] sm:$0xff]
        %v241 = vld [vmem:[#allocation2 + $0x8] sm:$0x1]
        %v242 = vld [vmem:[#allocation4 + $0xa8] sm:$0xff]
        %v243 = vld [vmem:[#allocation4 + $0xb0] sm:$0xff]
        %v244 = vld [vmem:[#allocation4 + $0xb8] sm:$0xff]
        %v245 = vld [vmem:[#allocation4 + $0xc0] sm:$0xff]
        %v246 = vld [vmem:[#allocation4 + $0xc8] sm:$0x1]
        %v247 = vlaneseq
        %v248 = vshrl.u32 %v247, 7
        %v249 = vsub.s32 0, %v248
        %v250 = vrot.slane %v246, %v249
        %v252 = vsel %vm235, %v240, 0
        %v255 = vsel %vm235, %v241, 0
        %257 = vmatprep.subr.mxu0 0.0
        %258 = vmatpush1.msra.mxu0 %v242
        %259 = vmatprep.subr.mxu0 0.0
        %260 = vmatpush1.msra.mxu0 %v243
        %261 = vmatprep.subr.mxu0 0.0
        %262 = vmatpush1.msra.mxu0 %v244
        %263 = vmatprep.subr.mxu0 0.0
        %264 = vmatpush1.msra.mxu0 %v245
        %265 = vmatprep.subr.mxu0 0.0
        %266 = vmatpush1.msra.mxu0 0.0
        %267 = vmatprep.subr.mxu0 0.0
        %268 = vmatpush1.msra.mxu0 0.0
        %269 = vmatprep.subr.mxu0 0.0
        %270 = vmatpush1.msra.mxu0 0.0
        %271 = vmatprep.subr.mxu0 0.0
        %272 = vmatpush1.msra.mxu0 0.0
        %273 = vmatprep.subr.mxu0 0.0
        %274 = vmatpush1.msra.mxu0 0.0
        %275 = vmatprep.subr.mxu0 0.0
        %276 = vmatpush1.msra.mxu0 0.0
        %277 = vmatprep.subr.mxu0 0.0
        %278 = vmatpush1.msra.mxu0 0.0
        %279 = vmatprep.subr.mxu0 0.0
        %280 = vmatpush1.msra.mxu0 0.0
        %281 = vmatprep.subr.mxu0 0.0
        %282 = vmatpush1.msra.mxu0 0.0
        %283 = vmatprep.subr.mxu0 0.0
        %284 = vmatpush1.msra.mxu0 0.0
        %285 = vmatprep.subr.mxu0 0.0
        %286 = vmatpush1.msra.mxu0 0.0
        %287 = vmatprep.subr.mxu0 0.0
        %288 = vmatpush1.msra.mxu0 0.0
        %289 = vmatprep.subr.mxu0 0.0
        %290 = vmatpush1.msra.mxu0 0.0
        %291 = vmatprep.subr.mxu0 0.0
        %292 = vmatpush1.msra.mxu0 0.0
        %293 = vmatprep.subr.mxu0 0.0
        %294 = vmatpush1.msra.mxu0 0.0
        %295 = vmatprep.subr.mxu0 0.0
        %296 = vmatpush1.msra.mxu0 0.0
        %297 = vmatprep.subr.mxu0 0.0
        %298 = vmatpush1.msra.mxu0 0.0
        %299 = vmatprep.subr.mxu0 0.0
        %300 = vmatpush1.msra.mxu0 0.0
        %301 = vmatprep.subr.mxu0 0.0
        %302 = vmatpush1.msra.mxu0 0.0
        %303 = vmatprep.subr.mxu0 0.0
        %304 = vmatpush1.msra.mxu0 0.0
        %305 = vmatprep.subr.mxu0 0.0
        %306 = vmatpush1.msra.mxu0 0.0
        %307 = vmatprep.subr.mxu0 0.0
        %308 = vmatpush1.msra.mxu0 0.0
        %309 = vmatprep.subr.mxu0 0.0
        %310 = vmatpush1.msra.mxu0 0.0
        %311 = vmatprep.subr.mxu0 0.0
        %312 = vmatpush1.msra.mxu0 0.0
        %313 = vmatprep.subr.mxu0 0.0
        %314 = vmatpush1.msra.mxu0 0.0
        %315 = vmatprep.subr.mxu0 0.0
        %316 = vmatpush1.msra.mxu0 0.0
        %317 = vmatprep.subr.mxu0 0.0
        %318 = vmatpush1.msra.mxu0 0.0
        %319 = vmatprep.subr.mxu0 0.0
        %320 = vmatpush1.msra.mxu0 0.0
        %321 = vmatprep.mubr.f32.mxu0 0.0
        %322 = vmatmul.mubr.f32.gmra.mrb[0].mxu0 %v252
        %v323 = vpop.f32.mrb[0].mxu0
        %v324 = vadd.f32 %v250, %v323
        %v325 = vpop.f32.mrb[0].mxu0
        %326 = vmatprep.mubr.f32.mxu0 0.0
        %327 = vmatmul.mubr.f32.gmra.mrb[0].mxu0 %v255
        %v328 = vpop.f32.mrb[0].mxu0
        %v329 = vadd.f32 %v250, %v328
        %v330 = vpop.f32.mrb[0].mxu0
        %331 = vdwg.mxu0
        %v332 = vld [vmem:[#allocation4 + $0xd0] sm:$0xff]
        %v333 = vld [vmem:[#allocation4 + $0xd8] sm:$0xff]
        %v334 = vld [vmem:[#allocation4 + $0xe0] sm:$0xff]
        %v335 = vld [vmem:[#allocation4 + $0xe8] sm:$0xff]
        %v336 = vld [vmem:[#allocation4 + $0xf0] sm:$0x1]
        %v337 = vlaneseq
        %v338 = vshrl.u32 %v337, 7
        %v339 = vsub.s32 0, %v338
        %v340 = vrot.slane %v336, %v339
        %341 = vmatprep.subr.mxu0 0.0
        %342 = vmatpush1.msra.mxu0 %v332
        %343 = vmatprep.subr.mxu0 0.0
        %344 = vmatpush1.msra.mxu0 %v333
        %345 = vmatprep.subr.mxu0 0.0
        %346 = vmatpush1.msra.mxu0 %v334
        %347 = vmatprep.subr.mxu0 0.0
        %348 = vmatpush1.msra.mxu0 %v335
        %349 = vmatprep.subr.mxu0 0.0
        %350 = vmatpush1.msra.mxu0 0.0
        %351 = vmatprep.subr.mxu0 0.0
        %352 = vmatpush1.msra.mxu0 0.0
        %353 = vmatprep.subr.mxu0 0.0
        %354 = vmatpush1.msra.mxu0 0.0
        %355 = vmatprep.subr.mxu0 0.0
        %356 = vmatpush1.msra.mxu0 0.0
        %357 = vmatprep.subr.mxu0 0.0
        %358 = vmatpush1.msra.mxu0 0.0
        %359 = vmatprep.subr.mxu0 0.0
        %360 = vmatpush1.msra.mxu0 0.0
        %361 = vmatprep.subr.mxu0 0.0
        %362 = vmatpush1.msra.mxu0 0.0
        %363 = vmatprep.subr.mxu0 0.0
        %364 = vmatpush1.msra.mxu0 0.0
        %365 = vmatprep.subr.mxu0 0.0
        %366 = vmatpush1.msra.mxu0 0.0
        %367 = vmatprep.subr.mxu0 0.0
        %368 = vmatpush1.msra.mxu0 0.0
        %369 = vmatprep.subr.mxu0 0.0
        %370 = vmatpush1.msra.mxu0 0.0
        %371 = vmatprep.subr.mxu0 0.0
        %372 = vmatpush1.msra.mxu0 0.0
        %373 = vmatprep.subr.mxu0 0.0
        %374 = vmatpush1.msra.mxu0 0.0
        %375 = vmatprep.subr.mxu0 0.0
        %376 = vmatpush1.msra.mxu0 0.0
        %377 = vmatprep.subr.mxu0 0.0
        %378 = vmatpush1.msra.mxu0 0.0
        %379 = vmatprep.subr.mxu0 0.0
        %380 = vmatpush1.msra.mxu0 0.0
        %381 = vmatprep.subr.mxu0 0.0
        %382 = vmatpush1.msra.mxu0 0.0
        %383 = vmatprep.subr.mxu0 0.0
        %384 = vmatpush1.msra.mxu0 0.0
        %385 = vmatprep.subr.mxu0 0.0
        %386 = vmatpush1.msra.mxu0 0.0
        %387 = vmatprep.subr.mxu0 0.0
        %388 = vmatpush1.msra.mxu0 0.0
        %389 = vmatprep.subr.mxu0 0.0
        %390 = vmatpush1.msra.mxu0 0.0
        %391 = vmatprep.subr.mxu0 0.0
        %392 = vmatpush1.msra.mxu0 0.0
        %393 = vmatprep.subr.mxu0 0.0
        %394 = vmatpush1.msra.mxu0 0.0
        %395 = vmatprep.subr.mxu0 0.0
        %396 = vmatpush1.msra.mxu0 0.0
        %397 = vmatprep.subr.mxu0 0.0
        %398 = vmatpush1.msra.mxu0 0.0
        %399 = vmatprep.subr.mxu0 0.0
        %400 = vmatpush1.msra.mxu0 0.0
        %401 = vmatprep.subr.mxu0 0.0
        %402 = vmatpush1.msra.mxu0 0.0
        %403 = vmatprep.subr.mxu0 0.0
        %404 = vmatpush1.msra.mxu0 0.0
        %405 = vmatprep.mubr.f32.mxu0 0.0
        %406 = vmatmul.mubr.f32.gmra.mrb[0].mxu0 %v252
        %v407 = vpop.f32.mrb[0].mxu0
        %v408 = vadd.f32 %v340, %v407
        %v409 = vpop.f32.mrb[0].mxu0
        %410 = vmatprep.mubr.f32.mxu0 0.0
        %411 = vmatmul.mubr.f32.gmra.mrb[0].mxu0 %v255
        %v412 = vpop.f32.mrb[0].mxu0
        %v413 = vadd.f32 %v340, %v412
        %v414 = vpop.f32.mrb[0].mxu0
        %415 = vdwg.mxu0
        %v416 = vld [vmem:[#allocation4 + $0xf8] sm:$0xff]
        %v417 = vld [vmem:[#allocation4 + $0x100] sm:$0xff]
        %v418 = vld [vmem:[#allocation4 + $0x108] sm:$0xff]
        %v419 = vld [vmem:[#allocation4 + $0x110] sm:$0xff]
        %v420 = vld [vmem:[#allocation4 + $0x118] sm:$0x1]
        %v421 = vlaneseq
        %v422 = vshrl.u32 %v421, 7
        %v423 = vsub.s32 0, %v422
        %v424 = vrot.slane %v420, %v423
        %425 = vmatprep.subr.mxu0 0.0
        %426 = vmatpush1.msra.mxu0 %v416
        %427 = vmatprep.subr.mxu0 0.0
        %428 = vmatpush1.msra.mxu0 %v417
        %429 = vmatprep.subr.mxu0 0.0
        %430 = vmatpush1.msra.mxu0 %v418
        %431 = vmatprep.subr.mxu0 0.0
        %432 = vmatpush1.msra.mxu0 %v419
        %433 = vmatprep.subr.mxu0 0.0
        %434 = vmatpush1.msra.mxu0 0.0
        %435 = vmatprep.subr.mxu0 0.0
        %436 = vmatpush1.msra.mxu0 0.0
        %437 = vmatprep.subr.mxu0 0.0
        %438 = vmatpush1.msra.mxu0 0.0
        %439 = vmatprep.subr.mxu0 0.0
        %440 = vmatpush1.msra.mxu0 0.0
        %441 = vmatprep.subr.mxu0 0.0
        %442 = vmatpush1.msra.mxu0 0.0
        %443 = vmatprep.subr.mxu0 0.0
        %444 = vmatpush1.msra.mxu0 0.0
        %445 = vmatprep.subr.mxu0 0.0
        %446 = vmatpush1.msra.mxu0 0.0
        %447 = vmatprep.subr.mxu0 0.0
        %448 = vmatpush1.msra.mxu0 0.0
        %449 = vmatprep.subr.mxu0 0.0
        %450 = vmatpush1.msra.mxu0 0.0
        %451 = vmatprep.subr.mxu0 0.0
        %452 = vmatpush1.msra.mxu0 0.0
        %453 = vmatprep.subr.mxu0 0.0
        %454 = vmatpush1.msra.mxu0 0.0
        %455 = vmatprep.subr.mxu0 0.0
        %456 = vmatpush1.msra.mxu0 0.0
        %457 = vmatprep.subr.mxu0 0.0
        %458 = vmatpush1.msra.mxu0 0.0
        %459 = vmatprep.subr.mxu0 0.0
        %460 = vmatpush1.msra.mxu0 0.0
        %461 = vmatprep.subr.mxu0 0.0
        %462 = vmatpush1.msra.mxu0 0.0
        %463 = vmatprep.subr.mxu0 0.0
        %464 = vmatpush1.msra.mxu0 0.0
        %465 = vmatprep.subr.mxu0 0.0
        %466 = vmatpush1.msra.mxu0 0.0
        %467 = vmatprep.subr.mxu0 0.0
        %468 = vmatpush1.msra.mxu0 0.0
        %469 = vmatprep.subr.mxu0 0.0
        %470 = vmatpush1.msra.mxu0 0.0
        %471 = vmatprep.subr.mxu0 0.0
        %472 = vmatpush1.msra.mxu0 0.0
        %473 = vmatprep.subr.mxu0 0.0
        %474 = vmatpush1.msra.mxu0 0.0
        %475 = vmatprep.subr.mxu0 0.0
        %476 = vmatpush1.msra.mxu0 0.0
        %477 = vmatprep.subr.mxu0 0.0
        %478 = vmatpush1.msra.mxu0 0.0
        %479 = vmatprep.subr.mxu0 0.0
        %480 = vmatpush1.msra.mxu0 0.0
        %481 = vmatprep.subr.mxu0 0.0
        %482 = vmatpush1.msra.mxu0 0.0
        %483 = vmatprep.subr.mxu0 0.0
        %484 = vmatpush1.msra.mxu0 0.0
        %485 = vmatprep.subr.mxu0 0.0
        %486 = vmatpush1.msra.mxu0 0.0
        %487 = vmatprep.subr.mxu0 0.0
        %488 = vmatpush1.msra.mxu0 0.0
        %489 = vmatprep.mubr.f32.mxu0 0.0
        %490 = vmatmul.mubr.f32.gmra.mrb[0].mxu0 %v252
        %v491 = vpop.f32.mrb[0].mxu0
        %v492 = vadd.f32 %v424, %v491
        %v493 = vpop.f32.mrb[0].mxu0
        %494 = vmatprep.mubr.f32.mxu0 0.0
        %495 = vmatmul.mubr.f32.gmra.mrb[0].mxu0 %v255
        %v496 = vpop.f32.mrb[0].mxu0
        %v497 = vadd.f32 %v424, %v496
        %v498 = vpop.f32.mrb[0].mxu0
        %499 = vdwg.mxu0
        %vm500 = vcmask 130048
        %v502 = vsel %vm500, %v324, 0
        %v505 = vsel %vm500, %v329, 0
        %v508 = vsel %vm500, %v408, 0
        %v511 = vsel %vm500, %v413, 0
        %513 = vmatprep.subr.mxu0 0.0
        %514 = vmatpush1.xpose.msra.mxu0 %v508
        %515 = vmatprep.subr.mxu0 0.0
        %516 = vmatpush1.xpose.msra.mxu0 %v511
        %517 = vmatprep.subr.mxu0 0.0
        %518 = vmatpush1.xpose.msra.mxu0 0.0
        %519 = vmatprep.subr.mxu0 0.0
        %520 = vmatpush1.xpose.msra.mxu0 0.0
        %521 = vmatprep.subr.mxu0 0.0
        %522 = vmatpush1.xpose.msra.mxu0 0.0
        %523 = vmatprep.subr.mxu0 0.0
        %524 = vmatpush1.xpose.msra.mxu0 0.0
        %525 = vmatprep.subr.mxu0 0.0
        %526 = vmatpush1.xpose.msra.mxu0 0.0
        %527 = vmatprep.subr.mxu0 0.0
        %528 = vmatpush1.xpose.msra.mxu0 0.0
        %529 = vmatprep.subr.mxu0 0.0
        %530 = vmatpush1.xpose.msra.mxu0 0.0
        %531 = vmatprep.subr.mxu0 0.0
        %532 = vmatpush1.xpose.msra.mxu0 0.0
        %533 = vmatprep.subr.mxu0 0.0
        %534 = vmatpush1.xpose.msra.mxu0 0.0
        %535 = vmatprep.subr.mxu0 0.0
        %536 = vmatpush1.xpose.msra.mxu0 0.0
        %537 = vmatprep.subr.mxu0 0.0
        %538 = vmatpush1.xpose.msra.mxu0 0.0
        %539 = vmatprep.subr.mxu0 0.0
        %540 = vmatpush1.xpose.msra.mxu0 0.0
        %541 = vmatprep.subr.mxu0 0.0
        %542 = vmatpush1.xpose.msra.mxu0 0.0
        %543 = vmatprep.subr.mxu0 0.0
        %544 = vmatpush1.xpose.msra.mxu0 0.0
        %545 = vmatprep.subr.mxu0 0.0
        %546 = vmatpush1.xpose.msra.mxu0 0.0
        %547 = vmatprep.subr.mxu0 0.0
        %548 = vmatpush1.xpose.msra.mxu0 0.0
        %549 = vmatprep.subr.mxu0 0.0
        %550 = vmatpush1.xpose.msra.mxu0 0.0
        %551 = vmatprep.subr.mxu0 0.0
        %552 = vmatpush1.xpose.msra.mxu0 0.0
        %553 = vmatprep.subr.mxu0 0.0
        %554 = vmatpush1.xpose.msra.mxu0 0.0
        %555 = vmatprep.subr.mxu0 0.0
        %556 = vmatpush1.xpose.msra.mxu0 0.0
        %557 = vmatprep.subr.mxu0 0.0
        %558 = vmatpush1.xpose.msra.mxu0 0.0
        %559 = vmatprep.subr.mxu0 0.0
        %560 = vmatpush1.xpose.msra.mxu0 0.0
        %561 = vmatprep.subr.mxu0 0.0
        %562 = vmatpush1.xpose.msra.mxu0 0.0
        %563 = vmatprep.subr.mxu0 0.0
        %564 = vmatpush1.xpose.msra.mxu0 0.0
        %565 = vmatprep.subr.mxu0 0.0
        %566 = vmatpush1.xpose.msra.mxu0 0.0
        %567 = vmatprep.subr.mxu0 0.0
        %568 = vmatpush1.xpose.msra.mxu0 0.0
        %569 = vmatprep.subr.mxu0 0.0
        %570 = vmatpush1.xpose.msra.mxu0 0.0
        %571 = vmatprep.subr.mxu0 0.0
        %572 = vmatpush1.xpose.msra.mxu0 0.0
        %573 = vmatprep.subr.mxu0 0.0
        %574 = vmatpush1.xpose.msra.mxu0 0.0
        %575 = vmatprep.subr.mxu0 0.0
        %576 = vmatpush1.xpose.msra.mxu0 0.0
        %577 = vmatprep.mubr.f32.mxu0 0.0
        %578 = vmatmul.mubr.f32.gmra.mrb[0].mxu0 %v502
        %v579 = vpop.f32.mrb[0].mxu0
        %v580 = vadd.f32 0.0, %v579
        %v581 = vpop.f32.mrb[0].mxu0
        %582 = vmatprep.mubr.f32.mxu0 0.0
        %583 = vmatmul.mubr.f32.gmra.mrb[0].mxu0 %v505
        %v584 = vpop.f32.mrb[0].mxu0
        %v585 = vadd.f32 0.0, %v584
        %v586 = vpop.f32.mrb[0].mxu0
        %587 = vdwg.mxu0
        %vm588 = vcmask 72704
        %v589 = vsel %vm588, %v580, -inf
        %590 = vmax.xlane.f32.xlu0 %v589
        %v591 = vpop.xlane.xlu0 %590
        %vm592 = vcmask 65536
        %v593 = vsel %vm592, %v585, -inf
        %594 = vmax.xlane.f32.xlu0 %v593
        %v595 = vpop.xlane.xlu0 %594
        %v596 = vsub.f32 %v580, %v591
        %v597 = vsub.f32 %v585, %v595
        %v598 = vmul.f32 %v596, 1.442695
        %v599 = vpow.pop %v598
        %v600 = vmul.f32 %v597, 1.442695
        %v601 = vpow.pop %v600
        %v602 = vsel %vm588, %v599, 0.0
        %603 = vadd.xlane.f32.xlu0 %v602
        %v604 = vpop.xlane.xlu0 %603
        %v605 = vsel %vm592, %v601, 0.0
        %606 = vadd.xlane.f32.xlu0 %v605
        %v607 = vpop.xlane.xlu0 %606
        %v608 = vrcp.pop %v604
        %v609 = vrcp.pop %v607
        %v610 = vmul.f32 %v599, %v608
        %v611 = vmul.f32 %v601, %v609
        %v613 = vsel %vm588, %v610, 0
        %v616 = vsel %vm588, %v611, 0
        %vm618 = vcmask 1040384
        %v620 = vsel %vm618, %v497, 0
        %622 = vmatprep.subr.mxu0 0.0
        %623 = vmatpush1.msra.mxu0 %v492
        %624 = vmatprep.subr.mxu0 0.0
        %625 = vmatpush1.msra.mxu0 %v620
        %626 = vmatprep.subr.mxu0 0.0
        %627 = vmatpush1.msra.mxu0 0.0
        %628 = vmatprep.subr.mxu0 0.0
        %629 = vmatpush1.msra.mxu0 0.0
        %630 = vmatprep.subr.mxu0 0.0
        %631 = vmatpush1.msra.mxu0 0.0
        %632 = vmatprep.subr.mxu0 0.0
        %633 = vmatpush1.msra.mxu0 0.0
        %634 = vmatprep.subr.mxu0 0.0
        %635 = vmatpush1.msra.mxu0 0.0
        %636 = vmatprep.subr.mxu0 0.0
        %637 = vmatpush1.msra.mxu0 0.0
        %638 = vmatprep.subr.mxu0 0.0
        %639 = vmatpush1.msra.mxu0 0.0
        %640 = vmatprep.subr.mxu0 0.0
        %641 = vmatpush1.msra.mxu0 0.0
        %642 = vmatprep.subr.mxu0 0.0
        %643 = vmatpush1.msra.mxu0 0.0
        %644 = vmatprep.subr.mxu0 0.0
        %645 = vmatpush1.msra.mxu0 0.0
        %646 = vmatprep.subr.mxu0 0.0
        %647 = vmatpush1.msra.mxu0 0.0
        %648 = vmatprep.subr.mxu0 0.0
        %649 = vmatpush1.msra.mxu0 0.0
        %650 = vmatprep.subr.mxu0 0.0
        %651 = vmatpush1.msra.mxu0 0.0
        %652 = vmatprep.subr.mxu0 0.0
        %653 = vmatpush1.msra.mxu0 0.0
        %654 = vmatprep.subr.mxu0 0.0
        %655 = vmatpush1.msra.mxu0 0.0
        %656 = vmatprep.subr.mxu0 0.0
        %657 = vmatpush1.msra.mxu0 0.0
        %658 = vmatprep.subr.mxu0 0.0
        %659 = vmatpush1.msra.mxu0 0.0
        %660 = vmatprep.subr.mxu0 0.0
        %661 = vmatpush1.msra.mxu0 0.0
        %662 = vmatprep.subr.mxu0 0.0
        %663 = vmatpush1.msra.mxu0 0.0
        %664 = vmatprep.subr.mxu0 0.0
        %665 = vmatpush1.msra.mxu0 0.0
        %666 = vmatprep.subr.mxu0 0.0
        %667 = vmatpush1.msra.mxu0 0.0
        %668 = vmatprep.subr.mxu0 0.0
        %669 = vmatpush1.msra.mxu0 0.0
        %670 = vmatprep.subr.mxu0 0.0
        %671 = vmatpush1.msra.mxu0 0.0
        %672 = vmatprep.subr.mxu0 0.0
        %673 = vmatpush1.msra.mxu0 0.0
        %674 = vmatprep.subr.mxu0 0.0
        %675 = vmatpush1.msra.mxu0 0.0
        %676 = vmatprep.subr.mxu0 0.0
        %677 = vmatpush1.msra.mxu0 0.0
        %678 = vmatprep.subr.mxu0 0.0
        %679 = vmatpush1.msra.mxu0 0.0
        %680 = vmatprep.subr.mxu0 0.0
        %681 = vmatpush1.msra.mxu0 0.0
        %682 = vmatprep.subr.mxu0 0.0
        %683 = vmatpush1.msra.mxu0 0.0
        %684 = vmatprep.subr.mxu0 0.0
        %685 = vmatpush1.msra.mxu0 0.0
        %686 = vmatprep.mubr.f32.mxu0 0.0
        %687 = vmatmul.mubr.f32.gmra.mrb[0].mxu0 %v613
        %v688 = vpop.f32.mrb[0].mxu0
        %v689 = vadd.f32 0.0, %v688
        %v690 = vpop.f32.mrb[0].mxu0
        %691 = vmatprep.mubr.f32.mxu0 0.0
        %692 = vmatmul.mubr.f32.gmra.mrb[0].mxu0 %v616
        %v693 = vpop.f32.mrb[0].mxu0
        %v694 = vadd.f32 0.0, %v693
        %v695 = vpop.f32.mrb[0].mxu0
        %696 = vdwg.mxu0
        %v697 = vld [vmem:[#allocation4 + $0x120] sm:$0xff]
        %v698 = vld [vmem:[#allocation4 + $0x128] sm:$0xff]
        %v699 = vld [vmem:[#allocation4 + $0x130] sm:$0xff]
        %v700 = vld [vmem:[#allocation4 + $0x138] sm:$0xff]
        %v701 = vld [vmem:[#allocation4 + $0x140] sm:$0xff]
        %v702 = vld [vmem:[#allocation4 + $0x148] sm:$0xff]
        %v703 = vld [vmem:[#allocation4 + $0x150] sm:$0x1]
        %v704 = vlaneseq
        %v705 = vshrl.u32 %v704, 7
        %v706 = vsub.s32 0, %v705
        %v707 = vrot.slane %v703, %v706
        %708 = vmatprep.subr.mxu0 0.0
        %709 = vmatpush1.msra.mxu0 %v699
        %710 = vmatprep.subr.mxu0 0.0
        %711 = vmatpush1.msra.mxu0 %v700
        %712 = vmatprep.subr.mxu0 0.0
        %713 = vmatpush1.msra.mxu0 %v701
        %714 = vmatprep.subr.mxu0 0.0
        %715 = vmatpush1.msra.mxu0 %v702
        %716 = vmatprep.subr.mxu0 0.0
        %717 = vmatpush1.msra.mxu0 0.0
        %718 = vmatprep.subr.mxu0 0.0
        %719 = vmatpush1.msra.mxu0 0.0
        %720 = vmatprep.subr.mxu0 0.0
        %721 = vmatpush1.msra.mxu0 0.0
        %722 = vmatprep.subr.mxu0 0.0
        %723 = vmatpush1.msra.mxu0 0.0
        %724 = vmatprep.subr.mxu0 0.0
        %725 = vmatpush1.msra.mxu0 0.0
        %726 = vmatprep.subr.mxu0 0.0
        %727 = vmatpush1.msra.mxu0 0.0
        %728 = vmatprep.subr.mxu0 0.0
        %729 = vmatpush1.msra.mxu0 0.0
        %730 = vmatprep.subr.mxu0 0.0
        %731 = vmatpush1.msra.mxu0 0.0
        %732 = vmatprep.subr.mxu0 0.0
        %733 = vmatpush1.msra.mxu0 0.0
        %734 = vmatprep.subr.mxu0 0.0
        %735 = vmatpush1.msra.mxu0 0.0
        %736 = vmatprep.subr.mxu0 0.0
        %737 = vmatpush1.msra.mxu0 0.0
        %738 = vmatprep.subr.mxu0 0.0
        %739 = vmatpush1.msra.mxu0 0.0
        %740 = vmatprep.subr.mxu0 0.0
        %741 = vmatpush1.msra.mxu0 0.0
        %742 = vmatprep.subr.mxu0 0.0
        %743 = vmatpush1.msra.mxu0 0.0
        %744 = vmatprep.subr.mxu0 0.0
        %745 = vmatpush1.msra.mxu0 0.0
        %746 = vmatprep.subr.mxu0 0.0
        %747 = vmatpush1.msra.mxu0 0.0
        %748 = vmatprep.subr.mxu0 0.0
        %749 = vmatpush1.msra.mxu0 0.0
        %750 = vmatprep.subr.mxu0 0.0
        %751 = vmatpush1.msra.mxu0 0.0
        %752 = vmatprep.subr.mxu0 0.0
        %753 = vmatpush1.msra.mxu0 0.0
        %754 = vmatprep.subr.mxu0 0.0
        %755 = vmatpush1.msra.mxu0 0.0
        %756 = vmatprep.subr.mxu0 0.0
        %757 = vmatpush1.msra.mxu0 0.0
        %758 = vmatprep.subr.mxu0 0.0
        %759 = vmatpush1.msra.mxu0 0.0
        %760 = vmatprep.subr.mxu0 0.0
        %761 = vmatpush1.msra.mxu0 0.0
        %762 = vmatprep.subr.mxu0 0.0
        %763 = vmatpush1.msra.mxu0 0.0
        %764 = vmatprep.subr.mxu0 0.0
        %765 = vmatpush1.msra.mxu0 0.0
        %766 = vmatprep.subr.mxu0 0.0
        %767 = vmatpush1.msra.mxu0 0.0
        %768 = vmatprep.subr.mxu0 0.0
        %769 = vmatpush1.msra.mxu0 0.0
        %770 = vmatprep.subr.mxu0 0.0
        %771 = vmatpush1.msra.mxu0 0.0
        %772 = vmatprep.mubr.f32.mxu0 0.0
        %773 = vmatmul.mubr.f32.gmra.mrb[0].mxu0 %v252
        %v774 = vpop.f32.mrb[0].mxu0
        %v775 = vadd.f32 %v707, %v774
        %v776 = vpop.f32.mrb[0].mxu0
        %777 = vmatprep.mubr.f32.mxu0 0.0
        %778 = vmatmul.mubr.f32.gmra.mrb[0].mxu0 %v255
        %v779 = vpop.f32.mrb[0].mxu0
        %v780 = vadd.f32 %v707, %v779
        %v781 = vpop.f32.mrb[0].mxu0
        %782 = vdwg.mxu0
        %v783 = vld [vmem:[#allocation4 + $0x158] sm:$0xff]
        %v784 = vld [vmem:[#allocation4 + $0x160] sm:$0xff]
        %v785 = vld [vmem:[#allocation4 + $0x168] sm:$0xff]
        %v786 = vld [vmem:[#allocation4 + $0x170] sm:$0xff]
        %v787 = vld [vmem:[#allocation4 + $0x178] sm:$0x1]
        %v788 = vlaneseq
        %v789 = vshrl.u32 %v788, 7
        %v790 = vsub.s32 0, %v789
        %v791 = vrot.slane %v787, %v790
        %792 = vmatprep.subr.mxu0 0.0
        %793 = vmatpush1.msra.mxu0 %v783
        %794 = vmatprep.subr.mxu0 0.0
        %795 = vmatpush1.msra.mxu0 %v784
        %796 = vmatprep.subr.mxu0 0.0
        %797 = vmatpush1.msra.mxu0 %v785
        %798 = vmatprep.subr.mxu0 0.0
        %799 = vmatpush1.msra.mxu0 %v786
        %800 = vmatprep.subr.mxu0 0.0
        %801 = vmatpush1.msra.mxu0 0.0
        %802 = vmatprep.subr.mxu0 0.0
        %803 = vmatpush1.msra.mxu0 0.0
        %804 = vmatprep.subr.mxu0 0.0
        %805 = vmatpush1.msra.mxu0 0.0
        %806 = vmatprep.subr.mxu0 0.0
        %807 = vmatpush1.msra.mxu0 0.0
        %808 = vmatprep.subr.mxu0 0.0
        %809 = vmatpush1.msra.mxu0 0.0
        %810 = vmatprep.subr.mxu0 0.0
        %811 = vmatpush1.msra.mxu0 0.0
        %812 = vmatprep.subr.mxu0 0.0
        %813 = vmatpush1.msra.mxu0 0.0
        %814 = vmatprep.subr.mxu0 0.0
        %815 = vmatpush1.msra.mxu0 0.0
        %816 = vmatprep.subr.mxu0 0.0
        %817 = vmatpush1.msra.mxu0 0.0
        %818 = vmatprep.subr.mxu0 0.0
        %819 = vmatpush1.msra.mxu0 0.0
        %820 = vmatprep.subr.mxu0 0.0
        %821 = vmatpush1.msra.mxu0 0.0
        %822 = vmatprep.subr.mxu0 0.0
        %823 = vmatpush1.msra.mxu0 0.0
        %824 = vmatprep.subr.mxu0 0.0
        %825 = vmatpush1.msra.mxu0 0.0
        %826 = vmatprep.subr.mxu0 0.0
        %827 = vmatpush1.msra.mxu0 0.0
        %828 = vmatprep.subr.mxu0 0.0
        %829 = vmatpush1.msra.mxu0 0.0
        %830 = vmatprep.subr.mxu0 0.0
        %831 = vmatpush1.msra.mxu0 0.0
        %832 = vmatprep.subr.mxu0 0.0
        %833 = vmatpush1.msra.mxu0 0.0
        %834 = vmatprep.subr.mxu0 0.0
        %835 = vmatpush1.msra.mxu0 0.0
        %836 = vmatprep.subr.mxu0 0.0
        %837 = vmatpush1.msra.mxu0 0.0
        %838 = vmatprep.subr.mxu0 0.0
        %839 = vmatpush1.msra.mxu0 0.0
        %840 = vmatprep.subr.mxu0 0.0
        %841 = vmatpush1.msra.mxu0 0.0
        %842 = vmatprep.subr.mxu0 0.0
        %843 = vmatpush1.msra.mxu0 0.0
        %844 = vmatprep.subr.mxu0 0.0
        %845 = vmatpush1.msra.mxu0 0.0
        %846 = vmatprep.subr.mxu0 0.0
        %847 = vmatpush1.msra.mxu0 0.0
        %848 = vmatprep.subr.mxu0 0.0
        %849 = vmatpush1.msra.mxu0 0.0
        %850 = vmatprep.subr.mxu0 0.0
        %851 = vmatpush1.msra.mxu0 0.0
        %852 = vmatprep.subr.mxu0 0.0
        %853 = vmatpush1.msra.mxu0 0.0
        %854 = vmatprep.subr.mxu0 0.0
        %855 = vmatpush1.msra.mxu0 0.0
        %856 = vmatprep.mubr.f32.mxu0 0.0
        %857 = vmatmul.mubr.f32.gmra.mrb[0].mxu0 %v252
        %v858 = vpop.f32.mrb[0].mxu0
        %v859 = vadd.f32 %v791, %v858
        %v860 = vpop.f32.mrb[0].mxu0
        %861 = vmatprep.mubr.f32.mxu0 0.0
        %862 = vmatmul.mubr.f32.gmra.mrb[0].mxu0 %v255
        %v863 = vpop.f32.mrb[0].mxu0
        %v864 = vadd.f32 %v791, %v863
        %v865 = vpop.f32.mrb[0].mxu0
        %866 = vdwg.mxu0
        %v867 = vld [vmem:[#allocation4 + $0x180] sm:$0xff]
        %v868 = vld [vmem:[#allocation4 + $0x188] sm:$0xff]
        %v869 = vld [vmem:[#allocation4 + $0x190] sm:$0xff]
        %v870 = vld [vmem:[#allocation4 + $0x198] sm:$0xff]
        %v871 = vld [vmem:[#allocation4 + $0x1a0] sm:$0x1]
        %v872 = vlaneseq
        %v873 = vshrl.u32 %v872, 7
        %v874 = vsub.s32 0, %v873
        %v875 = vrot.slane %v871, %v874
        %876 = vmatprep.subr.mxu0 0.0
        %877 = vmatpush1.msra.mxu0 %v867
        %878 = vmatprep.subr.mxu0 0.0
        %879 = vmatpush1.msra.mxu0 %v868
        %880 = vmatprep.subr.mxu0 0.0
        %881 = vmatpush1.msra.mxu0 %v869
        %882 = vmatprep.subr.mxu0 0.0
        %883 = vmatpush1.msra.mxu0 %v870
        %884 = vmatprep.subr.mxu0 0.0
        %885 = vmatpush1.msra.mxu0 0.0
        %886 = vmatprep.subr.mxu0 0.0
        %887 = vmatpush1.msra.mxu0 0.0
        %888 = vmatprep.subr.mxu0 0.0
        %889 = vmatpush1.msra.mxu0 0.0
        %890 = vmatprep.subr.mxu0 0.0
        %891 = vmatpush1.msra.mxu0 0.0
        %892 = vmatprep.subr.mxu0 0.0
        %893 = vmatpush1.msra.mxu0 0.0
        %894 = vmatprep.subr.mxu0 0.0
        %895 = vmatpush1.msra.mxu0 0.0
        %896 = vmatprep.subr.mxu0 0.0
        %897 = vmatpush1.msra.mxu0 0.0
        %898 = vmatprep.subr.mxu0 0.0
        %899 = vmatpush1.msra.mxu0 0.0
        %900 = vmatprep.subr.mxu0 0.0
        %901 = vmatpush1.msra.mxu0 0.0
        %902 = vmatprep.subr.mxu0 0.0
        %903 = vmatpush1.msra.mxu0 0.0
        %904 = vmatprep.subr.mxu0 0.0
        %905 = vmatpush1.msra.mxu0 0.0
        %906 = vmatprep.subr.mxu0 0.0
        %907 = vmatpush1.msra.mxu0 0.0
        %908 = vmatprep.subr.mxu0 0.0
        %909 = vmatpush1.msra.mxu0 0.0
        %910 = vmatprep.subr.mxu0 0.0
        %911 = vmatpush1.msra.mxu0 0.0
        %912 = vmatprep.subr.mxu0 0.0
        %913 = vmatpush1.msra.mxu0 0.0
        %914 = vmatprep.subr.mxu0 0.0
        %915 = vmatpush1.msra.mxu0 0.0
        %916 = vmatprep.subr.mxu0 0.0
        %917 = vmatpush1.msra.mxu0 0.0
        %918 = vmatprep.subr.mxu0 0.0
        %919 = vmatpush1.msra.mxu0 0.0
        %920 = vmatprep.subr.mxu0 0.0
        %921 = vmatpush1.msra.mxu0 0.0
        %922 = vmatprep.subr.mxu0 0.0
        %923 = vmatpush1.msra.mxu0 0.0
        %924 = vmatprep.subr.mxu0 0.0
        %925 = vmatpush1.msra.mxu0 0.0
        %926 = vmatprep.subr.mxu0 0.0
        %927 = vmatpush1.msra.mxu0 0.0
        %928 = vmatprep.subr.mxu0 0.0
        %929 = vmatpush1.msra.mxu0 0.0
        %930 = vmatprep.subr.mxu0 0.0
        %931 = vmatpush1.msra.mxu0 0.0
        %932 = vmatprep.subr.mxu0 0.0
        %933 = vmatpush1.msra.mxu0 0.0
        %934 = vmatprep.subr.mxu0 0.0
        %935 = vmatpush1.msra.mxu0 0.0
        %936 = vmatprep.subr.mxu0 0.0
        %937 = vmatpush1.msra.mxu0 0.0
        %938 = vmatprep.subr.mxu0 0.0
        %939 = vmatpush1.msra.mxu0 0.0
        %940 = vmatprep.mubr.f32.mxu0 0.0
        %941 = vmatmul.mubr.f32.gmra.mrb[0].mxu0 %v252
        %v942 = vpop.f32.mrb[0].mxu0
        %v943 = vadd.f32 %v875, %v942
        %v944 = vpop.f32.mrb[0].mxu0
        %945 = vmatprep.mubr.f32.mxu0 0.0
        %946 = vmatmul.mubr.f32.gmra.mrb[0].mxu0 %v255
        %v947 = vpop.f32.mrb[0].mxu0
        %v948 = vadd.f32 %v875, %v947
        %v949 = vpop.f32.mrb[0].mxu0
        %950 = vdwg.mxu0
        %v952 = vsel %vm500, %v775, 0
        %v955 = vsel %vm500, %v780, 0
        %v958 = vsel %vm500, %v859, 0
        %v961 = vsel %vm500, %v864, 0
        %963 = vmatprep.subr.mxu0 0.0
        %964 = vmatpush1.xpose.msra.mxu0 %v958
        %965 = vmatprep.subr.mxu0 0.0
        %966 = vmatpush1.xpose.msra.mxu0 %v961
        %967 = vmatprep.subr.mxu0 0.0
        %968 = vmatpush1.xpose.msra.mxu0 0.0
        %969 = vmatprep.subr.mxu0 0.0
        %970 = vmatpush1.xpose.msra.mxu0 0.0
        %971 = vmatprep.subr.mxu0 0.0
        %972 = vmatpush1.xpose.msra.mxu0 0.0
        %973 = vmatprep.subr.mxu0 0.0
        %974 = vmatpush1.xpose.msra.mxu0 0.0
        %975 = vmatprep.subr.mxu0 0.0
        %976 = vmatpush1.xpose.msra.mxu0 0.0
        %977 = vmatprep.subr.mxu0 0.0
        %978 = vmatpush1.xpose.msra.mxu0 0.0
        %979 = vmatprep.subr.mxu0 0.0
        %980 = vmatpush1.xpose.msra.mxu0 0.0
        %981 = vmatprep.subr.mxu0 0.0
        %982 = vmatpush1.xpose.msra.mxu0 0.0
        %983 = vmatprep.subr.mxu0 0.0
        %984 = vmatpush1.xpose.msra.mxu0 0.0
        %985 = vmatprep.subr.mxu0 0.0
        %986 = vmatpush1.xpose.msra.mxu0 0.0
        %987 = vmatprep.subr.mxu0 0.0
        %988 = vmatpush1.xpose.msra.mxu0 0.0
        %989 = vmatprep.subr.mxu0 0.0
        %990 = vmatpush1.xpose.msra.mxu0 0.0
        %991 = vmatprep.subr.mxu0 0.0
        %992 = vmatpush1.xpose.msra.mxu0 0.0
        %993 = vmatprep.subr.mxu0 0.0
        %994 = vmatpush1.xpose.msra.mxu0 0.0
        %995 = vmatprep.subr.mxu0 0.0
        %996 = vmatpush1.xpose.msra.mxu0 0.0
        %997 = vmatprep.subr.mxu0 0.0
        %998 = vmatpush1.xpose.msra.mxu0 0.0
        %999 = vmatprep.subr.mxu0 0.0
        %1000 = vmatpush1.xpose.msra.mxu0 0.0
        %1001 = vmatprep.subr.mxu0 0.0
        %1002 = vmatpush1.xpose.msra.mxu0 0.0
        %1003 = vmatprep.subr.mxu0 0.0
        %1004 = vmatpush1.xpose.msra.mxu0 0.0
        %1005 = vmatprep.subr.mxu0 0.0
        %1006 = vmatpush1.xpose.msra.mxu0 0.0
        %1007 = vmatprep.subr.mxu0 0.0
        %1008 = vmatpush1.xpose.msra.mxu0 0.0
        %1009 = vmatprep.subr.mxu0 0.0
        %1010 = vmatpush1.xpose.msra.mxu0 0.0
        %1011 = vmatprep.subr.mxu0 0.0
        %1012 = vmatpush1.xpose.msra.mxu0 0.0
        %1013 = vmatprep.subr.mxu0 0.0
        %1014 = vmatpush1.xpose.msra.mxu0 0.0
        %1015 = vmatprep.subr.mxu0 0.0
        %1016 = vmatpush1.xpose.msra.mxu0 0.0
        %1017 = vmatprep.subr.mxu0 0.0
        %1018 = vmatpush1.xpose.msra.mxu0 0.0
        %1019 = vmatprep.subr.mxu0 0.0
        %1020 = vmatpush1.xpose.msra.mxu0 0.0
        %1021 = vmatprep.subr.mxu0 0.0
        %1022 = vmatpush1.xpose.msra.mxu0 0.0
        %1023 = vmatprep.subr.mxu0 0.0
        %1024 = vmatpush1.xpose.msra.mxu0 0.0
        %1025 = vmatprep.subr.mxu0 0.0
        %1026 = vmatpush1.xpose.msra.mxu0 0.0
        %1027 = vmatprep.mubr.f32.mxu0 0.0
        %1028 = vmatmul.mubr.f32.gmra.mrb[0].mxu0 %v952
        %v1029 = vpop.f32.mrb[0].mxu0
        %v1030 = vadd.f32 0.0, %v1029
        %v1031 = vpop.f32.mrb[0].mxu0
        %1032 = vmatprep.mubr.f32.mxu0 0.0
        %1033 = vmatmul.mubr.f32.gmra.mrb[0].mxu0 %v955
        %v1034 = vpop.f32.mrb[0].mxu0
        %v1035 = vadd.f32 0.0, %v1034
        %v1036 = vpop.f32.mrb[0].mxu0
        %1037 = vdwg.mxu0
        %v1038 = vsel %vm588, %v1030, -inf
        %1039 = vmax.xlane.f32.xlu0 %v1038
        %v1040 = vpop.xlane.xlu0 %1039
        %v1041 = vsel %vm592, %v1035, -inf
        %1042 = vmax.xlane.f32.xlu0 %v1041
        %v1043 = vpop.xlane.xlu0 %1042
        %v1044 = vsub.f32 %v1030, %v1040
        %v1045 = vsub.f32 %v1035, %v1043
        %v1046 = vmul.f32 %v1044, 1.442695
        %v1047 = vpow.pop %v1046
        %v1048 = vmul.f32 %v1045, 1.442695
        %v1049 = vpow.pop %v1048
        %v1050 = vsel %vm588, %v1047, 0.0
        %1051 = vadd.xlane.f32.xlu0 %v1050
        %v1052 = vpop.xlane.xlu0 %1051
        %v1053 = vsel %vm592, %v1049, 0.0
        %1054 = vadd.xlane.f32.xlu0 %v1053
        %v1055 = vpop.xlane.xlu0 %1054
        %v1056 = vrcp.pop %v1052
        %v1057 = vrcp.pop %v1055
        %v1058 = vmul.f32 %v1047, %v1056
        %v1059 = vmul.f32 %v1049, %v1057
        %v1061 = vsel %vm588, %v1058, 0
        %v1064 = vsel %vm588, %v1059, 0
        %v1067 = vsel %vm618, %v948, 0
        %1069 = vmatprep.subr.mxu0 0.0
        %1070 = vmatpush1.msra.mxu0 %v943
        %1071 = vmatprep.subr.mxu0 0.0
        %1072 = vmatpush1.msra.mxu0 %v1067
        %1073 = vmatprep.subr.mxu0 0.0
        %1074 = vmatpush1.msra.mxu0 0.0
        %1075 = vmatprep.subr.mxu0 0.0
        %1076 = vmatpush1.msra.mxu0 0.0
        %1077 = vmatprep.subr.mxu0 0.0
        %1078 = vmatpush1.msra.mxu0 0.0
        %1079 = vmatprep.subr.mxu0 0.0
        %1080 = vmatpush1.msra.mxu0 0.0
        %1081 = vmatprep.subr.mxu0 0.0
        %1082 = vmatpush1.msra.mxu0 0.0
        %1083 = vmatprep.subr.mxu0 0.0
        %1084 = vmatpush1.msra.mxu0 0.0
        %1085 = vmatprep.subr.mxu0 0.0
        %1086 = vmatpush1.msra.mxu0 0.0
        %1087 = vmatprep.subr.mxu0 0.0
        %1088 = vmatpush1.msra.mxu0 0.0
        %1089 = vmatprep.subr.mxu0 0.0
        %1090 = vmatpush1.msra.mxu0 0.0
        %1091 = vmatprep.subr.mxu0 0.0
        %1092 = vmatpush1.msra.mxu0 0.0
        %1093 = vmatprep.subr.mxu0 0.0
        %1094 = vmatpush1.msra.mxu0 0.0
        %1095 = vmatprep.subr.mxu0 0.0
        %1096 = vmatpush1.msra.mxu0 0.0
        %1097 = vmatprep.subr.mxu0 0.0
        %1098 = vmatpush1.msra.mxu0 0.0
        %1099 = vmatprep.subr.mxu0 0.0
        %1100 = vmatpush1.msra.mxu0 0.0
        %1101 = vmatprep.subr.mxu0 0.0
        %1102 = vmatpush1.msra.mxu0 0.0
        %1103 = vmatprep.subr.mxu0 0.0
        %1104 = vmatpush1.msra.mxu0 0.0
        %1105 = vmatprep.subr.mxu0 0.0
        %1106 = vmatpush1.msra.mxu0 0.0
        %1107 = vmatprep.subr.mxu0 0.0
        %1108 = vmatpush1.msra.mxu0 0.0
        %1109 = vmatprep.subr.mxu0 0.0
        %1110 = vmatpush1.msra.mxu0 0.0
        %1111 = vmatprep.subr.mxu0 0.0
        %1112 = vmatpush1.msra.mxu0 0.0
        %1113 = vmatprep.subr.mxu0 0.0
        %1114 = vmatpush1.msra.mxu0 0.0
        %1115 = vmatprep.subr.mxu0 0.0
        %1116 = vmatpush1.msra.mxu0 0.0
        %1117 = vmatprep.subr.mxu0 0.0
        %1118 = vmatpush1.msra.mxu0 0.0
        %1119 = vmatprep.subr.mxu0 0.0
        %1120 = vmatpush1.msra.mxu0 0.0
        %1121 = vmatprep.subr.mxu0 0.0
        %1122 = vmatpush1.msra.mxu0 0.0
        %1123 = vmatprep.subr.mxu0 0.0
        %1124 = vmatpush1.msra.mxu0 0.0
        %1125 = vmatprep.subr.mxu0 0.0
        %1126 = vmatpush1.msra.mxu0 0.0
        %1127 = vmatprep.subr.mxu0 0.0
        %1128 = vmatpush1.msra.mxu0 0.0
        %1129 = vmatprep.subr.mxu0 0.0
        %1130 = vmatpush1.msra.mxu0 0.0
        %1131 = vmatprep.subr.mxu0 0.0
        %1132 = vmatpush1.msra.mxu0 0.0
        %1133 = vmatprep.mubr.f32.mxu0 0.0
        %1134 = vmatmul.mubr.f32.gmra.mrb[0].mxu0 %v1061
        %v1135 = vpop.f32.mrb[0].mxu0
        %v1136 = vadd.f32 0.0, %v1135
        %v1137 = vpop.f32.mrb[0].mxu0
        %1138 = vmatprep.mubr.f32.mxu0 0.0
        %1139 = vmatmul.mubr.f32.gmra.mrb[0].mxu0 %v1064
        %v1140 = vpop.f32.mrb[0].mxu0
        %v1141 = vadd.f32 0.0, %v1140
        %v1142 = vpop.f32.mrb[0].mxu0
        %1143 = vdwg.mxu0
        %v1144 = vld [vmem:[#allocation4 + $0x1a8] sm:$0xff]
        %v1145 = vld [vmem:[#allocation4 + $0x1b0] sm:$0xff]
        %v1147 = vsel %vm500, %v1136, 0
        %v1150 = vsel %vm500, %v1141, 0
        %1152 = vmatprep.subr.mxu0 0.0
        %1153 = vmatpush1.msra.mxu0 %v1144
        %1154 = vmatprep.subr.mxu0 0.0
        %1155 = vmatpush1.msra.mxu0 %v1145
        %1156 = vmatprep.subr.mxu0 0.0
        %1157 = vmatpush1.msra.mxu0 0.0
        %1158 = vmatprep.subr.mxu0 0.0
        %1159 = vmatpush1.msra.mxu0 0.0
        %1160 = vmatprep.subr.mxu0 0.0
        %1161 = vmatpush1.msra.mxu0 0.0
        %1162 = vmatprep.subr.mxu0 0.0
        %1163 = vmatpush1.msra.mxu0 0.0
        %1164 = vmatprep.subr.mxu0 0.0
        %1165 = vmatpush1.msra.mxu0 0.0
        %1166 = vmatprep.subr.mxu0 0.0
        %1167 = vmatpush1.msra.mxu0 0.0
        %1168 = vmatprep.subr.mxu0 0.0
        %1169 = vmatpush1.msra.mxu0 0.0
        %1170 = vmatprep.subr.mxu0 0.0
        %1171 = vmatpush1.msra.mxu0 0.0
        %1172 = vmatprep.subr.mxu0 0.0
        %1173 = vmatpush1.msra.mxu0 0.0
        %1174 = vmatprep.subr.mxu0 0.0
        %1175 = vmatpush1.msra.mxu0 0.0
        %1176 = vmatprep.subr.mxu0 0.0
        %1177 = vmatpush1.msra.mxu0 0.0
        %1178 = vmatprep.subr.mxu0 0.0
        %1179 = vmatpush1.msra.mxu0 0.0
        %1180 = vmatprep.subr.mxu0 0.0
        %1181 = vmatpush1.msra.mxu0 0.0
        %1182 = vmatprep.subr.mxu0 0.0
        %1183 = vmatpush1.msra.mxu0 0.0
        %1184 = vmatprep.subr.mxu0 0.0
        %1185 = vmatpush1.msra.mxu0 0.0
        %1186 = vmatprep.subr.mxu0 0.0
        %1187 = vmatpush1.msra.mxu0 0.0
        %1188 = vmatprep.subr.mxu0 0.0
        %1189 = vmatpush1.msra.mxu0 0.0
        %1190 = vmatprep.subr.mxu0 0.0
        %1191 = vmatpush1.msra.mxu0 0.0
        %1192 = vmatprep.subr.mxu0 0.0
        %1193 = vmatpush1.msra.mxu0 0.0
        %1194 = vmatprep.subr.mxu0 0.0
        %1195 = vmatpush1.msra.mxu0 0.0
        %1196 = vmatprep.subr.mxu0 0.0
        %1197 = vmatpush1.msra.mxu0 0.0
        %1198 = vmatprep.subr.mxu0 0.0
        %1199 = vmatpush1.msra.mxu0 0.0
        %1200 = vmatprep.subr.mxu0 0.0
        %1201 = vmatpush1.msra.mxu0 0.0
        %1202 = vmatprep.subr.mxu0 0.0
        %1203 = vmatpush1.msra.mxu0 0.0
        %1204 = vmatprep.subr.mxu0 0.0
        %1205 = vmatpush1.msra.mxu0 0.0
        %1206 = vmatprep.subr.mxu0 0.0
        %1207 = vmatpush1.msra.mxu0 0.0
        %1208 = vmatprep.subr.mxu0 0.0
        %1209 = vmatpush1.msra.mxu0 0.0
        %1210 = vmatprep.subr.mxu0 0.0
        %1211 = vmatpush1.msra.mxu0 0.0
        %1212 = vmatprep.subr.mxu0 0.0
        %1213 = vmatpush1.msra.mxu0 0.0
        %1214 = vmatprep.subr.mxu0 0.0
        %1215 = vmatpush1.msra.mxu0 0.0
        %1216 = vmatprep.mubr.f32.mxu0 0.0
        %1217 = vmatmul.mubr.f32.gmra.mrb[0].mxu0 %v1147
        %v1218 = vpop.f32.mrb[0].mxu0
        %v1219 = vadd.f32 0.0, %v1218
        %v1220 = vpop.f32.mrb[0].mxu0
        %1221 = vmatprep.mubr.f32.mxu0 0.0
        %1222 = vmatmul.mubr.f32.gmra.mrb[0].mxu0 %v1150
        %v1223 = vpop.f32.mrb[0].mxu0
        %v1224 = vadd.f32 0.0, %v1223
        %v1225 = vpop.f32.mrb[0].mxu0
        %1226 = vdwg.mxu0
        %v1228 = vsel %vm500, %v689, 0
        %v1231 = vsel %vm500, %v694, 0
        %1233 = vmatprep.subr.mxu0 0.0
        %1234 = vmatpush1.msra.mxu0 %v697
        %1235 = vmatprep.subr.mxu0 0.0
        %1236 = vmatpush1.msra.mxu0 %v698
        %1237 = vmatprep.subr.mxu0 0.0
        %1238 = vmatpush1.msra.mxu0 0.0
        %1239 = vmatprep.subr.mxu0 0.0
        %1240 = vmatpush1.msra.mxu0 0.0
        %1241 = vmatprep.subr.mxu0 0.0
        %1242 = vmatpush1.msra.mxu0 0.0
        %1243 = vmatprep.subr.mxu0 0.0
        %1244 = vmatpush1.msra.mxu0 0.0
        %1245 = vmatprep.subr.mxu0 0.0
        %1246 = vmatpush1.msra.mxu0 0.0
        %1247 = vmatprep.subr.mxu0 0.0
        %1248 = vmatpush1.msra.mxu0 0.0
        %1249 = vmatprep.subr.mxu0 0.0
        %1250 = vmatpush1.msra.mxu0 0.0
        %1251 = vmatprep.subr.mxu0 0.0
        %1252 = vmatpush1.msra.mxu0 0.0
        %1253 = vmatprep.subr.mxu0 0.0
        %1254 = vmatpush1.msra.mxu0 0.0
        %1255 = vmatprep.subr.mxu0 0.0
        %1256 = vmatpush1.msra.mxu0 0.0
        %1257 = vmatprep.subr.mxu0 0.0
        %1258 = vmatpush1.msra.mxu0 0.0
        %1259 = vmatprep.subr.mxu0 0.0
        %1260 = vmatpush1.msra.mxu0 0.0
        %1261 = vmatprep.subr.mxu0 0.0
        %1262 = vmatpush1.msra.mxu0 0.0
        %1263 = vmatprep.subr.mxu0 0.0
        %1264 = vmatpush1.msra.mxu0 0.0
        %1265 = vmatprep.subr.mxu0 0.0
        %1266 = vmatpush1.msra.mxu0 0.0
        %1267 = vmatprep.subr.mxu0 0.0
        %1268 = vmatpush1.msra.mxu0 0.0
        %1269 = vmatprep.subr.mxu0 0.0
        %1270 = vmatpush1.msra.mxu0 0.0
        %1271 = vmatprep.subr.mxu0 0.0
        %1272 = vmatpush1.msra.mxu0 0.0
        %1273 = vmatprep.subr.mxu0 0.0
        %1274 = vmatpush1.msra.mxu0 0.0
        %1275 = vmatprep.subr.mxu0 0.0
        %1276 = vmatpush1.msra.mxu0 0.0
        %1277 = vmatprep.subr.mxu0 0.0
        %1278 = vmatpush1.msra.mxu0 0.0
        %1279 = vmatprep.subr.mxu0 0.0
        %1280 = vmatpush1.msra.mxu0 0.0
        %1281 = vmatprep.subr.mxu0 0.0
        %1282 = vmatpush1.msra.mxu0 0.0
        %1283 = vmatprep.subr.mxu0 0.0
        %1284 = vmatpush1.msra.mxu0 0.0
        %1285 = vmatprep.subr.mxu0 0.0
        %1286 = vmatpush1.msra.mxu0 0.0
        %1287 = vmatprep.subr.mxu0 0.0
        %1288 = vmatpush1.msra.mxu0 0.0
        %1289 = vmatprep.subr.mxu0 0.0
        %1290 = vmatpush1.msra.mxu0 0.0
        %1291 = vmatprep.subr.mxu0 0.0
        %1292 = vmatpush1.msra.mxu0 0.0
        %1293 = vmatprep.subr.mxu0 0.0
        %1294 = vmatpush1.msra.mxu0 0.0
        %1295 = vmatprep.subr.mxu0 0.0
        %1296 = vmatpush1.msra.mxu0 0.0
        %1297 = vmatprep.mubr.f32.mxu0 0.0
        %1298 = vmatmul.mubr.f32.gmra.mrb[0].mxu0 %v1228
        %v1299 = vpop.f32.mrb[0].mxu0
        %v1300 = vadd.f32 %v1219, %v1299
        %v1301 = vpop.f32.mrb[0].mxu0
        %1302 = vmatprep.mubr.f32.mxu0 0.0
        %1303 = vmatmul.mubr.f32.gmra.mrb[0].mxu0 %v1231
        %v1304 = vpop.f32.mrb[0].mxu0
        %v1305 = vadd.f32 %v1224, %v1304
        %v1306 = vpop.f32.mrb[0].mxu0
        %1307 = vdwg.mxu0
        %v1308 = vld [vmem:[#allocation4 + $0x1b8] sm:$0x1]
        %v1309 = vlaneseq
        %v1310 = vshrl.u32 %v1309, 7
        %v1311 = vsub.s32 0, %v1310
        %v1312 = vrot.slane %v1308, %v1311
        %v1313 = vadd.f32 %v1300, %v1312
        %v1314 = vadd.f32 %v1305, %v1312
        %v1315 = vadd.f32 %v240, %v1313
        %v1316 = vadd.f32 %v241, %v1314
        %v1317 = vsel %vm235, %v1315, 0.0
        %1318 = vadd.xlane.f32.xlu0 %v1317
        %v1319 = vpop.xlane.xlu0 %1318
        %v1320 = vsel %vm238, %v1316, 0.0
        %1321 = vadd.xlane.f32.xlu0 %v1320
        %v1322 = vpop.xlane.xlu0 %1321
        %v1323 = vrcp.pop 32.0
        %v1324 = vmul.f32 %v1319, %v1323
        %v1325 = vmul.f32 %v1322, %v1323
        %v1326 = vsub.f32 %v1315, %v1324
        %v1327 = vsub.f32 %v1316, %v1325
        %v1328 = vmul.f32 %v1326, %v1326
        %v1329 = vmul.f32 %v1327, %v1327
        %v1330 = vsel %vm235, %v1328, 0.0
        %1331 = vadd.xlane.f32.xlu0 %v1330
        %v1332 = vpop.xlane.xlu0 %1331
        %v1333 = vsel %vm238, %v1329, 0.0
        %1334 = vadd.xlane.f32.xlu0 %v1333
        %v1335 = vpop.xlane.xlu0 %1334
        %v1336 = vmul.f32 %v1332, %v1323
        %v1337 = vmul.f32 %v1335, %v1323
        %v1338 = vadd.f32 %v1336, 1e-05
        %v1339 = vadd.f32 %v1337, 1e-05
        %v1340 = vrsqrt.pop %v1338
        %v1341 = vrsqrt.pop %v1339
        %v1342 = vmul.f32 %v1326, %v1340
        %v1343 = vmul.f32 %v1327, %v1341
        %v1344 = vld [vmem:[#allocation4 + $0x1c0] sm:$0x1]
        %v1345 = vlaneseq
        %v1346 = vshrl.u32 %v1345, 7
        %v1347 = vsub.s32 0, %v1346
        %v1348 = vrot.slane %v1344, %v1347
        %v1349 = vmul.f32 %v1342, %v1348
        %v1350 = vmul.f32 %v1343, %v1348
        %v1351 = vld [vmem:[#allocation4 + $0x1c8] sm:$0x1]
        %v1352 = vlaneseq
        %v1353 = vshrl.u32 %v1352, 7
        %v1354 = vsub.s32 0, %v1353
        %v1355 = vrot.slane %v1351, %v1354
        %v1356 = vadd.f32 %v1349, %v1355
        %v1357 = vadd.f32 %v1350, %v1355
        %v1358 = vld [vmem:[#allocation4 + $0x1d0] sm:$0xff]
        %v1359 = vld [vmem:[#allocation4 + $0x1d8] sm:$0xff]
        %v1360 = vld [vmem:[#allocation4 + $0x1e0] sm:$0xff]
        %v1361 = vld [vmem:[#allocation4 + $0x1e8] sm:$0xff]
        %v1362 = vld [vmem:[#allocation4 + $0x1f0] sm:$0x1]
        %v1363 = vlaneseq
        %v1364 = vshrl.u32 %v1363, 7
        %v1365 = vsub.s32 0, %v1364
        %v1366 = vrot.slane %v1362, %v1365
        %v1368 = vsel %vm235, %v1356, 0
        %v1371 = vsel %vm235, %v1357, 0
        %1373 = vmatprep.subr.mxu0 0.0
        %1374 = vmatpush1.msra.mxu0 %v1358
        %1375 = vmatprep.subr.mxu0 0.0
        %1376 = vmatpush1.msra.mxu0 %v1359
        %1377 = vmatprep.subr.mxu0 0.0
        %1378 = vmatpush1.msra.mxu0 %v1360
        %1379 = vmatprep.subr.mxu0 0.0
        %1380 = vmatpush1.msra.mxu0 %v1361
        %1381 = vmatprep.subr.mxu0 0.0
        %1382 = vmatpush1.msra.mxu0 0.0
        %1383 = vmatprep.subr.mxu0 0.0
        %1384 = vmatpush1.msra.mxu0 0.0
        %1385 = vmatprep.subr.mxu0 0.0
        %1386 = vmatpush1.msra.mxu0 0.0
        %1387 = vmatprep.subr.mxu0 0.0
        %1388 = vmatpush1.msra.mxu0 0.0
        %1389 = vmatprep.subr.mxu0 0.0
        %1390 = vmatpush1.msra.mxu0 0.0
        %1391 = vmatprep.subr.mxu0 0.0
        %1392 = vmatpush1.msra.mxu0 0.0
        %1393 = vmatprep.subr.mxu0 0.0
        %1394 = vmatpush1.msra.mxu0 0.0
        %1395 = vmatprep.subr.mxu0 0.0
        %1396 = vmatpush1.msra.mxu0 0.0
        %1397 = vmatprep.subr.mxu0 0.0
        %1398 = vmatpush1.msra.mxu0 0.0
        %1399 = vmatprep.subr.mxu0 0.0
        %1400 = vmatpush1.msra.mxu0 0.0
        %1401 = vmatprep.subr.mxu0 0.0
        %1402 = vmatpush1.msra.mxu0 0.0
        %1403 = vmatprep.subr.mxu0 0.0
        %1404 = vmatpush1.msra.mxu0 0.0
        %1405 = vmatprep.subr.mxu0 0.0
        %1406 = vmatpush1.msra.mxu0 0.0
        %1407 = vmatprep.subr.mxu0 0.0
        %1408 = vmatpush1.msra.mxu0 0.0
        %1409 = vmatprep.subr.mxu0 0.0
        %1410 = vmatpush1.msra.mxu0 0.0
        %1411 = vmatprep.subr.mxu0 0.0
        %1412 = vmatpush1.msra.mxu0 0.0
        %1413 = vmatprep.subr.mxu0 0.0
        %1414 = vmatpush1.msra.mxu0 0.0
        %1415 = vmatprep.subr.mxu0 0.0
        %1416 = vmatpush1.msra.mxu0 0.0
        %1417 = vmatprep.subr.mxu0 0.0
        %1418 = vmatpush1.msra.mxu0 0.0
        %1419 = vmatprep.subr.mxu0 0.0
        %1420 = vmatpush1.msra.mxu0 0.0
        %1421 = vmatprep.subr.mxu0 0.0
        %1422 = vmatpush1.msra.mxu0 0.0
        %1423 = vmatprep.subr.mxu0 0.0
        %1424 = vmatpush1.msra.mxu0 0.0
        %1425 = vmatprep.subr.mxu0 0.0
        %1426 = vmatpush1.msra.mxu0 0.0
        %1427 = vmatprep.subr.mxu0 0.0
        %1428 = vmatpush1.msra.mxu0 0.0
        %1429 = vmatprep.subr.mxu0 0.0
        %1430 = vmatpush1.msra.mxu0 0.0
        %1431 = vmatprep.subr.mxu0 0.0
        %1432 = vmatpush1.msra.mxu0 0.0
        %1433 = vmatprep.subr.mxu0 0.0
        %1434 = vmatpush1.msra.mxu0 0.0
        %1435 = vmatprep.subr.mxu0 0.0
        %1436 = vmatpush1.msra.mxu0 0.0
        %1437 = vmatprep.mubr.f32.mxu0 0.0
        %1438 = vmatmul.mubr.f32.gmra.mrb[0].mxu0 %v1368
        %v1439 = vpop.f32.mrb[0].mxu0
        %v1440 = vadd.f32 %v1366, %v1439
        %v1441 = vpop.f32.mrb[0].mxu0
        %1442 = vmatprep.mubr.f32.mxu0 0.0
        %1443 = vmatmul.mubr.f32.gmra.mrb[0].mxu0 %v1371
        %v1444 = vpop.f32.mrb[0].mxu0
        %v1445 = vadd.f32 %v1366, %v1444
        %v1446 = vpop.f32.mrb[0].mxu0
        %1447 = vdwg.mxu0
        %v1448 = vmax.f32 %v1440, 0.0
        %v1449 = vmax.f32 %v1445, 0.0
        %v1450 = vld [vmem:[#allocation4 + $0x1f8] sm:$0xff]
        %v1451 = vld [vmem:[#allocation4 + $0x200] sm:$0xff]
        %v1452 = vld [vmem:[#allocation4 + $0x208] sm:$0xff]
        %v1453 = vld [vmem:[#allocation4 + $0x210] sm:$0xff]
        %v1454 = vld [vmem:[#allocation4 + $0x218] sm:$0xff]
        %v1455 = vld [vmem:[#allocation4 + $0x220] sm:$0xff]
        %v1456 = vld [vmem:[#allocation4 + $0x228] sm:$0xff]
        %v1457 = vld [vmem:[#allocation4 + $0x230] sm:$0xff]
        %v1458 = vld [vmem:[#allocation4 + $0x238] sm:$0x1]
        %v1459 = vlaneseq
        %v1460 = vshrl.u32 %v1459, 7
        %v1461 = vsub.s32 0, %v1460
        %v1462 = vrot.slane %v1458, %v1461
        %vm1463 = vcmask 523264
        %v1465 = vsel %vm1463, %v1448, 0
        %v1468 = vsel %vm1463, %v1449, 0
        %1470 = vmatprep.subr.mxu0 0.0
        %1471 = vmatpush1.msra.mxu0 %v1450
        %1472 = vmatprep.subr.mxu0 0.0
        %1473 = vmatpush1.msra.mxu0 %v1451
        %1474 = vmatprep.subr.mxu0 0.0
        %1475 = vmatpush1.msra.mxu0 %v1452
        %1476 = vmatprep.subr.mxu0 0.0
        %1477 = vmatpush1.msra.mxu0 %v1453
        %1478 = vmatprep.subr.mxu0 0.0
        %1479 = vmatpush1.msra.mxu0 %v1454
        %1480 = vmatprep.subr.mxu0 0.0
        %1481 = vmatpush1.msra.mxu0 %v1455
        %1482 = vmatprep.subr.mxu0 0.0
        %1483 = vmatpush1.msra.mxu0 %v1456
        %1484 = vmatprep.subr.mxu0 0.0
        %1485 = vmatpush1.msra.mxu0 %v1457
        %1486 = vmatprep.subr.mxu0 0.0
        %1487 = vmatpush1.msra.mxu0 0.0
        %1488 = vmatprep.subr.mxu0 0.0
        %1489 = vmatpush1.msra.mxu0 0.0
        %1490 = vmatprep.subr.mxu0 0.0
        %1491 = vmatpush1.msra.mxu0 0.0
        %1492 = vmatprep.subr.mxu0 0.0
        %1493 = vmatpush1.msra.mxu0 0.0
        %1494 = vmatprep.subr.mxu0 0.0
        %1495 = vmatpush1.msra.mxu0 0.0
        %1496 = vmatprep.subr.mxu0 0.0
        %1497 = vmatpush1.msra.mxu0 0.0
        %1498 = vmatprep.subr.mxu0 0.0
        %1499 = vmatpush1.msra.mxu0 0.0
        %1500 = vmatprep.subr.mxu0 0.0
        %1501 = vmatpush1.msra.mxu0 0.0
        %1502 = vmatprep.subr.mxu0 0.0
        %1503 = vmatpush1.msra.mxu0 0.0
        %1504 = vmatprep.subr.mxu0 0.0
        %1505 = vmatpush1.msra.mxu0 0.0
        %1506 = vmatprep.subr.mxu0 0.0
        %1507 = vmatpush1.msra.mxu0 0.0
        %1508 = vmatprep.subr.mxu0 0.0
        %1509 = vmatpush1.msra.mxu0 0.0
        %1510 = vmatprep.subr.mxu0 0.0
        %1511 = vmatpush1.msra.mxu0 0.0
        %1512 = vmatprep.subr.mxu0 0.0
        %1513 = vmatpush1.msra.mxu0 0.0
        %1514 = vmatprep.subr.mxu0 0.0
        %1515 = vmatpush1.msra.mxu0 0.0
        %1516 = vmatprep.subr.mxu0 0.0
        %1517 = vmatpush1.msra.mxu0 0.0
        %1518 = vmatprep.subr.mxu0 0.0
        %1519 = vmatpush1.msra.mxu0 0.0
        %1520 = vmatprep.subr.mxu0 0.0
        %1521 = vmatpush1.msra.mxu0 0.0
        %1522 = vmatprep.subr.mxu0 0.0
        %1523 = vmatpush1.msra.mxu0 0.0
        %1524 = vmatprep.subr.mxu0 0.0
        %1525 = vmatpush1.msra.mxu0 0.0
        %1526 = vmatprep.subr.mxu0 0.0
        %1527 = vmatpush1.msra.mxu0 0.0
        %1528 = vmatprep.subr.mxu0 0.0
        %1529 = vmatpush1.msra.mxu0 0.0
        %1530 = vmatprep.subr.mxu0 0.0
        %1531 = vmatpush1.msra.mxu0 0.0
        %1532 = vmatprep.subr.mxu0 0.0
        %1533 = vmatpush1.msra.mxu0 0.0
        %1534 = vmatprep.mubr.f32.mxu0 0.0
        %1535 = vmatmul.mubr.f32.gmra.mrb[0].mxu0 %v1465
        %v1536 = vpop.f32.mrb[0].mxu0
        %v1537 = vpop.f32.mrb[0].mxu0
        %1538 = vmatprep.mubr.f32.mxu0 0.0
        %1539 = vmatmul.mubr.f32.gmra.mrb[0].mxu0 %v1468
        %v1540 = vpop.f32.mrb[0].mxu0
        %v1541 = vadd.f32 %v1462, %v1540
        %v1542 = vpop.f32.mrb[0].mxu0
        %1543 = vdwg.mxu0
        %v1544 = vadd.f32 %v1357, %v1541
        %v1545 = vsel %vm238, %v1544, 0.0
        %1546 = vadd.xlane.f32.xlu0 %v1545
        %v1547 = vpop.xlane.xlu0 %1546
        %v1548 = vmul.f32 %v1547, %v1323
        %v1549 = vsub.f32 %v1544, %v1548
        %v1550 = vmul.f32 %v1549, %v1549
        %v1551 = vsel %vm238, %v1550, 0.0
        %1552 = vadd.xlane.f32.xlu0 %v1551
        %v1553 = vpop.xlane.xlu0 %1552
        %v1554 = vmul.f32 %v1553, %v1323
        %v1555 = vadd.f32 %v1554, 1e-05
        %v1556 = vrsqrt.pop %v1555
        %v1557 = vmul.f32 %v1549, %v1556
        %v1558 = vld [vmem:[#allocation4 + $0x240] sm:$0x1]
        %v1559 = vlaneseq
        %v1560 = vshrl.u32 %v1559, 7
        %v1561 = vsub.s32 0, %v1560
        %v1562 = vrot.slane %v1558, %v1561
        %v1563 = vmul.f32 %v1557, %v1562
        %v1564 = vld [vmem:[#allocation4 + $0x248] sm:$0x1]
        %v1565 = vlaneseq
        %v1566 = vshrl.u32 %v1565, 7
        %v1567 = vsub.s32 0, %v1566
        %v1568 = vrot.slane %v1564, %v1567
        %v1569 = vadd.f32 %v1563, %v1568
        %v1570 = vld [vmem:[#allocation4 + $0x30] sm:$0xff]
        %v1571 = vld [vmem:[#allocation4 + $0x38] sm:$0xff]
        %v1572 = vld [vmem:[#allocation4 + $0x40] sm:$0xff]
        %v1573 = vld [vmem:[#allocation4 + $0x48] sm:$0xff]
        %v1574 = vld [vmem:[#allocation4 + $0x50] sm:$0x1]
        %v1576 = vsel %vm235, %v1569, 0
        %1578 = vmatprep.subr.mxu0 0.0
        %1579 = vmatpush1.msra.mxu0 %v1570
        %1580 = vmatprep.subr.mxu0 0.0
        %1581 = vmatpush1.msra.mxu0 %v1571
        %1582 = vmatprep.subr.mxu0 0.0
        %1583 = vmatpush1.msra.mxu0 %v1572
        %1584 = vmatprep.subr.mxu0 0.0
        %1585 = vmatpush1.msra.mxu0 %v1573
        %1586 = vmatprep.subr.mxu0 0.0
        %1587 = vmatpush1.msra.mxu0 0.0
        %1588 = vmatprep.subr.mxu0 0.0
        %1589 = vmatpush1.msra.mxu0 0.0
        %1590 = vmatprep.subr.mxu0 0.0
        %1591 = vmatpush1.msra.mxu0 0.0
        %1592 = vmatprep.subr.mxu0 0.0
        %1593 = vmatpush1.msra.mxu0 0.0
        %1594 = vmatprep.subr.mxu0 0.0
        %1595 = vmatpush1.msra.mxu0 0.0
        %1596 = vmatprep.subr.mxu0 0.0
        %1597 = vmatpush1.msra.mxu0 0.0
        %1598 = vmatprep.subr.mxu0 0.0
        %1599 = vmatpush1.msra.mxu0 0.0
        %1600 = vmatprep.subr.mxu0 0.0
        %1601 = vmatpush1.msra.mxu0 0.0
        %1602 = vmatprep.subr.mxu0 0.0
        %1603 = vmatpush1.msra.mxu0 0.0
        %1604 = vmatprep.subr.mxu0 0.0
        %1605 = vmatpush1.msra.mxu0 0.0
        %1606 = vmatprep.subr.mxu0 0.0
        %1607 = vmatpush1.msra.mxu0 0.0
        %1608 = vmatprep.subr.mxu0 0.0
        %1609 = vmatpush1.msra.mxu0 0.0
        %1610 = vmatprep.subr.mxu0 0.0
        %1611 = vmatpush1.msra.mxu0 0.0
        %1612 = vmatprep.subr.mxu0 0.0
        %1613 = vmatpush1.msra.mxu0 0.0
        %1614 = vmatprep.subr.mxu0 0.0
        %1615 = vmatpush1.msra.mxu0 0.0
        %1616 = vmatprep.subr.mxu0 0.0
        %1617 = vmatpush1.msra.mxu0 0.0
        %1618 = vmatprep.subr.mxu0 0.0
        %1619 = vmatpush1.msra.mxu0 0.0
        %1620 = vmatprep.subr.mxu0 0.0
        %1621 = vmatpush1.msra.mxu0 0.0
        %1622 = vmatprep.subr.mxu0 0.0
        %1623 = vmatpush1.msra.mxu0 0.0
        %1624 = vmatprep.subr.mxu0 0.0
        %1625 = vmatpush1.msra.mxu0 0.0
        %1626 = vmatprep.subr.mxu0 0.0
        %1627 = vmatpush1.msra.mxu0 0.0
        %1628 = vmatprep.subr.mxu0 0.0
        %1629 = vmatpush1.msra.mxu0 0.0
        %1630 = vmatprep.subr.mxu0 0.0
        %1631 = vmatpush1.msra.mxu0 0.0
        %1632 = vmatprep.subr.mxu0 0.0
        %1633 = vmatpush1.msra.mxu0 0.0
        %1634 = vmatprep.subr.mxu0 0.0
        %1635 = vmatpush1.msra.mxu0 0.0
        %1636 = vmatprep.subr.mxu0 0.0
        %1637 = vmatpush1.msra.mxu0 0.0
        %1638 = vmatprep.subr.mxu0 0.0
        %1639 = vmatpush1.msra.mxu0 0.0
        %1640 = vmatprep.subr.mxu0 0.0
        %1641 = vmatpush1.msra.mxu0 0.0
        %1642 = vmatprep.mubr.f32.mxu0 0.0
        %1643 = vmatmul.mubr.f32.gmra.mrb[0].mxu0 %v1576
        %v1644 = vpop.f32.mrb[0].mxu0
        %v1645 = vadd.f32 %v1574, %v1644
        %v1646 = vpop.f32.mrb[0].mxu0
        %1647 = vdwg.mxu0
        %v1648 = vmul.f32 %v1645, 0.5
        %v1649 = vmul.f32 %v1648, 1.442695
        %v1650 = vpow.pop %v1649
        %1652 = vrot.lane.b32.xlu0 %v158, 64
        %v1653 = vpop.permute.xlu0 %1652
        %v1655 = vmul.f32 %v1650, %v1653
        %1657 = vrot.lane.b32.xlu0 %v1655, 96
        %v1658 = vpop.permute.xlu0 %1657
        %v1660 = vadd.f32 %v1645, %v1658
        %v1661 = vld [vmem:[#allocation4 + $0x10] sm:$0xff]
        %v1662 = vld [vmem:[#allocation4 + $0x18] sm:$0xff]
        %v1663 = vld [vmem:[#allocation4 + $0x20] sm:$0xff]
        %v1664 = vld [vmem:[#allocation4 + $0x28] sm:$0xff]
        %v1665 = vld [vmem:[#allocation4] sm:$0xff]
        %v1666 = vld [vmem:[#allocation4 + $0x98] sm:$0x1]
        %v1667 = vsel %vm161, %v158, 0
        %1669 = vmatprep.subr.mxu0 0.0
        %1670 = vmatpush1.msra.mxu0 %v1665
        %1671 = vmatprep.subr.mxu0 0.0
        %1672 = vmatpush1.msra.mxu0 0.0
        %1673 = vmatprep.subr.mxu0 0.0
        %1674 = vmatpush1.msra.mxu0 0.0
        %1675 = vmatprep.subr.mxu0 0.0
        %1676 = vmatpush1.msra.mxu0 0.0
        %1677 = vmatprep.subr.mxu0 0.0
        %1678 = vmatpush1.msra.mxu0 0.0
        %1679 = vmatprep.subr.mxu0 0.0
        %1680 = vmatpush1.msra.mxu0 0.0
        %1681 = vmatprep.subr.mxu0 0.0
        %1682 = vmatpush1.msra.mxu0 0.0
        %1683 = vmatprep.subr.mxu0 0.0
        %1684 = vmatpush1.msra.mxu0 0.0
        %1685 = vmatprep.subr.mxu0 0.0
        %1686 = vmatpush1.msra.mxu0 0.0
        %1687 = vmatprep.subr.mxu0 0.0
        %1688 = vmatpush1.msra.mxu0 0.0
        %1689 = vmatprep.subr.mxu0 0.0
        %1690 = vmatpush1.msra.mxu0 0.0
        %1691 = vmatprep.subr.mxu0 0.0
        %1692 = vmatpush1.msra.mxu0 0.0
        %1693 = vmatprep.subr.mxu0 0.0
        %1694 = vmatpush1.msra.mxu0 0.0
        %1695 = vmatprep.subr.mxu0 0.0
        %1696 = vmatpush1.msra.mxu0 0.0
        %1697 = vmatprep.subr.mxu0 0.0
        %1698 = vmatpush1.msra.mxu0 0.0
        %1699 = vmatprep.subr.mxu0 0.0
        %1700 = vmatpush1.msra.mxu0 0.0
        %1701 = vmatprep.subr.mxu0 0.0
        %1702 = vmatpush1.msra.mxu0 0.0
        %1703 = vmatprep.subr.mxu0 0.0
        %1704 = vmatpush1.msra.mxu0 0.0
        %1705 = vmatprep.subr.mxu0 0.0
        %1706 = vmatpush1.msra.mxu0 0.0
        %1707 = vmatprep.subr.mxu0 0.0
        %1708 = vmatpush1.msra.mxu0 0.0
        %1709 = vmatprep.subr.mxu0 0.0
        %1710 = vmatpush1.msra.mxu0 0.0
        %1711 = vmatprep.subr.mxu0 0.0
        %1712 = vmatpush1.msra.mxu0 0.0
        %1713 = vmatprep.subr.mxu0 0.0
        %1714 = vmatpush1.msra.mxu0 0.0
        %1715 = vmatprep.subr.mxu0 0.0
        %1716 = vmatpush1.msra.mxu0 0.0
        %1717 = vmatprep.subr.mxu0 0.0
        %1718 = vmatpush1.msra.mxu0 0.0
        %1719 = vmatprep.subr.mxu0 0.0
        %1720 = vmatpush1.msra.mxu0 0.0
        %1721 = vmatprep.subr.mxu0 0.0
        %1722 = vmatpush1.msra.mxu0 0.0
        %1723 = vmatprep.subr.mxu0 0.0
        %1724 = vmatpush1.msra.mxu0 0.0
        %1725 = vmatprep.subr.mxu0 0.0
        %1726 = vmatpush1.msra.mxu0 0.0
        %1727 = vmatprep.subr.mxu0 0.0
        %1728 = vmatpush1.msra.mxu0 0.0
        %1729 = vmatprep.subr.mxu0 0.0
        %1730 = vmatpush1.msra.mxu0 0.0
        %1731 = vmatprep.subr.mxu0 0.0
        %1732 = vmatpush1.msra.mxu0 0.0
        %1733 = vmatprep.mubr.f32.mxu0 0.0
        %1734 = vmatmul.mubr.f32.gmra.mrb[0].mxu0 %v1667
        %v1735 = vpop.f32.mrb[0].mxu0
        %v1736 = vadd.f32 %v1666, %v1735
        %v1737 = vpop.f32.mrb[0].mxu0
        %1738 = vdwg.mxu0
        %1739 = vst.msk [vmem:[#allocation3] sm:$0x1] %vm238, %v1736
        %v1740 = vld [vmem:[#allocation4 + $0xa0] sm:$0x1]
        %v1742 = vsel %vm235, %v1660, 0
        %1744 = vmatprep.subr.mxu0 0.0
        %1745 = vmatpush1.msra.mxu0 %v1661
        %1746 = vmatprep.subr.mxu0 0.0
        %1747 = vmatpush1.msra.mxu0 %v1662
        %1748 = vmatprep.subr.mxu0 0.0
        %1749 = vmatpush1.msra.mxu0 %v1663
        %1750 = vmatprep.subr.mxu0 0.0
        %1751 = vmatpush1.msra.mxu0 %v1664
        %1752 = vmatprep.subr.mxu0 0.0
        %1753 = vmatpush1.msra.mxu0 0.0
        %1754 = vmatprep.subr.mxu0 0.0
        %1755 = vmatpush1.msra.mxu0 0.0
        %1756 = vmatprep.subr.mxu0 0.0
        %1757 = vmatpush1.msra.mxu0 0.0
        %1758 = vmatprep.subr.mxu0 0.0
        %1759 = vmatpush1.msra.mxu0 0.0
        %1760 = vmatprep.subr.mxu0 0.0
        %1761 = vmatpush1.msra.mxu0 0.0
        %1762 = vmatprep.subr.mxu0 0.0
        %1763 = vmatpush1.msra.mxu0 0.0
        %1764 = vmatprep.subr.mxu0 0.0
        %1765 = vmatpush1.msra.mxu0 0.0
        %1766 = vmatprep.subr.mxu0 0.0
        %1767 = vmatpush1.msra.mxu0 0.0
        %1768 = vmatprep.subr.mxu0 0.0
        %1769 = vmatpush1.msra.mxu0 0.0
        %1770 = vmatprep.subr.mxu0 0.0
        %1771 = vmatpush1.msra.mxu0 0.0
        %1772 = vmatprep.subr.mxu0 0.0
        %1773 = vmatpush1.msra.mxu0 0.0
        %1774 = vmatprep.subr.mxu0 0.0
        %1775 = vmatpush1.msra.mxu0 0.0
        %1776 = vmatprep.subr.mxu0 0.0
        %1777 = vmatpush1.msra.mxu0 0.0
        %1778 = vmatprep.subr.mxu0 0.0
        %1779 = vmatpush1.msra.mxu0 0.0
        %1780 = vmatprep.subr.mxu0 0.0
        %1781 = vmatpush1.msra.mxu0 0.0
        %1782 = vmatprep.subr.mxu0 0.0
        %1783 = vmatpush1.msra.mxu0 0.0
        %1784 = vmatprep.subr.mxu0 0.0
        %1785 = vmatpush1.msra.mxu0 0.0
        %1786 = vmatprep.subr.mxu0 0.0
        %1787 = vmatpush1.msra.mxu0 0.0
        %1788 = vmatprep.subr.mxu0 0.0
        %1789 = vmatpush1.msra.mxu0 0.0
        %1790 = vmatprep.subr.mxu0 0.0
        %1791 = vmatpush1.msra.mxu0 0.0
        %1792 = vmatprep.subr.mxu0 0.0
        %1793 = vmatpush1.msra.mxu0 0.0
        %1794 = vmatprep.subr.mxu0 0.0
        %1795 = vmatpush1.msra.mxu0 0.0
        %1796 = vmatprep.subr.mxu0 0.0
        %1797 = vmatpush1.msra.mxu0 0.0
        %1798 = vmatprep.subr.mxu0 0.0
        %1799 = vmatpush1.msra.mxu0 0.0
        %1800 = vmatprep.subr.mxu0 0.0
        %1801 = vmatpush1.msra.mxu0 0.0
        %1802 = vmatprep.subr.mxu0 0.0
        %1803 = vmatpush1.msra.mxu0 0.0
        %1804 = vmatprep.subr.mxu0 0.0
        %1805 = vmatpush1.msra.mxu0 0.0
        %1806 = vmatprep.subr.mxu0 0.0
        %1807 = vmatpush1.msra.mxu0 0.0
        %1808 = vmatprep.mubr.f32.mxu0 0.0
        %1809 = vmatmul.mubr.f32.gmra.mrb[0].mxu0 %v1742
        %v1810 = vpop.f32.mrb[0].mxu0
        %v1811 = vadd.f32 %v1740, %v1810
        %v1812 = vpop.f32.mrb[0].mxu0
        %1813 = vdwg.mxu0
        %1814 = vst.msk [vmem:[#allocation3 + $0x1] sm:$0x1] %vm238, %v1811
        %v1815 = vld [vmem:[#allocation3] sm:$0x3]
        %v1816 = vld [vmem:[#allocation4 + $0x250] sm:$0xff]
        %v1817 = vld [vmem:[#allocation4 + $0x258] sm:$0xff]
        %v1818 = vld [vmem:[#allocation4 + $0x260] sm:$0xff]
        %v1819 = vld [vmem:[#allocation4 + $0x268] sm:$0xff]
        %v1820 = vld [vmem:[#allocation4 + $0x270] sm:$0x1]
        %v1821 = vlaneseq
        %v1822 = vshrl.u32 %v1821, 7
        %v1823 = vsub.s32 0, %v1822
        %v1824 = vrot.slane %v1820, %v1823
        %v1826 = vsel %vm235, %v1815, 0
        %1828 = vmatprep.subr.mxu0 0.0
        %1829 = vmatpush1.msra.mxu0 %v1816
        %1830 = vmatprep.subr.mxu0 0.0
        %1831 = vmatpush1.msra.mxu0 %v1817
        %1832 = vmatprep.subr.mxu0 0.0
        %1833 = vmatpush1.msra.mxu0 %v1818
        %1834 = vmatprep.subr.mxu0 0.0
        %1835 = vmatpush1.msra.mxu0 %v1819
        %1836 = vmatprep.subr.mxu0 0.0
        %1837 = vmatpush1.msra.mxu0 0.0
        %1838 = vmatprep.subr.mxu0 0.0
        %1839 = vmatpush1.msra.mxu0 0.0
        %1840 = vmatprep.subr.mxu0 0.0
        %1841 = vmatpush1.msra.mxu0 0.0
        %1842 = vmatprep.subr.mxu0 0.0
        %1843 = vmatpush1.msra.mxu0 0.0
        %1844 = vmatprep.subr.mxu0 0.0
        %1845 = vmatpush1.msra.mxu0 0.0
        %1846 = vmatprep.subr.mxu0 0.0
        %1847 = vmatpush1.msra.mxu0 0.0
        %1848 = vmatprep.subr.mxu0 0.0
        %1849 = vmatpush1.msra.mxu0 0.0
        %1850 = vmatprep.subr.mxu0 0.0
        %1851 = vmatpush1.msra.mxu0 0.0
        %1852 = vmatprep.subr.mxu0 0.0
        %1853 = vmatpush1.msra.mxu0 0.0
        %1854 = vmatprep.subr.mxu0 0.0
        %1855 = vmatpush1.msra.mxu0 0.0
        %1856 = vmatprep.subr.mxu0 0.0
        %1857 = vmatpush1.msra.mxu0 0.0
        %1858 = vmatprep.subr.mxu0 0.0
        %1859 = vmatpush1.msra.mxu0 0.0
        %1860 = vmatprep.subr.mxu0 0.0
        %1861 = vmatpush1.msra.mxu0 0.0
        %1862 = vmatprep.subr.mxu0 0.0
        %1863 = vmatpush1.msra.mxu0 0.0
        %1864 = vmatprep.subr.mxu0 0.0
        %1865 = vmatpush1.msra.mxu0 0.0
        %1866 = vmatprep.subr.mxu0 0.0
        %1867 = vmatpush1.msra.mxu0 0.0
        %1868 = vmatprep.subr.mxu0 0.0
        %1869 = vmatpush1.msra.mxu0 0.0
        %1870 = vmatprep.subr.mxu0 0.0
        %1871 = vmatpush1.msra.mxu0 0.0
        %1872 = vmatprep.subr.mxu0 0.0
        %1873 = vmatpush1.msra.mxu0 0.0
        %1874 = vmatprep.subr.mxu0 0.0
        %1875 = vmatpush1.msra.mxu0 0.0
        %1876 = vmatprep.subr.mxu0 0.0
        %1877 = vmatpush1.msra.mxu0 0.0
        %1878 = vmatprep.subr.mxu0 0.0
        %1879 = vmatpush1.msra.mxu0 0.0
        %1880 = vmatprep.subr.mxu0 0.0
        %1881 = vmatpush1.msra.mxu0 0.0
        %1882 = vmatprep.subr.mxu0 0.0
        %1883 = vmatpush1.msra.mxu0 0.0
        %1884 = vmatprep.subr.mxu0 0.0
        %1885 = vmatpush1.msra.mxu0 0.0
        %1886 = vmatprep.subr.mxu0 0.0
        %1887 = vmatpush1.msra.mxu0 0.0
        %1888 = vmatprep.subr.mxu0 0.0
        %1889 = vmatpush1.msra.mxu0 0.0
        %1890 = vmatprep.subr.mxu0 0.0
        %1891 = vmatpush1.msra.mxu0 0.0
        %1892 = vmatprep.mubr.f32.mxu0 0.0
        %1893 = vmatmul.mubr.f32.gmra.mrb[0].mxu0 %v1826
        %v1894 = vpop.f32.mrb[0].mxu0
        %v1895 = vadd.f32 %v1824, %v1894
        %v1896 = vpop.f32.mrb[0].mxu0
        %1897 = vdwg.mxu0
        %v1898 = vld [vmem:[#allocation4 + $0x278] sm:$0xff]
        %v1899 = vld [vmem:[#allocation4 + $0x280] sm:$0xff]
        %v1900 = vld [vmem:[#allocation4 + $0x288] sm:$0xff]
        %v1901 = vld [vmem:[#allocation4 + $0x290] sm:$0xff]
        %v1902 = vld [vmem:[#allocation4 + $0x298] sm:$0x1]
        %v1903 = vlaneseq
        %v1904 = vshrl.u32 %v1903, 7
        %v1905 = vsub.s32 0, %v1904
        %v1906 = vrot.slane %v1902, %v1905
        %1907 = vmatprep.subr.mxu0 0.0
        %1908 = vmatpush1.msra.mxu0 %v1898
        %1909 = vmatprep.subr.mxu0 0.0
        %1910 = vmatpush1.msra.mxu0 %v1899
        %1911 = vmatprep.subr.mxu0 0.0
        %1912 = vmatpush1.msra.mxu0 %v1900
        %1913 = vmatprep.subr.mxu0 0.0
        %1914 = vmatpush1.msra.mxu0 %v1901
        %1915 = vmatprep.subr.mxu0 0.0
        %1916 = vmatpush1.msra.mxu0 0.0
        %1917 = vmatprep.subr.mxu0 0.0
        %1918 = vmatpush1.msra.mxu0 0.0
        %1919 = vmatprep.subr.mxu0 0.0
        %1920 = vmatpush1.msra.mxu0 0.0
        %1921 = vmatprep.subr.mxu0 0.0
        %1922 = vmatpush1.msra.mxu0 0.0
        %1923 = vmatprep.subr.mxu0 0.0
        %1924 = vmatpush1.msra.mxu0 0.0
        %1925 = vmatprep.subr.mxu0 0.0
        %1926 = vmatpush1.msra.mxu0 0.0
        %1927 = vmatprep.subr.mxu0 0.0
        %1928 = vmatpush1.msra.mxu0 0.0
        %1929 = vmatprep.subr.mxu0 0.0
        %1930 = vmatpush1.msra.mxu0 0.0
        %1931 = vmatprep.subr.mxu0 0.0
        %1932 = vmatpush1.msra.mxu0 0.0
        %1933 = vmatprep.subr.mxu0 0.0
        %1934 = vmatpush1.msra.mxu0 0.0
        %1935 = vmatprep.subr.mxu0 0.0
        %1936 = vmatpush1.msra.mxu0 0.0
        %1937 = vmatprep.subr.mxu0 0.0
        %1938 = vmatpush1.msra.mxu0 0.0
        %1939 = vmatprep.subr.mxu0 0.0
        %1940 = vmatpush1.msra.mxu0 0.0
        %1941 = vmatprep.subr.mxu0 0.0
        %1942 = vmatpush1.msra.mxu0 0.0
        %1943 = vmatprep.subr.mxu0 0.0
        %1944 = vmatpush1.msra.mxu0 0.0
        %1945 = vmatprep.subr.mxu0 0.0
        %1946 = vmatpush1.msra.mxu0 0.0
        %1947 = vmatprep.subr.mxu0 0.0
        %1948 = vmatpush1.msra.mxu0 0.0
        %1949 = vmatprep.subr.mxu0 0.0
        %1950 = vmatpush1.msra.mxu0 0.0
        %1951 = vmatprep.subr.mxu0 0.0
        %1952 = vmatpush1.msra.mxu0 0.0
        %1953 = vmatprep.subr.mxu0 0.0
        %1954 = vmatpush1.msra.mxu0 0.0
        %1955 = vmatprep.subr.mxu0 0.0
        %1956 = vmatpush1.msra.mxu0 0.0
        %1957 = vmatprep.subr.mxu0 0.0
        %1958 = vmatpush1.msra.mxu0 0.0
        %1959 = vmatprep.subr.mxu0 0.0
        %1960 = vmatpush1.msra.mxu0 0.0
        %1961 = vmatprep.subr.mxu0 0.0
        %1962 = vmatpush1.msra.mxu0 0.0
        %1963 = vmatprep.subr.mxu0 0.0
        %1964 = vmatpush1.msra.mxu0 0.0
        %1965 = vmatprep.subr.mxu0 0.0
        %1966 = vmatpush1.msra.mxu0 0.0
        %1967 = vmatprep.subr.mxu0 0.0
        %1968 = vmatpush1.msra.mxu0 0.0
        %1969 = vmatprep.subr.mxu0 0.0
        %1970 = vmatpush1.msra.mxu0 0.0
        %1971 = vmatprep.mubr.f32.mxu0 0.0
        %1972 = vmatmul.mubr.f32.gmra.mrb[0].mxu0 %v1826
        %v1973 = vpop.f32.mrb[0].mxu0
        %v1974 = vadd.f32 %v1906, %v1973
        %v1975 = vpop.f32.mrb[0].mxu0
        %1976 = vdwg.mxu0
        %v1977 = vld [vmem:[#allocation4 + $0x2a0] sm:$0xff]
        %v1978 = vld [vmem:[#allocation4 + $0x2a8] sm:$0xff]
        %v1979 = vld [vmem:[#allocation4 + $0x2b0] sm:$0xff]
        %v1980 = vld [vmem:[#allocation4 + $0x2b8] sm:$0xff]
        %v1981 = vld [vmem:[#allocation4 + $0x2c0] sm:$0x1]
        %v1982 = vlaneseq
        %v1983 = vshrl.u32 %v1982, 7
        %v1984 = vsub.s32 0, %v1983
        %v1985 = vrot.slane %v1981, %v1984
        %1986 = vmatprep.subr.mxu0 0.0
        %1987 = vmatpush1.msra.mxu0 %v1977
        %1988 = vmatprep.subr.mxu0 0.0
        %1989 = vmatpush1.msra.mxu0 %v1978
        %1990 = vmatprep.subr.mxu0 0.0
        %1991 = vmatpush1.msra.mxu0 %v1979
        %1992 = vmatprep.subr.mxu0 0.0
        %1993 = vmatpush1.msra.mxu0 %v1980
        %1994 = vmatprep.subr.mxu0 0.0
        %1995 = vmatpush1.msra.mxu0 0.0
        %1996 = vmatprep.subr.mxu0 0.0
        %1997 = vmatpush1.msra.mxu0 0.0
        %1998 = vmatprep.subr.mxu0 0.0
        %1999 = vmatpush1.msra.mxu0 0.0
        %2000 = vmatprep.subr.mxu0 0.0
        %2001 = vmatpush1.msra.mxu0 0.0
        %2002 = vmatprep.subr.mxu0 0.0
        %2003 = vmatpush1.msra.mxu0 0.0
        %2004 = vmatprep.subr.mxu0 0.0
        %2005 = vmatpush1.msra.mxu0 0.0
        %2006 = vmatprep.subr.mxu0 0.0
        %2007 = vmatpush1.msra.mxu0 0.0
        %2008 = vmatprep.subr.mxu0 0.0
        %2009 = vmatpush1.msra.mxu0 0.0
        %2010 = vmatprep.subr.mxu0 0.0
        %2011 = vmatpush1.msra.mxu0 0.0
        %2012 = vmatprep.subr.mxu0 0.0
        %2013 = vmatpush1.msra.mxu0 0.0
        %2014 = vmatprep.subr.mxu0 0.0
        %2015 = vmatpush1.msra.mxu0 0.0
        %2016 = vmatprep.subr.mxu0 0.0
        %2017 = vmatpush1.msra.mxu0 0.0
        %2018 = vmatprep.subr.mxu0 0.0
        %2019 = vmatpush1.msra.mxu0 0.0
        %2020 = vmatprep.subr.mxu0 0.0
        %2021 = vmatpush1.msra.mxu0 0.0
        %2022 = vmatprep.subr.mxu0 0.0
        %2023 = vmatpush1.msra.mxu0 0.0
        %2024 = vmatprep.subr.mxu0 0.0
        %2025 = vmatpush1.msra.mxu0 0.0
        %2026 = vmatprep.subr.mxu0 0.0
        %2027 = vmatpush1.msra.mxu0 0.0
        %2028 = vmatprep.subr.mxu0 0.0
        %2029 = vmatpush1.msra.mxu0 0.0
        %2030 = vmatprep.subr.mxu0 0.0
        %2031 = vmatpush1.msra.mxu0 0.0
        %2032 = vmatprep.subr.mxu0 0.0
        %2033 = vmatpush1.msra.mxu0 0.0
        %2034 = vmatprep.subr.mxu0 0.0
        %2035 = vmatpush1.msra.mxu0 0.0
        %2036 = vmatprep.subr.mxu0 0.0
        %2037 = vmatpush1.msra.mxu0 0.0
        %2038 = vmatprep.subr.mxu0 0.0
        %2039 = vmatpush1.msra.mxu0 0.0
        %2040 = vmatprep.subr.mxu0 0.0
        %2041 = vmatpush1.msra.mxu0 0.0
        %2042 = vmatprep.subr.mxu0 0.0
        %2043 = vmatpush1.msra.mxu0 0.0
        %2044 = vmatprep.subr.mxu0 0.0
        %2045 = vmatpush1.msra.mxu0 0.0
        %2046 = vmatprep.subr.mxu0 0.0
        %2047 = vmatpush1.msra.mxu0 0.0
        %2048 = vmatprep.subr.mxu0 0.0
        %2049 = vmatpush1.msra.mxu0 0.0
        %2050 = vmatprep.mubr.f32.mxu0 0.0
        %2051 = vmatmul.mubr.f32.gmra.mrb[0].mxu0 %v1826
        %v2052 = vpop.f32.mrb[0].mxu0
        %v2053 = vadd.f32 %v1985, %v2052
        %v2054 = vpop.f32.mrb[0].mxu0
        %2055 = vdwg.mxu0
        %v2057 = vsel %vm500, %v1895, 0
        %v2060 = vsel %vm500, %v1974, 0
        %2062 = vmatprep.subr.mxu0 0.0
        %2063 = vmatpush1.xpose.msra.mxu0 %v2060
        %2064 = vmatprep.subr.mxu0 0.0
        %2065 = vmatpush1.xpose.msra.mxu0 0.0
        %2066 = vmatprep.subr.mxu0 0.0
        %2067 = vmatpush1.xpose.msra.mxu0 0.0
        %2068 = vmatprep.subr.mxu0 0.0
        %2069 = vmatpush1.xpose.msra.mxu0 0.0
        %2070 = vmatprep.subr.mxu0 0.0
        %2071 = vmatpush1.xpose.msra.mxu0 0.0
        %2072 = vmatprep.subr.mxu0 0.0
        %2073 = vmatpush1.xpose.msra.mxu0 0.0
        %2074 = vmatprep.subr.mxu0 0.0
        %2075 = vmatpush1.xpose.msra.mxu0 0.0
        %2076 = vmatprep.subr.mxu0 0.0
        %2077 = vmatpush1.xpose.msra.mxu0 0.0
        %2078 = vmatprep.subr.mxu0 0.0
        %2079 = vmatpush1.xpose.msra.mxu0 0.0
        %2080 = vmatprep.subr.mxu0 0.0
        %2081 = vmatpush1.xpose.msra.mxu0 0.0
        %2082 = vmatprep.subr.mxu0 0.0
        %2083 = vmatpush1.xpose.msra.mxu0 0.0
        %2084 = vmatprep.subr.mxu0 0.0
        %2085 = vmatpush1.xpose.msra.mxu0 0.0
        %2086 = vmatprep.subr.mxu0 0.0
        %2087 = vmatpush1.xpose.msra.mxu0 0.0
        %2088 = vmatprep.subr.mxu0 0.0
        %2089 = vmatpush1.xpose.msra.mxu0 0.0
        %2090 = vmatprep.subr.mxu0 0.0
        %2091 = vmatpush1.xpose.msra.mxu0 0.0
        %2092 = vmatprep.subr.mxu0 0.0
        %2093 = vmatpush1.xpose.msra.mxu0 0.0
        %2094 = vmatprep.subr.mxu0 0.0
        %2095 = vmatpush1.xpose.msra.mxu0 0.0
        %2096 = vmatprep.subr.mxu0 0.0
        %2097 = vmatpush1.xpose.msra.mxu0 0.0
        %2098 = vmatprep.subr.mxu0 0.0
        %2099 = vmatpush1.xpose.msra.mxu0 0.0
        %2100 = vmatprep.subr.mxu0 0.0
        %2101 = vmatpush1.xpose.msra.mxu0 0.0
        %2102 = vmatprep.subr.mxu0 0.0
        %2103 = vmatpush1.xpose.msra.mxu0 0.0
        %2104 = vmatprep.subr.mxu0 0.0
        %2105 = vmatpush1.xpose.msra.mxu0 0.0
        %2106 = vmatprep.subr.mxu0 0.0
        %2107 = vmatpush1.xpose.msra.mxu0 0.0
        %2108 = vmatprep.subr.mxu0 0.0
        %2109 = vmatpush1.xpose.msra.mxu0 0.0
        %2110 = vmatprep.subr.mxu0 0.0
        %2111 = vmatpush1.xpose.msra.mxu0 0.0
        %2112 = vmatprep.subr.mxu0 0.0
        %2113 = vmatpush1.xpose.msra.mxu0 0.0
        %2114 = vmatprep.subr.mxu0 0.0
        %2115 = vmatpush1.xpose.msra.mxu0 0.0
        %2116 = vmatprep.subr.mxu0 0.0
        %2117 = vmatpush1.xpose.msra.mxu0 0.0
        %2118 = vmatprep.subr.mxu0 0.0
        %2119 = vmatpush1.xpose.msra.mxu0 0.0
        %2120 = vmatprep.subr.mxu0 0.0
        %2121 = vmatpush1.xpose.msra.mxu0 0.0
        %2122 = vmatprep.subr.mxu0 0.0
        %2123 = vmatpush1.xpose.msra.mxu0 0.0
        %2124 = vmatprep.subr.mxu0 0.0
        %2125 = vmatpush1.xpose.msra.mxu0 0.0
        %2126 = vmatprep.mubr.f32.mxu0 0.0
        %2127 = vmatmul.mubr.f32.gmra.mrb[0].mxu0 %v2057
        %v2128 = vpop.f32.mrb[0].mxu0
        %v2129 = vadd.f32 0.0, %v2128
        %v2130 = vpop.f32.mrb[0].mxu0
        %2131 = vdwg.mxu0
        %vm2132 = vcmask 9216
        %v2133 = vsel %vm2132, %v2129, -inf
        %2134 = vmax.xlane.f32.xlu0 %v2133
        %v2135 = vpop.xlane.xlu0 %2134
        %v2136 = vsub.f32 %v2129, %v2135
        %v2137 = vmul.f32 %v2136, 1.442695
        %v2138 = vpow.pop %v2137
        %v2139 = vsel %vm2132, %v2138, 0.0
        %2140 = vadd.xlane.f32.xlu0 %v2139
        %v2141 = vpop.xlane.xlu0 %2140
        %v2142 = vrcp.pop %v2141
        %v2143 = vmul.f32 %v2138, %v2142
        %vm2144 = vcmask 15360
        %v2146 = vsel %vm2144, %v2143, 0
        %vm2148 = vcmask 1041408
        %v2150 = vsel %vm2148, %v2053, 0
        %2152 = vmatprep.subr.mxu0 0.0
        %2153 = vmatpush1.msra.mxu0 %v2150
        %2154 = vmatprep.subr.mxu0 0.0
        %2155 = vmatpush1.msra.mxu0 0.0
        %2156 = vmatprep.subr.mxu0 0.0
        %2157 = vmatpush1.msra.mxu0 0.0
        %2158 = vmatprep.subr.mxu0 0.0
        %2159 = vmatpush1.msra.mxu0 0.0
        %2160 = vmatprep.subr.mxu0 0.0
        %2161 = vmatpush1.msra.mxu0 0.0
        %2162 = vmatprep.subr.mxu0 0.0
        %2163 = vmatpush1.msra.mxu0 0.0
        %2164 = vmatprep.subr.mxu0 0.0
        %2165 = vmatpush1.msra.mxu0 0.0
        %2166 = vmatprep.subr.mxu0 0.0
        %2167 = vmatpush1.msra.mxu0 0.0
        %2168 = vmatprep.subr.mxu0 0.0
        %2169 = vmatpush1.msra.mxu0 0.0
        %2170 = vmatprep.subr.mxu0 0.0
        %2171 = vmatpush1.msra.mxu0 0.0
        %2172 = vmatprep.subr.mxu0 0.0
        %2173 = vmatpush1.msra.mxu0 0.0
        %2174 = vmatprep.subr.mxu0 0.0
        %2175 = vmatpush1.msra.mxu0 0.0
        %2176 = vmatprep.subr.mxu0 0.0
        %2177 = vmatpush1.msra.mxu0 0.0
        %2178 = vmatprep.subr.mxu0 0.0
        %2179 = vmatpush1.msra.mxu0 0.0
        %2180 = vmatprep.subr.mxu0 0.0
        %2181 = vmatpush1.msra.mxu0 0.0
        %2182 = vmatprep.subr.mxu0 0.0
        %2183 = vmatpush1.msra.mxu0 0.0
        %2184 = vmatprep.subr.mxu0 0.0
        %2185 = vmatpush1.msra.mxu0 0.0
        %2186 = vmatprep.subr.mxu0 0.0
        %2187 = vmatpush1.msra.mxu0 0.0
        %2188 = vmatprep.subr.mxu0 0.0
        %2189 = vmatpush1.msra.mxu0 0.0
        %2190 = vmatprep.subr.mxu0 0.0
        %2191 = vmatpush1.msra.mxu0 0.0
        %2192 = vmatprep.subr.mxu0 0.0
        %2193 = vmatpush1.msra.mxu0 0.0
        %2194 = vmatprep.subr.mxu0 0.0
        %2195 = vmatpush1.msra.mxu0 0.0
        %2196 = vmatprep.subr.mxu0 0.0
        %2197 = vmatpush1.msra.mxu0 0.0
        %2198 = vmatprep.subr.mxu0 0.0
        %2199 = vmatpush1.msra.mxu0 0.0
        %2200 = vmatprep.subr.mxu0 0.0
        %2201 = vmatpush1.msra.mxu0 0.0
        %2202 = vmatprep.subr.mxu0 0.0
        %2203 = vmatpush1.msra.mxu0 0.0
        %2204 = vmatprep.subr.mxu0 0.0
        %2205 = vmatpush1.msra.mxu0 0.0
        %2206 = vmatprep.subr.mxu0 0.0
        %2207 = vmatpush1.msra.mxu0 0.0
        %2208 = vmatprep.subr.mxu0 0.0
        %2209 = vmatpush1.msra.mxu0 0.0
        %2210 = vmatprep.subr.mxu0 0.0
        %2211 = vmatpush1.msra.mxu0 0.0
        %2212 = vmatprep.subr.mxu0 0.0
        %2213 = vmatpush1.msra.mxu0 0.0
        %2214 = vmatprep.subr.mxu0 0.0
        %2215 = vmatpush1.msra.mxu0 0.0
        %2216 = vmatprep.mubr.f32.mxu0 0.0
        %2217 = vmatmul.mubr.f32.gmra.mrb[0].mxu0 %v2146
        %v2218 = vpop.f32.mrb[0].mxu0
        %v2219 = vadd.f32 0.0, %v2218
        %v2220 = vpop.f32.mrb[0].mxu0
        %2221 = vdwg.mxu0
        %v2222 = vld [vmem:[#allocation4 + $0x2c8] sm:$0xff]
        %v2223 = vld [vmem:[#allocation4 + $0x2d0] sm:$0xff]
        %v2224 = vld [vmem:[#allocation4 + $0x2d8] sm:$0xff]
        %v2225 = vld [vmem:[#allocation4 + $0x2e0] sm:$0xff]
        %v2226 = vld [vmem:[#allocation4 + $0x2e8] sm:$0xff]
        %v2227 = vld [vmem:[#allocation4 + $0x2f0] sm:$0xff]
        %v2228 = vld [vmem:[#allocation4 + $0x2f8] sm:$0x1]
        %v2229 = vlaneseq
        %v2230 = vshrl.u32 %v2229, 7
        %v2231 = vsub.s32 0, %v2230
        %v2232 = vrot.slane %v2228, %v2231
        %2233 = vmatprep.subr.mxu0 0.0
        %2234 = vmatpush1.msra.mxu0 %v2224
        %2235 = vmatprep.subr.mxu0 0.0
        %2236 = vmatpush1.msra.mxu0 %v2225
        %2237 = vmatprep.subr.mxu0 0.0
        %2238 = vmatpush1.msra.mxu0 %v2226
        %2239 = vmatprep.subr.mxu0 0.0
        %2240 = vmatpush1.msra.mxu0 %v2227
        %2241 = vmatprep.subr.mxu0 0.0
        %2242 = vmatpush1.msra.mxu0 0.0
        %2243 = vmatprep.subr.mxu0 0.0
        %2244 = vmatpush1.msra.mxu0 0.0
        %2245 = vmatprep.subr.mxu0 0.0
        %2246 = vmatpush1.msra.mxu0 0.0
        %2247 = vmatprep.subr.mxu0 0.0
        %2248 = vmatpush1.msra.mxu0 0.0
        %2249 = vmatprep.subr.mxu0 0.0
        %2250 = vmatpush1.msra.mxu0 0.0
        %2251 = vmatprep.subr.mxu0 0.0
        %2252 = vmatpush1.msra.mxu0 0.0
        %2253 = vmatprep.subr.mxu0 0.0
        %2254 = vmatpush1.msra.mxu0 0.0
        %2255 = vmatprep.subr.mxu0 0.0
        %2256 = vmatpush1.msra.mxu0 0.0
        %2257 = vmatprep.subr.mxu0 0.0
        %2258 = vmatpush1.msra.mxu0 0.0
        %2259 = vmatprep.subr.mxu0 0.0
        %2260 = vmatpush1.msra.mxu0 0.0
        %2261 = vmatprep.subr.mxu0 0.0
        %2262 = vmatpush1.msra.mxu0 0.0
        %2263 = vmatprep.subr.mxu0 0.0
        %2264 = vmatpush1.msra.mxu0 0.0
        %2265 = vmatprep.subr.mxu0 0.0
        %2266 = vmatpush1.msra.mxu0 0.0
        %2267 = vmatprep.subr.mxu0 0.0
        %2268 = vmatpush1.msra.mxu0 0.0
        %2269 = vmatprep.subr.mxu0 0.0
        %2270 = vmatpush1.msra.mxu0 0.0
        %2271 = vmatprep.subr.mxu0 0.0
        %2272 = vmatpush1.msra.mxu0 0.0
        %2273 = vmatprep.subr.mxu0 0.0
        %2274 = vmatpush1.msra.mxu0 0.0
        %2275 = vmatprep.subr.mxu0 0.0
        %2276 = vmatpush1.msra.mxu0 0.0
        %2277 = vmatprep.subr.mxu0 0.0
        %2278 = vmatpush1.msra.mxu0 0.0
        %2279 = vmatprep.subr.mxu0 0.0
        %2280 = vmatpush1.msra.mxu0 0.0
        %2281 = vmatprep.subr.mxu0 0.0
        %2282 = vmatpush1.msra.mxu0 0.0
        %2283 = vmatprep.subr.mxu0 0.0
        %2284 = vmatpush1.msra.mxu0 0.0
        %2285 = vmatprep.subr.mxu0 0.0
        %2286 = vmatpush1.msra.mxu0 0.0
        %2287 = vmatprep.subr.mxu0 0.0
        %2288 = vmatpush1.msra.mxu0 0.0
        %2289 = vmatprep.subr.mxu0 0.0
        %2290 = vmatpush1.msra.mxu0 0.0
        %2291 = vmatprep.subr.mxu0 0.0
        %2292 = vmatpush1.msra.mxu0 0.0
        %2293 = vmatprep.subr.mxu0 0.0
        %2294 = vmatpush1.msra.mxu0 0.0
        %2295 = vmatprep.subr.mxu0 0.0
        %2296 = vmatpush1.msra.mxu0 0.0
        %2297 = vmatprep.mubr.f32.mxu0 0.0
        %2298 = vmatmul.mubr.f32.gmra.mrb[0].mxu0 %v1826
        %v2299 = vpop.f32.mrb[0].mxu0
        %v2300 = vadd.f32 %v2232, %v2299
        %v2301 = vpop.f32.mrb[0].mxu0
        %2302 = vdwg.mxu0
        %v2303 = vld [vmem:[#allocation4 + $0x300] sm:$0xff]
        %v2304 = vld [vmem:[#allocation4 + $0x308] sm:$0xff]
        %v2305 = vld [vmem:[#allocation4 + $0x310] sm:$0xff]
        %v2306 = vld [vmem:[#allocation4 + $0x318] sm:$0xff]
        %v2307 = vld [vmem:[#allocation4 + $0x320] sm:$0x1]
        %v2308 = vlaneseq
        %v2309 = vshrl.u32 %v2308, 7
        %v2310 = vsub.s32 0, %v2309
        %v2311 = vrot.slane %v2307, %v2310
        %2312 = vmatprep.subr.mxu0 0.0
        %2313 = vmatpush1.msra.mxu0 %v2303
        %2314 = vmatprep.subr.mxu0 0.0
        %2315 = vmatpush1.msra.mxu0 %v2304
        %2316 = vmatprep.subr.mxu0 0.0
        %2317 = vmatpush1.msra.mxu0 %v2305
        %2318 = vmatprep.subr.mxu0 0.0
        %2319 = vmatpush1.msra.mxu0 %v2306
        %2320 = vmatprep.subr.mxu0 0.0
        %2321 = vmatpush1.msra.mxu0 0.0
        %2322 = vmatprep.subr.mxu0 0.0
        %2323 = vmatpush1.msra.mxu0 0.0
        %2324 = vmatprep.subr.mxu0 0.0
        %2325 = vmatpush1.msra.mxu0 0.0
        %2326 = vmatprep.subr.mxu0 0.0
        %2327 = vmatpush1.msra.mxu0 0.0
        %2328 = vmatprep.subr.mxu0 0.0
        %2329 = vmatpush1.msra.mxu0 0.0
        %2330 = vmatprep.subr.mxu0 0.0
        %2331 = vmatpush1.msra.mxu0 0.0
        %2332 = vmatprep.subr.mxu0 0.0
        %2333 = vmatpush1.msra.mxu0 0.0
        %2334 = vmatprep.subr.mxu0 0.0
        %2335 = vmatpush1.msra.mxu0 0.0
        %2336 = vmatprep.subr.mxu0 0.0
        %2337 = vmatpush1.msra.mxu0 0.0
        %2338 = vmatprep.subr.mxu0 0.0
        %2339 = vmatpush1.msra.mxu0 0.0
        %2340 = vmatprep.subr.mxu0 0.0
        %2341 = vmatpush1.msra.mxu0 0.0
        %2342 = vmatprep.subr.mxu0 0.0
        %2343 = vmatpush1.msra.mxu0 0.0
        %2344 = vmatprep.subr.mxu0 0.0
        %2345 = vmatpush1.msra.mxu0 0.0
        %2346 = vmatprep.subr.mxu0 0.0
        %2347 = vmatpush1.msra.mxu0 0.0
        %2348 = vmatprep.subr.mxu0 0.0
        %2349 = vmatpush1.msra.mxu0 0.0
        %2350 = vmatprep.subr.mxu0 0.0
        %2351 = vmatpush1.msra.mxu0 0.0
        %2352 = vmatprep.subr.mxu0 0.0
        %2353 = vmatpush1.msra.mxu0 0.0
        %2354 = vmatprep.subr.mxu0 0.0
        %2355 = vmatpush1.msra.mxu0 0.0
        %2356 = vmatprep.subr.mxu0 0.0
        %2357 = vmatpush1.msra.mxu0 0.0
        %2358 = vmatprep.subr.mxu0 0.0
        %2359 = vmatpush1.msra.mxu0 0.0
        %2360 = vmatprep.subr.mxu0 0.0
        %2361 = vmatpush1.msra.mxu0 0.0
        %2362 = vmatprep.subr.mxu0 0.0
        %2363 = vmatpush1.msra.mxu0 0.0
        %2364 = vmatprep.subr.mxu0 0.0
        %2365 = vmatpush1.msra.mxu0 0.0
        %2366 = vmatprep.subr.mxu0 0.0
        %2367 = vmatpush1.msra.mxu0 0.0
        %2368 = vmatprep.subr.mxu0 0.0
        %2369 = vmatpush1.msra.mxu0 0.0
        %2370 = vmatprep.subr.mxu0 0.0
        %2371 = vmatpush1.msra.mxu0 0.0
        %2372 = vmatprep.subr.mxu0 0.0
        %2373 = vmatpush1.msra.mxu0 0.0
        %2374 = vmatprep.subr.mxu0 0.0
        %2375 = vmatpush1.msra.mxu0 0.0
        %2376 = vmatprep.mubr.f32.mxu0 0.0
        %2377 = vmatmul.mubr.f32.gmra.mrb[0].mxu0 %v1826
        %v2378 = vpop.f32.mrb[0].mxu0
        %v2379 = vadd.f32 %v2311, %v2378
        %v2380 = vpop.f32.mrb[0].mxu0
        %2381 = vdwg.mxu0
        %v2382 = vld [vmem:[#allocation4 + $0x328] sm:$0xff]
        %v2383 = vld [vmem:[#allocation4 + $0x330] sm:$0xff]
        %v2384 = vld [vmem:[#allocation4 + $0x338] sm:$0xff]
        %v2385 = vld [vmem:[#allocation4 + $0x340] sm:$0xff]
        %v2386 = vld [vmem:[#allocation4 + $0x348] sm:$0x1]
        %v2387 = vlaneseq
        %v2388 = vshrl.u32 %v2387, 7
        %v2389 = vsub.s32 0, %v2388
        %v2390 = vrot.slane %v2386, %v2389
        %2391 = vmatprep.subr.mxu0 0.0
        %2392 = vmatpush1.msra.mxu0 %v2382
        %2393 = vmatprep.subr.mxu0 0.0
        %2394 = vmatpush1.msra.mxu0 %v2383
        %2395 = vmatprep.subr.mxu0 0.0
        %2396 = vmatpush1.msra.mxu0 %v2384
        %2397 = vmatprep.subr.mxu0 0.0
        %2398 = vmatpush1.msra.mxu0 %v2385
        %2399 = vmatprep.subr.mxu0 0.0
        %2400 = vmatpush1.msra.mxu0 0.0
        %2401 = vmatprep.subr.mxu0 0.0
        %2402 = vmatpush1.msra.mxu0 0.0
        %2403 = vmatprep.subr.mxu0 0.0
        %2404 = vmatpush1.msra.mxu0 0.0
        %2405 = vmatprep.subr.mxu0 0.0
        %2406 = vmatpush1.msra.mxu0 0.0
        %2407 = vmatprep.subr.mxu0 0.0
        %2408 = vmatpush1.msra.mxu0 0.0
        %2409 = vmatprep.subr.mxu0 0.0
        %2410 = vmatpush1.msra.mxu0 0.0
        %2411 = vmatprep.subr.mxu0 0.0
        %2412 = vmatpush1.msra.mxu0 0.0
        %2413 = vmatprep.subr.mxu0 0.0
        %2414 = vmatpush1.msra.mxu0 0.0
        %2415 = vmatprep.subr.mxu0 0.0
        %2416 = vmatpush1.msra.mxu0 0.0
        %2417 = vmatprep.subr.mxu0 0.0
        %2418 = vmatpush1.msra.mxu0 0.0
        %2419 = vmatprep.subr.mxu0 0.0
        %2420 = vmatpush1.msra.mxu0 0.0
        %2421 = vmatprep.subr.mxu0 0.0
        %2422 = vmatpush1.msra.mxu0 0.0
        %2423 = vmatprep.subr.mxu0 0.0
        %2424 = vmatpush1.msra.mxu0 0.0
        %2425 = vmatprep.subr.mxu0 0.0
        %2426 = vmatpush1.msra.mxu0 0.0
        %2427 = vmatprep.subr.mxu0 0.0
        %2428 = vmatpush1.msra.mxu0 0.0
        %2429 = vmatprep.subr.mxu0 0.0
        %2430 = vmatpush1.msra.mxu0 0.0
        %2431 = vmatprep.subr.mxu0 0.0
        %2432 = vmatpush1.msra.mxu0 0.0
        %2433 = vmatprep.subr.mxu0 0.0
        %2434 = vmatpush1.msra.mxu0 0.0
        %2435 = vmatprep.subr.mxu0 0.0
        %2436 = vmatpush1.msra.mxu0 0.0
        %2437 = vmatprep.subr.mxu0 0.0
        %2438 = vmatpush1.msra.mxu0 0.0
        %2439 = vmatprep.subr.mxu0 0.0
        %2440 = vmatpush1.msra.mxu0 0.0
        %2441 = vmatprep.subr.mxu0 0.0
        %2442 = vmatpush1.msra.mxu0 0.0
        %2443 = vmatprep.subr.mxu0 0.0
        %2444 = vmatpush1.msra.mxu0 0.0
        %2445 = vmatprep.subr.mxu0 0.0
        %2446 = vmatpush1.msra.mxu0 0.0
        %2447 = vmatprep.subr.mxu0 0.0
        %2448 = vmatpush1.msra.mxu0 0.0
        %2449 = vmatprep.subr.mxu0 0.0
        %2450 = vmatpush1.msra.mxu0 0.0
        %2451 = vmatprep.subr.mxu0 0.0
        %2452 = vmatpush1.msra.mxu0 0.0
        %2453 = vmatprep.subr.mxu0 0.0
        %2454 = vmatpush1.msra.mxu0 0.0
        %2455 = vmatprep.mubr.f32.mxu0 0.0
        %2456 = vmatmul.mubr.f32.gmra.mrb[0].mxu0 %v1826
        %v2457 = vpop.f32.mrb[0].mxu0
        %v2458 = vadd.f32 %v2390, %v2457
        %v2459 = vpop.f32.mrb[0].mxu0
        %2460 = vdwg.mxu0
        %v2462 = vsel %vm500, %v2300, 0
        %v2465 = vsel %vm500, %v2379, 0
        %2467 = vmatprep.subr.mxu0 0.0
        %2468 = vmatpush1.xpose.msra.mxu0 %v2465
        %2469 = vmatprep.subr.mxu0 0.0
        %2470 = vmatpush1.xpose.msra.mxu0 0.0
        %2471 = vmatprep.subr.mxu0 0.0
        %2472 = vmatpush1.xpose.msra.mxu0 0.0
        %2473 = vmatprep.subr.mxu0 0.0
        %2474 = vmatpush1.xpose.msra.mxu0 0.0
        %2475 = vmatprep.subr.mxu0 0.0
        %2476 = vmatpush1.xpose.msra.mxu0 0.0
        %2477 = vmatprep.subr.mxu0 0.0
        %2478 = vmatpush1.xpose.msra.mxu0 0.0
        %2479 = vmatprep.subr.mxu0 0.0
        %2480 = vmatpush1.xpose.msra.mxu0 0.0
        %2481 = vmatprep.subr.mxu0 0.0
        %2482 = vmatpush1.xpose.msra.mxu0 0.0
        %2483 = vmatprep.subr.mxu0 0.0
        %2484 = vmatpush1.xpose.msra.mxu0 0.0
        %2485 = vmatprep.subr.mxu0 0.0
        %2486 = vmatpush1.xpose.msra.mxu0 0.0
        %2487 = vmatprep.subr.mxu0 0.0
        %2488 = vmatpush1.xpose.msra.mxu0 0.0
        %2489 = vmatprep.subr.mxu0 0.0
        %2490 = vmatpush1.xpose.msra.mxu0 0.0
        %2491 = vmatprep.subr.mxu0 0.0
        %2492 = vmatpush1.xpose.msra.mxu0 0.0
        %2493 = vmatprep.subr.mxu0 0.0
        %2494 = vmatpush1.xpose.msra.mxu0 0.0
        %2495 = vmatprep.subr.mxu0 0.0
        %2496 = vmatpush1.xpose.msra.mxu0 0.0
        %2497 = vmatprep.subr.mxu0 0.0
        %2498 = vmatpush1.xpose.msra.mxu0 0.0
        %2499 = vmatprep.subr.mxu0 0.0
        %2500 = vmatpush1.xpose.msra.mxu0 0.0
        %2501 = vmatprep.subr.mxu0 0.0
        %2502 = vmatpush1.xpose.msra.mxu0 0.0
        %2503 = vmatprep.subr.mxu0 0.0
        %2504 = vmatpush1.xpose.msra.mxu0 0.0
        %2505 = vmatprep.subr.mxu0 0.0
        %2506 = vmatpush1.xpose.msra.mxu0 0.0
        %2507 = vmatprep.subr.mxu0 0.0
        %2508 = vmatpush1.xpose.msra.mxu0 0.0
        %2509 = vmatprep.subr.mxu0 0.0
        %2510 = vmatpush1.xpose.msra.mxu0 0.0
        %2511 = vmatprep.subr.mxu0 0.0
        %2512 = vmatpush1.xpose.msra.mxu0 0.0
        %2513 = vmatprep.subr.mxu0 0.0
        %2514 = vmatpush1.xpose.msra.mxu0 0.0
        %2515 = vmatprep.subr.mxu0 0.0
        %2516 = vmatpush1.xpose.msra.mxu0 0.0
        %2517 = vmatprep.subr.mxu0 0.0
        %2518 = vmatpush1.xpose.msra.mxu0 0.0
        %2519 = vmatprep.subr.mxu0 0.0
        %2520 = vmatpush1.xpose.msra.mxu0 0.0
        %2521 = vmatprep.subr.mxu0 0.0
        %2522 = vmatpush1.xpose.msra.mxu0 0.0
        %2523 = vmatprep.subr.mxu0 0.0
        %2524 = vmatpush1.xpose.msra.mxu0 0.0
        %2525 = vmatprep.subr.mxu0 0.0
        %2526 = vmatpush1.xpose.msra.mxu0 0.0
        %2527 = vmatprep.subr.mxu0 0.0
        %2528 = vmatpush1.xpose.msra.mxu0 0.0
        %2529 = vmatprep.subr.mxu0 0.0
        %2530 = vmatpush1.xpose.msra.mxu0 0.0
        %2531 = vmatprep.mubr.f32.mxu0 0.0
        %2532 = vmatmul.mubr.f32.gmra.mrb[0].mxu0 %v2462
        %v2533 = vpop.f32.mrb[0].mxu0
        %v2534 = vadd.f32 0.0, %v2533
        %v2535 = vpop.f32.mrb[0].mxu0
        %2536 = vdwg.mxu0
        %v2537 = vsel %vm2132, %v2534, -inf
        %2538 = vmax.xlane.f32.xlu0 %v2537
        %v2539 = vpop.xlane.xlu0 %2538
        %v2540 = vsub.f32 %v2534, %v2539
        %v2541 = vmul.f32 %v2540, 1.442695
        %v2542 = vpow.pop %v2541
        %v2543 = vsel %vm2132, %v2542, 0.0
        %2544 = vadd.xlane.f32.xlu0 %v2543
        %v2545 = vpop.xlane.xlu0 %2544
        %v2546 = vrcp.pop %v2545
        %v2547 = vmul.f32 %v2542, %v2546
        %v2549 = vsel %vm2144, %v2547, 0
        %v2552 = vsel %vm2148, %v2458, 0
        %2554 = vmatprep.subr.mxu0 0.0
        %2555 = vmatpush1.msra.mxu0 %v2552
        %2556 = vmatprep.subr.mxu0 0.0
        %2557 = vmatpush1.msra.mxu0 0.0
        %2558 = vmatprep.subr.mxu0 0.0
        %2559 = vmatpush1.msra.mxu0 0.0
        %2560 = vmatprep.subr.mxu0 0.0
        %2561 = vmatpush1.msra.mxu0 0.0
        %2562 = vmatprep.subr.mxu0 0.0
        %2563 = vmatpush1.msra.mxu0 0.0
        %2564 = vmatprep.subr.mxu0 0.0
        %2565 = vmatpush1.msra.mxu0 0.0
        %2566 = vmatprep.subr.mxu0 0.0
        %2567 = vmatpush1.msra.mxu0 0.0
        %2568 = vmatprep.subr.mxu0 0.0
        %2569 = vmatpush1.msra.mxu0 0.0
        %2570 = vmatprep.subr.mxu0 0.0
        %2571 = vmatpush1.msra.mxu0 0.0
        %2572 = vmatprep.subr.mxu0 0.0
        %2573 = vmatpush1.msra.mxu0 0.0
        %2574 = vmatprep.subr.mxu0 0.0
        %2575 = vmatpush1.msra.mxu0 0.0
        %2576 = vmatprep.subr.mxu0 0.0
        %2577 = vmatpush1.msra.mxu0 0.0
        %2578 = vmatprep.subr.mxu0 0.0
        %2579 = vmatpush1.msra.mxu0 0.0
        %2580 = vmatprep.subr.mxu0 0.0
        %2581 = vmatpush1.msra.mxu0 0.0
        %2582 = vmatprep.subr.mxu0 0.0
        %2583 = vmatpush1.msra.mxu0 0.0
        %2584 = vmatprep.subr.mxu0 0.0
        %2585 = vmatpush1.msra.mxu0 0.0
        %2586 = vmatprep.subr.mxu0 0.0
        %2587 = vmatpush1.msra.mxu0 0.0
        %2588 = vmatprep.subr.mxu0 0.0
        %2589 = vmatpush1.msra.mxu0 0.0
        %2590 = vmatprep.subr.mxu0 0.0
        %2591 = vmatpush1.msra.mxu0 0.0
        %2592 = vmatprep.subr.mxu0 0.0
        %2593 = vmatpush1.msra.mxu0 0.0
        %2594 = vmatprep.subr.mxu0 0.0
        %2595 = vmatpush1.msra.mxu0 0.0
        %2596 = vmatprep.subr.mxu0 0.0
        %2597 = vmatpush1.msra.mxu0 0.0
        %2598 = vmatprep.subr.mxu0 0.0
        %2599 = vmatpush1.msra.mxu0 0.0
        %2600 = vmatprep.subr.mxu0 0.0
        %2601 = vmatpush1.msra.mxu0 0.0
        %2602 = vmatprep.subr.mxu0 0.0
        %2603 = vmatpush1.msra.mxu0 0.0
        %2604 = vmatprep.subr.mxu0 0.0
        %2605 = vmatpush1.msra.mxu0 0.0
        %2606 = vmatprep.subr.mxu0 0.0
        %2607 = vmatpush1.msra.mxu0 0.0
        %2608 = vmatprep.subr.mxu0 0.0
        %2609 = vmatpush1.msra.mxu0 0.0
        %2610 = vmatprep.subr.mxu0 0.0
        %2611 = vmatpush1.msra.mxu0 0.0
        %2612 = vmatprep.subr.mxu0 0.0
        %2613 = vmatpush1.msra.mxu0 0.0
        %2614 = vmatprep.subr.mxu0 0.0
        %2615 = vmatpush1.msra.mxu0 0.0
        %2616 = vmatprep.subr.mxu0 0.0
        %2617 = vmatpush1.msra.mxu0 0.0
        %2618 = vmatprep.mubr.f32.mxu0 0.0
        %2619 = vmatmul.mubr.f32.gmra.mrb[0].mxu0 %v2549
        %v2620 = vpop.f32.mrb[0].mxu0
        %v2621 = vadd.f32 0.0, %v2620
        %v2622 = vpop.f32.mrb[0].mxu0
        %2623 = vdwg.mxu0
        %v2624 = vld [vmem:[#allocation4 + $0x350] sm:$0xff]
        %v2625 = vld [vmem:[#allocation4 + $0x358] sm:$0xff]
        %v2627 = vsel %vm500, %v2621, 0
        %2629 = vmatprep.subr.mxu0 0.0
        %2630 = vmatpush1.msra.mxu0 %v2624
        %2631 = vmatprep.subr.mxu0 0.0
        %2632 = vmatpush1.msra.mxu0 %v2625
        %2633 = vmatprep.subr.mxu0 0.0
        %2634 = vmatpush1.msra.mxu0 0.0
        %2635 = vmatprep.subr.mxu0 0.0
        %2636 = vmatpush1.msra.mxu0 0.0
        %2637 = vmatprep.subr.mxu0 0.0
        %2638 = vmatpush1.msra.mxu0 0.0
        %2639 = vmatprep.subr.mxu0 0.0
        %2640 = vmatpush1.msra.mxu0 0.0
        %2641 = vmatprep.subr.mxu0 0.0
        %2642 = vmatpush1.msra.mxu0 0.0
        %2643 = vmatprep.subr.mxu0 0.0
        %2644 = vmatpush1.msra.mxu0 0.0
        %2645 = vmatprep.subr.mxu0 0.0
        %2646 = vmatpush1.msra.mxu0 0.0
        %2647 = vmatprep.subr.mxu0 0.0
        %2648 = vmatpush1.msra.mxu0 0.0
        %2649 = vmatprep.subr.mxu0 0.0
        %2650 = vmatpush1.msra.mxu0 0.0
        %2651 = vmatprep.subr.mxu0 0.0
        %2652 = vmatpush1.msra.mxu0 0.0
        %2653 = vmatprep.subr.mxu0 0.0
        %2654 = vmatpush1.msra.mxu0 0.0
        %2655 = vmatprep.subr.mxu0 0.0
        %2656 = vmatpush1.msra.mxu0 0.0
        %2657 = vmatprep.subr.mxu0 0.0
        %2658 = vmatpush1.msra.mxu0 0.0
        %2659 = vmatprep.subr.mxu0 0.0
        %2660 = vmatpush1.msra.mxu0 0.0
        %2661 = vmatprep.subr.mxu0 0.0
        %2662 = vmatpush1.msra.mxu0 0.0
        %2663 = vmatprep.subr.mxu0 0.0
        %2664 = vmatpush1.msra.mxu0 0.0
        %2665 = vmatprep.subr.mxu0 0.0
        %2666 = vmatpush1.msra.mxu0 0.0
        %2667 = vmatprep.subr.mxu0 0.0
        %2668 = vmatpush1.msra.mxu0 0.0
        %2669 = vmatprep.subr.mxu0 0.0
        %2670 = vmatpush1.msra.mxu0 0.0
        %2671 = vmatprep.subr.mxu0 0.0
        %2672 = vmatpush1.msra.mxu0 0.0
        %2673 = vmatprep.subr.mxu0 0.0
        %2674 = vmatpush1.msra.mxu0 0.0
        %2675 = vmatprep.subr.mxu0 0.0
        %2676 = vmatpush1.msra.mxu0 0.0
        %2677 = vmatprep.subr.mxu0 0.0
        %2678 = vmatpush1.msra.mxu0 0.0
        %2679 = vmatprep.subr.mxu0 0.0
        %2680 = vmatpush1.msra.mxu0 0.0
        %2681 = vmatprep.subr.mxu0 0.0
        %2682 = vmatpush1.msra.mxu0 0.0
        %2683 = vmatprep.subr.mxu0 0.0
        %2684 = vmatpush1.msra.mxu0 0.0
        %2685 = vmatprep.subr.mxu0 0.0
        %2686 = vmatpush1.msra.mxu0 0.0
        %2687 = vmatprep.subr.mxu0 0.0
        %2688 = vmatpush1.msra.mxu0 0.0
        %2689 = vmatprep.subr.mxu0 0.0
        %2690 = vmatpush1.msra.mxu0 0.0
        %2691 = vmatprep.subr.mxu0 0.0
        %2692 = vmatpush1.msra.mxu0 0.0
        %2693 = vmatprep.mubr.f32.mxu0 0.0
        %2694 = vmatmul.mubr.f32.gmra.mrb[0].mxu0 %v2627
        %v2695 = vpop.f32.mrb[0].mxu0
        %v2696 = vadd.f32 0.0, %v2695
        %v2697 = vpop.f32.mrb[0].mxu0
        %2698 = vdwg.mxu0
        %v2700 = vsel %vm500, %v2219, 0
        %2702 = vmatprep.subr.mxu0 0.0
        %2703 = vmatpush1.msra.mxu0 %v2222
        %2704 = vmatprep.subr.mxu0 0.0
        %2705 = vmatpush1.msra.mxu0 %v2223
        %2706 = vmatprep.subr.mxu0 0.0
        %2707 = vmatpush1.msra.mxu0 0.0
        %2708 = vmatprep.subr.mxu0 0.0
        %2709 = vmatpush1.msra.mxu0 0.0
        %2710 = vmatprep.subr.mxu0 0.0
        %2711 = vmatpush1.msra.mxu0 0.0
        %2712 = vmatprep.subr.mxu0 0.0
        %2713 = vmatpush1.msra.mxu0 0.0
        %2714 = vmatprep.subr.mxu0 0.0
        %2715 = vmatpush1.msra.mxu0 0.0
        %2716 = vmatprep.subr.mxu0 0.0
        %2717 = vmatpush1.msra.mxu0 0.0
        %2718 = vmatprep.subr.mxu0 0.0
        %2719 = vmatpush1.msra.mxu0 0.0
        %2720 = vmatprep.subr.mxu0 0.0
        %2721 = vmatpush1.msra.mxu0 0.0
        %2722 = vmatprep.subr.mxu0 0.0
        %2723 = vmatpush1.msra.mxu0 0.0
        %2724 = vmatprep.subr.mxu0 0.0
        %2725 = vmatpush1.msra.mxu0 0.0
        %2726 = vmatprep.subr.mxu0 0.0
        %2727 = vmatpush1.msra.mxu0 0.0
        %2728 = vmatprep.subr.mxu0 0.0
        %2729 = vmatpush1.msra.mxu0 0.0
        %2730 = vmatprep.subr.mxu0 0.0
        %2731 = vmatpush1.msra.mxu0 0.0
        %2732 = vmatprep.subr.mxu0 0.0
        %2733 = vmatpush1.msra.mxu0 0.0
        %2734 = vmatprep.subr.mxu0 0.0
        %2735 = vmatpush1.msra.mxu0 0.0
        %2736 = vmatprep.subr.mxu0 0.0
        %2737 = vmatpush1.msra.mxu0 0.0
        %2738 = vmatprep.subr.mxu0 0.0
        %2739 = vmatpush1.msra.mxu0 0.0
        %2740 = vmatprep.subr.mxu0 0.0
        %2741 = vmatpush1.msra.mxu0 0.0
        %2742 = vmatprep.subr.mxu0 0.0
        %2743 = vmatpush1.msra.mxu0 0.0
        %2744 = vmatprep.subr.mxu0 0.0
        %2745 = vmatpush1.msra.mxu0 0.0
        %2746 = vmatprep.subr.mxu0 0.0
        %2747 = vmatpush1.msra.mxu0 0.0
        %2748 = vmatprep.subr.mxu0 0.0
        %2749 = vmatpush1.msra.mxu0 0.0
        %2750 = vmatprep.subr.mxu0 0.0
        %2751 = vmatpush1.msra.mxu0 0.0
        %2752 = vmatprep.subr.mxu0 0.0
        %2753 = vmatpush1.msra.mxu0 0.0
        %2754 = vmatprep.subr.mxu0 0.0
        %2755 = vmatpush1.msra.mxu0 0.0
        %2756 = vmatprep.subr.mxu0 0.0
        %2757 = vmatpush1.msra.mxu0 0.0
        %2758 = vmatprep.subr.mxu0 0.0
        %2759 = vmatpush1.msra.mxu0 0.0
        %2760 = vmatprep.subr.mxu0 0.0
        %2761 = vmatpush1.msra.mxu0 0.0
        %2762 = vmatprep.subr.mxu0 0.0
        %2763 = vmatpush1.msra.mxu0 0.0
        %2764 = vmatprep.subr.mxu0 0.0
        %2765 = vmatpush1.msra.mxu0 0.0
        %2766 = vmatprep.mubr.f32.mxu0 0.0
        %2767 = vmatmul.mubr.f32.gmra.mrb[0].mxu0 %v2700
        %v2768 = vpop.f32.mrb[0].mxu0
        %v2769 = vadd.f32 %v2696, %v2768
        %v2770 = vpop.f32.mrb[0].mxu0
        %2771 = vdwg.mxu0
        %v2772 = vld [vmem:[#allocation4 + $0x360] sm:$0x1]
        %v2773 = vlaneseq
        %v2774 = vshrl.u32 %v2773, 7
        %v2775 = vsub.s32 0, %v2774
        %v2776 = vrot.slane %v2772, %v2775
        %v2777 = vadd.f32 %v2769, %v2776
        %v2778 = vadd.f32 %v1815, %v2777
        %vm2779 = vcmask 254976
        %v2780 = vsel %vm2779, %v2778, 0.0
        %2781 = vadd.xlane.f32.xlu0 %v2780
        %v2782 = vpop.xlane.xlu0 %2781
        %v2783 = vmul.f32 %v2782, %v1323
        %v2784 = vsub.f32 %v2778, %v2783
        %v2785 = vmul.f32 %v2784, %v2784
        %v2786 = vsel %vm2779, %v2785, 0.0
        %2787 = vadd.xlane.f32.xlu0 %v2786
        %v2788 = vpop.xlane.xlu0 %2787
        %v2789 = vmul.f32 %v2788, %v1323
        %v2790 = vadd.f32 %v2789, 1e-05
        %v2791 = vrsqrt.pop %v2790
        %v2792 = vmul.f32 %v2784, %v2791
        %v2793 = vld [vmem:[#allocation4 + $0x368] sm:$0x1]
        %v2794 = vlaneseq
        %v2795 = vshrl.u32 %v2794, 7
        %v2796 = vsub.s32 0, %v2795
        %v2797 = vrot.slane %v2793, %v2796
        %v2798 = vmul.f32 %v2792, %v2797
        %v2799 = vld [vmem:[#allocation4 + $0x370] sm:$0x1]
        %v2800 = vlaneseq
        %v2801 = vshrl.u32 %v2800, 7
        %v2802 = vsub.s32 0, %v2801
        %v2803 = vrot.slane %v2799, %v2802
        %v2804 = vadd.f32 %v2798, %v2803
        %v2805 = vld [vmem:[#allocation4 + $0x378] sm:$0xff]
        %v2806 = vld [vmem:[#allocation4 + $0x380] sm:$0xff]
        %v2807 = vld [vmem:[#allocation4 + $0x388] sm:$0xff]
        %v2808 = vld [vmem:[#allocation4 + $0x390] sm:$0xff]
        %v2809 = vld [vmem:[#allocation4 + $0x398] sm:$0x1]
        %v2810 = vlaneseq
        %v2811 = vshrl.u32 %v2810, 7
        %v2812 = vsub.s32 0, %v2811
        %v2813 = vrot.slane %v2809, %v2812
        %v2815 = vsel %vm235, %v2804, 0
        %2817 = vmatprep.subr.mxu0 0.0
        %2818 = vmatpush1.msra.mxu0 %v2805
        %2819 = vmatprep.subr.mxu0 0.0
        %2820 = vmatpush1.msra.mxu0 %v2806
        %2821 = vmatprep.subr.mxu0 0.0
        %2822 = vmatpush1.msra.mxu0 %v2807
        %2823 = vmatprep.subr.mxu0 0.0
        %2824 = vmatpush1.msra.mxu0 %v2808
        %2825 = vmatprep.subr.mxu0 0.0
        %2826 = vmatpush1.msra.mxu0 0.0
        %2827 = vmatprep.subr.mxu0 0.0
        %2828 = vmatpush1.msra.mxu0 0.0
        %2829 = vmatprep.subr.mxu0 0.0
        %2830 = vmatpush1.msra.mxu0 0.0
        %2831 = vmatprep.subr.mxu0 0.0
        %2832 = vmatpush1.msra.mxu0 0.0
        %2833 = vmatprep.subr.mxu0 0.0
        %2834 = vmatpush1.msra.mxu0 0.0
        %2835 = vmatprep.subr.mxu0 0.0
        %2836 = vmatpush1.msra.mxu0 0.0
        %2837 = vmatprep.subr.mxu0 0.0
        %2838 = vmatpush1.msra.mxu0 0.0
        %2839 = vmatprep.subr.mxu0 0.0
        %2840 = vmatpush1.msra.mxu0 0.0
        %2841 = vmatprep.subr.mxu0 0.0
        %2842 = vmatpush1.msra.mxu0 0.0
        %2843 = vmatprep.subr.mxu0 0.0
        %2844 = vmatpush1.msra.mxu0 0.0
        %2845 = vmatprep.subr.mxu0 0.0
        %2846 = vmatpush1.msra.mxu0 0.0
        %2847 = vmatprep.subr.mxu0 0.0
        %2848 = vmatpush1.msra.mxu0 0.0
        %2849 = vmatprep.subr.mxu0 0.0
        %2850 = vmatpush1.msra.mxu0 0.0
        %2851 = vmatprep.subr.mxu0 0.0
        %2852 = vmatpush1.msra.mxu0 0.0
        %2853 = vmatprep.subr.mxu0 0.0
        %2854 = vmatpush1.msra.mxu0 0.0
        %2855 = vmatprep.subr.mxu0 0.0
        %2856 = vmatpush1.msra.mxu0 0.0
        %2857 = vmatprep.subr.mxu0 0.0
        %2858 = vmatpush1.msra.mxu0 0.0
        %2859 = vmatprep.subr.mxu0 0.0
        %2860 = vmatpush1.msra.mxu0 0.0
        %2861 = vmatprep.subr.mxu0 0.0
        %2862 = vmatpush1.msra.mxu0 0.0
        %2863 = vmatprep.subr.mxu0 0.0
        %2864 = vmatpush1.msra.mxu0 0.0
        %2865 = vmatprep.subr.mxu0 0.0
        %2866 = vmatpush1.msra.mxu0 0.0
        %2867 = vmatprep.subr.mxu0 0.0
        %2868 = vmatpush1.msra.mxu0 0.0
        %2869 = vmatprep.subr.mxu0 0.0
        %2870 = vmatpush1.msra.mxu0 0.0
        %2871 = vmatprep.subr.mxu0 0.0
        %2872 = vmatpush1.msra.mxu0 0.0
        %2873 = vmatprep.subr.mxu0 0.0
        %2874 = vmatpush1.msra.mxu0 0.0
        %2875 = vmatprep.subr.mxu0 0.0
        %2876 = vmatpush1.msra.mxu0 0.0
        %2877 = vmatprep.subr.mxu0 0.0
        %2878 = vmatpush1.msra.mxu0 0.0
        %2879 = vmatprep.subr.mxu0 0.0
        %2880 = vmatpush1.msra.mxu0 0.0
        %2881 = vmatprep.mubr.f32.mxu0 0.0
        %2882 = vmatmul.mubr.f32.gmra.mrb[0].mxu0 %v2815
        %v2883 = vpop.f32.mrb[0].mxu0
        %v2884 = vadd.f32 %v2813, %v2883
        %v2885 = vpop.f32.mrb[0].mxu0
        %2886 = vdwg.mxu0
        %v2887 = vmax.f32 %v2884, 0.0
        %v2888 = vld [vmem:[#allocation4 + $0x3a0] sm:$0xff]
        %v2889 = vld [vmem:[#allocation4 + $0x3a8] sm:$0xff]
        %v2890 = vld [vmem:[#allocation4 + $0x3b0] sm:$0xff]
        %v2891 = vld [vmem:[#allocation4 + $0x3b8] sm:$0xff]
        %v2892 = vld [vmem:[#allocation4 + $0x3c0] sm:$0xff]
        %v2893 = vld [vmem:[#allocation4 + $0x3c8] sm:$0xff]
        %v2894 = vld [vmem:[#allocation4 + $0x3d0] sm:$0xff]
        %v2895 = vld [vmem:[#allocation4 + $0x3d8] sm:$0xff]
        %v2896 = vld [vmem:[#allocation4 + $0x3e0] sm:$0x1]
        %v2897 = vlaneseq
        %v2898 = vshrl.u32 %v2897, 7
        %v2899 = vsub.s32 0, %v2898
        %v2900 = vrot.slane %v2896, %v2899
        %v2902 = vsel %vm1463, %v2887, 0
        %2904 = vmatprep.subr.mxu0 0.0
        %2905 = vmatpush1.msra.mxu0 %v2888
        %2906 = vmatprep.subr.mxu0 0.0
        %2907 = vmatpush1.msra.mxu0 %v2889
        %2908 = vmatprep.subr.mxu0 0.0
        %2909 = vmatpush1.msra.mxu0 %v2890
        %2910 = vmatprep.subr.mxu0 0.0
        %2911 = vmatpush1.msra.mxu0 %v2891
        %2912 = vmatprep.subr.mxu0 0.0
        %2913 = vmatpush1.msra.mxu0 %v2892
        %2914 = vmatprep.subr.mxu0 0.0
        %2915 = vmatpush1.msra.mxu0 %v2893
        %2916 = vmatprep.subr.mxu0 0.0
        %2917 = vmatpush1.msra.mxu0 %v2894
        %2918 = vmatprep.subr.mxu0 0.0
        %2919 = vmatpush1.msra.mxu0 %v2895
        %2920 = vmatprep.subr.mxu0 0.0
        %2921 = vmatpush1.msra.mxu0 0.0
        %2922 = vmatprep.subr.mxu0 0.0
        %2923 = vmatpush1.msra.mxu0 0.0
        %2924 = vmatprep.subr.mxu0 0.0
        %2925 = vmatpush1.msra.mxu0 0.0
        %2926 = vmatprep.subr.mxu0 0.0
        %2927 = vmatpush1.msra.mxu0 0.0
        %2928 = vmatprep.subr.mxu0 0.0
        %2929 = vmatpush1.msra.mxu0 0.0
        %2930 = vmatprep.subr.mxu0 0.0
        %2931 = vmatpush1.msra.mxu0 0.0
        %2932 = vmatprep.subr.mxu0 0.0
        %2933 = vmatpush1.msra.mxu0 0.0
        %2934 = vmatprep.subr.mxu0 0.0
        %2935 = vmatpush1.msra.mxu0 0.0
        %2936 = vmatprep.subr.mxu0 0.0
        %2937 = vmatpush1.msra.mxu0 0.0
        %2938 = vmatprep.subr.mxu0 0.0
        %2939 = vmatpush1.msra.mxu0 0.0
        %2940 = vmatprep.subr.mxu0 0.0
        %2941 = vmatpush1.msra.mxu0 0.0
        %2942 = vmatprep.subr.mxu0 0.0
        %2943 = vmatpush1.msra.mxu0 0.0
        %2944 = vmatprep.subr.mxu0 0.0
        %2945 = vmatpush1.msra.mxu0 0.0
        %2946 = vmatprep.subr.mxu0 0.0
        %2947 = vmatpush1.msra.mxu0 0.0
        %2948 = vmatprep.subr.mxu0 0.0
        %2949 = vmatpush1.msra.mxu0 0.0
        %2950 = vmatprep.subr.mxu0 0.0
        %2951 = vmatpush1.msra.mxu0 0.0
        %2952 = vmatprep.subr.mxu0 0.0
        %2953 = vmatpush1.msra.mxu0 0.0
        %2954 = vmatprep.subr.mxu0 0.0
        %2955 = vmatpush1.msra.mxu0 0.0
        %2956 = vmatprep.subr.mxu0 0.0
        %2957 = vmatpush1.msra.mxu0 0.0
        %2958 = vmatprep.subr.mxu0 0.0
        %2959 = vmatpush1.msra.mxu0 0.0
        %2960 = vmatprep.subr.mxu0 0.0
        %2961 = vmatpush1.msra.mxu0 0.0
        %2962 = vmatprep.subr.mxu0 0.0
        %2963 = vmatpush1.msra.mxu0 0.0
        %2964 = vmatprep.subr.mxu0 0.0
        %2965 = vmatpush1.msra.mxu0 0.0
        %2966 = vmatprep.subr.mxu0 0.0
        %2967 = vmatpush1.msra.mxu0 0.0
        %2968 = vmatprep.mubr.f32.mxu0 0.0
        %2969 = vmatmul.mubr.f32.gmra.mrb[0].mxu0 %v2902
        %v2970 = vpop.f32.mrb[0].mxu0
        %v2971 = vadd.f32 %v2900, %v2970
        %v2972 = vpop.f32.mrb[0].mxu0
        %2973 = vdwg.mxu0
        %v2974 = vadd.f32 %v2804, %v2971
        %v2975 = vsel %vm2779, %v2974, 0.0
        %2976 = vadd.xlane.f32.xlu0 %v2975
        %v2977 = vpop.xlane.xlu0 %2976
        %v2978 = vmul.f32 %v2977, %v1323
        %v2979 = vsub.f32 %v2974, %v2978
        %v2980 = vmul.f32 %v2979, %v2979
        %v2981 = vsel %vm2779, %v2980, 0.0
        %2982 = vadd.xlane.f32.xlu0 %v2981
        %v2983 = vpop.xlane.xlu0 %2982
        %v2984 = vmul.f32 %v2983, %v1323
        %v2985 = vadd.f32 %v2984, 1e-05
        %v2986 = vrsqrt.pop %v2985
        %v2987 = vmul.f32 %v2979, %v2986
        %v2988 = vld [vmem:[#allocation4 + $0x3e8] sm:$0x1]
        %v2989 = vlaneseq
        %v2990 = vshrl.u32 %v2989, 7
        %v2991 = vsub.s32 0, %v2990
        %v2992 = vrot.slane %v2988, %v2991
        %v2993 = vmul.f32 %v2987, %v2992
        %v2994 = vld [vmem:[#allocation4 + $0x3f0] sm:$0x1]
        %v2995 = vlaneseq
        %v2996 = vshrl.u32 %v2995, 7
        %v2997 = vsub.s32 0, %v2996
        %v2998 = vrot.slane %v2994, %v2997
        %v2999 = vadd.f32 %v2993, %v2998
        %v3000 = vld [vmem:[#allocation4 + $0x80] sm:$0xff]
        %v3001 = vld [vmem:[#allocation4 + $0x3f8] sm:$0xff]
        %v3002 = vld [vmem:[#allocation4 + $0x400] sm:$0xff]
        %v3003 = vld [vmem:[#allocation4 + $0x408] sm:$0xff]
        %v3004 = vld [vmem:[#allocation4 + $0x410] sm:$0xff]
        %v3005 = vld [vmem:[#allocation4 + $0x418] sm:$0x1]
        %v3006 = vlaneseq
        %v3007 = vshrl.u32 %v3006, 7
        %v3008 = vsub.s32 0, %v3007
        %v3009 = vrot.slane %v3005, %v3008
        %v3011 = vsel %vm235, %v3000, 0
        %3013 = vmatprep.subr.mxu0 0.0
        %3014 = vmatpush1.msra.mxu0 %v3001
        %3015 = vmatprep.subr.mxu0 0.0
        %3016 = vmatpush1.msra.mxu0 %v3002
        %3017 = vmatprep.subr.mxu0 0.0
        %3018 = vmatpush1.msra.mxu0 %v3003
        %3019 = vmatprep.subr.mxu0 0.0
        %3020 = vmatpush1.msra.mxu0 %v3004
        %3021 = vmatprep.subr.mxu0 0.0
        %3022 = vmatpush1.msra.mxu0 0.0
        %3023 = vmatprep.subr.mxu0 0.0
        %3024 = vmatpush1.msra.mxu0 0.0
        %3025 = vmatprep.subr.mxu0 0.0
        %3026 = vmatpush1.msra.mxu0 0.0
        %3027 = vmatprep.subr.mxu0 0.0
        %3028 = vmatpush1.msra.mxu0 0.0
        %3029 = vmatprep.subr.mxu0 0.0
        %3030 = vmatpush1.msra.mxu0 0.0
        %3031 = vmatprep.subr.mxu0 0.0
        %3032 = vmatpush1.msra.mxu0 0.0
        %3033 = vmatprep.subr.mxu0 0.0
        %3034 = vmatpush1.msra.mxu0 0.0
        %3035 = vmatprep.subr.mxu0 0.0
        %3036 = vmatpush1.msra.mxu0 0.0
        %3037 = vmatprep.subr.mxu0 0.0
        %3038 = vmatpush1.msra.mxu0 0.0
        %3039 = vmatprep.subr.mxu0 0.0
        %3040 = vmatpush1.msra.mxu0 0.0
        %3041 = vmatprep.subr.mxu0 0.0
        %3042 = vmatpush1.msra.mxu0 0.0
        %3043 = vmatprep.subr.mxu0 0.0
        %3044 = vmatpush1.msra.mxu0 0.0
        %3045 = vmatprep.subr.mxu0 0.0
        %3046 = vmatpush1.msra.mxu0 0.0
        %3047 = vmatprep.subr.mxu0 0.0
        %3048 = vmatpush1.msra.mxu0 0.0
        %3049 = vmatprep.subr.mxu0 0.0
        %3050 = vmatpush1.msra.mxu0 0.0
        %3051 = vmatprep.subr.mxu0 0.0
        %3052 = vmatpush1.msra.mxu0 0.0
        %3053 = vmatprep.subr.mxu0 0.0
        %3054 = vmatpush1.msra.mxu0 0.0
        %3055 = vmatprep.subr.mxu0 0.0
        %3056 = vmatpush1.msra.mxu0 0.0
        %3057 = vmatprep.subr.mxu0 0.0
        %3058 = vmatpush1.msra.mxu0 0.0
        %3059 = vmatprep.subr.mxu0 0.0
        %3060 = vmatpush1.msra.mxu0 0.0
        %3061 = vmatprep.subr.mxu0 0.0
        %3062 = vmatpush1.msra.mxu0 0.0
        %3063 = vmatprep.subr.mxu0 0.0
        %3064 = vmatpush1.msra.mxu0 0.0
        %3065 = vmatprep.subr.mxu0 0.0
        %3066 = vmatpush1.msra.mxu0 0.0
        %3067 = vmatprep.subr.mxu0 0.0
        %3068 = vmatpush1.msra.mxu0 0.0
        %3069 = vmatprep.subr.mxu0 0.0
        %3070 = vmatpush1.msra.mxu0 0.0
        %3071 = vmatprep.subr.mxu0 0.0
        %3072 = vmatpush1.msra.mxu0 0.0
        %3073 = vmatprep.subr.mxu0 0.0
        %3074 = vmatpush1.msra.mxu0 0.0
        %3075 = vmatprep.subr.mxu0 0.0
        %3076 = vmatpush1.msra.mxu0 0.0
        %3077 = vmatprep.mubr.f32.mxu0 0.0
        %3078 = vmatmul.mubr.f32.gmra.mrb[0].mxu0 %v3011
        %v3079 = vpop.f32.mrb[0].mxu0
        %v3080 = vadd.f32 %v3009, %v3079
        %v3081 = vpop.f32.mrb[0].mxu0
        %3082 = vdwg.mxu0
        %v3083 = vld [vmem:[#allocation4 + $0x420] sm:$0xff]
        %v3084 = vld [vmem:[#allocation4 + $0x428] sm:$0xff]
        %v3085 = vld [vmem:[#allocation4 + $0x430] sm:$0xff]
        %v3086 = vld [vmem:[#allocation4 + $0x438] sm:$0xff]
        %v3087 = vld [vmem:[#allocation4 + $0x440] sm:$0x1]
        %v3088 = vlaneseq
        %v3089 = vshrl.u32 %v3088, 7
        %v3090 = vsub.s32 0, %v3089
        %v3091 = vrot.slane %v3087, %v3090
        %3092 = vmatprep.subr.mxu0 0.0
        %3093 = vmatpush1.msra.mxu0 %v3083
        %3094 = vmatprep.subr.mxu0 0.0
        %3095 = vmatpush1.msra.mxu0 %v3084
        %3096 = vmatprep.subr.mxu0 0.0
        %3097 = vmatpush1.msra.mxu0 %v3085
        %3098 = vmatprep.subr.mxu0 0.0
        %3099 = vmatpush1.msra.mxu0 %v3086
        %3100 = vmatprep.subr.mxu0 0.0
        %3101 = vmatpush1.msra.mxu0 0.0
        %3102 = vmatprep.subr.mxu0 0.0
        %3103 = vmatpush1.msra.mxu0 0.0
        %3104 = vmatprep.subr.mxu0 0.0
        %3105 = vmatpush1.msra.mxu0 0.0
        %3106 = vmatprep.subr.mxu0 0.0
        %3107 = vmatpush1.msra.mxu0 0.0
        %3108 = vmatprep.subr.mxu0 0.0
        %3109 = vmatpush1.msra.mxu0 0.0
        %3110 = vmatprep.subr.mxu0 0.0
        %3111 = vmatpush1.msra.mxu0 0.0
        %3112 = vmatprep.subr.mxu0 0.0
        %3113 = vmatpush1.msra.mxu0 0.0
        %3114 = vmatprep.subr.mxu0 0.0
        %3115 = vmatpush1.msra.mxu0 0.0
        %3116 = vmatprep.subr.mxu0 0.0
        %3117 = vmatpush1.msra.mxu0 0.0
        %3118 = vmatprep.subr.mxu0 0.0
        %3119 = vmatpush1.msra.mxu0 0.0
        %3120 = vmatprep.subr.mxu0 0.0
        %3121 = vmatpush1.msra.mxu0 0.0
        %3122 = vmatprep.subr.mxu0 0.0
        %3123 = vmatpush1.msra.mxu0 0.0
        %3124 = vmatprep.subr.mxu0 0.0
        %3125 = vmatpush1.msra.mxu0 0.0
        %3126 = vmatprep.subr.mxu0 0.0
        %3127 = vmatpush1.msra.mxu0 0.0
        %3128 = vmatprep.subr.mxu0 0.0
        %3129 = vmatpush1.msra.mxu0 0.0
        %3130 = vmatprep.subr.mxu0 0.0
        %3131 = vmatpush1.msra.mxu0 0.0
        %3132 = vmatprep.subr.mxu0 0.0
        %3133 = vmatpush1.msra.mxu0 0.0
        %3134 = vmatprep.subr.mxu0 0.0
        %3135 = vmatpush1.msra.mxu0 0.0
        %3136 = vmatprep.subr.mxu0 0.0
        %3137 = vmatpush1.msra.mxu0 0.0
        %3138 = vmatprep.subr.mxu0 0.0
        %3139 = vmatpush1.msra.mxu0 0.0
        %3140 = vmatprep.subr.mxu0 0.0
        %3141 = vmatpush1.msra.mxu0 0.0
        %3142 = vmatprep.subr.mxu0 0.0
        %3143 = vmatpush1.msra.mxu0 0.0
        %3144 = vmatprep.subr.mxu0 0.0
        %3145 = vmatpush1.msra.mxu0 0.0
        %3146 = vmatprep.subr.mxu0 0.0
        %3147 = vmatpush1.msra.mxu0 0.0
        %3148 = vmatprep.subr.mxu0 0.0
        %3149 = vmatpush1.msra.mxu0 0.0
        %3150 = vmatprep.subr.mxu0 0.0
        %3151 = vmatpush1.msra.mxu0 0.0
        %3152 = vmatprep.subr.mxu0 0.0
        %3153 = vmatpush1.msra.mxu0 0.0
        %3154 = vmatprep.subr.mxu0 0.0
        %3155 = vmatpush1.msra.mxu0 0.0
        %3156 = vmatprep.mubr.f32.mxu0 0.0
        %3157 = vmatmul.mubr.f32.gmra.mrb[0].mxu0 %v3011
        %v3158 = vpop.f32.mrb[0].mxu0
        %v3159 = vadd.f32 %v3091, %v3158
        %v3160 = vpop.f32.mrb[0].mxu0
        %3161 = vdwg.mxu0
        %v3162 = vld [vmem:[#allocation4 + $0x448] sm:$0xff]
        %v3163 = vld [vmem:[#allocation4 + $0x450] sm:$0xff]
        %v3164 = vld [vmem:[#allocation4 + $0x458] sm:$0xff]
        %v3165 = vld [vmem:[#allocation4 + $0x460] sm:$0xff]
        %v3166 = vld [vmem:[#allocation4 + $0x468] sm:$0x1]
        %v3167 = vlaneseq
        %v3168 = vshrl.u32 %v3167, 7
        %v3169 = vsub.s32 0, %v3168
        %v3170 = vrot.slane %v3166, %v3169
        %3171 = vmatprep.subr.mxu0 0.0
        %3172 = vmatpush1.msra.mxu0 %v3162
        %3173 = vmatprep.subr.mxu0 0.0
        %3174 = vmatpush1.msra.mxu0 %v3163
        %3175 = vmatprep.subr.mxu0 0.0
        %3176 = vmatpush1.msra.mxu0 %v3164
        %3177 = vmatprep.subr.mxu0 0.0
        %3178 = vmatpush1.msra.mxu0 %v3165
        %3179 = vmatprep.subr.mxu0 0.0
        %3180 = vmatpush1.msra.mxu0 0.0
        %3181 = vmatprep.subr.mxu0 0.0
        %3182 = vmatpush1.msra.mxu0 0.0
        %3183 = vmatprep.subr.mxu0 0.0
        %3184 = vmatpush1.msra.mxu0 0.0
        %3185 = vmatprep.subr.mxu0 0.0
        %3186 = vmatpush1.msra.mxu0 0.0
        %3187 = vmatprep.subr.mxu0 0.0
        %3188 = vmatpush1.msra.mxu0 0.0
        %3189 = vmatprep.subr.mxu0 0.0
        %3190 = vmatpush1.msra.mxu0 0.0
        %3191 = vmatprep.subr.mxu0 0.0
        %3192 = vmatpush1.msra.mxu0 0.0
        %3193 = vmatprep.subr.mxu0 0.0
        %3194 = vmatpush1.msra.mxu0 0.0
        %3195 = vmatprep.subr.mxu0 0.0
        %3196 = vmatpush1.msra.mxu0 0.0
        %3197 = vmatprep.subr.mxu0 0.0
        %3198 = vmatpush1.msra.mxu0 0.0
        %3199 = vmatprep.subr.mxu0 0.0
        %3200 = vmatpush1.msra.mxu0 0.0
        %3201 = vmatprep.subr.mxu0 0.0
        %3202 = vmatpush1.msra.mxu0 0.0
        %3203 = vmatprep.subr.mxu0 0.0
        %3204 = vmatpush1.msra.mxu0 0.0
        %3205 = vmatprep.subr.mxu0 0.0
        %3206 = vmatpush1.msra.mxu0 0.0
        %3207 = vmatprep.subr.mxu0 0.0
        %3208 = vmatpush1.msra.mxu0 0.0
        %3209 = vmatprep.subr.mxu0 0.0
        %3210 = vmatpush1.msra.mxu0 0.0
        %3211 = vmatprep.subr.mxu0 0.0
        %3212 = vmatpush1.msra.mxu0 0.0
        %3213 = vmatprep.subr.mxu0 0.0
        %3214 = vmatpush1.msra.mxu0 0.0
        %3215 = vmatprep.subr.mxu0 0.0
        %3216 = vmatpush1.msra.mxu0 0.0
        %3217 = vmatprep.subr.mxu0 0.0
        %3218 = vmatpush1.msra.mxu0 0.0
        %3219 = vmatprep.subr.mxu0 0.0
        %3220 = vmatpush1.msra.mxu0 0.0
        %3221 = vmatprep.subr.mxu0 0.0
        %3222 = vmatpush1.msra.mxu0 0.0
        %3223 = vmatprep.subr.mxu0 0.0
        %3224 = vmatpush1.msra.mxu0 0.0
        %3225 = vmatprep.subr.mxu0 0.0
        %3226 = vmatpush1.msra.mxu0 0.0
        %3227 = vmatprep.subr.mxu0 0.0
        %3228 = vmatpush1.msra.mxu0 0.0
        %3229 = vmatprep.subr.mxu0 0.0
        %3230 = vmatpush1.msra.mxu0 0.0
        %3231 = vmatprep.subr.mxu0 0.0
        %3232 = vmatpush1.msra.mxu0 0.0
        %3233 = vmatprep.subr.mxu0 0.0
        %3234 = vmatpush1.msra.mxu0 0.0
        %3235 = vmatprep.mubr.f32.mxu0 0.0
        %3236 = vmatmul.mubr.f32.gmra.mrb[0].mxu0 %v3011
        %v3237 = vpop.f32.mrb[0].mxu0
        %v3238 = vadd.f32 %v3170, %v3237
        %v3239 = vpop.f32.mrb[0].mxu0
        %3240 = vdwg.mxu0
        %v3242 = vsel %vm500, %v3080, 0
        %v3245 = vsel %vm500, %v3159, 0
        %3247 = vmatprep.subr.mxu0 0.0
        %3248 = vmatpush1.xpose.msra.mxu0 %v3245
        %3249 = vmatprep.subr.mxu0 0.0
        %3250 = vmatpush1.xpose.msra.mxu0 0.0
        %3251 = vmatprep.subr.mxu0 0.0
        %3252 = vmatpush1.xpose.msra.mxu0 0.0
        %3253 = vmatprep.subr.mxu0 0.0
        %3254 = vmatpush1.xpose.msra.mxu0 0.0
        %3255 = vmatprep.subr.mxu0 0.0
        %3256 = vmatpush1.xpose.msra.mxu0 0.0
        %3257 = vmatprep.subr.mxu0 0.0
        %3258 = vmatpush1.xpose.msra.mxu0 0.0
        %3259 = vmatprep.subr.mxu0 0.0
        %3260 = vmatpush1.xpose.msra.mxu0 0.0
        %3261 = vmatprep.subr.mxu0 0.0
        %3262 = vmatpush1.xpose.msra.mxu0 0.0
        %3263 = vmatprep.subr.mxu0 0.0
        %3264 = vmatpush1.xpose.msra.mxu0 0.0
        %3265 = vmatprep.subr.mxu0 0.0
        %3266 = vmatpush1.xpose.msra.mxu0 0.0
        %3267 = vmatprep.subr.mxu0 0.0
        %3268 = vmatpush1.xpose.msra.mxu0 0.0
        %3269 = vmatprep.subr.mxu0 0.0
        %3270 = vmatpush1.xpose.msra.mxu0 0.0
        %3271 = vmatprep.subr.mxu0 0.0
        %3272 = vmatpush1.xpose.msra.mxu0 0.0
        %3273 = vmatprep.subr.mxu0 0.0
        %3274 = vmatpush1.xpose.msra.mxu0 0.0
        %3275 = vmatprep.subr.mxu0 0.0
        %3276 = vmatpush1.xpose.msra.mxu0 0.0
        %3277 = vmatprep.subr.mxu0 0.0
        %3278 = vmatpush1.xpose.msra.mxu0 0.0
        %3279 = vmatprep.subr.mxu0 0.0
        %3280 = vmatpush1.xpose.msra.mxu0 0.0
        %3281 = vmatprep.subr.mxu0 0.0
        %3282 = vmatpush1.xpose.msra.mxu0 0.0
        %3283 = vmatprep.subr.mxu0 0.0
        %3284 = vmatpush1.xpose.msra.mxu0 0.0
        %3285 = vmatprep.subr.mxu0 0.0
        %3286 = vmatpush1.xpose.msra.mxu0 0.0
        %3287 = vmatprep.subr.mxu0 0.0
        %3288 = vmatpush1.xpose.msra.mxu0 0.0
        %3289 = vmatprep.subr.mxu0 0.0
        %3290 = vmatpush1.xpose.msra.mxu0 0.0
        %3291 = vmatprep.subr.mxu0 0.0
        %3292 = vmatpush1.xpose.msra.mxu0 0.0
        %3293 = vmatprep.subr.mxu0 0.0
        %3294 = vmatpush1.xpose.msra.mxu0 0.0
        %3295 = vmatprep.subr.mxu0 0.0
        %3296 = vmatpush1.xpose.msra.mxu0 0.0
        %3297 = vmatprep.subr.mxu0 0.0
        %3298 = vmatpush1.xpose.msra.mxu0 0.0
        %3299 = vmatprep.subr.mxu0 0.0
        %3300 = vmatpush1.xpose.msra.mxu0 0.0
        %3301 = vmatprep.subr.mxu0 0.0
        %3302 = vmatpush1.xpose.msra.mxu0 0.0
        %3303 = vmatprep.subr.mxu0 0.0
        %3304 = vmatpush1.xpose.msra.mxu0 0.0
        %3305 = vmatprep.subr.mxu0 0.0
        %3306 = vmatpush1.xpose.msra.mxu0 0.0
        %3307 = vmatprep.subr.mxu0 0.0
        %3308 = vmatpush1.xpose.msra.mxu0 0.0
        %3309 = vmatprep.subr.mxu0 0.0
        %3310 = vmatpush1.xpose.msra.mxu0 0.0
        %3311 = vmatprep.mubr.f32.mxu0 0.0
        %3312 = vmatmul.mubr.f32.gmra.mrb[0].mxu0 %v3242
        %v3313 = vpop.f32.mrb[0].mxu0
        %v3314 = vadd.f32 0.0, %v3313
        %v3315 = vpop.f32.mrb[0].mxu0
        %3316 = vdwg.mxu0
        %v3317 = vsel %vm161, %v3314, -inf
        %3318 = vmax.xlane.f32.xlu0 %v3317
        %v3319 = vpop.xlane.xlu0 %3318
        %v3320 = vsub.f32 %v3314, %v3319
        %v3321 = vmul.f32 %v3320, 1.442695
        %v3322 = vpow.pop %v3321
        %v3323 = vsel %vm161, %v3322, 0.0
        %3324 = vadd.xlane.f32.xlu0 %v3323
        %v3325 = vpop.xlane.xlu0 %3324
        %v3326 = vrcp.pop %v3325
        %v3327 = vmul.f32 %v3322, %v3326
        %v3329 = vsel %vm161, %v3327, 0
        %3331 = vmatprep.subr.mxu0 0.0
        %3332 = vmatpush1.msra.mxu0 %v3238
        %3333 = vmatprep.subr.mxu0 0.0
        %3334 = vmatpush1.msra.mxu0 0.0
        %3335 = vmatprep.subr.mxu0 0.0
        %3336 = vmatpush1.msra.mxu0 0.0
        %3337 = vmatprep.subr.mxu0 0.0
        %3338 = vmatpush1.msra.mxu0 0.0
        %3339 = vmatprep.subr.mxu0 0.0
        %3340 = vmatpush1.msra.mxu0 0.0
        %3341 = vmatprep.subr.mxu0 0.0
        %3342 = vmatpush1.msra.mxu0 0.0
        %3343 = vmatprep.subr.mxu0 0.0
        %3344 = vmatpush1.msra.mxu0 0.0
        %3345 = vmatprep.subr.mxu0 0.0
        %3346 = vmatpush1.msra.mxu0 0.0
        %3347 = vmatprep.subr.mxu0 0.0
        %3348 = vmatpush1.msra.mxu0 0.0
        %3349 = vmatprep.subr.mxu0 0.0
        %3350 = vmatpush1.msra.mxu0 0.0
        %3351 = vmatprep.subr.mxu0 0.0
        %3352 = vmatpush1.msra.mxu0 0.0
        %3353 = vmatprep.subr.mxu0 0.0
        %3354 = vmatpush1.msra.mxu0 0.0
        %3355 = vmatprep.subr.mxu0 0.0
        %3356 = vmatpush1.msra.mxu0 0.0
        %3357 = vmatprep.subr.mxu0 0.0
        %3358 = vmatpush1.msra.mxu0 0.0
        %3359 = vmatprep.subr.mxu0 0.0
        %3360 = vmatpush1.msra.mxu0 0.0
        %3361 = vmatprep.subr.mxu0 0.0
        %3362 = vmatpush1.msra.mxu0 0.0
        %3363 = vmatprep.subr.mxu0 0.0
        %3364 = vmatpush1.msra.mxu0 0.0
        %3365 = vmatprep.subr.mxu0 0.0
        %3366 = vmatpush1.msra.mxu0 0.0
        %3367 = vmatprep.subr.mxu0 0.0
        %3368 = vmatpush1.msra.mxu0 0.0
        %3369 = vmatprep.subr.mxu0 0.0
        %3370 = vmatpush1.msra.mxu0 0.0
        %3371 = vmatprep.subr.mxu0 0.0
        %3372 = vmatpush1.msra.mxu0 0.0
        %3373 = vmatprep.subr.mxu0 0.0
        %3374 = vmatpush1.msra.mxu0 0.0
        %3375 = vmatprep.subr.mxu0 0.0
        %3376 = vmatpush1.msra.mxu0 0.0
        %3377 = vmatprep.subr.mxu0 0.0
        %3378 = vmatpush1.msra.mxu0 0.0
        %3379 = vmatprep.subr.mxu0 0.0
        %3380 = vmatpush1.msra.mxu0 0.0
        %3381 = vmatprep.subr.mxu0 0.0
        %3382 = vmatpush1.msra.mxu0 0.0
        %3383 = vmatprep.subr.mxu0 0.0
        %3384 = vmatpush1.msra.mxu0 0.0
        %3385 = vmatprep.subr.mxu0 0.0
        %3386 = vmatpush1.msra.mxu0 0.0
        %3387 = vmatprep.subr.mxu0 0.0
        %3388 = vmatpush1.msra.mxu0 0.0
        %3389 = vmatprep.subr.mxu0 0.0
        %3390 = vmatpush1.msra.mxu0 0.0
        %3391 = vmatprep.subr.mxu0 0.0
        %3392 = vmatpush1.msra.mxu0 0.0
        %3393 = vmatprep.subr.mxu0 0.0
        %3394 = vmatpush1.msra.mxu0 0.0
        %3395 = vmatprep.mubr.f32.mxu0 0.0
        %3396 = vmatmul.mubr.f32.gmra.mrb[0].mxu0 %v3329
        %v3397 = vpop.f32.mrb[0].mxu0
        %v3398 = vadd.f32 0.0, %v3397
        %v3399 = vpop.f32.mrb[0].mxu0
        %3400 = vdwg.mxu0
        %v3401 = vld [vmem:[#allocation4 + $0x470] sm:$0xff]
        %v3402 = vld [vmem:[#allocation4 + $0x478] sm:$0xff]
        %v3403 = vld [vmem:[#allocation4 + $0x480] sm:$0xff]
        %v3404 = vld [vmem:[#allocation4 + $0x488] sm:$0xff]
        %v3405 = vld [vmem:[#allocation4 + $0x490] sm:$0xff]
        %v3406 = vld [vmem:[#allocation4 + $0x498] sm:$0xff]
        %v3407 = vld [vmem:[#allocation4 + $0x4a0] sm:$0x1]
        %v3408 = vlaneseq
        %v3409 = vshrl.u32 %v3408, 7
        %v3410 = vsub.s32 0, %v3409
        %v3411 = vrot.slane %v3407, %v3410
        %3412 = vmatprep.subr.mxu0 0.0
        %3413 = vmatpush1.msra.mxu0 %v3403
        %3414 = vmatprep.subr.mxu0 0.0
        %3415 = vmatpush1.msra.mxu0 %v3404
        %3416 = vmatprep.subr.mxu0 0.0
        %3417 = vmatpush1.msra.mxu0 %v3405
        %3418 = vmatprep.subr.mxu0 0.0
        %3419 = vmatpush1.msra.mxu0 %v3406
        %3420 = vmatprep.subr.mxu0 0.0
        %3421 = vmatpush1.msra.mxu0 0.0
        %3422 = vmatprep.subr.mxu0 0.0
        %3423 = vmatpush1.msra.mxu0 0.0
        %3424 = vmatprep.subr.mxu0 0.0
        %3425 = vmatpush1.msra.mxu0 0.0
        %3426 = vmatprep.subr.mxu0 0.0
        %3427 = vmatpush1.msra.mxu0 0.0
        %3428 = vmatprep.subr.mxu0 0.0
        %3429 = vmatpush1.msra.mxu0 0.0
        %3430 = vmatprep.subr.mxu0 0.0
        %3431 = vmatpush1.msra.mxu0 0.0
        %3432 = vmatprep.subr.mxu0 0.0
        %3433 = vmatpush1.msra.mxu0 0.0
        %3434 = vmatprep.subr.mxu0 0.0
        %3435 = vmatpush1.msra.mxu0 0.0
        %3436 = vmatprep.subr.mxu0 0.0
        %3437 = vmatpush1.msra.mxu0 0.0
        %3438 = vmatprep.subr.mxu0 0.0
        %3439 = vmatpush1.msra.mxu0 0.0
        %3440 = vmatprep.subr.mxu0 0.0
        %3441 = vmatpush1.msra.mxu0 0.0
        %3442 = vmatprep.subr.mxu0 0.0
        %3443 = vmatpush1.msra.mxu0 0.0
        %3444 = vmatprep.subr.mxu0 0.0
        %3445 = vmatpush1.msra.mxu0 0.0
        %3446 = vmatprep.subr.mxu0 0.0
        %3447 = vmatpush1.msra.mxu0 0.0
        %3448 = vmatprep.subr.mxu0 0.0
        %3449 = vmatpush1.msra.mxu0 0.0
        %3450 = vmatprep.subr.mxu0 0.0
        %3451 = vmatpush1.msra.mxu0 0.0
        %3452 = vmatprep.subr.mxu0 0.0
        %3453 = vmatpush1.msra.mxu0 0.0
        %3454 = vmatprep.subr.mxu0 0.0
        %3455 = vmatpush1.msra.mxu0 0.0
        %3456 = vmatprep.subr.mxu0 0.0
        %3457 = vmatpush1.msra.mxu0 0.0
        %3458 = vmatprep.subr.mxu0 0.0
        %3459 = vmatpush1.msra.mxu0 0.0
        %3460 = vmatprep.subr.mxu0 0.0
        %3461 = vmatpush1.msra.mxu0 0.0
        %3462 = vmatprep.subr.mxu0 0.0
        %3463 = vmatpush1.msra.mxu0 0.0
        %3464 = vmatprep.subr.mxu0 0.0
        %3465 = vmatpush1.msra.mxu0 0.0
        %3466 = vmatprep.subr.mxu0 0.0
        %3467 = vmatpush1.msra.mxu0 0.0
        %3468 = vmatprep.subr.mxu0 0.0
        %3469 = vmatpush1.msra.mxu0 0.0
        %3470 = vmatprep.subr.mxu0 0.0
        %3471 = vmatpush1.msra.mxu0 0.0
        %3472 = vmatprep.subr.mxu0 0.0
        %3473 = vmatpush1.msra.mxu0 0.0
        %3474 = vmatprep.subr.mxu0 0.0
        %3475 = vmatpush1.msra.mxu0 0.0
        %3476 = vmatprep.mubr.f32.mxu0 0.0
        %3477 = vmatmul.mubr.f32.gmra.mrb[0].mxu0 %v3011
        %v3478 = vpop.f32.mrb[0].mxu0
        %v3479 = vadd.f32 %v3411, %v3478
        %v3480 = vpop.f32.mrb[0].mxu0
        %3481 = vdwg.mxu0
        %v3482 = vld [vmem:[#allocation4 + $0x4a8] sm:$0xff]
        %v3483 = vld [vmem:[#allocation4 + $0x4b0] sm:$0xff]
        %v3484 = vld [vmem:[#allocation4 + $0x4b8] sm:$0xff]
        %v3485 = vld [vmem:[#allocation4 + $0x4c0] sm:$0xff]
        %v3486 = vld [vmem:[#allocation4 + $0x4c8] sm:$0x1]
        %v3487 = vlaneseq
        %v3488 = vshrl.u32 %v3487, 7
        %v3489 = vsub.s32 0, %v3488
        %v3490 = vrot.slane %v3486, %v3489
        %3491 = vmatprep.subr.mxu0 0.0
        %3492 = vmatpush1.msra.mxu0 %v3482
        %3493 = vmatprep.subr.mxu0 0.0
        %3494 = vmatpush1.msra.mxu0 %v3483
        %3495 = vmatprep.subr.mxu0 0.0
        %3496 = vmatpush1.msra.mxu0 %v3484
        %3497 = vmatprep.subr.mxu0 0.0
        %3498 = vmatpush1.msra.mxu0 %v3485
        %3499 = vmatprep.subr.mxu0 0.0
        %3500 = vmatpush1.msra.mxu0 0.0
        %3501 = vmatprep.subr.mxu0 0.0
        %3502 = vmatpush1.msra.mxu0 0.0
        %3503 = vmatprep.subr.mxu0 0.0
        %3504 = vmatpush1.msra.mxu0 0.0
        %3505 = vmatprep.subr.mxu0 0.0
        %3506 = vmatpush1.msra.mxu0 0.0
        %3507 = vmatprep.subr.mxu0 0.0
        %3508 = vmatpush1.msra.mxu0 0.0
        %3509 = vmatprep.subr.mxu0 0.0
        %3510 = vmatpush1.msra.mxu0 0.0
        %3511 = vmatprep.subr.mxu0 0.0
        %3512 = vmatpush1.msra.mxu0 0.0
        %3513 = vmatprep.subr.mxu0 0.0
        %3514 = vmatpush1.msra.mxu0 0.0
        %3515 = vmatprep.subr.mxu0 0.0
        %3516 = vmatpush1.msra.mxu0 0.0
        %3517 = vmatprep.subr.mxu0 0.0
        %3518 = vmatpush1.msra.mxu0 0.0
        %3519 = vmatprep.subr.mxu0 0.0
        %3520 = vmatpush1.msra.mxu0 0.0
        %3521 = vmatprep.subr.mxu0 0.0
        %3522 = vmatpush1.msra.mxu0 0.0
        %3523 = vmatprep.subr.mxu0 0.0
        %3524 = vmatpush1.msra.mxu0 0.0
        %3525 = vmatprep.subr.mxu0 0.0
        %3526 = vmatpush1.msra.mxu0 0.0
        %3527 = vmatprep.subr.mxu0 0.0
        %3528 = vmatpush1.msra.mxu0 0.0
        %3529 = vmatprep.subr.mxu0 0.0
        %3530 = vmatpush1.msra.mxu0 0.0
        %3531 = vmatprep.subr.mxu0 0.0
        %3532 = vmatpush1.msra.mxu0 0.0
        %3533 = vmatprep.subr.mxu0 0.0
        %3534 = vmatpush1.msra.mxu0 0.0
        %3535 = vmatprep.subr.mxu0 0.0
        %3536 = vmatpush1.msra.mxu0 0.0
        %3537 = vmatprep.subr.mxu0 0.0
        %3538 = vmatpush1.msra.mxu0 0.0
        %3539 = vmatprep.subr.mxu0 0.0
        %3540 = vmatpush1.msra.mxu0 0.0
        %3541 = vmatprep.subr.mxu0 0.0
        %3542 = vmatpush1.msra.mxu0 0.0
        %3543 = vmatprep.subr.mxu0 0.0
        %3544 = vmatpush1.msra.mxu0 0.0
        %3545 = vmatprep.subr.mxu0 0.0
        %3546 = vmatpush1.msra.mxu0 0.0
        %3547 = vmatprep.subr.mxu0 0.0
        %3548 = vmatpush1.msra.mxu0 0.0
        %3549 = vmatprep.subr.mxu0 0.0
        %3550 = vmatpush1.msra.mxu0 0.0
        %3551 = vmatprep.subr.mxu0 0.0
        %3552 = vmatpush1.msra.mxu0 0.0
        %3553 = vmatprep.subr.mxu0 0.0
        %3554 = vmatpush1.msra.mxu0 0.0
        %3555 = vmatprep.mubr.f32.mxu0 0.0
        %3556 = vmatmul.mubr.f32.gmra.mrb[0].mxu0 %v3011
        %v3557 = vpop.f32.mrb[0].mxu0
        %v3558 = vadd.f32 %v3490, %v3557
        %v3559 = vpop.f32.mrb[0].mxu0
        %3560 = vdwg.mxu0
        %v3561 = vld [vmem:[#allocation4 + $0x4d0] sm:$0xff]
        %v3562 = vld [vmem:[#allocation4 + $0x4d8] sm:$0xff]
        %v3563 = vld [vmem:[#allocation4 + $0x4e0] sm:$0xff]
        %v3564 = vld [vmem:[#allocation4 + $0x4e8] sm:$0xff]
        %v3565 = vld [vmem:[#allocation4 + $0x4f0] sm:$0x1]
        %v3566 = vlaneseq
        %v3567 = vshrl.u32 %v3566, 7
        %v3568 = vsub.s32 0, %v3567
        %v3569 = vrot.slane %v3565, %v3568
        %3570 = vmatprep.subr.mxu0 0.0
        %3571 = vmatpush1.msra.mxu0 %v3561
        %3572 = vmatprep.subr.mxu0 0.0
        %3573 = vmatpush1.msra.mxu0 %v3562
        %3574 = vmatprep.subr.mxu0 0.0
        %3575 = vmatpush1.msra.mxu0 %v3563
        %3576 = vmatprep.subr.mxu0 0.0
        %3577 = vmatpush1.msra.mxu0 %v3564
        %3578 = vmatprep.subr.mxu0 0.0
        %3579 = vmatpush1.msra.mxu0 0.0
        %3580 = vmatprep.subr.mxu0 0.0
        %3581 = vmatpush1.msra.mxu0 0.0
        %3582 = vmatprep.subr.mxu0 0.0
        %3583 = vmatpush1.msra.mxu0 0.0
        %3584 = vmatprep.subr.mxu0 0.0
        %3585 = vmatpush1.msra.mxu0 0.0
        %3586 = vmatprep.subr.mxu0 0.0
        %3587 = vmatpush1.msra.mxu0 0.0
        %3588 = vmatprep.subr.mxu0 0.0
        %3589 = vmatpush1.msra.mxu0 0.0
        %3590 = vmatprep.subr.mxu0 0.0
        %3591 = vmatpush1.msra.mxu0 0.0
        %3592 = vmatprep.subr.mxu0 0.0
        %3593 = vmatpush1.msra.mxu0 0.0
        %3594 = vmatprep.subr.mxu0 0.0
        %3595 = vmatpush1.msra.mxu0 0.0
        %3596 = vmatprep.subr.mxu0 0.0
        %3597 = vmatpush1.msra.mxu0 0.0
        %3598 = vmatprep.subr.mxu0 0.0
        %3599 = vmatpush1.msra.mxu0 0.0
        %3600 = vmatprep.subr.mxu0 0.0
        %3601 = vmatpush1.msra.mxu0 0.0
        %3602 = vmatprep.subr.mxu0 0.0
        %3603 = vmatpush1.msra.mxu0 0.0
        %3604 = vmatprep.subr.mxu0 0.0
        %3605 = vmatpush1.msra.mxu0 0.0
        %3606 = vmatprep.subr.mxu0 0.0
        %3607 = vmatpush1.msra.mxu0 0.0
        %3608 = vmatprep.subr.mxu0 0.0
        %3609 = vmatpush1.msra.mxu0 0.0
        %3610 = vmatprep.subr.mxu0 0.0
        %3611 = vmatpush1.msra.mxu0 0.0
        %3612 = vmatprep.subr.mxu0 0.0
        %3613 = vmatpush1.msra.mxu0 0.0
        %3614 = vmatprep.subr.mxu0 0.0
        %3615 = vmatpush1.msra.mxu0 0.0
        %3616 = vmatprep.subr.mxu0 0.0
        %3617 = vmatpush1.msra.mxu0 0.0
        %3618 = vmatprep.subr.mxu0 0.0
        %3619 = vmatpush1.msra.mxu0 0.0
        %3620 = vmatprep.subr.mxu0 0.0
        %3621 = vmatpush1.msra.mxu0 0.0
        %3622 = vmatprep.subr.mxu0 0.0
        %3623 = vmatpush1.msra.mxu0 0.0
        %3624 = vmatprep.subr.mxu0 0.0
        %3625 = vmatpush1.msra.mxu0 0.0
        %3626 = vmatprep.subr.mxu0 0.0
        %3627 = vmatpush1.msra.mxu0 0.0
        %3628 = vmatprep.subr.mxu0 0.0
        %3629 = vmatpush1.msra.mxu0 0.0
        %3630 = vmatprep.subr.mxu0 0.0
        %3631 = vmatpush1.msra.mxu0 0.0
        %3632 = vmatprep.subr.mxu0 0.0
        %3633 = vmatpush1.msra.mxu0 0.0
        %3634 = vmatprep.mubr.f32.mxu0 0.0
        %3635 = vmatmul.mubr.f32.gmra.mrb[0].mxu0 %v3011
        %v3636 = vpop.f32.mrb[0].mxu0
        %v3637 = vadd.f32 %v3569, %v3636
        %v3638 = vpop.f32.mrb[0].mxu0
        %3639 = vdwg.mxu0
        %v3641 = vsel %vm500, %v3479, 0
        %v3644 = vsel %vm500, %v3558, 0
        %3646 = vmatprep.subr.mxu0 0.0
        %3647 = vmatpush1.xpose.msra.mxu0 %v3644
        %3648 = vmatprep.subr.mxu0 0.0
        %3649 = vmatpush1.xpose.msra.mxu0 0.0
        %3650 = vmatprep.subr.mxu0 0.0
        %3651 = vmatpush1.xpose.msra.mxu0 0.0
        %3652 = vmatprep.subr.mxu0 0.0
        %3653 = vmatpush1.xpose.msra.mxu0 0.0
        %3654 = vmatprep.subr.mxu0 0.0
        %3655 = vmatpush1.xpose.msra.mxu0 0.0
        %3656 = vmatprep.subr.mxu0 0.0
        %3657 = vmatpush1.xpose.msra.mxu0 0.0
        %3658 = vmatprep.subr.mxu0 0.0
        %3659 = vmatpush1.xpose.msra.mxu0 0.0
        %3660 = vmatprep.subr.mxu0 0.0
        %3661 = vmatpush1.xpose.msra.mxu0 0.0
        %3662 = vmatprep.subr.mxu0 0.0
        %3663 = vmatpush1.xpose.msra.mxu0 0.0
        %3664 = vmatprep.subr.mxu0 0.0
        %3665 = vmatpush1.xpose.msra.mxu0 0.0
        %3666 = vmatprep.subr.mxu0 0.0
        %3667 = vmatpush1.xpose.msra.mxu0 0.0
        %3668 = vmatprep.subr.mxu0 0.0
        %3669 = vmatpush1.xpose.msra.mxu0 0.0
        %3670 = vmatprep.subr.mxu0 0.0
        %3671 = vmatpush1.xpose.msra.mxu0 0.0
        %3672 = vmatprep.subr.mxu0 0.0
        %3673 = vmatpush1.xpose.msra.mxu0 0.0
        %3674 = vmatprep.subr.mxu0 0.0
        %3675 = vmatpush1.xpose.msra.mxu0 0.0
        %3676 = vmatprep.subr.mxu0 0.0
        %3677 = vmatpush1.xpose.msra.mxu0 0.0
        %3678 = vmatprep.subr.mxu0 0.0
        %3679 = vmatpush1.xpose.msra.mxu0 0.0
        %3680 = vmatprep.subr.mxu0 0.0
        %3681 = vmatpush1.xpose.msra.mxu0 0.0
        %3682 = vmatprep.subr.mxu0 0.0
        %3683 = vmatpush1.xpose.msra.mxu0 0.0
        %3684 = vmatprep.subr.mxu0 0.0
        %3685 = vmatpush1.xpose.msra.mxu0 0.0
        %3686 = vmatprep.subr.mxu0 0.0
        %3687 = vmatpush1.xpose.msra.mxu0 0.0
        %3688 = vmatprep.subr.mxu0 0.0
        %3689 = vmatpush1.xpose.msra.mxu0 0.0
        %3690 = vmatprep.subr.mxu0 0.0
        %3691 = vmatpush1.xpose.msra.mxu0 0.0
        %3692 = vmatprep.subr.mxu0 0.0
        %3693 = vmatpush1.xpose.msra.mxu0 0.0
        %3694 = vmatprep.subr.mxu0 0.0
        %3695 = vmatpush1.xpose.msra.mxu0 0.0
        %3696 = vmatprep.subr.mxu0 0.0
        %3697 = vmatpush1.xpose.msra.mxu0 0.0
        %3698 = vmatprep.subr.mxu0 0.0
        %3699 = vmatpush1.xpose.msra.mxu0 0.0
        %3700 = vmatprep.subr.mxu0 0.0
        %3701 = vmatpush1.xpose.msra.mxu0 0.0
        %3702 = vmatprep.subr.mxu0 0.0
        %3703 = vmatpush1.xpose.msra.mxu0 0.0
        %3704 = vmatprep.subr.mxu0 0.0
        %3705 = vmatpush1.xpose.msra.mxu0 0.0
        %3706 = vmatprep.subr.mxu0 0.0
        %3707 = vmatpush1.xpose.msra.mxu0 0.0
        %3708 = vmatprep.subr.mxu0 0.0
        %3709 = vmatpush1.xpose.msra.mxu0 0.0
        %3710 = vmatprep.mubr.f32.mxu0 0.0
        %3711 = vmatmul.mubr.f32.gmra.mrb[0].mxu0 %v3641
        %v3712 = vpop.f32.mrb[0].mxu0
        %v3713 = vadd.f32 0.0, %v3712
        %v3714 = vpop.f32.mrb[0].mxu0
        %3715 = vdwg.mxu0
        %v3716 = vsel %vm161, %v3713, -inf
        %3717 = vmax.xlane.f32.xlu0 %v3716
        %v3718 = vpop.xlane.xlu0 %3717
        %v3719 = vsub.f32 %v3713, %v3718
        %v3720 = vmul.f32 %v3719, 1.442695
        %v3721 = vpow.pop %v3720
        %v3722 = vsel %vm161, %v3721, 0.0
        %3723 = vadd.xlane.f32.xlu0 %v3722
        %v3724 = vpop.xlane.xlu0 %3723
        %v3725 = vrcp.pop %v3724
        %v3726 = vmul.f32 %v3721, %v3725
        %v3728 = vsel %vm161, %v3726, 0
        %3730 = vmatprep.subr.mxu0 0.0
        %3731 = vmatpush1.msra.mxu0 %v3637
        %3732 = vmatprep.subr.mxu0 0.0
        %3733 = vmatpush1.msra.mxu0 0.0
        %3734 = vmatprep.subr.mxu0 0.0
        %3735 = vmatpush1.msra.mxu0 0.0
        %3736 = vmatprep.subr.mxu0 0.0
        %3737 = vmatpush1.msra.mxu0 0.0
        %3738 = vmatprep.subr.mxu0 0.0
        %3739 = vmatpush1.msra.mxu0 0.0
        %3740 = vmatprep.subr.mxu0 0.0
        %3741 = vmatpush1.msra.mxu0 0.0
        %3742 = vmatprep.subr.mxu0 0.0
        %3743 = vmatpush1.msra.mxu0 0.0
        %3744 = vmatprep.subr.mxu0 0.0
        %3745 = vmatpush1.msra.mxu0 0.0
        %3746 = vmatprep.subr.mxu0 0.0
        %3747 = vmatpush1.msra.mxu0 0.0
        %3748 = vmatprep.subr.mxu0 0.0
        %3749 = vmatpush1.msra.mxu0 0.0
        %3750 = vmatprep.subr.mxu0 0.0
        %3751 = vmatpush1.msra.mxu0 0.0
        %3752 = vmatprep.subr.mxu0 0.0
        %3753 = vmatpush1.msra.mxu0 0.0
        %3754 = vmatprep.subr.mxu0 0.0
        %3755 = vmatpush1.msra.mxu0 0.0
        %3756 = vmatprep.subr.mxu0 0.0
        %3757 = vmatpush1.msra.mxu0 0.0
        %3758 = vmatprep.subr.mxu0 0.0
        %3759 = vmatpush1.msra.mxu0 0.0
        %3760 = vmatprep.subr.mxu0 0.0
        %3761 = vmatpush1.msra.mxu0 0.0
        %3762 = vmatprep.subr.mxu0 0.0
        %3763 = vmatpush1.msra.mxu0 0.0
        %3764 = vmatprep.subr.mxu0 0.0
        %3765 = vmatpush1.msra.mxu0 0.0
        %3766 = vmatprep.subr.mxu0 0.0
        %3767 = vmatpush1.msra.mxu0 0.0
        %3768 = vmatprep.subr.mxu0 0.0
        %3769 = vmatpush1.msra.mxu0 0.0
        %3770 = vmatprep.subr.mxu0 0.0
        %3771 = vmatpush1.msra.mxu0 0.0
        %3772 = vmatprep.subr.mxu0 0.0
        %3773 = vmatpush1.msra.mxu0 0.0
        %3774 = vmatprep.subr.mxu0 0.0
        %3775 = vmatpush1.msra.mxu0 0.0
        %3776 = vmatprep.subr.mxu0 0.0
        %3777 = vmatpush1.msra.mxu0 0.0
        %3778 = vmatprep.subr.mxu0 0.0
        %3779 = vmatpush1.msra.mxu0 0.0
        %3780 = vmatprep.subr.mxu0 0.0
        %3781 = vmatpush1.msra.mxu0 0.0
        %3782 = vmatprep.subr.mxu0 0.0
        %3783 = vmatpush1.msra.mxu0 0.0
        %3784 = vmatprep.subr.mxu0 0.0
        %3785 = vmatpush1.msra.mxu0 0.0
        %3786 = vmatprep.subr.mxu0 0.0
        %3787 = vmatpush1.msra.mxu0 0.0
        %3788 = vmatprep.subr.mxu0 0.0
        %3789 = vmatpush1.msra.mxu0 0.0
        %3790 = vmatprep.subr.mxu0 0.0
        %3791 = vmatpush1.msra.mxu0 0.0
        %3792 = vmatprep.subr.mxu0 0.0
        %3793 = vmatpush1.msra.mxu0 0.0
        %3794 = vmatprep.mubr.f32.mxu0 0.0
        %3795 = vmatmul.mubr.f32.gmra.mrb[0].mxu0 %v3728
        %v3796 = vpop.f32.mrb[0].mxu0
        %v3797 = vadd.f32 0.0, %v3796
        %v3798 = vpop.f32.mrb[0].mxu0
        %3799 = vdwg.mxu0
        %v3800 = vld [vmem:[#allocation4 + $0x4f8] sm:$0xff]
        %v3801 = vld [vmem:[#allocation4 + $0x500] sm:$0xff]
        %v3803 = vsel %vm500, %v3797, 0
        %3805 = vmatprep.subr.mxu0 0.0
        %3806 = vmatpush1.msra.mxu0 %v3800
        %3807 = vmatprep.subr.mxu0 0.0
        %3808 = vmatpush1.msra.mxu0 %v3801
        %3809 = vmatprep.subr.mxu0 0.0
        %3810 = vmatpush1.msra.mxu0 0.0
        %3811 = vmatprep.subr.mxu0 0.0
        %3812 = vmatpush1.msra.mxu0 0.0
        %3813 = vmatprep.subr.mxu0 0.0
        %3814 = vmatpush1.msra.mxu0 0.0
        %3815 = vmatprep.subr.mxu0 0.0
        %3816 = vmatpush1.msra.mxu0 0.0
        %3817 = vmatprep.subr.mxu0 0.0
        %3818 = vmatpush1.msra.mxu0 0.0
        %3819 = vmatprep.subr.mxu0 0.0
        %3820 = vmatpush1.msra.mxu0 0.0
        %3821 = vmatprep.subr.mxu0 0.0
        %3822 = vmatpush1.msra.mxu0 0.0
        %3823 = vmatprep.subr.mxu0 0.0
        %3824 = vmatpush1.msra.mxu0 0.0
        %3825 = vmatprep.subr.mxu0 0.0
        %3826 = vmatpush1.msra.mxu0 0.0
        %3827 = vmatprep.subr.mxu0 0.0
        %3828 = vmatpush1.msra.mxu0 0.0
        %3829 = vmatprep.subr.mxu0 0.0
        %3830 = vmatpush1.msra.mxu0 0.0
        %3831 = vmatprep.subr.mxu0 0.0
        %3832 = vmatpush1.msra.mxu0 0.0
        %3833 = vmatprep.subr.mxu0 0.0
        %3834 = vmatpush1.msra.mxu0 0.0
        %3835 = vmatprep.subr.mxu0 0.0
        %3836 = vmatpush1.msra.mxu0 0.0
        %3837 = vmatprep.subr.mxu0 0.0
        %3838 = vmatpush1.msra.mxu0 0.0
        %3839 = vmatprep.subr.mxu0 0.0
        %3840 = vmatpush1.msra.mxu0 0.0
        %3841 = vmatprep.subr.mxu0 0.0
        %3842 = vmatpush1.msra.mxu0 0.0
        %3843 = vmatprep.subr.mxu0 0.0
        %3844 = vmatpush1.msra.mxu0 0.0
        %3845 = vmatprep.subr.mxu0 0.0
        %3846 = vmatpush1.msra.mxu0 0.0
        %3847 = vmatprep.subr.mxu0 0.0
        %3848 = vmatpush1.msra.mxu0 0.0
        %3849 = vmatprep.subr.mxu0 0.0
        %3850 = vmatpush1.msra.mxu0 0.0
        %3851 = vmatprep.subr.mxu0 0.0
        %3852 = vmatpush1.msra.mxu0 0.0
        %3853 = vmatprep.subr.mxu0 0.0
        %3854 = vmatpush1.msra.mxu0 0.0
        %3855 = vmatprep.subr.mxu0 0.0
        %3856 = vmatpush1.msra.mxu0 0.0
        %3857 = vmatprep.subr.mxu0 0.0
        %3858 = vmatpush1.msra.mxu0 0.0
        %3859 = vmatprep.subr.mxu0 0.0
        %3860 = vmatpush1.msra.mxu0 0.0
        %3861 = vmatprep.subr.mxu0 0.0
        %3862 = vmatpush1.msra.mxu0 0.0
        %3863 = vmatprep.subr.mxu0 0.0
        %3864 = vmatpush1.msra.mxu0 0.0
        %3865 = vmatprep.subr.mxu0 0.0
        %3866 = vmatpush1.msra.mxu0 0.0
        %3867 = vmatprep.subr.mxu0 0.0
        %3868 = vmatpush1.msra.mxu0 0.0
        %3869 = vmatprep.mubr.f32.mxu0 0.0
        %3870 = vmatmul.mubr.f32.gmra.mrb[0].mxu0 %v3803
        %v3871 = vpop.f32.mrb[0].mxu0
        %v3872 = vadd.f32 0.0, %v3871
        %v3873 = vpop.f32.mrb[0].mxu0
        %3874 = vdwg.mxu0
        %v3876 = vsel %vm500, %v3398, 0
        %3878 = vmatprep.subr.mxu0 0.0
        %3879 = vmatpush1.msra.mxu0 %v3401
        %3880 = vmatprep.subr.mxu0 0.0
        %3881 = vmatpush1.msra.mxu0 %v3402
        %3882 = vmatprep.subr.mxu0 0.0
        %3883 = vmatpush1.msra.mxu0 0.0
        %3884 = vmatprep.subr.mxu0 0.0
        %3885 = vmatpush1.msra.mxu0 0.0
        %3886 = vmatprep.subr.mxu0 0.0
        %3887 = vmatpush1.msra.mxu0 0.0
        %3888 = vmatprep.subr.mxu0 0.0
        %3889 = vmatpush1.msra.mxu0 0.0
        %3890 = vmatprep.subr.mxu0 0.0
        %3891 = vmatpush1.msra.mxu0 0.0
        %3892 = vmatprep.subr.mxu0 0.0
        %3893 = vmatpush1.msra.mxu0 0.0
        %3894 = vmatprep.subr.mxu0 0.0
        %3895 = vmatpush1.msra.mxu0 0.0
        %3896 = vmatprep.subr.mxu0 0.0
        %3897 = vmatpush1.msra.mxu0 0.0
        %3898 = vmatprep.subr.mxu0 0.0
        %3899 = vmatpush1.msra.mxu0 0.0
        %3900 = vmatprep.subr.mxu0 0.0
        %3901 = vmatpush1.msra.mxu0 0.0
        %3902 = vmatprep.subr.mxu0 0.0
        %3903 = vmatpush1.msra.mxu0 0.0
        %3904 = vmatprep.subr.mxu0 0.0
        %3905 = vmatpush1.msra.mxu0 0.0
        %3906 = vmatprep.subr.mxu0 0.0
        %3907 = vmatpush1.msra.mxu0 0.0
        %3908 = vmatprep.subr.mxu0 0.0
        %3909 = vmatpush1.msra.mxu0 0.0
        %3910 = vmatprep.subr.mxu0 0.0
        %3911 = vmatpush1.msra.mxu0 0.0
        %3912 = vmatprep.subr.mxu0 0.0
        %3913 = vmatpush1.msra.mxu0 0.0
        %3914 = vmatprep.subr.mxu0 0.0
        %3915 = vmatpush1.msra.mxu0 0.0
        %3916 = vmatprep.subr.mxu0 0.0
        %3917 = vmatpush1.msra.mxu0 0.0
        %3918 = vmatprep.subr.mxu0 0.0
        %3919 = vmatpush1.msra.mxu0 0.0
        %3920 = vmatprep.subr.mxu0 0.0
        %3921 = vmatpush1.msra.mxu0 0.0
        %3922 = vmatprep.subr.mxu0 0.0
        %3923 = vmatpush1.msra.mxu0 0.0
        %3924 = vmatprep.subr.mxu0 0.0
        %3925 = vmatpush1.msra.mxu0 0.0
        %3926 = vmatprep.subr.mxu0 0.0
        %3927 = vmatpush1.msra.mxu0 0.0
        %3928 = vmatprep.subr.mxu0 0.0
        %3929 = vmatpush1.msra.mxu0 0.0
        %3930 = vmatprep.subr.mxu0 0.0
        %3931 = vmatpush1.msra.mxu0 0.0
        %3932 = vmatprep.subr.mxu0 0.0
        %3933 = vmatpush1.msra.mxu0 0.0
        %3934 = vmatprep.subr.mxu0 0.0
        %3935 = vmatpush1.msra.mxu0 0.0
        %3936 = vmatprep.subr.mxu0 0.0
        %3937 = vmatpush1.msra.mxu0 0.0
        %3938 = vmatprep.subr.mxu0 0.0
        %3939 = vmatpush1.msra.mxu0 0.0
        %3940 = vmatprep.subr.mxu0 0.0
        %3941 = vmatpush1.msra.mxu0 0.0
        %3942 = vmatprep.mubr.f32.mxu0 0.0
        %3943 = vmatmul.mubr.f32.gmra.mrb[0].mxu0 %v3876
        %v3944 = vpop.f32.mrb[0].mxu0
        %v3945 = vadd.f32 %v3872, %v3944
        %v3946 = vpop.f32.mrb[0].mxu0
        %3947 = vdwg.mxu0
        %v3948 = vld [vmem:[#allocation4 + $0x508] sm:$0x1]
        %v3949 = vlaneseq
        %v3950 = vshrl.u32 %v3949, 7
        %v3951 = vsub.s32 0, %v3950
        %v3952 = vrot.slane %v3948, %v3951
        %v3953 = vadd.f32 %v3945, %v3952
        %v3954 = vadd.f32 %v3000, %v3953
        %v3955 = vsel %vm235, %v3954, 0.0
        %3956 = vadd.xlane.f32.xlu0 %v3955
        %v3957 = vpop.xlane.xlu0 %3956
        %v3958 = vmul.f32 %v3957, %v1323
        %v3959 = vsub.f32 %v3954, %v3958
        %v3960 = vmul.f32 %v3959, %v3959
        %v3961 = vsel %vm235, %v3960, 0.0
        %3962 = vadd.xlane.f32.xlu0 %v3961
        %v3963 = vpop.xlane.xlu0 %3962
        %v3964 = vmul.f32 %v3963, %v1323
        %v3965 = vadd.f32 %v3964, 1e-05
        %v3966 = vrsqrt.pop %v3965
        %v3967 = vmul.f32 %v3959, %v3966
        %v3968 = vld [vmem:[#allocation4 + $0x510] sm:$0x1]
        %v3969 = vlaneseq
        %v3970 = vshrl.u32 %v3969, 7
        %v3971 = vsub.s32 0, %v3970
        %v3972 = vrot.slane %v3968, %v3971
        %v3973 = vmul.f32 %v3967, %v3972
        %v3974 = vld [vmem:[#allocation4 + $0x518] sm:$0x1]
        %v3975 = vlaneseq
        %v3976 = vshrl.u32 %v3975, 7
        %v3977 = vsub.s32 0, %v3976
        %v3978 = vrot.slane %v3974, %v3977
        %v3979 = vadd.f32 %v3973, %v3978
        %v3980 = vld [vmem:[#allocation4 + $0x520] sm:$0xff]
        %v3981 = vld [vmem:[#allocation4 + $0x528] sm:$0xff]
        %v3982 = vld [vmem:[#allocation4 + $0x530] sm:$0xff]
        %v3983 = vld [vmem:[#allocation4 + $0x538] sm:$0xff]
        %v3984 = vld [vmem:[#allocation4 + $0x540] sm:$0x1]
        %v3985 = vlaneseq
        %v3986 = vshrl.u32 %v3985, 7
        %v3987 = vsub.s32 0, %v3986
        %v3988 = vrot.slane %v3984, %v3987
        %v3990 = vsel %vm235, %v3979, 0
        %3992 = vmatprep.subr.mxu0 0.0
        %3993 = vmatpush1.msra.mxu0 %v3980
        %3994 = vmatprep.subr.mxu0 0.0
        %3995 = vmatpush1.msra.mxu0 %v3981
        %3996 = vmatprep.subr.mxu0 0.0
        %3997 = vmatpush1.msra.mxu0 %v3982
        %3998 = vmatprep.subr.mxu0 0.0
        %3999 = vmatpush1.msra.mxu0 %v3983
        %4000 = vmatprep.subr.mxu0 0.0
        %4001 = vmatpush1.msra.mxu0 0.0
        %4002 = vmatprep.subr.mxu0 0.0
        %4003 = vmatpush1.msra.mxu0 0.0
        %4004 = vmatprep.subr.mxu0 0.0
        %4005 = vmatpush1.msra.mxu0 0.0
        %4006 = vmatprep.subr.mxu0 0.0
        %4007 = vmatpush1.msra.mxu0 0.0
        %4008 = vmatprep.subr.mxu0 0.0
        %4009 = vmatpush1.msra.mxu0 0.0
        %4010 = vmatprep.subr.mxu0 0.0
        %4011 = vmatpush1.msra.mxu0 0.0
        %4012 = vmatprep.subr.mxu0 0.0
        %4013 = vmatpush1.msra.mxu0 0.0
        %4014 = vmatprep.subr.mxu0 0.0
        %4015 = vmatpush1.msra.mxu0 0.0
        %4016 = vmatprep.subr.mxu0 0.0
        %4017 = vmatpush1.msra.mxu0 0.0
        %4018 = vmatprep.subr.mxu0 0.0
        %4019 = vmatpush1.msra.mxu0 0.0
        %4020 = vmatprep.subr.mxu0 0.0
        %4021 = vmatpush1.msra.mxu0 0.0
        %4022 = vmatprep.subr.mxu0 0.0
        %4023 = vmatpush1.msra.mxu0 0.0
        %4024 = vmatprep.subr.mxu0 0.0
        %4025 = vmatpush1.msra.mxu0 0.0
        %4026 = vmatprep.subr.mxu0 0.0
        %4027 = vmatpush1.msra.mxu0 0.0
        %4028 = vmatprep.subr.mxu0 0.0
        %4029 = vmatpush1.msra.mxu0 0.0
        %4030 = vmatprep.subr.mxu0 0.0
        %4031 = vmatpush1.msra.mxu0 0.0
        %4032 = vmatprep.subr.mxu0 0.0
        %4033 = vmatpush1.msra.mxu0 0.0
        %4034 = vmatprep.subr.mxu0 0.0
        %4035 = vmatpush1.msra.mxu0 0.0
        %4036 = vmatprep.subr.mxu0 0.0
        %4037 = vmatpush1.msra.mxu0 0.0
        %4038 = vmatprep.subr.mxu0 0.0
        %4039 = vmatpush1.msra.mxu0 0.0
        %4040 = vmatprep.subr.mxu0 0.0
        %4041 = vmatpush1.msra.mxu0 0.0
        %4042 = vmatprep.subr.mxu0 0.0
        %4043 = vmatpush1.msra.mxu0 0.0
        %4044 = vmatprep.subr.mxu0 0.0
        %4045 = vmatpush1.msra.mxu0 0.0
        %4046 = vmatprep.subr.mxu0 0.0
        %4047 = vmatpush1.msra.mxu0 0.0
        %4048 = vmatprep.subr.mxu0 0.0
        %4049 = vmatpush1.msra.mxu0 0.0
        %4050 = vmatprep.subr.mxu0 0.0
        %4051 = vmatpush1.msra.mxu0 0.0
        %4052 = vmatprep.subr.mxu0 0.0
        %4053 = vmatpush1.msra.mxu0 0.0
        %4054 = vmatprep.subr.mxu0 0.0
        %4055 = vmatpush1.msra.mxu0 0.0
        %4056 = vmatprep.mubr.f32.mxu0 0.0
        %4057 = vmatmul.mubr.f32.gmra.mrb[0].mxu0 %v3990
        %v4058 = vpop.f32.mrb[0].mxu0
        %v4059 = vadd.f32 %v3988, %v4058
        %v4060 = vpop.f32.mrb[0].mxu0
        %4061 = vdwg.mxu0
        %v4062 = vld [vmem:[#allocation4 + $0x548] sm:$0xff]
        %v4063 = vld [vmem:[#allocation4 + $0x550] sm:$0xff]
        %v4064 = vld [vmem:[#allocation4 + $0x558] sm:$0xff]
        %v4065 = vld [vmem:[#allocation4 + $0x560] sm:$0xff]
        %v4066 = vld [vmem:[#allocation4 + $0x568] sm:$0x1]
        %v4067 = vlaneseq
        %v4068 = vshrl.u32 %v4067, 7
        %v4069 = vsub.s32 0, %v4068
        %v4070 = vrot.slane %v4066, %v4069
        %v4072 = vsel %vm235, %v2999, 0
        %4074 = vmatprep.subr.mxu0 0.0
        %4075 = vmatpush1.msra.mxu0 %v4062
        %4076 = vmatprep.subr.mxu0 0.0
        %4077 = vmatpush1.msra.mxu0 %v4063
        %4078 = vmatprep.subr.mxu0 0.0
        %4079 = vmatpush1.msra.mxu0 %v4064
        %4080 = vmatprep.subr.mxu0 0.0
        %4081 = vmatpush1.msra.mxu0 %v4065
        %4082 = vmatprep.subr.mxu0 0.0
        %4083 = vmatpush1.msra.mxu0 0.0
        %4084 = vmatprep.subr.mxu0 0.0
        %4085 = vmatpush1.msra.mxu0 0.0
        %4086 = vmatprep.subr.mxu0 0.0
        %4087 = vmatpush1.msra.mxu0 0.0
        %4088 = vmatprep.subr.mxu0 0.0
        %4089 = vmatpush1.msra.mxu0 0.0
        %4090 = vmatprep.subr.mxu0 0.0
        %4091 = vmatpush1.msra.mxu0 0.0
        %4092 = vmatprep.subr.mxu0 0.0
        %4093 = vmatpush1.msra.mxu0 0.0
        %4094 = vmatprep.subr.mxu0 0.0
        %4095 = vmatpush1.msra.mxu0 0.0
        %4096 = vmatprep.subr.mxu0 0.0
        %4097 = vmatpush1.msra.mxu0 0.0
        %4098 = vmatprep.subr.mxu0 0.0
        %4099 = vmatpush1.msra.mxu0 0.0
        %4100 = vmatprep.subr.mxu0 0.0
        %4101 = vmatpush1.msra.mxu0 0.0
        %4102 = vmatprep.subr.mxu0 0.0
        %4103 = vmatpush1.msra.mxu0 0.0
        %4104 = vmatprep.subr.mxu0 0.0
        %4105 = vmatpush1.msra.mxu0 0.0
        %4106 = vmatprep.subr.mxu0 0.0
        %4107 = vmatpush1.msra.mxu0 0.0
        %4108 = vmatprep.subr.mxu0 0.0
        %4109 = vmatpush1.msra.mxu0 0.0
        %4110 = vmatprep.subr.mxu0 0.0
        %4111 = vmatpush1.msra.mxu0 0.0
        %4112 = vmatprep.subr.mxu0 0.0
        %4113 = vmatpush1.msra.mxu0 0.0
        %4114 = vmatprep.subr.mxu0 0.0
        %4115 = vmatpush1.msra.mxu0 0.0
        %4116 = vmatprep.subr.mxu0 0.0
        %4117 = vmatpush1.msra.mxu0 0.0
        %4118 = vmatprep.subr.mxu0 0.0
        %4119 = vmatpush1.msra.mxu0 0.0
        %4120 = vmatprep.subr.mxu0 0.0
        %4121 = vmatpush1.msra.mxu0 0.0
        %4122 = vmatprep.subr.mxu0 0.0
        %4123 = vmatpush1.msra.mxu0 0.0
        %4124 = vmatprep.subr.mxu0 0.0
        %4125 = vmatpush1.msra.mxu0 0.0
        %4126 = vmatprep.subr.mxu0 0.0
        %4127 = vmatpush1.msra.mxu0 0.0
        %4128 = vmatprep.subr.mxu0 0.0
        %4129 = vmatpush1.msra.mxu0 0.0
        %4130 = vmatprep.subr.mxu0 0.0
        %4131 = vmatpush1.msra.mxu0 0.0
        %4132 = vmatprep.subr.mxu0 0.0
        %4133 = vmatpush1.msra.mxu0 0.0
        %4134 = vmatprep.subr.mxu0 0.0
        %4135 = vmatpush1.msra.mxu0 0.0
        %4136 = vmatprep.subr.mxu0 0.0
        %4137 = vmatpush1.msra.mxu0 0.0
        %4138 = vmatprep.mubr.f32.mxu0 0.0
        %4139 = vmatmul.mubr.f32.gmra.mrb[0].mxu0 %v4072
        %v4140 = vpop.f32.mrb[0].mxu0
        %v4141 = vadd.f32 %v4070, %v4140
        %v4142 = vpop.f32.mrb[0].mxu0
        %4143 = vdwg.mxu0
        %v4144 = vld [vmem:[#allocation4 + $0x570] sm:$0xff]
        %v4145 = vld [vmem:[#allocation4 + $0x578] sm:$0xff]
        %v4146 = vld [vmem:[#allocation4 + $0x580] sm:$0xff]
        %v4147 = vld [vmem:[#allocation4 + $0x588] sm:$0xff]
        %v4148 = vld [vmem:[#allocation4 + $0x590] sm:$0x1]
        %v4149 = vlaneseq
        %v4150 = vshrl.u32 %v4149, 7
        %v4151 = vsub.s32 0, %v4150
        %v4152 = vrot.slane %v4148, %v4151
        %4153 = vmatprep.subr.mxu0 0.0
        %4154 = vmatpush1.msra.mxu0 %v4144
        %4155 = vmatprep.subr.mxu0 0.0
        %4156 = vmatpush1.msra.mxu0 %v4145
        %4157 = vmatprep.subr.mxu0 0.0
        %4158 = vmatpush1.msra.mxu0 %v4146
        %4159 = vmatprep.subr.mxu0 0.0
        %4160 = vmatpush1.msra.mxu0 %v4147
        %4161 = vmatprep.subr.mxu0 0.0
        %4162 = vmatpush1.msra.mxu0 0.0
        %4163 = vmatprep.subr.mxu0 0.0
        %4164 = vmatpush1.msra.mxu0 0.0
        %4165 = vmatprep.subr.mxu0 0.0
        %4166 = vmatpush1.msra.mxu0 0.0
        %4167 = vmatprep.subr.mxu0 0.0
        %4168 = vmatpush1.msra.mxu0 0.0
        %4169 = vmatprep.subr.mxu0 0.0
        %4170 = vmatpush1.msra.mxu0 0.0
        %4171 = vmatprep.subr.mxu0 0.0
        %4172 = vmatpush1.msra.mxu0 0.0
        %4173 = vmatprep.subr.mxu0 0.0
        %4174 = vmatpush1.msra.mxu0 0.0
        %4175 = vmatprep.subr.mxu0 0.0
        %4176 = vmatpush1.msra.mxu0 0.0
        %4177 = vmatprep.subr.mxu0 0.0
        %4178 = vmatpush1.msra.mxu0 0.0
        %4179 = vmatprep.subr.mxu0 0.0
        %4180 = vmatpush1.msra.mxu0 0.0
        %4181 = vmatprep.subr.mxu0 0.0
        %4182 = vmatpush1.msra.mxu0 0.0
        %4183 = vmatprep.subr.mxu0 0.0
        %4184 = vmatpush1.msra.mxu0 0.0
        %4185 = vmatprep.subr.mxu0 0.0
        %4186 = vmatpush1.msra.mxu0 0.0
        %4187 = vmatprep.subr.mxu0 0.0
        %4188 = vmatpush1.msra.mxu0 0.0
        %4189 = vmatprep.subr.mxu0 0.0
        %4190 = vmatpush1.msra.mxu0 0.0
        %4191 = vmatprep.subr.mxu0 0.0
        %4192 = vmatpush1.msra.mxu0 0.0
        %4193 = vmatprep.subr.mxu0 0.0
        %4194 = vmatpush1.msra.mxu0 0.0
        %4195 = vmatprep.subr.mxu0 0.0
        %4196 = vmatpush1.msra.mxu0 0.0
        %4197 = vmatprep.subr.mxu0 0.0
        %4198 = vmatpush1.msra.mxu0 0.0
        %4199 = vmatprep.subr.mxu0 0.0
        %4200 = vmatpush1.msra.mxu0 0.0
        %4201 = vmatprep.subr.mxu0 0.0
        %4202 = vmatpush1.msra.mxu0 0.0
        %4203 = vmatprep.subr.mxu0 0.0
        %4204 = vmatpush1.msra.mxu0 0.0
        %4205 = vmatprep.subr.mxu0 0.0
        %4206 = vmatpush1.msra.mxu0 0.0
        %4207 = vmatprep.subr.mxu0 0.0
        %4208 = vmatpush1.msra.mxu0 0.0
        %4209 = vmatprep.subr.mxu0 0.0
        %4210 = vmatpush1.msra.mxu0 0.0
        %4211 = vmatprep.subr.mxu0 0.0
        %4212 = vmatpush1.msra.mxu0 0.0
        %4213 = vmatprep.subr.mxu0 0.0
        %4214 = vmatpush1.msra.mxu0 0.0
        %4215 = vmatprep.subr.mxu0 0.0
        %4216 = vmatpush1.msra.mxu0 0.0
        %4217 = vmatprep.mubr.f32.mxu0 0.0
        %4218 = vmatmul.mubr.f32.gmra.mrb[0].mxu0 %v4072
        %v4219 = vpop.f32.mrb[0].mxu0
        %v4220 = vadd.f32 %v4152, %v4219
        %v4221 = vpop.f32.mrb[0].mxu0
        %4222 = vdwg.mxu0
        %v4224 = vsel %vm500, %v4059, 0
        %v4227 = vsel %vm500, %v4141, 0
        %4229 = vmatprep.subr.mxu0 0.0
        %4230 = vmatpush1.xpose.msra.mxu0 %v4227
        %4231 = vmatprep.subr.mxu0 0.0
        %4232 = vmatpush1.xpose.msra.mxu0 0.0
        %4233 = vmatprep.subr.mxu0 0.0
        %4234 = vmatpush1.xpose.msra.mxu0 0.0
        %4235 = vmatprep.subr.mxu0 0.0
        %4236 = vmatpush1.xpose.msra.mxu0 0.0
        %4237 = vmatprep.subr.mxu0 0.0
        %4238 = vmatpush1.xpose.msra.mxu0 0.0
        %4239 = vmatprep.subr.mxu0 0.0
        %4240 = vmatpush1.xpose.msra.mxu0 0.0
        %4241 = vmatprep.subr.mxu0 0.0
        %4242 = vmatpush1.xpose.msra.mxu0 0.0
        %4243 = vmatprep.subr.mxu0 0.0
        %4244 = vmatpush1.xpose.msra.mxu0 0.0
        %4245 = vmatprep.subr.mxu0 0.0
        %4246 = vmatpush1.xpose.msra.mxu0 0.0
        %4247 = vmatprep.subr.mxu0 0.0
        %4248 = vmatpush1.xpose.msra.mxu0 0.0
        %4249 = vmatprep.subr.mxu0 0.0
        %4250 = vmatpush1.xpose.msra.mxu0 0.0
        %4251 = vmatprep.subr.mxu0 0.0
        %4252 = vmatpush1.xpose.msra.mxu0 0.0
        %4253 = vmatprep.subr.mxu0 0.0
        %4254 = vmatpush1.xpose.msra.mxu0 0.0
        %4255 = vmatprep.subr.mxu0 0.0
        %4256 = vmatpush1.xpose.msra.mxu0 0.0
        %4257 = vmatprep.subr.mxu0 0.0
        %4258 = vmatpush1.xpose.msra.mxu0 0.0
        %4259 = vmatprep.subr.mxu0 0.0
        %4260 = vmatpush1.xpose.msra.mxu0 0.0
        %4261 = vmatprep.subr.mxu0 0.0
        %4262 = vmatpush1.xpose.msra.mxu0 0.0
        %4263 = vmatprep.subr.mxu0 0.0
        %4264 = vmatpush1.xpose.msra.mxu0 0.0
        %4265 = vmatprep.subr.mxu0 0.0
        %4266 = vmatpush1.xpose.msra.mxu0 0.0
        %4267 = vmatprep.subr.mxu0 0.0
        %4268 = vmatpush1.xpose.msra.mxu0 0.0
        %4269 = vmatprep.subr.mxu0 0.0
        %4270 = vmatpush1.xpose.msra.mxu0 0.0
        %4271 = vmatprep.subr.mxu0 0.0
        %4272 = vmatpush1.xpose.msra.mxu0 0.0
        %4273 = vmatprep.subr.mxu0 0.0
        %4274 = vmatpush1.xpose.msra.mxu0 0.0
        %4275 = vmatprep.subr.mxu0 0.0
        %4276 = vmatpush1.xpose.msra.mxu0 0.0
        %4277 = vmatprep.subr.mxu0 0.0
        %4278 = vmatpush1.xpose.msra.mxu0 0.0
        %4279 = vmatprep.subr.mxu0 0.0
        %4280 = vmatpush1.xpose.msra.mxu0 0.0
        %4281 = vmatprep.subr.mxu0 0.0
        %4282 = vmatpush1.xpose.msra.mxu0 0.0
        %4283 = vmatprep.subr.mxu0 0.0
        %4284 = vmatpush1.xpose.msra.mxu0 0.0
        %4285 = vmatprep.subr.mxu0 0.0
        %4286 = vmatpush1.xpose.msra.mxu0 0.0
        %4287 = vmatprep.subr.mxu0 0.0
        %4288 = vmatpush1.xpose.msra.mxu0 0.0
        %4289 = vmatprep.subr.mxu0 0.0
        %4290 = vmatpush1.xpose.msra.mxu0 0.0
        %4291 = vmatprep.subr.mxu0 0.0
        %4292 = vmatpush1.xpose.msra.mxu0 0.0
        %4293 = vmatprep.mubr.f32.mxu0 0.0
        %4294 = vmatmul.mubr.f32.gmra.mrb[0].mxu0 %v4224
        %v4295 = vpop.f32.mrb[0].mxu0
        %v4296 = vadd.f32 0.0, %v4295
        %v4297 = vpop.f32.mrb[0].mxu0
        %4298 = vdwg.mxu0
        %v4299 = vsel %vm2144, %v4296, -inf
        %4300 = vmax.xlane.f32.xlu0 %v4299
        %v4301 = vpop.xlane.xlu0 %4300
        %v4302 = vsub.f32 %v4296, %v4301
        %v4303 = vmul.f32 %v4302, 1.442695
        %v4304 = vpow.pop %v4303
        %v4305 = vsel %vm2144, %v4304, 0.0
        %4306 = vadd.xlane.f32.xlu0 %v4305
        %v4307 = vpop.xlane.xlu0 %4306
        %v4308 = vrcp.pop %v4307
        %v4309 = vmul.f32 %v4304, %v4308
        %v4311 = vsel %vm2144, %v4309, 0
        %v4314 = vsel %vm2148, %v4220, 0
        %4316 = vmatprep.subr.mxu0 0.0
        %4317 = vmatpush1.msra.mxu0 %v4314
        %4318 = vmatprep.subr.mxu0 0.0
        %4319 = vmatpush1.msra.mxu0 0.0
        %4320 = vmatprep.subr.mxu0 0.0
        %4321 = vmatpush1.msra.mxu0 0.0
        %4322 = vmatprep.subr.mxu0 0.0
        %4323 = vmatpush1.msra.mxu0 0.0
        %4324 = vmatprep.subr.mxu0 0.0
        %4325 = vmatpush1.msra.mxu0 0.0
        %4326 = vmatprep.subr.mxu0 0.0
        %4327 = vmatpush1.msra.mxu0 0.0
        %4328 = vmatprep.subr.mxu0 0.0
        %4329 = vmatpush1.msra.mxu0 0.0
        %4330 = vmatprep.subr.mxu0 0.0
        %4331 = vmatpush1.msra.mxu0 0.0
        %4332 = vmatprep.subr.mxu0 0.0
        %4333 = vmatpush1.msra.mxu0 0.0
        %4334 = vmatprep.subr.mxu0 0.0
        %4335 = vmatpush1.msra.mxu0 0.0
        %4336 = vmatprep.subr.mxu0 0.0
        %4337 = vmatpush1.msra.mxu0 0.0
        %4338 = vmatprep.subr.mxu0 0.0
        %4339 = vmatpush1.msra.mxu0 0.0
        %4340 = vmatprep.subr.mxu0 0.0
        %4341 = vmatpush1.msra.mxu0 0.0
        %4342 = vmatprep.subr.mxu0 0.0
        %4343 = vmatpush1.msra.mxu0 0.0
        %4344 = vmatprep.subr.mxu0 0.0
        %4345 = vmatpush1.msra.mxu0 0.0
        %4346 = vmatprep.subr.mxu0 0.0
        %4347 = vmatpush1.msra.mxu0 0.0
        %4348 = vmatprep.subr.mxu0 0.0
        %4349 = vmatpush1.msra.mxu0 0.0
        %4350 = vmatprep.subr.mxu0 0.0
        %4351 = vmatpush1.msra.mxu0 0.0
        %4352 = vmatprep.subr.mxu0 0.0
        %4353 = vmatpush1.msra.mxu0 0.0
        %4354 = vmatprep.subr.mxu0 0.0
        %4355 = vmatpush1.msra.mxu0 0.0
        %4356 = vmatprep.subr.mxu0 0.0
        %4357 = vmatpush1.msra.mxu0 0.0
        %4358 = vmatprep.subr.mxu0 0.0
        %4359 = vmatpush1.msra.mxu0 0.0
        %4360 = vmatprep.subr.mxu0 0.0
        %4361 = vmatpush1.msra.mxu0 0.0
        %4362 = vmatprep.subr.mxu0 0.0
        %4363 = vmatpush1.msra.mxu0 0.0
        %4364 = vmatprep.subr.mxu0 0.0
        %4365 = vmatpush1.msra.mxu0 0.0
        %4366 = vmatprep.subr.mxu0 0.0
        %4367 = vmatpush1.msra.mxu0 0.0
        %4368 = vmatprep.subr.mxu0 0.0
        %4369 = vmatpush1.msra.mxu0 0.0
        %4370 = vmatprep.subr.mxu0 0.0
        %4371 = vmatpush1.msra.mxu0 0.0
        %4372 = vmatprep.subr.mxu0 0.0
        %4373 = vmatpush1.msra.mxu0 0.0
        %4374 = vmatprep.subr.mxu0 0.0
        %4375 = vmatpush1.msra.mxu0 0.0
        %4376 = vmatprep.subr.mxu0 0.0
        %4377 = vmatpush1.msra.mxu0 0.0
        %4378 = vmatprep.subr.mxu0 0.0
        %4379 = vmatpush1.msra.mxu0 0.0
        %4380 = vmatprep.mubr.f32.mxu0 0.0
        %4381 = vmatmul.mubr.f32.gmra.mrb[0].mxu0 %v4311
        %v4382 = vpop.f32.mrb[0].mxu0
        %v4383 = vadd.f32 0.0, %v4382
        %v4384 = vpop.f32.mrb[0].mxu0
        %4385 = vdwg.mxu0
        %v4386 = vld [vmem:[#allocation4 + $0x598] sm:$0xff]
        %v4387 = vld [vmem:[#allocation4 + $0x5a0] sm:$0xff]
        %v4388 = vld [vmem:[#allocation4 + $0x5a8] sm:$0xff]
        %v4389 = vld [vmem:[#allocation4 + $0x5b0] sm:$0xff]
        %v4390 = vld [vmem:[#allocation4 + $0x5b8] sm:$0xff]
        %v4391 = vld [vmem:[#allocation4 + $0x5c0] sm:$0xff]
        %v4392 = vld [vmem:[#allocation4 + $0x5c8] sm:$0x1]
        %v4393 = vlaneseq
        %v4394 = vshrl.u32 %v4393, 7
        %v4395 = vsub.s32 0, %v4394
        %v4396 = vrot.slane %v4392, %v4395
        %4397 = vmatprep.subr.mxu0 0.0
        %4398 = vmatpush1.msra.mxu0 %v4388
        %4399 = vmatprep.subr.mxu0 0.0
        %4400 = vmatpush1.msra.mxu0 %v4389
        %4401 = vmatprep.subr.mxu0 0.0
        %4402 = vmatpush1.msra.mxu0 %v4390
        %4403 = vmatprep.subr.mxu0 0.0
        %4404 = vmatpush1.msra.mxu0 %v4391
        %4405 = vmatprep.subr.mxu0 0.0
        %4406 = vmatpush1.msra.mxu0 0.0
        %4407 = vmatprep.subr.mxu0 0.0
        %4408 = vmatpush1.msra.mxu0 0.0
        %4409 = vmatprep.subr.mxu0 0.0
        %4410 = vmatpush1.msra.mxu0 0.0
        %4411 = vmatprep.subr.mxu0 0.0
        %4412 = vmatpush1.msra.mxu0 0.0
        %4413 = vmatprep.subr.mxu0 0.0
        %4414 = vmatpush1.msra.mxu0 0.0
        %4415 = vmatprep.subr.mxu0 0.0
        %4416 = vmatpush1.msra.mxu0 0.0
        %4417 = vmatprep.subr.mxu0 0.0
        %4418 = vmatpush1.msra.mxu0 0.0
        %4419 = vmatprep.subr.mxu0 0.0
        %4420 = vmatpush1.msra.mxu0 0.0
        %4421 = vmatprep.subr.mxu0 0.0
        %4422 = vmatpush1.msra.mxu0 0.0
        %4423 = vmatprep.subr.mxu0 0.0
        %4424 = vmatpush1.msra.mxu0 0.0
        %4425 = vmatprep.subr.mxu0 0.0
        %4426 = vmatpush1.msra.mxu0 0.0
        %4427 = vmatprep.subr.mxu0 0.0
        %4428 = vmatpush1.msra.mxu0 0.0
        %4429 = vmatprep.subr.mxu0 0.0
        %4430 = vmatpush1.msra.mxu0 0.0
        %4431 = vmatprep.subr.mxu0 0.0
        %4432 = vmatpush1.msra.mxu0 0.0
        %4433 = vmatprep.subr.mxu0 0.0
        %4434 = vmatpush1.msra.mxu0 0.0
        %4435 = vmatprep.subr.mxu0 0.0
        %4436 = vmatpush1.msra.mxu0 0.0
        %4437 = vmatprep.subr.mxu0 0.0
        %4438 = vmatpush1.msra.mxu0 0.0
        %4439 = vmatprep.subr.mxu0 0.0
        %4440 = vmatpush1.msra.mxu0 0.0
        %4441 = vmatprep.subr.mxu0 0.0
        %4442 = vmatpush1.msra.mxu0 0.0
        %4443 = vmatprep.subr.mxu0 0.0
        %4444 = vmatpush1.msra.mxu0 0.0
        %4445 = vmatprep.subr.mxu0 0.0
        %4446 = vmatpush1.msra.mxu0 0.0
        %4447 = vmatprep.subr.mxu0 0.0
        %4448 = vmatpush1.msra.mxu0 0.0
        %4449 = vmatprep.subr.mxu0 0.0
        %4450 = vmatpush1.msra.mxu0 0.0
        %4451 = vmatprep.subr.mxu0 0.0
        %4452 = vmatpush1.msra.mxu0 0.0
        %4453 = vmatprep.subr.mxu0 0.0
        %4454 = vmatpush1.msra.mxu0 0.0
        %4455 = vmatprep.subr.mxu0 0.0
        %4456 = vmatpush1.msra.mxu0 0.0
        %4457 = vmatprep.subr.mxu0 0.0
        %4458 = vmatpush1.msra.mxu0 0.0
        %4459 = vmatprep.subr.mxu0 0.0
        %4460 = vmatpush1.msra.mxu0 0.0
        %4461 = vmatprep.mubr.f32.mxu0 0.0
        %4462 = vmatmul.mubr.f32.gmra.mrb[0].mxu0 %v3990
        %v4463 = vpop.f32.mrb[0].mxu0
        %v4464 = vadd.f32 %v4396, %v4463
        %v4465 = vpop.f32.mrb[0].mxu0
        %4466 = vdwg.mxu0
        %v4467 = vld [vmem:[#allocation4 + $0x5d0] sm:$0xff]
        %v4468 = vld [vmem:[#allocation4 + $0x5d8] sm:$0xff]
        %v4469 = vld [vmem:[#allocation4 + $0x5e0] sm:$0xff]
        %v4470 = vld [vmem:[#allocation4 + $0x5e8] sm:$0xff]
        %v4471 = vld [vmem:[#allocation4 + $0x5f0] sm:$0x1]
        %v4472 = vlaneseq
        %v4473 = vshrl.u32 %v4472, 7
        %v4474 = vsub.s32 0, %v4473
        %v4475 = vrot.slane %v4471, %v4474
        %4476 = vmatprep.subr.mxu0 0.0
        %4477 = vmatpush1.msra.mxu0 %v4467
        %4478 = vmatprep.subr.mxu0 0.0
        %4479 = vmatpush1.msra.mxu0 %v4468
        %4480 = vmatprep.subr.mxu0 0.0
        %4481 = vmatpush1.msra.mxu0 %v4469
        %4482 = vmatprep.subr.mxu0 0.0
        %4483 = vmatpush1.msra.mxu0 %v4470
        %4484 = vmatprep.subr.mxu0 0.0
        %4485 = vmatpush1.msra.mxu0 0.0
        %4486 = vmatprep.subr.mxu0 0.0
        %4487 = vmatpush1.msra.mxu0 0.0
        %4488 = vmatprep.subr.mxu0 0.0
        %4489 = vmatpush1.msra.mxu0 0.0
        %4490 = vmatprep.subr.mxu0 0.0
        %4491 = vmatpush1.msra.mxu0 0.0
        %4492 = vmatprep.subr.mxu0 0.0
        %4493 = vmatpush1.msra.mxu0 0.0
        %4494 = vmatprep.subr.mxu0 0.0
        %4495 = vmatpush1.msra.mxu0 0.0
        %4496 = vmatprep.subr.mxu0 0.0
        %4497 = vmatpush1.msra.mxu0 0.0
        %4498 = vmatprep.subr.mxu0 0.0
        %4499 = vmatpush1.msra.mxu0 0.0
        %4500 = vmatprep.subr.mxu0 0.0
        %4501 = vmatpush1.msra.mxu0 0.0
        %4502 = vmatprep.subr.mxu0 0.0
        %4503 = vmatpush1.msra.mxu0 0.0
        %4504 = vmatprep.subr.mxu0 0.0
        %4505 = vmatpush1.msra.mxu0 0.0
        %4506 = vmatprep.subr.mxu0 0.0
        %4507 = vmatpush1.msra.mxu0 0.0
        %4508 = vmatprep.subr.mxu0 0.0
        %4509 = vmatpush1.msra.mxu0 0.0
        %4510 = vmatprep.subr.mxu0 0.0
        %4511 = vmatpush1.msra.mxu0 0.0
        %4512 = vmatprep.subr.mxu0 0.0
        %4513 = vmatpush1.msra.mxu0 0.0
        %4514 = vmatprep.subr.mxu0 0.0
        %4515 = vmatpush1.msra.mxu0 0.0
        %4516 = vmatprep.subr.mxu0 0.0
        %4517 = vmatpush1.msra.mxu0 0.0
        %4518 = vmatprep.subr.mxu0 0.0
        %4519 = vmatpush1.msra.mxu0 0.0
        %4520 = vmatprep.subr.mxu0 0.0
        %4521 = vmatpush1.msra.mxu0 0.0
        %4522 = vmatprep.subr.mxu0 0.0
        %4523 = vmatpush1.msra.mxu0 0.0
        %4524 = vmatprep.subr.mxu0 0.0
        %4525 = vmatpush1.msra.mxu0 0.0
        %4526 = vmatprep.subr.mxu0 0.0
        %4527 = vmatpush1.msra.mxu0 0.0
        %4528 = vmatprep.subr.mxu0 0.0
        %4529 = vmatpush1.msra.mxu0 0.0
        %4530 = vmatprep.subr.mxu0 0.0
        %4531 = vmatpush1.msra.mxu0 0.0
        %4532 = vmatprep.subr.mxu0 0.0
        %4533 = vmatpush1.msra.mxu0 0.0
        %4534 = vmatprep.subr.mxu0 0.0
        %4535 = vmatpush1.msra.mxu0 0.0
        %4536 = vmatprep.subr.mxu0 0.0
        %4537 = vmatpush1.msra.mxu0 0.0
        %4538 = vmatprep.subr.mxu0 0.0
        %4539 = vmatpush1.msra.mxu0 0.0
        %4540 = vmatprep.mubr.f32.mxu0 0.0
        %4541 = vmatmul.mubr.f32.gmra.mrb[0].mxu0 %v4072
        %v4542 = vpop.f32.mrb[0].mxu0
        %v4543 = vadd.f32 %v4475, %v4542
        %v4544 = vpop.f32.mrb[0].mxu0
        %4545 = vdwg.mxu0
        %v4546 = vld [vmem:[#allocation4 + $0x5f8] sm:$0xff]
        %v4547 = vld [vmem:[#allocation4 + $0x600] sm:$0xff]
        %v4548 = vld [vmem:[#allocation4 + $0x608] sm:$0xff]
        %v4549 = vld [vmem:[#allocation4 + $0x610] sm:$0xff]
        %v4550 = vld [vmem:[#allocation4 + $0x618] sm:$0x1]
        %v4551 = vlaneseq
        %v4552 = vshrl.u32 %v4551, 7
        %v4553 = vsub.s32 0, %v4552
        %v4554 = vrot.slane %v4550, %v4553
        %4555 = vmatprep.subr.mxu0 0.0
        %4556 = vmatpush1.msra.mxu0 %v4546
        %4557 = vmatprep.subr.mxu0 0.0
        %4558 = vmatpush1.msra.mxu0 %v4547
        %4559 = vmatprep.subr.mxu0 0.0
        %4560 = vmatpush1.msra.mxu0 %v4548
        %4561 = vmatprep.subr.mxu0 0.0
        %4562 = vmatpush1.msra.mxu0 %v4549
        %4563 = vmatprep.subr.mxu0 0.0
        %4564 = vmatpush1.msra.mxu0 0.0
        %4565 = vmatprep.subr.mxu0 0.0
        %4566 = vmatpush1.msra.mxu0 0.0
        %4567 = vmatprep.subr.mxu0 0.0
        %4568 = vmatpush1.msra.mxu0 0.0
        %4569 = vmatprep.subr.mxu0 0.0
        %4570 = vmatpush1.msra.mxu0 0.0
        %4571 = vmatprep.subr.mxu0 0.0
        %4572 = vmatpush1.msra.mxu0 0.0
        %4573 = vmatprep.subr.mxu0 0.0
        %4574 = vmatpush1.msra.mxu0 0.0
        %4575 = vmatprep.subr.mxu0 0.0
        %4576 = vmatpush1.msra.mxu0 0.0
        %4577 = vmatprep.subr.mxu0 0.0
        %4578 = vmatpush1.msra.mxu0 0.0
        %4579 = vmatprep.subr.mxu0 0.0
        %4580 = vmatpush1.msra.mxu0 0.0
        %4581 = vmatprep.subr.mxu0 0.0
        %4582 = vmatpush1.msra.mxu0 0.0
        %4583 = vmatprep.subr.mxu0 0.0
        %4584 = vmatpush1.msra.mxu0 0.0
        %4585 = vmatprep.subr.mxu0 0.0
        %4586 = vmatpush1.msra.mxu0 0.0
        %4587 = vmatprep.subr.mxu0 0.0
        %4588 = vmatpush1.msra.mxu0 0.0
        %4589 = vmatprep.subr.mxu0 0.0
        %4590 = vmatpush1.msra.mxu0 0.0
        %4591 = vmatprep.subr.mxu0 0.0
        %4592 = vmatpush1.msra.mxu0 0.0
        %4593 = vmatprep.subr.mxu0 0.0
        %4594 = vmatpush1.msra.mxu0 0.0
        %4595 = vmatprep.subr.mxu0 0.0
        %4596 = vmatpush1.msra.mxu0 0.0
        %4597 = vmatprep.subr.mxu0 0.0
        %4598 = vmatpush1.msra.mxu0 0.0
        %4599 = vmatprep.subr.mxu0 0.0
        %4600 = vmatpush1.msra.mxu0 0.0
        %4601 = vmatprep.subr.mxu0 0.0
        %4602 = vmatpush1.msra.mxu0 0.0
        %4603 = vmatprep.subr.mxu0 0.0
        %4604 = vmatpush1.msra.mxu0 0.0
        %4605 = vmatprep.subr.mxu0 0.0
        %4606 = vmatpush1.msra.mxu0 0.0
        %4607 = vmatprep.subr.mxu0 0.0
        %4608 = vmatpush1.msra.mxu0 0.0
        %4609 = vmatprep.subr.mxu0 0.0
        %4610 = vmatpush1.msra.mxu0 0.0
        %4611 = vmatprep.subr.mxu0 0.0
        %4612 = vmatpush1.msra.mxu0 0.0
        %4613 = vmatprep.subr.mxu0 0.0
        %4614 = vmatpush1.msra.mxu0 0.0
        %4615 = vmatprep.subr.mxu0 0.0
        %4616 = vmatpush1.msra.mxu0 0.0
        %4617 = vmatprep.subr.mxu0 0.0
        %4618 = vmatpush1.msra.mxu0 0.0
        %4619 = vmatprep.mubr.f32.mxu0 0.0
        %4620 = vmatmul.mubr.f32.gmra.mrb[0].mxu0 %v4072
        %v4621 = vpop.f32.mrb[0].mxu0
        %v4622 = vadd.f32 %v4554, %v4621
        %v4623 = vpop.f32.mrb[0].mxu0
        %4624 = vdwg.mxu0
        %v4626 = vsel %vm500, %v4464, 0
        %v4629 = vsel %vm500, %v4543, 0
        %4631 = vmatprep.subr.mxu0 0.0
        %4632 = vmatpush1.xpose.msra.mxu0 %v4629
        %4633 = vmatprep.subr.mxu0 0.0
        %4634 = vmatpush1.xpose.msra.mxu0 0.0
        %4635 = vmatprep.subr.mxu0 0.0
        %4636 = vmatpush1.xpose.msra.mxu0 0.0
        %4637 = vmatprep.subr.mxu0 0.0
        %4638 = vmatpush1.xpose.msra.mxu0 0.0
        %4639 = vmatprep.subr.mxu0 0.0
        %4640 = vmatpush1.xpose.msra.mxu0 0.0
        %4641 = vmatprep.subr.mxu0 0.0
        %4642 = vmatpush1.xpose.msra.mxu0 0.0
        %4643 = vmatprep.subr.mxu0 0.0
        %4644 = vmatpush1.xpose.msra.mxu0 0.0
        %4645 = vmatprep.subr.mxu0 0.0
        %4646 = vmatpush1.xpose.msra.mxu0 0.0
        %4647 = vmatprep.subr.mxu0 0.0
        %4648 = vmatpush1.xpose.msra.mxu0 0.0
        %4649 = vmatprep.subr.mxu0 0.0
        %4650 = vmatpush1.xpose.msra.mxu0 0.0
        %4651 = vmatprep.subr.mxu0 0.0
        %4652 = vmatpush1.xpose.msra.mxu0 0.0
        %4653 = vmatprep.subr.mxu0 0.0
        %4654 = vmatpush1.xpose.msra.mxu0 0.0
        %4655 = vmatprep.subr.mxu0 0.0
        %4656 = vmatpush1.xpose.msra.mxu0 0.0
        %4657 = vmatprep.subr.mxu0 0.0
        %4658 = vmatpush1.xpose.msra.mxu0 0.0
        %4659 = vmatprep.subr.mxu0 0.0
        %4660 = vmatpush1.xpose.msra.mxu0 0.0
        %4661 = vmatprep.subr.mxu0 0.0
        %4662 = vmatpush1.xpose.msra.mxu0 0.0
        %4663 = vmatprep.subr.mxu0 0.0
        %4664 = vmatpush1.xpose.msra.mxu0 0.0
        %4665 = vmatprep.subr.mxu0 0.0
        %4666 = vmatpush1.xpose.msra.mxu0 0.0
        %4667 = vmatprep.subr.mxu0 0.0
        %4668 = vmatpush1.xpose.msra.mxu0 0.0
        %4669 = vmatprep.subr.mxu0 0.0
        %4670 = vmatpush1.xpose.msra.mxu0 0.0
        %4671 = vmatprep.subr.mxu0 0.0
        %4672 = vmatpush1.xpose.msra.mxu0 0.0
        %4673 = vmatprep.subr.mxu0 0.0
        %4674 = vmatpush1.xpose.msra.mxu0 0.0
        %4675 = vmatprep.subr.mxu0 0.0
        %4676 = vmatpush1.xpose.msra.mxu0 0.0
        %4677 = vmatprep.subr.mxu0 0.0
        %4678 = vmatpush1.xpose.msra.mxu0 0.0
        %4679 = vmatprep.subr.mxu0 0.0
        %4680 = vmatpush1.xpose.msra.mxu0 0.0
        %4681 = vmatprep.subr.mxu0 0.0
        %4682 = vmatpush1.xpose.msra.mxu0 0.0
        %4683 = vmatprep.subr.mxu0 0.0
        %4684 = vmatpush1.xpose.msra.mxu0 0.0
        %4685 = vmatprep.subr.mxu0 0.0
        %4686 = vmatpush1.xpose.msra.mxu0 0.0
        %4687 = vmatprep.subr.mxu0 0.0
        %4688 = vmatpush1.xpose.msra.mxu0 0.0
        %4689 = vmatprep.subr.mxu0 0.0
        %4690 = vmatpush1.xpose.msra.mxu0 0.0
        %4691 = vmatprep.subr.mxu0 0.0
        %4692 = vmatpush1.xpose.msra.mxu0 0.0
        %4693 = vmatprep.subr.mxu0 0.0
        %4694 = vmatpush1.xpose.msra.mxu0 0.0
        %4695 = vmatprep.mubr.f32.mxu0 0.0
        %4696 = vmatmul.mubr.f32.gmra.mrb[0].mxu0 %v4626
        %v4697 = vpop.f32.mrb[0].mxu0
        %v4698 = vadd.f32 0.0, %v4697
        %v4699 = vpop.f32.mrb[0].mxu0
        %4700 = vdwg.mxu0
        %v4701 = vsel %vm2144, %v4698, -inf
        %4702 = vmax.xlane.f32.xlu0 %v4701
        %v4703 = vpop.xlane.xlu0 %4702
        %v4704 = vsub.f32 %v4698, %v4703
        %v4705 = vmul.f32 %v4704, 1.442695
        %v4706 = vpow.pop %v4705
        %v4707 = vsel %vm2144, %v4706, 0.0
        %4708 = vadd.xlane.f32.xlu0 %v4707
        %v4709 = vpop.xlane.xlu0 %4708
        %v4710 = vrcp.pop %v4709
        %v4711 = vmul.f32 %v4706, %v4710
        %v4713 = vsel %vm2144, %v4711, 0
        %v4716 = vsel %vm2148, %v4622, 0
        %4718 = vmatprep.subr.mxu0 0.0
        %4719 = vmatpush1.msra.mxu0 %v4716
        %4720 = vmatprep.subr.mxu0 0.0
        %4721 = vmatpush1.msra.mxu0 0.0
        %4722 = vmatprep.subr.mxu0 0.0
        %4723 = vmatpush1.msra.mxu0 0.0
        %4724 = vmatprep.subr.mxu0 0.0
        %4725 = vmatpush1.msra.mxu0 0.0
        %4726 = vmatprep.subr.mxu0 0.0
        %4727 = vmatpush1.msra.mxu0 0.0
        %4728 = vmatprep.subr.mxu0 0.0
        %4729 = vmatpush1.msra.mxu0 0.0
        %4730 = vmatprep.subr.mxu0 0.0
        %4731 = vmatpush1.msra.mxu0 0.0
        %4732 = vmatprep.subr.mxu0 0.0
        %4733 = vmatpush1.msra.mxu0 0.0
        %4734 = vmatprep.subr.mxu0 0.0
        %4735 = vmatpush1.msra.mxu0 0.0
        %4736 = vmatprep.subr.mxu0 0.0
        %4737 = vmatpush1.msra.mxu0 0.0
        %4738 = vmatprep.subr.mxu0 0.0
        %4739 = vmatpush1.msra.mxu0 0.0
        %4740 = vmatprep.subr.mxu0 0.0
        %4741 = vmatpush1.msra.mxu0 0.0
        %4742 = vmatprep.subr.mxu0 0.0
        %4743 = vmatpush1.msra.mxu0 0.0
        %4744 = vmatprep.subr.mxu0 0.0
        %4745 = vmatpush1.msra.mxu0 0.0
        %4746 = vmatprep.subr.mxu0 0.0
        %4747 = vmatpush1.msra.mxu0 0.0
        %4748 = vmatprep.subr.mxu0 0.0
        %4749 = vmatpush1.msra.mxu0 0.0
        %4750 = vmatprep.subr.mxu0 0.0
        %4751 = vmatpush1.msra.mxu0 0.0
        %4752 = vmatprep.subr.mxu0 0.0
        %4753 = vmatpush1.msra.mxu0 0.0
        %4754 = vmatprep.subr.mxu0 0.0
        %4755 = vmatpush1.msra.mxu0 0.0
        %4756 = vmatprep.subr.mxu0 0.0
        %4757 = vmatpush1.msra.mxu0 0.0
        %4758 = vmatprep.subr.mxu0 0.0
        %4759 = vmatpush1.msra.mxu0 0.0
        %4760 = vmatprep.subr.mxu0 0.0
        %4761 = vmatpush1.msra.mxu0 0.0
        %4762 = vmatprep.subr.mxu0 0.0
        %4763 = vmatpush1.msra.mxu0 0.0
        %4764 = vmatprep.subr.mxu0 0.0
        %4765 = vmatpush1.msra.mxu0 0.0
        %4766 = vmatprep.subr.mxu0 0.0
        %4767 = vmatpush1.msra.mxu0 0.0
        %4768 = vmatprep.subr.mxu0 0.0
        %4769 = vmatpush1.msra.mxu0 0.0
        %4770 = vmatprep.subr.mxu0 0.0
        %4771 = vmatpush1.msra.mxu0 0.0
        %4772 = vmatprep.subr.mxu0 0.0
        %4773 = vmatpush1.msra.mxu0 0.0
        %4774 = vmatprep.subr.mxu0 0.0
        %4775 = vmatpush1.msra.mxu0 0.0
        %4776 = vmatprep.subr.mxu0 0.0
        %4777 = vmatpush1.msra.mxu0 0.0
        %4778 = vmatprep.subr.mxu0 0.0
        %4779 = vmatpush1.msra.mxu0 0.0
        %4780 = vmatprep.subr.mxu0 0.0
        %4781 = vmatpush1.msra.mxu0 0.0
        %4782 = vmatprep.mubr.f32.mxu0 0.0
        %4783 = vmatmul.mubr.f32.gmra.mrb[0].mxu0 %v4713
        %v4784 = vpop.f32.mrb[0].mxu0
        %v4785 = vadd.f32 0.0, %v4784
        %v4786 = vpop.f32.mrb[0].mxu0
        %4787 = vdwg.mxu0
        %v4788 = vld [vmem:[#allocation4 + $0x620] sm:$0xff]
        %v4789 = vld [vmem:[#allocation4 + $0x628] sm:$0xff]
        %v4791 = vsel %vm500, %v4785, 0
        %4793 = vmatprep.subr.mxu0 0.0
        %4794 = vmatpush1.msra.mxu0 %v4788
        %4795 = vmatprep.subr.mxu0 0.0
        %4796 = vmatpush1.msra.mxu0 %v4789
        %4797 = vmatprep.subr.mxu0 0.0
        %4798 = vmatpush1.msra.mxu0 0.0
        %4799 = vmatprep.subr.mxu0 0.0
        %4800 = vmatpush1.msra.mxu0 0.0
        %4801 = vmatprep.subr.mxu0 0.0
        %4802 = vmatpush1.msra.mxu0 0.0
        %4803 = vmatprep.subr.mxu0 0.0
        %4804 = vmatpush1.msra.mxu0 0.0
        %4805 = vmatprep.subr.mxu0 0.0
        %4806 = vmatpush1.msra.mxu0 0.0
        %4807 = vmatprep.subr.mxu0 0.0
        %4808 = vmatpush1.msra.mxu0 0.0
        %4809 = vmatprep.subr.mxu0 0.0
        %4810 = vmatpush1.msra.mxu0 0.0
        %4811 = vmatprep.subr.mxu0 0.0
        %4812 = vmatpush1.msra.mxu0 0.0
        %4813 = vmatprep.subr.mxu0 0.0
        %4814 = vmatpush1.msra.mxu0 0.0
        %4815 = vmatprep.subr.mxu0 0.0
        %4816 = vmatpush1.msra.mxu0 0.0
        %4817 = vmatprep.subr.mxu0 0.0
        %4818 = vmatpush1.msra.mxu0 0.0
        %4819 = vmatprep.subr.mxu0 0.0
        %4820 = vmatpush1.msra.mxu0 0.0
        %4821 = vmatprep.subr.mxu0 0.0
        %4822 = vmatpush1.msra.mxu0 0.0
        %4823 = vmatprep.subr.mxu0 0.0
        %4824 = vmatpush1.msra.mxu0 0.0
        %4825 = vmatprep.subr.mxu0 0.0
        %4826 = vmatpush1.msra.mxu0 0.0
        %4827 = vmatprep.subr.mxu0 0.0
        %4828 = vmatpush1.msra.mxu0 0.0
        %4829 = vmatprep.subr.mxu0 0.0
        %4830 = vmatpush1.msra.mxu0 0.0
        %4831 = vmatprep.subr.mxu0 0.0
        %4832 = vmatpush1.msra.mxu0 0.0
        %4833 = vmatprep.subr.mxu0 0.0
        %4834 = vmatpush1.msra.mxu0 0.0
        %4835 = vmatprep.subr.mxu0 0.0
        %4836 = vmatpush1.msra.mxu0 0.0
        %4837 = vmatprep.subr.mxu0 0.0
        %4838 = vmatpush1.msra.mxu0 0.0
        %4839 = vmatprep.subr.mxu0 0.0
        %4840 = vmatpush1.msra.mxu0 0.0
        %4841 = vmatprep.subr.mxu0 0.0
        %4842 = vmatpush1.msra.mxu0 0.0
        %4843 = vmatprep.subr.mxu0 0.0
        %4844 = vmatpush1.msra.mxu0 0.0
        %4845 = vmatprep.subr.mxu0 0.0
        %4846 = vmatpush1.msra.mxu0 0.0
        %4847 = vmatprep.subr.mxu0 0.0
        %4848 = vmatpush1.msra.mxu0 0.0
        %4849 = vmatprep.subr.mxu0 0.0
        %4850 = vmatpush1.msra.mxu0 0.0
        %4851 = vmatprep.subr.mxu0 0.0
        %4852 = vmatpush1.msra.mxu0 0.0
        %4853 = vmatprep.subr.mxu0 0.0
        %4854 = vmatpush1.msra.mxu0 0.0
        %4855 = vmatprep.subr.mxu0 0.0
        %4856 = vmatpush1.msra.mxu0 0.0
        %4857 = vmatprep.mubr.f32.mxu0 0.0
        %4858 = vmatmul.mubr.f32.gmra.mrb[0].mxu0 %v4791
        %v4859 = vpop.f32.mrb[0].mxu0
        %v4860 = vadd.f32 0.0, %v4859
        %v4861 = vpop.f32.mrb[0].mxu0
        %4862 = vdwg.mxu0
        %v4864 = vsel %vm500, %v4383, 0
        %4866 = vmatprep.subr.mxu0 0.0
        %4867 = vmatpush1.msra.mxu0 %v4386
        %4868 = vmatprep.subr.mxu0 0.0
        %4869 = vmatpush1.msra.mxu0 %v4387
        %4870 = vmatprep.subr.mxu0 0.0
        %4871 = vmatpush1.msra.mxu0 0.0
        %4872 = vmatprep.subr.mxu0 0.0
        %4873 = vmatpush1.msra.mxu0 0.0
        %4874 = vmatprep.subr.mxu0 0.0
        %4875 = vmatpush1.msra.mxu0 0.0
        %4876 = vmatprep.subr.mxu0 0.0
        %4877 = vmatpush1.msra.mxu0 0.0
        %4878 = vmatprep.subr.mxu0 0.0
        %4879 = vmatpush1.msra.mxu0 0.0
        %4880 = vmatprep.subr.mxu0 0.0
        %4881 = vmatpush1.msra.mxu0 0.0
        %4882 = vmatprep.subr.mxu0 0.0
        %4883 = vmatpush1.msra.mxu0 0.0
        %4884 = vmatprep.subr.mxu0 0.0
        %4885 = vmatpush1.msra.mxu0 0.0
        %4886 = vmatprep.subr.mxu0 0.0
        %4887 = vmatpush1.msra.mxu0 0.0
        %4888 = vmatprep.subr.mxu0 0.0
        %4889 = vmatpush1.msra.mxu0 0.0
        %4890 = vmatprep.subr.mxu0 0.0
        %4891 = vmatpush1.msra.mxu0 0.0
        %4892 = vmatprep.subr.mxu0 0.0
        %4893 = vmatpush1.msra.mxu0 0.0
        %4894 = vmatprep.subr.mxu0 0.0
        %4895 = vmatpush1.msra.mxu0 0.0
        %4896 = vmatprep.subr.mxu0 0.0
        %4897 = vmatpush1.msra.mxu0 0.0
        %4898 = vmatprep.subr.mxu0 0.0
        %4899 = vmatpush1.msra.mxu0 0.0
        %4900 = vmatprep.subr.mxu0 0.0
        %4901 = vmatpush1.msra.mxu0 0.0
        %4902 = vmatprep.subr.mxu0 0.0
        %4903 = vmatpush1.msra.mxu0 0.0
        %4904 = vmatprep.subr.mxu0 0.0
        %4905 = vmatpush1.msra.mxu0 0.0
        %4906 = vmatprep.subr.mxu0 0.0
        %4907 = vmatpush1.msra.mxu0 0.0
        %4908 = vmatprep.subr.mxu0 0.0
        %4909 = vmatpush1.msra.mxu0 0.0
        %4910 = vmatprep.subr.mxu0 0.0
        %4911 = vmatpush1.msra.mxu0 0.0
        %4912 = vmatprep.subr.mxu0 0.0
        %4913 = vmatpush1.msra.mxu0 0.0
        %4914 = vmatprep.subr.mxu0 0.0
        %4915 = vmatpush1.msra.mxu0 0.0
        %4916 = vmatprep.subr.mxu0 0.0
        %4917 = vmatpush1.msra.mxu0 0.0
        %4918 = vmatprep.subr.mxu0 0.0
        %4919 = vmatpush1.msra.mxu0 0.0
        %4920 = vmatprep.subr.mxu0 0.0
        %4921 = vmatpush1.msra.mxu0 0.0
        %4922 = vmatprep.subr.mxu0 0.0
        %4923 = vmatpush1.msra.mxu0 0.0
        %4924 = vmatprep.subr.mxu0 0.0
        %4925 = vmatpush1.msra.mxu0 0.0
        %4926 = vmatprep.subr.mxu0 0.0
        %4927 = vmatpush1.msra.mxu0 0.0
        %4928 = vmatprep.subr.mxu0 0.0
        %4929 = vmatpush1.msra.mxu0 0.0
        %4930 = vmatprep.mubr.f32.mxu0 0.0
        %4931 = vmatmul.mubr.f32.gmra.mrb[0].mxu0 %v4864
        %v4932 = vpop.f32.mrb[0].mxu0
        %v4933 = vadd.f32 %v4860, %v4932
        %v4934 = vpop.f32.mrb[0].mxu0
        %4935 = vdwg.mxu0
        %v4936 = vld [vmem:[#allocation4 + $0x630] sm:$0x1]
        %v4937 = vlaneseq
        %v4938 = vshrl.u32 %v4937, 7
        %v4939 = vsub.s32 0, %v4938
        %v4940 = vrot.slane %v4936, %v4939
        %v4941 = vadd.f32 %v4933, %v4940
        %v4942 = vadd.f32 %v3979, %v4941
        %v4943 = vsel %vm235, %v4942, 0.0
        %4944 = vadd.xlane.f32.xlu0 %v4943
        %v4945 = vpop.xlane.xlu0 %4944
        %v4946 = vmul.f32 %v4945, %v1323
        %v4947 = vsub.f32 %v4942, %v4946
        %v4948 = vmul.f32 %v4947, %v4947
        %v4949 = vsel %vm235, %v4948, 0.0
        %4950 = vadd.xlane.f32.xlu0 %v4949
        %v4951 = vpop.xlane.xlu0 %4950
        %v4952 = vmul.f32 %v4951, %v1323
        %v4953 = vadd.f32 %v4952, 1e-05
        %v4954 = vrsqrt.pop %v4953
        %v4955 = vmul.f32 %v4947, %v4954
        %v4956 = vld [vmem:[#allocation4 + $0x638] sm:$0x1]
        %v4957 = vlaneseq
        %v4958 = vshrl.u32 %v4957, 7
        %v4959 = vsub.s32 0, %v4958
        %v4960 = vrot.slane %v4956, %v4959
        %v4961 = vmul.f32 %v4955, %v4960
        %v4962 = vld [vmem:[#allocation4 + $0x640] sm:$0x1]
        %v4963 = vlaneseq
        %v4964 = vshrl.u32 %v4963, 7
        %v4965 = vsub.s32 0, %v4964
        %v4966 = vrot.slane %v4962, %v4965
        %v4967 = vadd.f32 %v4961, %v4966
        %v4968 = vld [vmem:[#allocation4 + $0x648] sm:$0xff]
        %v4969 = vld [vmem:[#allocation4 + $0x650] sm:$0xff]
        %v4970 = vld [vmem:[#allocation4 + $0x658] sm:$0xff]
        %v4971 = vld [vmem:[#allocation4 + $0x660] sm:$0xff]
        %v4972 = vld [vmem:[#allocation4 + $0x668] sm:$0x1]
        %v4973 = vlaneseq
        %v4974 = vshrl.u32 %v4973, 7
        %v4975 = vsub.s32 0, %v4974
        %v4976 = vrot.slane %v4972, %v4975
        %v4978 = vsel %vm235, %v4967, 0
        %4980 = vmatprep.subr.mxu0 0.0
        %4981 = vmatpush1.msra.mxu0 %v4968
        %4982 = vmatprep.subr.mxu0 0.0
        %4983 = vmatpush1.msra.mxu0 %v4969
        %4984 = vmatprep.subr.mxu0 0.0
        %4985 = vmatpush1.msra.mxu0 %v4970
        %4986 = vmatprep.subr.mxu0 0.0
        %4987 = vmatpush1.msra.mxu0 %v4971
        %4988 = vmatprep.subr.mxu0 0.0
        %4989 = vmatpush1.msra.mxu0 0.0
        %4990 = vmatprep.subr.mxu0 0.0
        %4991 = vmatpush1.msra.mxu0 0.0
        %4992 = vmatprep.subr.mxu0 0.0
        %4993 = vmatpush1.msra.mxu0 0.0
        %4994 = vmatprep.subr.mxu0 0.0
        %4995 = vmatpush1.msra.mxu0 0.0
        %4996 = vmatprep.subr.mxu0 0.0
        %4997 = vmatpush1.msra.mxu0 0.0
        %4998 = vmatprep.subr.mxu0 0.0
        %4999 = vmatpush1.msra.mxu0 0.0
        %5000 = vmatprep.subr.mxu0 0.0
        %5001 = vmatpush1.msra.mxu0 0.0
        %5002 = vmatprep.subr.mxu0 0.0
        %5003 = vmatpush1.msra.mxu0 0.0
        %5004 = vmatprep.subr.mxu0 0.0
        %5005 = vmatpush1.msra.mxu0 0.0
        %5006 = vmatprep.subr.mxu0 0.0
        %5007 = vmatpush1.msra.mxu0 0.0
        %5008 = vmatprep.subr.mxu0 0.0
        %5009 = vmatpush1.msra.mxu0 0.0
        %5010 = vmatprep.subr.mxu0 0.0
        %5011 = vmatpush1.msra.mxu0 0.0
        %5012 = vmatprep.subr.mxu0 0.0
        %5013 = vmatpush1.msra.mxu0 0.0
        %5014 = vmatprep.subr.mxu0 0.0
        %5015 = vmatpush1.msra.mxu0 0.0
        %5016 = vmatprep.subr.mxu0 0.0
        %5017 = vmatpush1.msra.mxu0 0.0
        %5018 = vmatprep.subr.mxu0 0.0
        %5019 = vmatpush1.msra.mxu0 0.0
        %5020 = vmatprep.subr.mxu0 0.0
        %5021 = vmatpush1.msra.mxu0 0.0
        %5022 = vmatprep.subr.mxu0 0.0
        %5023 = vmatpush1.msra.mxu0 0.0
        %5024 = vmatprep.subr.mxu0 0.0
        %5025 = vmatpush1.msra.mxu0 0.0
        %5026 = vmatprep.subr.mxu0 0.0
        %5027 = vmatpush1.msra.mxu0 0.0
        %5028 = vmatprep.subr.mxu0 0.0
        %5029 = vmatpush1.msra.mxu0 0.0
        %5030 = vmatprep.subr.mxu0 0.0
        %5031 = vmatpush1.msra.mxu0 0.0
        %5032 = vmatprep.subr.mxu0 0.0
        %5033 = vmatpush1.msra.mxu0 0.0
        %5034 = vmatprep.subr.mxu0 0.0
        %5035 = vmatpush1.msra.mxu0 0.0
        %5036 = vmatprep.subr.mxu0 0.0
        %5037 = vmatpush1.msra.mxu0 0.0
        %5038 = vmatprep.subr.mxu0 0.0
        %5039 = vmatpush1.msra.mxu0 0.0
        %5040 = vmatprep.subr.mxu0 0.0
        %5041 = vmatpush1.msra.mxu0 0.0
        %5042 = vmatprep.subr.mxu0 0.0
        %5043 = vmatpush1.msra.mxu0 0.0
        %5044 = vmatprep.mubr.f32.mxu0 0.0
        %5045 = vmatmul.mubr.f32.gmra.mrb[0].mxu0 %v4978
        %v5046 = vpop.f32.mrb[0].mxu0
        %v5047 = vadd.f32 %v4976, %v5046
        %v5048 = vpop.f32.mrb[0].mxu0
        %5049 = vdwg.mxu0
        %v5050 = vmax.f32 %v5047, 0.0
        %v5051 = vld [vmem:[#allocation4 + $0x670] sm:$0xff]
        %v5052 = vld [vmem:[#allocation4 + $0x678] sm:$0xff]
        %v5053 = vld [vmem:[#allocation4 + $0x680] sm:$0xff]
        %v5054 = vld [vmem:[#allocation4 + $0x688] sm:$0xff]
        %v5055 = vld [vmem:[#allocation4 + $0x690] sm:$0xff]
        %v5056 = vld [vmem:[#allocation4 + $0x698] sm:$0xff]
        %v5057 = vld [vmem:[#allocation4 + $0x6a0] sm:$0xff]
        %v5058 = vld [vmem:[#allocation4 + $0x6a8] sm:$0xff]
        %v5059 = vld [vmem:[#allocation4 + $0x6b0] sm:$0x1]
        %v5060 = vlaneseq
        %v5061 = vshrl.u32 %v5060, 7
        %v5062 = vsub.s32 0, %v5061
        %v5063 = vrot.slane %v5059, %v5062
        %v5065 = vsel %vm1463, %v5050, 0
        %5067 = vmatprep.subr.mxu0 0.0
        %5068 = vmatpush1.msra.mxu0 %v5051
        %5069 = vmatprep.subr.mxu0 0.0
        %5070 = vmatpush1.msra.mxu0 %v5052
        %5071 = vmatprep.subr.mxu0 0.0
        %5072 = vmatpush1.msra.mxu0 %v5053
        %5073 = vmatprep.subr.mxu0 0.0
        %5074 = vmatpush1.msra.mxu0 %v5054
        %5075 = vmatprep.subr.mxu0 0.0
        %5076 = vmatpush1.msra.mxu0 %v5055
        %5077 = vmatprep.subr.mxu0 0.0
        %5078 = vmatpush1.msra.mxu0 %v5056
        %5079 = vmatprep.subr.mxu0 0.0
        %5080 = vmatpush1.msra.mxu0 %v5057
        %5081 = vmatprep.subr.mxu0 0.0
        %5082 = vmatpush1.msra.mxu0 %v5058
        %5083 = vmatprep.subr.mxu0 0.0
        %5084 = vmatpush1.msra.mxu0 0.0
        %5085 = vmatprep.subr.mxu0 0.0
        %5086 = vmatpush1.msra.mxu0 0.0
        %5087 = vmatprep.subr.mxu0 0.0
        %5088 = vmatpush1.msra.mxu0 0.0
        %5089 = vmatprep.subr.mxu0 0.0
        %5090 = vmatpush1.msra.mxu0 0.0
        %5091 = vmatprep.subr.mxu0 0.0
        %5092 = vmatpush1.msra.mxu0 0.0
        %5093 = vmatprep.subr.mxu0 0.0
        %5094 = vmatpush1.msra.mxu0 0.0
        %5095 = vmatprep.subr.mxu0 0.0
        %5096 = vmatpush1.msra.mxu0 0.0
        %5097 = vmatprep.subr.mxu0 0.0
        %5098 = vmatpush1.msra.mxu0 0.0
        %5099 = vmatprep.subr.mxu0 0.0
        %5100 = vmatpush1.msra.mxu0 0.0
        %5101 = vmatprep.subr.mxu0 0.0
        %5102 = vmatpush1.msra.mxu0 0.0
        %5103 = vmatprep.subr.mxu0 0.0
        %5104 = vmatpush1.msra.mxu0 0.0
        %5105 = vmatprep.subr.mxu0 0.0
        %5106 = vmatpush1.msra.mxu0 0.0
        %5107 = vmatprep.subr.mxu0 0.0
        %5108 = vmatpush1.msra.mxu0 0.0
        %5109 = vmatprep.subr.mxu0 0.0
        %5110 = vmatpush1.msra.mxu0 0.0
        %5111 = vmatprep.subr.mxu0 0.0
        %5112 = vmatpush1.msra.mxu0 0.0
        %5113 = vmatprep.subr.mxu0 0.0
        %5114 = vmatpush1.msra.mxu0 0.0
        %5115 = vmatprep.subr.mxu0 0.0
        %5116 = vmatpush1.msra.mxu0 0.0
        %5117 = vmatprep.subr.mxu0 0.0
        %5118 = vmatpush1.msra.mxu0 0.0
        %5119 = vmatprep.subr.mxu0 0.0
        %5120 = vmatpush1.msra.mxu0 0.0
        %5121 = vmatprep.subr.mxu0 0.0
        %5122 = vmatpush1.msra.mxu0 0.0
        %5123 = vmatprep.subr.mxu0 0.0
        %5124 = vmatpush1.msra.mxu0 0.0
        %5125 = vmatprep.subr.mxu0 0.0
        %5126 = vmatpush1.msra.mxu0 0.0
        %5127 = vmatprep.subr.mxu0 0.0
        %5128 = vmatpush1.msra.mxu0 0.0
        %5129 = vmatprep.subr.mxu0 0.0
        %5130 = vmatpush1.msra.mxu0 0.0
        %5131 = vmatprep.mubr.f32.mxu0 0.0
        %5132 = vmatmul.mubr.f32.gmra.mrb[0].mxu0 %v5065
        %v5133 = vpop.f32.mrb[0].mxu0
        %v5134 = vadd.f32 %v5063, %v5133
        %v5135 = vpop.f32.mrb[0].mxu0
        %5136 = vdwg.mxu0
        %v5137 = vadd.f32 %v4967, %v5134
        %v5138 = vsel %vm235, %v5137, 0.0
        %5139 = vadd.xlane.f32.xlu0 %v5138
        %v5140 = vpop.xlane.xlu0 %5139
        %v5141 = vmul.f32 %v5140, %v1323
        %v5142 = vsub.f32 %v5137, %v5141
        %v5143 = vmul.f32 %v5142, %v5142
        %v5144 = vsel %vm235, %v5143, 0.0
        %5145 = vadd.xlane.f32.xlu0 %v5144
        %v5146 = vpop.xlane.xlu0 %5145
        %v5147 = vmul.f32 %v5146, %v1323
        %v5148 = vadd.f32 %v5147, 1e-05
        %v5149 = vrsqrt.pop %v5148
        %v5150 = vmul.f32 %v5142, %v5149
        %v5151 = vld [vmem:[#allocation4 + $0x6b8] sm:$0x1]
        %v5152 = vlaneseq
        %v5153 = vshrl.u32 %v5152, 7
        %v5154 = vsub.s32 0, %v5153
        %v5155 = vrot.slane %v5151, %v5154
        %v5156 = vmul.f32 %v5150, %v5155
        %v5157 = vld [vmem:[#allocation4 + $0x6c0] sm:$0x1]
        %v5158 = vlaneseq
        %v5159 = vshrl.u32 %v5158, 7
        %v5160 = vsub.s32 0, %v5159
        %v5161 = vrot.slane %v5157, %v5160
        %v5162 = vadd.f32 %v5156, %v5161
        %v5163 = vld [vmem:[#allocation4 + $0x58] sm:$0xff]
        %v5164 = vld [vmem:[#allocation4 + $0x60] sm:$0xff]
        %v5165 = vld [vmem:[#allocation4 + $0x68] sm:$0xff]
        %v5166 = vld [vmem:[#allocation4 + $0x70] sm:$0xff]
        %v5167 = vld [vmem:[#allocation4 + $0x78] sm:$0x1]
        %v5168 = vlaneseq
        %v5169 = vshrl.u32 %v5168, 7
        %v5170 = vsub.s32 0, %v5169
        %v5171 = vrot.slane %v5167, %v5170
        %v5173 = vsel %vm235, %v5162, 0
        %5175 = vmatprep.subr.mxu0 0.0
        %5176 = vmatpush1.msra.mxu0 %v5163
        %5177 = vmatprep.subr.mxu0 0.0
        %5178 = vmatpush1.msra.mxu0 %v5164
        %5179 = vmatprep.subr.mxu0 0.0
        %5180 = vmatpush1.msra.mxu0 %v5165
        %5181 = vmatprep.subr.mxu0 0.0
        %5182 = vmatpush1.msra.mxu0 %v5166
        %5183 = vmatprep.subr.mxu0 0.0
        %5184 = vmatpush1.msra.mxu0 0.0
        %5185 = vmatprep.subr.mxu0 0.0
        %5186 = vmatpush1.msra.mxu0 0.0
        %5187 = vmatprep.subr.mxu0 0.0
        %5188 = vmatpush1.msra.mxu0 0.0
        %5189 = vmatprep.subr.mxu0 0.0
        %5190 = vmatpush1.msra.mxu0 0.0
        %5191 = vmatprep.subr.mxu0 0.0
        %5192 = vmatpush1.msra.mxu0 0.0
        %5193 = vmatprep.subr.mxu0 0.0
        %5194 = vmatpush1.msra.mxu0 0.0
        %5195 = vmatprep.subr.mxu0 0.0
        %5196 = vmatpush1.msra.mxu0 0.0
        %5197 = vmatprep.subr.mxu0 0.0
        %5198 = vmatpush1.msra.mxu0 0.0
        %5199 = vmatprep.subr.mxu0 0.0
        %5200 = vmatpush1.msra.mxu0 0.0
        %5201 = vmatprep.subr.mxu0 0.0
        %5202 = vmatpush1.msra.mxu0 0.0
        %5203 = vmatprep.subr.mxu0 0.0
        %5204 = vmatpush1.msra.mxu0 0.0
        %5205 = vmatprep.subr.mxu0 0.0
        %5206 = vmatpush1.msra.mxu0 0.0
        %5207 = vmatprep.subr.mxu0 0.0
        %5208 = vmatpush1.msra.mxu0 0.0
        %5209 = vmatprep.subr.mxu0 0.0
        %5210 = vmatpush1.msra.mxu0 0.0
        %5211 = vmatprep.subr.mxu0 0.0
        %5212 = vmatpush1.msra.mxu0 0.0
        %5213 = vmatprep.subr.mxu0 0.0
        %5214 = vmatpush1.msra.mxu0 0.0
        %5215 = vmatprep.subr.mxu0 0.0
        %5216 = vmatpush1.msra.mxu0 0.0
        %5217 = vmatprep.subr.mxu0 0.0
        %5218 = vmatpush1.msra.mxu0 0.0
        %5219 = vmatprep.subr.mxu0 0.0
        %5220 = vmatpush1.msra.mxu0 0.0
        %5221 = vmatprep.subr.mxu0 0.0
        %5222 = vmatpush1.msra.mxu0 0.0
        %5223 = vmatprep.subr.mxu0 0.0
        %5224 = vmatpush1.msra.mxu0 0.0
        %5225 = vmatprep.subr.mxu0 0.0
        %5226 = vmatpush1.msra.mxu0 0.0
        %5227 = vmatprep.subr.mxu0 0.0
        %5228 = vmatpush1.msra.mxu0 0.0
        %5229 = vmatprep.subr.mxu0 0.0
        %5230 = vmatpush1.msra.mxu0 0.0
        %5231 = vmatprep.subr.mxu0 0.0
        %5232 = vmatpush1.msra.mxu0 0.0
        %5233 = vmatprep.subr.mxu0 0.0
        %5234 = vmatpush1.msra.mxu0 0.0
        %5235 = vmatprep.subr.mxu0 0.0
        %5236 = vmatpush1.msra.mxu0 0.0
        %5237 = vmatprep.subr.mxu0 0.0
        %5238 = vmatpush1.msra.mxu0 0.0
        %5239 = vmatprep.mubr.f32.mxu0 0.0
        %5240 = vmatmul.mubr.f32.gmra.mrb[0].mxu0 %v5173
        %v5241 = vpop.f32.mrb[0].mxu0
        %v5242 = vadd.f32 %v5171, %v5241
        %v5243 = vpop.f32.mrb[0].mxu0
        %5244 = vdwg.mxu0
        %5245 = vst [vmem:[%s151] sm:$0xff] %v5242
        %5247 = vrot.lane.b32.xlu0 %v1645, 64
        %v5248 = vpop.permute.xlu0 %5247
        %vm5250 = vcmask 1040896
        %5251 = vst.msk [vmem:[%s151] sm:$0x1] %vm5250, %v5248
        %s5252 = sand.u32 %s72, 1
        %s5253 = scalar_lea.sflag [#allocation6], %s5252
        %s5254 = sand.u32 %s72, 1
        %s5255 = smul.addr %s5254, 8
        %s5256 = scalar_lea.vmem [#allocation7], %s5255
        // Predicated region
        $region33: #{tpu_custom_call.1} parent=27 // pred_check
          %p5257 = pneg %p82
        $region34: #{tpu_custom_call.1} parent=27 // pred_check_branch
          %5259 = sbr.rel (%p5257) target = $region36
        $region35: #{tpu_custom_call.1} parent=27 // pred_region
          %s5261 = ssub.s32 128, 128
          %5262 = vsyncadd %s5253, %s5261
          %s5263 = smul.addr %s17, 128
          %s5264 = scalar_lea.hbm %s2, %s5263
          %s5266 = sshll.u32 %s5256, 4
          %s5267 = int_to_ptr.vmem [resolvable:$true] %s5266
          %5269 = dma.vmem_to_hbm [thread:$0]  %s5267, 128, %s5264, %s5253
        $region36: #{tpu_custom_call.1} parent=27 // pred_fallthru
          _
      $region28: #{tpu_custom_call.1} parent=5 // pred_fallthru
        _
      %p5270 = scmp.le.s32.totalorder 2, %s12
      // Predicated region
      $region37: #{tpu_custom_call.1} parent=5 // pred_check
        %p5271 = pneg %p5270
      $region38: #{tpu_custom_call.1} parent=5 // pred_check_branch
        %5273 = sbr.rel (%p5271) target = $region40
      $region39: #{tpu_custom_call.1} parent=5 // pred_region
        %s5274 = ssub.s32 %s12, 2
        // Predicated region
        $region41: #{tpu_custom_call.1} parent=39 // pred_check
          %p5275 = pneg %p88
        $region42: #{tpu_custom_call.1} parent=39 // pred_check_branch
          %5277 = sbr.rel (%p5275) target = $region44
        $region43: #{tpu_custom_call.1} parent=39 // pred_region
          %s5278 = sand.u32 %s73, 1
          %s5279 = scalar_lea.sflag [#allocation6], %s5278
          %s5280 = sand.u32 %s73, 1
          %s5281 = smul.addr %s5280, 8
          %s5282 = scalar_lea.vmem [#allocation7], %s5281
          %5283 = dma.done %s5279, 128
        $region44: #{tpu_custom_call.1} parent=39 // pred_fallthru
          _
      $region40: #{tpu_custom_call.1} parent=5 // pred_fallthru
        _
    $region6: #{tpu_custom_call.1} parent=1 // loop_footer
      %s16 = sadd.s32 1, %s12
    $region7: #{tpu_custom_call.1} parent=1 // loop_footer_branch
      %11 = sbr.rel target = $region3
    $region8: #{tpu_custom_call.1} parent=1 // loop_exit
      _
    %5284 = vsyncpa [#allocation5], 1
    %s5285 = scalar_lea.sflag [#allocation5], 1
    %5286 = vsyncpa %s5285, 1
    %5287 = vsyncpa [#allocation6], 1
    %s5288 = scalar_lea.sflag [#allocation6], 1
    %5289 = vsyncpa %s5288, 1

</llo_original>
